<compile_context>
chip_gen: v7x
topology: tpu7x:2x2x1
jax: 0.10.0
libtpu: 0.0.40
codegen_flags: <defaults>
</compile_context>

<pallas_src>
import functools

import jax
import jax.numpy as jnp
from jax import lax
from jax.experimental import pallas as pl
from jax.experimental.pallas import tpu as pltpu


def _round_up(x, m):
    return ((x + m - 1) // m) * m


def _fused_double_conv_kernel(x_ref, w1_ref, b1_ref, w2_ref, b2_ref, o_ref,
                              xpad_ref, mid_ref, *, H, W, Cin, Cp):
    """Fused (Conv3x3 pad=1 -> ReLU) x2 for one batch element.

    x_ref   : (1, H, W, Cin)    bf16  unpadded input tile
    w1_ref  : (9, Cin, Cp)      bf16  conv1 weights, tap-major (tap = 3*dy + dx)
    b1_ref  : (1, Cp)           f32
    w2_ref  : (9, Cp, Cp)       bf16  conv2 weights, tap-major
    b2_ref  : (1, Cp)           f32
    o_ref   : (1, H, W, Cp)     f32   lane-dense output (Cp % 128 == 0)
    xpad_ref: (H+2, W+2, Cin)   f32   scratch: zero-padded input
    mid_ref : (H+2, W+2, Cp)    f32   scratch: zero-padded conv1 activation
    """
    f32 = jnp.float32
    bf16 = jnp.bfloat16

    # Scratch persists across grid steps; the halo is never written again, so it
    # only needs to be zeroed once.
    @pl.when(pl.program_id(0) == 0)
    def _init():
        xpad_ref[...] = jnp.zeros_like(xpad_ref)
        mid_ref[...] = jnp.zeros_like(mid_ref)

    # ---- Stage 0: fold padding=1 into the kernel (no jnp.pad HBM pass). ----
    xpad_ref[1:H + 1, 1:W + 1, :] = x_ref[0].astype(f32)

    # ---- Stage 1: conv1 + bias + ReLU.  9 shifted (H*W, Cin) @ (Cin, Cp)
    # MXU matmuls, bf16 operands, f32 accumulation, lane-dense N = Cp. ----
    acc = jnp.zeros((H * W, Cp), dtype=f32)
    for dy in range(3):
        for dx in range(3):
            tap = xpad_ref[dy:dy + H, dx:dx + W, :].reshape(H * W, Cin)
            acc += jnp.dot(tap.astype(bf16), w1_ref[3 * dy + dx],
                           preferred_element_type=f32)
    y1 = jnp.maximum(acc + b1_ref[0][None, :], 0.0)

    # Intermediate activation stays in VMEM (zero halo) — no HBM round trip.
    mid_ref[1:H + 1, 1:W + 1, :] = y1.reshape(H, W, Cp)

    # ---- Stage 2: conv2 + bias + ReLU.  Per-tap K = Cp (>=128): this is a
    # K-tiled im2col matmul with K-tile = Cp; each dot is a well-shaped MXU
    # call and the f32 accumulator stays resident in vregs. ----
    acc = jnp.zeros((H * W, Cp), dtype=f32)
    for dy in range(3):
        for dx in range(3):
            tap = mid_ref[dy:dy + H, dx:dx + W, :].reshape(H * W, Cp)
            acc += jnp.dot(tap.astype(bf16), w2_ref[3 * dy + dx],
                           preferred_element_type=f32)
    y2 = jnp.maximum(acc + b2_ref[0][None, :], 0.0)
    o_ref[0] = y2.reshape(H, W, Cp).astype(o_ref.dtype)


def _prep_conv_params(w, b, ci_pad, co_pad):
    """w: (3, 3, ci, co) HWIO, b: (co,) -> tap-major padded bf16 weights + f32 bias.

    Returns w_p: (9, ci_pad, co_pad) bf16, b_p: (1, co_pad) f32.  Zero padding of
    channels is exact, so padded output channels are identically zero downstream.
    """
    kh, kw, ci, co = w.shape
    assert (kh, kw) == (3, 3), "DoubleConv uses 3x3 kernels"
    wp = jnp.zeros((kh * kw, ci_pad, co_pad), jnp.float32)
    wp = wp.at[:, :ci, :co].set(w.reshape(kh * kw, ci, co).astype(jnp.float32))
    bp = jnp.zeros((1, co_pad), jnp.float32)
    bp = bp.at[0, :co].set(b.astype(jnp.float32))
    return wp.astype(jnp.bfloat16), bp


def double_conv(x_nchw, w1, b1, w2, b2):
    """DoubleConv forward.  x_nchw: (N, Cin, H, W) f32 -> (N, Cout, H, W) f32."""
    N, Cin, H, W = x_nchw.shape
    Cout = w1.shape[-1]
    Cp = _round_up(Cout, 128)                 # lane-dense channel dimension

    x_nhwc = jnp.transpose(x_nchw, (0, 2, 3, 1)).astype(jnp.bfloat16)
    w1_p, b1_p = _prep_conv_params(w1, b1, Cin, Cp)   # conv1: K = Cin
    w2_p, b2_p = _prep_conv_params(w2, b2, Cp, Cp)    # conv2: K = Cp (mid is padded)

    kernel = functools.partial(_fused_double_conv_kernel,
                               H=H, W=W, Cin=Cin, Cp=Cp)

    flops = 2 * N * H * W * 9 * (Cin * Cp + Cp * Cp)
    bytes_accessed = (x_nhwc.size * 2 + w1_p.size * 2 + w2_p.size * 2
                      + b1_p.size * 4 + b2_p.size * 4 + N * H * W * Cp * 4)

    out = pl.pallas_call(
        kernel,
        out_shape=jax.ShapeDtypeStruct((N, H, W, Cp), jnp.float32),
        grid_spec=pltpu.PrefetchScalarGridSpec(
            num_scalar_prefetch=0,
            grid=(N,),
            in_specs=[
                pl.BlockSpec((1, H, W, Cin), lambda n: (n, 0, 0, 0)),
                pl.BlockSpec((9, Cin, Cp), lambda n: (0, 0, 0)),
                pl.BlockSpec((1, Cp), lambda n: (0, 0)),
                pl.BlockSpec((9, Cp, Cp), lambda n: (0, 0, 0)),
                pl.BlockSpec((1, Cp), lambda n: (0, 0)),
            ],
            out_specs=pl.BlockSpec((1, H, W, Cp), lambda n: (n, 0, 0, 0)),
            scratch_shapes=[
                pltpu.VMEM((H + 2, W + 2, Cin), jnp.float32),   # padded input
                pltpu.VMEM((H + 2, W + 2, Cp), jnp.float32),    # padded conv1 act
            ],
        ),
        compiler_params=pltpu.CompilerParams(
            dimension_semantics=("parallel",),
            # Explicit VMEM budget (~1.5 MiB actually used here) — safe on
            # v5e/v6e (128 MiB) and v7x (64 MiB physical, 32 MiB default scope).
            vmem_limit_bytes=32 * 1024 * 1024,
        ),
        cost_estimate=pl.CostEstimate(
            flops=flops, transcendentals=0, bytes_accessed=bytes_accessed),
    )(x_nhwc, w1_p, b1_p, w2_p, b2_p)

    return jnp.transpose(out[..., :Cout], (0, 3, 1, 2))


def _reference_double_conv(x_nchw, w1, b1, w2, b2, *, mirror_bf16_inputs):
    """Pure-JAX reference.  mirror_bf16_inputs=True rounds every matmul operand
    to bf16 (f32 accumulation) exactly like the kernel's MXU policy."""
    def cast(a):
        a = a.astype(jnp.float32)
        return a.astype(jnp.bfloat16).astype(jnp.float32) if mirror_bf16_inputs else a

    def conv(x, w, b):
        y = lax.conv_general_dilated(
            cast(x), cast(w), window_strides=(1, 1), padding="SAME",
            dimension_numbers=("NCHW", "HWIO", "NCHW"),
            precision=lax.Precision.HIGHEST)
        return jnp.maximum(y + b[None, :, None, None].astype(jnp.float32), 0.0)

    return conv(conv(x_nchw, w1, b1), w2, b2)


if __name__ == "__main__":
    key = jax.random.PRNGKey(0)
    k_x, k_w1, k_b1, k_w2, k_b2 = jax.random.split(key, 5)

    N, Cin, Cout, H, W = 2, 4, 8, 16, 16

    x = jax.random.normal(k_x, (N, Cin, H, W), dtype=jnp.float32)
    # Weights stored HWIO: (3, 3, Cin, Cout) (PyTorch OIHW -> transpose(2, 3, 1, 0)).
    w1 = jax.random.normal(k_w1, (3, 3, Cin, Cout), dtype=jnp.float32) * 0.1
    b1 = jax.random.normal(k_b1, (Cout,), dtype=jnp.float32) * 0.1
    w2 = jax.random.normal(k_w2, (3, 3, Cout, Cout), dtype=jnp.float32) * 0.1
    b2 = jax.random.normal(k_b2, (Cout,), dtype=jnp.float32) * 0.1

    out = jax.block_until_ready(jax.jit(double_conv)(x, w1, b1, w2, b2))
    assert out.shape == (N, Cout, H, W)
    assert out.dtype == jnp.float32

    # Reference mirroring the kernel's precision policy (bf16 operands, f32 acc):
    # should match up to f32 accumulation-order noise.
    ref_mx = jax.block_until_ready(
        _reference_double_conv(x, w1, b1, w2, b2, mirror_bf16_inputs=True))
    assert jnp.allclose(out, ref_mx, atol=2e-3, rtol=2e-3), \
        float(jnp.max(jnp.abs(out - ref_mx)))

    # Full-f32 module semantics: the only deviation is bf16 rounding of operands.
    ref_f32 = jax.block_until_ready(
        _reference_double_conv(x, w1, b1, w2, b2, mirror_bf16_inputs=False))
    assert jnp.allclose(out, ref_f32, atol=1e-1, rtol=1e-1)

    print("KERNEL_OK")
</pallas_src>

<mosaic_0001>
module attributes {stable_mosaic.version = 11 : i64} {
  func.func @_fused_double_conv_kernel(%arg0: i32, %arg1: memref<1x16x16x4xbf16, #tpu.memory_space<vmem>>, %arg2: memref<9x4x128xbf16, #tpu.memory_space<vmem>>, %arg3: memref<1x128xf32, #tpu.memory_space<vmem>>, %arg4: memref<9x128x128xbf16, #tpu.memory_space<vmem>>, %arg5: memref<1x128xf32, #tpu.memory_space<vmem>>, %arg6: memref<1x16x16x128xf32, #tpu.memory_space<vmem>>, %arg7: memref<18x18x4xf32, #tpu.memory_space<vmem>>, %arg8: memref<18x18x128xf32, #tpu.memory_space<vmem>>) attributes {dimension_semantics = [#tpu.dimension_semantics<parallel>], iteration_bounds = array<i64: 2>, scalar_prefetch = 0 : i64, scratch_operands = 2 : i64, tpu.core_type = #tpu.core_type<tc>, window_params = [{transform_indices = @transform_0, window_bounds = array<i64: 1, 16, 16, 4>}, {pipeline_mode = #tpu.pipeline_mode<synchronous>, transform_indices = @transform_1, window_bounds = array<i64: 9, 4, 128>}, {pipeline_mode = #tpu.pipeline_mode<synchronous>, transform_indices = @transform_2, window_bounds = array<i64: 1, 128>}, {pipeline_mode = #tpu.pipeline_mode<synchronous>, transform_indices = @transform_3, window_bounds = array<i64: 9, 128, 128>}, {pipeline_mode = #tpu.pipeline_mode<synchronous>, transform_indices = @transform_4, window_bounds = array<i64: 1, 128>}, {transform_indices = @transform_5, window_bounds = array<i64: 1, 16, 16, 128>}]} {
    %c0_i32 = arith.constant 0 : i32
    %0 = arith.cmpi eq, %arg0, %c0_i32 : i32
    %1 = arith.extui %0 : i1 to i32
    %c0_i32_0 = arith.constant 0 : i32
    %2 = arith.cmpi ne, %1, %c0_i32_0 : i32
    scf.if %2 {
      %cst_139 = arith.constant 0.000000e+00 : f32
      %155 = vector.broadcast %cst_139 : f32 to vector<18x18x4xf32>
      %c0_140 = arith.constant 0 : index
      %c0_141 = arith.constant 0 : index
      %c0_142 = arith.constant 0 : index
      %156 = vector.load %arg7[%c0_140, %c0_141, %c0_142] : memref<18x18x4xf32, #tpu.memory_space<vmem>>, vector<18x18x4xf32>
      tpu.vector_store %arg7[%c0_140, %c0_141, %c0_142], %155 {strides = array<i32>} : memref<18x18x4xf32, #tpu.memory_space<vmem>>, vector<18x18x4xf32>,
      %cst_143 = arith.constant 0.000000e+00 : f32
      %157 = vector.broadcast %cst_143 : f32 to vector<18x18x128xf32>
      %c0_144 = arith.constant 0 : index
      %c0_145 = arith.constant 0 : index
      %c0_146 = arith.constant 0 : index
      %158 = vector.load %arg8[%c0_144, %c0_145, %c0_146] : memref<18x18x128xf32, #tpu.memory_space<vmem>>, vector<18x18x128xf32>
      tpu.vector_store %arg8[%c0_144, %c0_145, %c0_146], %157 {strides = array<i32>} : memref<18x18x128xf32, #tpu.memory_space<vmem>>, vector<18x18x128xf32>,
    } else {
    }
    %c0 = arith.constant 0 : index
    %c0_1 = arith.constant 0 : index
    %c0_2 = arith.constant 0 : index
    %c0_3 = arith.constant 0 : index
    %3 = vector.load %arg1[%c0, %c0_1, %c0_2, %c0_3] : memref<1x16x16x4xbf16, #tpu.memory_space<vmem>>, vector<1x16x16x4xbf16>
    %4 = vector.shape_cast %3 : vector<1x16x16x4xbf16> to vector<16x16x4xbf16>
    %5 = arith.extf %4 : vector<16x16x4xbf16> to vector<16x16x4xf32>
    %c1 = arith.constant 1 : index
    %c1_4 = arith.constant 1 : index
    %c0_5 = arith.constant 0 : index
    %6 = vector.load %arg7[%c1, %c1_4, %c0_5] : memref<18x18x4xf32, #tpu.memory_space<vmem>>, vector<16x16x4xf32>
    tpu.vector_store %arg7[%c1, %c1_4, %c0_5], %5 {strides = array<i32>} : memref<18x18x4xf32, #tpu.memory_space<vmem>>, vector<16x16x4xf32>,
    %cst = arith.constant 0.000000e+00 : f32
    %7 = vector.broadcast %cst : f32 to vector<256x128xf32>
    %c0_6 = arith.constant 0 : index
    %c0_7 = arith.constant 0 : index
    %c0_8 = arith.constant 0 : index
    %8 = vector.load %arg7[%c0_6, %c0_7, %c0_8] : memref<18x18x4xf32, #tpu.memory_space<vmem>>, vector<16x16x4xf32>
    %9 = vector.shape_cast %8 : vector<16x16x4xf32> to vector<256x4xf32>
    %10 = arith.truncf %9 : vector<256x4xf32> to vector<256x4xbf16>
    %c0_9 = arith.constant 0 : index
    %c0_10 = arith.constant 0 : index
    %c0_11 = arith.constant 0 : index
    %11 = vector.load %arg2[%c0_9, %c0_10, %c0_11] : memref<9x4x128xbf16, #tpu.memory_space<vmem>>, vector<1x4x128xbf16>
    %12 = vector.shape_cast %11 : vector<1x4x128xbf16> to vector<4x128xbf16>
    %cst_12 = arith.constant dense<0.000000e+00> : vector<256x128xf32>
    %13 = tpu.matmul %10, %12, %cst_12 {dimension_numbers = #tpu.dot_dimension_numbers<[1], [0], [0], [1], [0, 0, 1, 1], [], []>} : vector<256x4xbf16>, vector<4x128xbf16>, vector<256x128xf32> -> vector<256x128xf32>
    %14 = arith.addf %7, %13 : vector<256x128xf32>
    %c0_13 = arith.constant 0 : index
    %c1_14 = arith.constant 1 : index
    %c0_15 = arith.constant 0 : index
    %15 = vector.load %arg7[%c0_13, %c1_14, %c0_15] : memref<18x18x4xf32, #tpu.memory_space<vmem>>, vector<16x16x4xf32>
    %16 = vector.shape_cast %15 : vector<16x16x4xf32> to vector<256x4xf32>
    %17 = arith.truncf %16 : vector<256x4xf32> to vector<256x4xbf16>
    %c1_16 = arith.constant 1 : index
    %c0_17 = arith.constant 0 : index
    %c0_18 = arith.constant 0 : index
    %18 = vector.load %arg2[%c1_16, %c0_17, %c0_18] : memref<9x4x128xbf16, #tpu.memory_space<vmem>>, vector<1x4x128xbf16>
    %19 = vector.shape_cast %18 : vector<1x4x128xbf16> to vector<4x128xbf16>
    %cst_19 = arith.constant dense<0.000000e+00> : vector<256x128xf32>
    %20 = tpu.matmul %17, %19, %cst_19 {dimension_numbers = #tpu.dot_dimension_numbers<[1], [0], [0], [1], [0, 0, 1, 1], [], []>} : vector<256x4xbf16>, vector<4x128xbf16>, vector<256x128xf32> -> vector<256x128xf32>
    %21 = arith.addf %14, %20 : vector<256x128xf32>
    %c0_20 = arith.constant 0 : index
    %c2 = arith.constant 2 : index
    %c0_21 = arith.constant 0 : index
    %22 = vector.load %arg7[%c0_20, %c2, %c0_21] : memref<18x18x4xf32, #tpu.memory_space<vmem>>, vector<16x16x4xf32>
    %23 = vector.shape_cast %22 : vector<16x16x4xf32> to vector<256x4xf32>
    %24 = arith.truncf %23 : vector<256x4xf32> to vector<256x4xbf16>
    %c2_22 = arith.constant 2 : index
    %c0_23 = arith.constant 0 : index
    %c0_24 = arith.constant 0 : index
    %25 = vector.load %arg2[%c2_22, %c0_23, %c0_24] : memref<9x4x128xbf16, #tpu.memory_space<vmem>>, vector<1x4x128xbf16>
    %26 = vector.shape_cast %25 : vector<1x4x128xbf16> to vector<4x128xbf16>
    %cst_25 = arith.constant dense<0.000000e+00> : vector<256x128xf32>
    %27 = tpu.matmul %24, %26, %cst_25 {dimension_numbers = #tpu.dot_dimension_numbers<[1], [0], [0], [1], [0, 0, 1, 1], [], []>} : vector<256x4xbf16>, vector<4x128xbf16>, vector<256x128xf32> -> vector<256x128xf32>
    %28 = arith.addf %21, %27 : vector<256x128xf32>
    %c1_26 = arith.constant 1 : index
    %c0_27 = arith.constant 0 : index
    %c0_28 = arith.constant 0 : index
    %29 = vector.load %arg7[%c1_26, %c0_27, %c0_28] : memref<18x18x4xf32, #tpu.memory_space<vmem>>, vector<16x16x4xf32>
    %30 = vector.shape_cast %29 : vector<16x16x4xf32> to vector<256x4xf32>
    %31 = arith.truncf %30 : vector<256x4xf32> to vector<256x4xbf16>
    %c3 = arith.constant 3 : index
    %c0_29 = arith.constant 0 : index
    %c0_30 = arith.constant 0 : index
    %32 = vector.load %arg2[%c3, %c0_29, %c0_30] : memref<9x4x128xbf16, #tpu.memory_space<vmem>>, vector<1x4x128xbf16>
    %33 = vector.shape_cast %32 : vector<1x4x128xbf16> to vector<4x128xbf16>
    %cst_31 = arith.constant dense<0.000000e+00> : vector<256x128xf32>
    %34 = tpu.matmul %31, %33, %cst_31 {dimension_numbers = #tpu.dot_dimension_numbers<[1], [0], [0], [1], [0, 0, 1, 1], [], []>} : vector<256x4xbf16>, vector<4x128xbf16>, vector<256x128xf32> -> vector<256x128xf32>
    %35 = arith.addf %28, %34 : vector<256x128xf32>
    %c1_32 = arith.constant 1 : index
    %c1_33 = arith.constant 1 : index
    %c0_34 = arith.constant 0 : index
    %36 = vector.load %arg7[%c1_32, %c1_33, %c0_34] : memref<18x18x4xf32, #tpu.memory_space<vmem>>, vector<16x16x4xf32>
    %37 = vector.shape_cast %36 : vector<16x16x4xf32> to vector<256x4xf32>
    %38 = arith.truncf %37 : vector<256x4xf32> to vector<256x4xbf16>
    %c4 = arith.constant 4 : index
    %c0_35 = arith.constant 0 : index
    %c0_36 = arith.constant 0 : index
    %39 = vector.load %arg2[%c4, %c0_35, %c0_36] : memref<9x4x128xbf16, #tpu.memory_space<vmem>>, vector<1x4x128xbf16>
    %40 = vector.shape_cast %39 : vector<1x4x128xbf16> to vector<4x128xbf16>
    %cst_37 = arith.constant dense<0.000000e+00> : vector<256x128xf32>
    %41 = tpu.matmul %38, %40, %cst_37 {dimension_numbers = #tpu.dot_dimension_numbers<[1], [0], [0], [1], [0, 0, 1, 1], [], []>} : vector<256x4xbf16>, vector<4x128xbf16>, vector<256x128xf32> -> vector<256x128xf32>
    %42 = arith.addf %35, %41 : vector<256x128xf32>
    %c1_38 = arith.constant 1 : index
    %c2_39 = arith.constant 2 : index
    %c0_40 = arith.constant 0 : index
    %43 = vector.load %arg7[%c1_38, %c2_39, %c0_40] : memref<18x18x4xf32, #tpu.memory_space<vmem>>, vector<16x16x4xf32>
    %44 = vector.shape_cast %43 : vector<16x16x4xf32> to vector<256x4xf32>
    %45 = arith.truncf %44 : vector<256x4xf32> to vector<256x4xbf16>
    %c5 = arith.constant 5 : index
    %c0_41 = arith.constant 0 : index
    %c0_42 = arith.constant 0 : index
    %46 = vector.load %arg2[%c5, %c0_41, %c0_42] : memref<9x4x128xbf16, #tpu.memory_space<vmem>>, vector<1x4x128xbf16>
    %47 = vector.shape_cast %46 : vector<1x4x128xbf16> to vector<4x128xbf16>
    %cst_43 = arith.constant dense<0.000000e+00> : vector<256x128xf32>
    %48 = tpu.matmul %45, %47, %cst_43 {dimension_numbers = #tpu.dot_dimension_numbers<[1], [0], [0], [1], [0, 0, 1, 1], [], []>} : vector<256x4xbf16>, vector<4x128xbf16>, vector<256x128xf32> -> vector<256x128xf32>
    %49 = arith.addf %42, %48 : vector<256x128xf32>
    %c2_44 = arith.constant 2 : index
    %c0_45 = arith.constant 0 : index
    %c0_46 = arith.constant 0 : index
    %50 = vector.load %arg7[%c2_44, %c0_45, %c0_46] : memref<18x18x4xf32, #tpu.memory_space<vmem>>, vector<16x16x4xf32>
    %51 = vector.shape_cast %50 : vector<16x16x4xf32> to vector<256x4xf32>
    %52 = arith.truncf %51 : vector<256x4xf32> to vector<256x4xbf16>
    %c6 = arith.constant 6 : index
    %c0_47 = arith.constant 0 : index
    %c0_48 = arith.constant 0 : index
    %53 = vector.load %arg2[%c6, %c0_47, %c0_48] : memref<9x4x128xbf16, #tpu.memory_space<vmem>>, vector<1x4x128xbf16>
    %54 = vector.shape_cast %53 : vector<1x4x128xbf16> to vector<4x128xbf16>
    %cst_49 = arith.constant dense<0.000000e+00> : vector<256x128xf32>
    %55 = tpu.matmul %52, %54, %cst_49 {dimension_numbers = #tpu.dot_dimension_numbers<[1], [0], [0], [1], [0, 0, 1, 1], [], []>} : vector<256x4xbf16>, vector<4x128xbf16>, vector<256x128xf32> -> vector<256x128xf32>
    %56 = arith.addf %49, %55 : vector<256x128xf32>
    %c2_50 = arith.constant 2 : index
    %c1_51 = arith.constant 1 : index
    %c0_52 = arith.constant 0 : index
    %57 = vector.load %arg7[%c2_50, %c1_51, %c0_52] : memref<18x18x4xf32, #tpu.memory_space<vmem>>, vector<16x16x4xf32>
    %58 = vector.shape_cast %57 : vector<16x16x4xf32> to vector<256x4xf32>
    %59 = arith.truncf %58 : vector<256x4xf32> to vector<256x4xbf16>
    %c7 = arith.constant 7 : index
    %c0_53 = arith.constant 0 : index
    %c0_54 = arith.constant 0 : index
    %60 = vector.load %arg2[%c7, %c0_53, %c0_54] : memref<9x4x128xbf16, #tpu.memory_space<vmem>>, vector<1x4x128xbf16>
    %61 = vector.shape_cast %60 : vector<1x4x128xbf16> to vector<4x128xbf16>
    %cst_55 = arith.constant dense<0.000000e+00> : vector<256x128xf32>
    %62 = tpu.matmul %59, %61, %cst_55 {dimension_numbers = #tpu.dot_dimension_numbers<[1], [0], [0], [1], [0, 0, 1, 1], [], []>} : vector<256x4xbf16>, vector<4x128xbf16>, vector<256x128xf32> -> vector<256x128xf32>
    %63 = arith.addf %56, %62 : vector<256x128xf32>
    %c2_56 = arith.constant 2 : index
    %c2_57 = arith.constant 2 : index
    %c0_58 = arith.constant 0 : index
    %64 = vector.load %arg7[%c2_56, %c2_57, %c0_58] : memref<18x18x4xf32, #tpu.memory_space<vmem>>, vector<16x16x4xf32>
    %65 = vector.shape_cast %64 : vector<16x16x4xf32> to vector<256x4xf32>
    %66 = arith.truncf %65 : vector<256x4xf32> to vector<256x4xbf16>
    %c8 = arith.constant 8 : index
    %c0_59 = arith.constant 0 : index
    %c0_60 = arith.constant 0 : index
    %67 = vector.load %arg2[%c8, %c0_59, %c0_60] : memref<9x4x128xbf16, #tpu.memory_space<vmem>>, vector<1x4x128xbf16>
    %68 = vector.shape_cast %67 : vector<1x4x128xbf16> to vector<4x128xbf16>
    %cst_61 = arith.constant dense<0.000000e+00> : vector<256x128xf32>
    %69 = tpu.matmul %66, %68, %cst_61 {dimension_numbers = #tpu.dot_dimension_numbers<[1], [0], [0], [1], [0, 0, 1, 1], [], []>} : vector<256x4xbf16>, vector<4x128xbf16>, vector<256x128xf32> -> vector<256x128xf32>
    %70 = arith.addf %63, %69 : vector<256x128xf32>
    %c0_62 = arith.constant 0 : index
    %c0_63 = arith.constant 0 : index
    %71 = vector.load %arg3[%c0_62, %c0_63] : memref<1x128xf32, #tpu.memory_space<vmem>>, vector<1x128xf32>
    %72 = vector.shape_cast %71 : vector<1x128xf32> to vector<128xf32>
    %73 = vector.shape_cast %72 : vector<128xf32> to vector<1x128xf32>
    %74 = vector.broadcast %73 : vector<1x128xf32> to vector<256x128xf32>
    %75 = arith.addf %70, %74 : vector<256x128xf32>
    %cst_64 = arith.constant 0.000000e+00 : f32
    %76 = vector.broadcast %cst_64 : f32 to vector<256x128xf32>
    %77 = arith.maximumf %75, %76 : vector<256x128xf32>
    %78 = vector.shape_cast %77 : vector<256x128xf32> to vector<16x16x128xf32>
    %c1_65 = arith.constant 1 : index
    %c1_66 = arith.constant 1 : index
    %c0_67 = arith.constant 0 : index
    %79 = vector.load %arg8[%c1_65, %c1_66, %c0_67] : memref<18x18x128xf32, #tpu.memory_space<vmem>>, vector<16x16x128xf32>
    tpu.vector_store %arg8[%c1_65, %c1_66, %c0_67], %78 {strides = array<i32>} : memref<18x18x128xf32, #tpu.memory_space<vmem>>, vector<16x16x128xf32>,
    %cst_68 = arith.constant 0.000000e+00 : f32
    %80 = vector.broadcast %cst_68 : f32 to vector<256x128xf32>
    %c0_69 = arith.constant 0 : index
    %c0_70 = arith.constant 0 : index
    %c0_71 = arith.constant 0 : index
    %81 = vector.load %arg8[%c0_69, %c0_70, %c0_71] : memref<18x18x128xf32, #tpu.memory_space<vmem>>, vector<16x16x128xf32>
    %82 = vector.shape_cast %81 : vector<16x16x128xf32> to vector<256x128xf32>
    %83 = arith.truncf %82 : vector<256x128xf32> to vector<256x128xbf16>
    %c0_72 = arith.constant 0 : index
    %c0_73 = arith.constant 0 : index
    %c0_74 = arith.constant 0 : index
    %84 = vector.load %arg4[%c0_72, %c0_73, %c0_74] : memref<9x128x128xbf16, #tpu.memory_space<vmem>>, vector<1x128x128xbf16>
    %85 = vector.shape_cast %84 : vector<1x128x128xbf16> to vector<128x128xbf16>
    %cst_75 = arith.constant dense<0.000000e+00> : vector<256x128xf32>
    %86 = tpu.matmul %83, %85, %cst_75 {dimension_numbers = #tpu.dot_dimension_numbers<[1], [0], [0], [1], [0, 0, 1, 1], [], []>} : vector<256x128xbf16>, vector<128x128xbf16>, vector<256x128xf32> -> vector<256x128xf32>
    %87 = arith.addf %80, %86 : vector<256x128xf32>
    %c0_76 = arith.constant 0 : index
    %c1_77 = arith.constant 1 : index
    %c0_78 = arith.constant 0 : index
    %88 = vector.load %arg8[%c0_76, %c1_77, %c0_78] : memref<18x18x128xf32, #tpu.memory_space<vmem>>, vector<16x16x128xf32>
    %89 = vector.shape_cast %88 : vector<16x16x128xf32> to vector<256x128xf32>
    %90 = arith.truncf %89 : vector<256x128xf32> to vector<256x128xbf16>
    %c1_79 = arith.constant 1 : index
    %c0_80 = arith.constant 0 : index
    %c0_81 = arith.constant 0 : index
    %91 = vector.load %arg4[%c1_79, %c0_80, %c0_81] : memref<9x128x128xbf16, #tpu.memory_space<vmem>>, vector<1x128x128xbf16>
    %92 = vector.shape_cast %91 : vector<1x128x128xbf16> to vector<128x128xbf16>
    %cst_82 = arith.constant dense<0.000000e+00> : vector<256x128xf32>
    %93 = tpu.matmul %90, %92, %cst_82 {dimension_numbers = #tpu.dot_dimension_numbers<[1], [0], [0], [1], [0, 0, 1, 1], [], []>} : vector<256x128xbf16>, vector<128x128xbf16>, vector<256x128xf32> -> vector<256x128xf32>
    %94 = arith.addf %87, %93 : vector<256x128xf32>
    %c0_83 = arith.constant 0 : index
    %c2_84 = arith.constant 2 : index
    %c0_85 = arith.constant 0 : index
    %95 = vector.load %arg8[%c0_83, %c2_84, %c0_85] : memref<18x18x128xf32, #tpu.memory_space<vmem>>, vector<16x16x128xf32>
    %96 = vector.shape_cast %95 : vector<16x16x128xf32> to vector<256x128xf32>
    %97 = arith.truncf %96 : vector<256x128xf32> to vector<256x128xbf16>
    %c2_86 = arith.constant 2 : index
    %c0_87 = arith.constant 0 : index
    %c0_88 = arith.constant 0 : index
    %98 = vector.load %arg4[%c2_86, %c0_87, %c0_88] : memref<9x128x128xbf16, #tpu.memory_space<vmem>>, vector<1x128x128xbf16>
    %99 = vector.shape_cast %98 : vector<1x128x128xbf16> to vector<128x128xbf16>
    %cst_89 = arith.constant dense<0.000000e+00> : vector<256x128xf32>
    %100 = tpu.matmul %97, %99, %cst_89 {dimension_numbers = #tpu.dot_dimension_numbers<[1], [0], [0], [1], [0, 0, 1, 1], [], []>} : vector<256x128xbf16>, vector<128x128xbf16>, vector<256x128xf32> -> vector<256x128xf32>
    %101 = arith.addf %94, %100 : vector<256x128xf32>
    %c1_90 = arith.constant 1 : index
    %c0_91 = arith.constant 0 : index
    %c0_92 = arith.constant 0 : index
    %102 = vector.load %arg8[%c1_90, %c0_91, %c0_92] : memref<18x18x128xf32, #tpu.memory_space<vmem>>, vector<16x16x128xf32>
    %103 = vector.shape_cast %102 : vector<16x16x128xf32> to vector<256x128xf32>
    %104 = arith.truncf %103 : vector<256x128xf32> to vector<256x128xbf16>
    %c3_93 = arith.constant 3 : index
    %c0_94 = arith.constant 0 : index
    %c0_95 = arith.constant 0 : index
    %105 = vector.load %arg4[%c3_93, %c0_94, %c0_95] : memref<9x128x128xbf16, #tpu.memory_space<vmem>>, vector<1x128x128xbf16>
    %106 = vector.shape_cast %105 : vector<1x128x128xbf16> to vector<128x128xbf16>
    %cst_96 = arith.constant dense<0.000000e+00> : vector<256x128xf32>
    %107 = tpu.matmul %104, %106, %cst_96 {dimension_numbers = #tpu.dot_dimension_numbers<[1], [0], [0], [1], [0, 0, 1, 1], [], []>} : vector<256x128xbf16>, vector<128x128xbf16>, vector<256x128xf32> -> vector<256x128xf32>
    %108 = arith.addf %101, %107 : vector<256x128xf32>
    %c1_97 = arith.constant 1 : index
    %c1_98 = arith.constant 1 : index
    %c0_99 = arith.constant 0 : index
    %109 = vector.load %arg8[%c1_97, %c1_98, %c0_99] : memref<18x18x128xf32, #tpu.memory_space<vmem>>, vector<16x16x128xf32>
    %110 = vector.shape_cast %109 : vector<16x16x128xf32> to vector<256x128xf32>
    %111 = arith.truncf %110 : vector<256x128xf32> to vector<256x128xbf16>
    %c4_100 = arith.constant 4 : index
    %c0_101 = arith.constant 0 : index
    %c0_102 = arith.constant 0 : index
    %112 = vector.load %arg4[%c4_100, %c0_101, %c0_102] : memref<9x128x128xbf16, #tpu.memory_space<vmem>>, vector<1x128x128xbf16>
    %113 = vector.shape_cast %112 : vector<1x128x128xbf16> to vector<128x128xbf16>
    %cst_103 = arith.constant dense<0.000000e+00> : vector<256x128xf32>
    %114 = tpu.matmul %111, %113, %cst_103 {dimension_numbers = #tpu.dot_dimension_numbers<[1], [0], [0], [1], [0, 0, 1, 1], [], []>} : vector<256x128xbf16>, vector<128x128xbf16>, vector<256x128xf32> -> vector<256x128xf32>
    %115 = arith.addf %108, %114 : vector<256x128xf32>
    %c1_104 = arith.constant 1 : index
    %c2_105 = arith.constant 2 : index
    %c0_106 = arith.constant 0 : index
    %116 = vector.load %arg8[%c1_104, %c2_105, %c0_106] : memref<18x18x128xf32, #tpu.memory_space<vmem>>, vector<16x16x128xf32>
    %117 = vector.shape_cast %116 : vector<16x16x128xf32> to vector<256x128xf32>
    %118 = arith.truncf %117 : vector<256x128xf32> to vector<256x128xbf16>
    %c5_107 = arith.constant 5 : index
    %c0_108 = arith.constant 0 : index
    %c0_109 = arith.constant 0 : index
    %119 = vector.load %arg4[%c5_107, %c0_108, %c0_109] : memref<9x128x128xbf16, #tpu.memory_space<vmem>>, vector<1x128x128xbf16>
    %120 = vector.shape_cast %119 : vector<1x128x128xbf16> to vector<128x128xbf16>
    %cst_110 = arith.constant dense<0.000000e+00> : vector<256x128xf32>
    %121 = tpu.matmul %118, %120, %cst_110 {dimension_numbers = #tpu.dot_dimension_numbers<[1], [0], [0], [1], [0, 0, 1, 1], [], []>} : vector<256x128xbf16>, vector<128x128xbf16>, vector<256x128xf32> -> vector<256x128xf32>
    %122 = arith.addf %115, %121 : vector<256x128xf32>
    %c2_111 = arith.constant 2 : index
    %c0_112 = arith.constant 0 : index
    %c0_113 = arith.constant 0 : index
    %123 = vector.load %arg8[%c2_111, %c0_112, %c0_113] : memref<18x18x128xf32, #tpu.memory_space<vmem>>, vector<16x16x128xf32>
    %124 = vector.shape_cast %123 : vector<16x16x128xf32> to vector<256x128xf32>
    %125 = arith.truncf %124 : vector<256x128xf32> to vector<256x128xbf16>
    %c6_114 = arith.constant 6 : index
    %c0_115 = arith.constant 0 : index
    %c0_116 = arith.constant 0 : index
    %126 = vector.load %arg4[%c6_114, %c0_115, %c0_116] : memref<9x128x128xbf16, #tpu.memory_space<vmem>>, vector<1x128x128xbf16>
    %127 = vector.shape_cast %126 : vector<1x128x128xbf16> to vector<128x128xbf16>
    %cst_117 = arith.constant dense<0.000000e+00> : vector<256x128xf32>
    %128 = tpu.matmul %125, %127, %cst_117 {dimension_numbers = #tpu.dot_dimension_numbers<[1], [0], [0], [1], [0, 0, 1, 1], [], []>} : vector<256x128xbf16>, vector<128x128xbf16>, vector<256x128xf32> -> vector<256x128xf32>
    %129 = arith.addf %122, %128 : vector<256x128xf32>
    %c2_118 = arith.constant 2 : index
    %c1_119 = arith.constant 1 : index
    %c0_120 = arith.constant 0 : index
    %130 = vector.load %arg8[%c2_118, %c1_119, %c0_120] : memref<18x18x128xf32, #tpu.memory_space<vmem>>, vector<16x16x128xf32>
    %131 = vector.shape_cast %130 : vector<16x16x128xf32> to vector<256x128xf32>
    %132 = arith.truncf %131 : vector<256x128xf32> to vector<256x128xbf16>
    %c7_121 = arith.constant 7 : index
    %c0_122 = arith.constant 0 : index
    %c0_123 = arith.constant 0 : index
    %133 = vector.load %arg4[%c7_121, %c0_122, %c0_123] : memref<9x128x128xbf16, #tpu.memory_space<vmem>>, vector<1x128x128xbf16>
    %134 = vector.shape_cast %133 : vector<1x128x128xbf16> to vector<128x128xbf16>
    %cst_124 = arith.constant dense<0.000000e+00> : vector<256x128xf32>
    %135 = tpu.matmul %132, %134, %cst_124 {dimension_numbers = #tpu.dot_dimension_numbers<[1], [0], [0], [1], [0, 0, 1, 1], [], []>} : vector<256x128xbf16>, vector<128x128xbf16>, vector<256x128xf32> -> vector<256x128xf32>
    %136 = arith.addf %129, %135 : vector<256x128xf32>
    %c2_125 = arith.constant 2 : index
    %c2_126 = arith.constant 2 : index
    %c0_127 = arith.constant 0 : index
    %137 = vector.load %arg8[%c2_125, %c2_126, %c0_127] : memref<18x18x128xf32, #tpu.memory_space<vmem>>, vector<16x16x128xf32>
    %138 = vector.shape_cast %137 : vector<16x16x128xf32> to vector<256x128xf32>
    %139 = arith.truncf %138 : vector<256x128xf32> to vector<256x128xbf16>
    %c8_128 = arith.constant 8 : index
    %c0_129 = arith.constant 0 : index
    %c0_130 = arith.constant 0 : index
    %140 = vector.load %arg4[%c8_128, %c0_129, %c0_130] : memref<9x128x128xbf16, #tpu.memory_space<vmem>>, vector<1x128x128xbf16>
    %141 = vector.shape_cast %140 : vector<1x128x128xbf16> to vector<128x128xbf16>
    %cst_131 = arith.constant dense<0.000000e+00> : vector<256x128xf32>
    %142 = tpu.matmul %139, %141, %cst_131 {dimension_numbers = #tpu.dot_dimension_numbers<[1], [0], [0], [1], [0, 0, 1, 1], [], []>} : vector<256x128xbf16>, vector<128x128xbf16>, vector<256x128xf32> -> vector<256x128xf32>
    %143 = arith.addf %136, %142 : vector<256x128xf32>
    %c0_132 = arith.constant 0 : index
    %c0_133 = arith.constant 0 : index
    %144 = vector.load %arg5[%c0_132, %c0_133] : memref<1x128xf32, #tpu.memory_space<vmem>>, vector<1x128xf32>
    %145 = vector.shape_cast %144 : vector<1x128xf32> to vector<128xf32>
    %146 = vector.shape_cast %145 : vector<128xf32> to vector<1x128xf32>
    %147 = vector.broadcast %146 : vector<1x128xf32> to vector<256x128xf32>
    %148 = arith.addf %143, %147 : vector<256x128xf32>
    %cst_134 = arith.constant 0.000000e+00 : f32
    %149 = vector.broadcast %cst_134 : f32 to vector<256x128xf32>
    %150 = arith.maximumf %148, %149 : vector<256x128xf32>
    %151 = vector.shape_cast %150 : vector<256x128xf32> to vector<16x16x128xf32>
    %c0_135 = arith.constant 0 : index
    %c0_136 = arith.constant 0 : index
    %c0_137 = arith.constant 0 : index
    %c0_138 = arith.constant 0 : index
    %152 = vector.load %arg6[%c0_135, %c0_136, %c0_137, %c0_138] : memref<1x16x16x128xf32, #tpu.memory_space<vmem>>, vector<1x16x16x128xf32>
    %153 = vector.shape_cast %152 : vector<1x16x16x128xf32> to vector<16x16x128xf32>
    %154 = vector.shape_cast %151 : vector<16x16x128xf32> to vector<1x16x16x128xf32>
    tpu.vector_store %arg6[%c0_135, %c0_136, %c0_137, %c0_138], %154 {strides = array<i32>} : memref<1x16x16x128xf32, #tpu.memory_space<vmem>>, vector<1x16x16x128xf32>,
    return
  }
  func.func @transform_0(%arg0: i32) -> (i32, i32, i32, i32) {
    %c0_i32 = arith.constant 0 : i32
    %c0_i32_0 = arith.constant 0 : i32
    %c0_i32_1 = arith.constant 0 : i32
    %c0_i32_2 = arith.constant 0 : i32
    return %arg0, %c0_i32, %c0_i32_0, %c0_i32_1 : i32, i32, i32, i32
  }
  func.func @transform_1(%arg0: i32) -> (i32, i32, i32) {
    %c0_i32 = arith.constant 0 : i32
    %c0_i32_0 = arith.constant 0 : i32
    %c0_i32_1 = arith.constant 0 : i32
    %c0_i32_2 = arith.constant 0 : i32
    return %c0_i32, %c0_i32_0, %c0_i32_1 : i32, i32, i32
  }
  func.func @transform_2(%arg0: i32) -> (i32, i32) {
    %c0_i32 = arith.constant 0 : i32
    %c0_i32_0 = arith.constant 0 : i32
    %c0_i32_1 = arith.constant 0 : i32
    return %c0_i32, %c0_i32_0 : i32, i32
  }
  func.func @transform_3(%arg0: i32) -> (i32, i32, i32) {
    %c0_i32 = arith.constant 0 : i32
    %c0_i32_0 = arith.constant 0 : i32
    %c0_i32_1 = arith.constant 0 : i32
    %c0_i32_2 = arith.constant 0 : i32
    return %c0_i32, %c0_i32_0, %c0_i32_1 : i32, i32, i32
  }
  func.func @transform_4(%arg0: i32) -> (i32, i32) {
    %c0_i32 = arith.constant 0 : i32
    %c0_i32_0 = arith.constant 0 : i32
    %c0_i32_1 = arith.constant 0 : i32
    return %c0_i32, %c0_i32_0 : i32, i32
  }
  func.func @transform_5(%arg0: i32) -> (i32, i32, i32, i32) {
    %c0_i32 = arith.constant 0 : i32
    %c0_i32_0 = arith.constant 0 : i32
    %c0_i32_1 = arith.constant 0 : i32
    %c0_i32_2 = arith.constant 0 : i32
    return %arg0, %c0_i32, %c0_i32_0, %c0_i32_1 : i32, i32, i32, i32
  }
}

</mosaic_0001>

<llo_original>
// kernel: double_conv.1
$region0: #{double_conv.1}
  #allocation0 [shape = 'u32[]', space=smem, size = 0x4, offset = 0x4, fixed_abs, tag = 'smem constant byte address 0x4 - core index']
  #allocation1 [shape = 'u32[144,128]{1,0:T(1,128)}', space=vmem, size = 0x12000, scoped, tag = 'internal scratch']
  #allocation2 [shape = 'f32[18,18,4]{2,1,0:T(8,128)}', space=vmem, size = 0x36000, scoped, tag = 'scratch operand']
  #allocation3 [shape = 'f32[18,18,128]{2,1,0:T(8,128)}', space=vmem, size = 0x36000, scoped, tag = 'scratch operand']
  %s0 = inlined_call_operand.vmem [shape: bf16[2,16,16,4], index: 0, kind: input, shape index: {}]
  %s1 = inlined_call_operand.vmem [shape: bf16[9,4,128], index: 1, kind: input, shape index: {}]
  %s2 = inlined_call_operand.vmem [shape: f32[1,128], index: 2, kind: input, shape index: {}]
  %s3 = inlined_call_operand.vmem [shape: bf16[9,128,128], index: 3, kind: input, shape index: {}]
  %s4 = inlined_call_operand.vmem [shape: f32[1,128], index: 4, kind: input, shape index: {}]
  %s5 = inlined_call_operand.vmem [shape: f32[2,16,16,128], index: 5, kind: output, shape index: {}]
  %s6 = sld [smem:[#allocation0]]
  $region57: #{double_conv.1} parent=0
    _
  %s8 = ssub.s32 1, %s6
  %s9 = scalar_select 0, %s8, %s6
  loop: start=0, step=1, limit=4
  $region2: #{double_conv.1} parent=0 // loop_pre_header
    _
  $region3: #{double_conv.1} parent=0 // loop_header
    %s11 = sphi 0, %s15
    %p12 = scmp.ge.s32.totalorder %s11, 4
    %s21 = sphi 0, %s23
    %s24 = sphi 0, %s21
    %s25 = sphi 0, %s24
    %s41 = sphi 0, %s25
    %s45 = sphi 0, %s45
    %s47 = sphi 0, %s45
    %s48 = sphi 0, %s47
    %s62 = sphi 0, %s48
    %s66 = sphi 0, %s66
    %s68 = sphi 0, %s66
    %s69 = sphi 0, %s68
    %s83 = sphi 0, %s69
    %s87 = sphi 0, %s87
    %s89 = sphi 0, %s87
    %s90 = sphi 0, %s89
    %s104 = sphi 0, %s90
    %s108 = sphi 0, %s108
    %s110 = sphi 0, %s108
    %s111 = sphi 0, %s110
    %s125 = sphi 0, %s111
    %s131 = sphi 0, %s133
    %s134 = sphi 0, %s131
    %s135 = sphi 0, %s134
    %s151 = sphi 0, %s135
  $region4: #{double_conv.1} parent=0 // loop_header_branch
    %14 = sbr.rel (%p12) target = $region8
  $region5: #{double_conv.1} parent=0 // loop_body
    %s16 = ssub.s32 %s11, 1
    %s17 = ssub.s32 %s11, 2
    %s18 = sadd.s32 %s11, 1
    %s19 = ssub.s32 %s11, %s18
    %p20 = scmp.eq.s32.totalorder %s19, 0
    %s22 = sadd.s32 %s21, 1
    %s23 = scalar_select %p20, %s21, %s22
    %p26 = pneg %p20
    %p27 = scmp.eq.s32.totalorder %s11, 1
    %p28 = por %p26, %p27
    %p29 = scmp.ne.s32.totalorder %s21, %s24
    %p30 = scmp.eq.s32.totalorder %s11, 0
    %p31 = por %p29, %p30
    %p32 = scmp.ne.s32.totalorder %s21, %s24
    %p33 = scmp.eq.s32.totalorder %s16, 1
    %p34 = por %p32, %p33
    %p35 = scmp.ne.s32.totalorder %s24, %s25
    %p36 = scmp.eq.s32.totalorder %s16, 0
    %p37 = por %p35, %p36
    %p38 = scmp.ne.s32.totalorder %s24, %s25
    %p39 = scmp.eq.s32.totalorder %s17, 1
    %p40 = por %p38, %p39
    %p42 = scmp.ne.s32.totalorder %s25, %s41
    %p43 = scmp.eq.s32.totalorder %s17, 0
    %p44 = por %p42, %p43
    %s46 = sadd.s32 %s45, 1
    %p49 = scmp.eq.s32.totalorder %s11, 1
    %p50 = scmp.ne.s32.totalorder %s45, %s47
    %p51 = scmp.eq.s32.totalorder %s11, 0
    %p52 = por %p50, %p51
    %p53 = scmp.ne.s32.totalorder %s45, %s47
    %p54 = scmp.eq.s32.totalorder %s16, 1
    %p55 = por %p53, %p54
    %p56 = scmp.ne.s32.totalorder %s47, %s48
    %p57 = scmp.eq.s32.totalorder %s16, 0
    %p58 = por %p56, %p57
    %p59 = scmp.ne.s32.totalorder %s47, %s48
    %p60 = scmp.eq.s32.totalorder %s17, 1
    %p61 = por %p59, %p60
    %p63 = scmp.ne.s32.totalorder %s48, %s62
    %p64 = scmp.eq.s32.totalorder %s17, 0
    %p65 = por %p63, %p64
    %s67 = sadd.s32 %s66, 1
    %p70 = scmp.eq.s32.totalorder %s11, 1
    %p71 = scmp.ne.s32.totalorder %s66, %s68
    %p72 = scmp.eq.s32.totalorder %s11, 0
    %p73 = por %p71, %p72
    %p74 = scmp.ne.s32.totalorder %s66, %s68
    %p75 = scmp.eq.s32.totalorder %s16, 1
    %p76 = por %p74, %p75
    %p77 = scmp.ne.s32.totalorder %s68, %s69
    %p78 = scmp.eq.s32.totalorder %s16, 0
    %p79 = por %p77, %p78
    %p80 = scmp.ne.s32.totalorder %s68, %s69
    %p81 = scmp.eq.s32.totalorder %s17, 1
    %p82 = por %p80, %p81
    %p84 = scmp.ne.s32.totalorder %s69, %s83
    %p85 = scmp.eq.s32.totalorder %s17, 0
    %p86 = por %p84, %p85
    %s88 = sadd.s32 %s87, 1
    %p91 = scmp.eq.s32.totalorder %s11, 1
    %p92 = scmp.ne.s32.totalorder %s87, %s89
    %p93 = scmp.eq.s32.totalorder %s11, 0
    %p94 = por %p92, %p93
    %p95 = scmp.ne.s32.totalorder %s87, %s89
    %p96 = scmp.eq.s32.totalorder %s16, 1
    %p97 = por %p95, %p96
    %p98 = scmp.ne.s32.totalorder %s89, %s90
    %p99 = scmp.eq.s32.totalorder %s16, 0
    %p100 = por %p98, %p99
    %p101 = scmp.ne.s32.totalorder %s89, %s90
    %p102 = scmp.eq.s32.totalorder %s17, 1
    %p103 = por %p101, %p102
    %p105 = scmp.ne.s32.totalorder %s90, %s104
    %p106 = scmp.eq.s32.totalorder %s17, 0
    %p107 = por %p105, %p106
    %s109 = sadd.s32 %s108, 1
    %p112 = scmp.eq.s32.totalorder %s11, 1
    %p113 = scmp.ne.s32.totalorder %s108, %s110
    %p114 = scmp.eq.s32.totalorder %s11, 0
    %p115 = por %p113, %p114
    %p116 = scmp.ne.s32.totalorder %s108, %s110
    %p117 = scmp.eq.s32.totalorder %s16, 1
    %p118 = por %p116, %p117
    %p119 = scmp.ne.s32.totalorder %s110, %s111
    %p120 = scmp.eq.s32.totalorder %s16, 0
    %p121 = por %p119, %p120
    %p122 = scmp.ne.s32.totalorder %s110, %s111
    %p123 = scmp.eq.s32.totalorder %s17, 1
    %p124 = por %p122, %p123
    %p126 = scmp.ne.s32.totalorder %s111, %s125
    %p127 = scmp.eq.s32.totalorder %s17, 0
    %p128 = por %p126, %p127
    %s129 = ssub.s32 %s11, %s18
    %p130 = scmp.eq.s32.totalorder %s129, 0
    %s132 = sadd.s32 %s131, 1
    %s133 = scalar_select %p130, %s131, %s132
    %p136 = pneg %p130
    %p137 = scmp.eq.s32.totalorder %s11, 1
    %p138 = por %p136, %p137
    %p139 = scmp.ne.s32.totalorder %s131, %s134
    %p140 = scmp.eq.s32.totalorder %s11, 0
    %p141 = por %p139, %p140
    %p142 = scmp.ne.s32.totalorder %s131, %s134
    %p143 = scmp.eq.s32.totalorder %s16, 1
    %p144 = por %p142, %p143
    %p145 = scmp.ne.s32.totalorder %s134, %s135
    %p146 = scmp.eq.s32.totalorder %s16, 0
    %p147 = por %p145, %p146
    %p148 = scmp.ne.s32.totalorder %s134, %s135
    %p149 = scmp.eq.s32.totalorder %s17, 1
    %p150 = por %p148, %p149
    %p152 = scmp.ne.s32.totalorder %s135, %s151
    %p153 = scmp.eq.s32.totalorder %s17, 0
    %p154 = por %p152, %p153
    %p155 = scmp.le.s32.totalorder 1, %s11
    %p156 = scmp.lt.s32.totalorder %s11, 3
    %p157 = pnand %p155, %p156
    %p158 = pneg %p157
    // Predicated region
    $region9: #{double_conv.1} parent=5 // pred_check
      _
    $region10: #{double_conv.1} parent=5 // pred_check_branch
      %160 = sbr.rel (%p157) target = $region12
    $region11: #{double_conv.1} parent=5 // pred_region
      %s161 = ssub.s32 %s11, 1
      // Predicated region
      $region13: #{double_conv.1} parent=11 // pred_check
        %p162 = pneg %p58
      $region14: #{double_conv.1} parent=11 // pred_check_branch
        %164 = sbr.rel (%p162) target = $region16
      $region15: #{double_conv.1} parent=11 // pred_region
        _
      $region16: #{double_conv.1} parent=11 // pred_fallthru
        _
      // Predicated region
      $region17: #{double_conv.1} parent=11 // pred_check
        %p165 = pneg %p79
      $region18: #{double_conv.1} parent=11 // pred_check_branch
        %167 = sbr.rel (%p165) target = $region20
      $region19: #{double_conv.1} parent=11 // pred_region
        _
      $region20: #{double_conv.1} parent=11 // pred_fallthru
        _
      // Predicated region
      $region21: #{double_conv.1} parent=11 // pred_check
        %p168 = pneg %p100
      $region22: #{double_conv.1} parent=11 // pred_check_branch
        %170 = sbr.rel (%p168) target = $region24
      $region23: #{double_conv.1} parent=11 // pred_region
        _
      $region24: #{double_conv.1} parent=11 // pred_fallthru
        _
      // Predicated region
      $region25: #{double_conv.1} parent=11 // pred_check
        %p171 = pneg %p121
      $region26: #{double_conv.1} parent=11 // pred_check_branch
        %173 = sbr.rel (%p171) target = $region28
      $region27: #{double_conv.1} parent=11 // pred_region
        _
      $region28: #{double_conv.1} parent=11 // pred_fallthru
        _
    $region12: #{double_conv.1} parent=5 // pred_fallthru
      _
    %p174 = scmp.lt.s32.totalorder %s11, 2
    // Predicated region
    $region29: #{double_conv.1} parent=5 // pred_check
      %p175 = pneg %p174
    $region30: #{double_conv.1} parent=5 // pred_check_branch
      %177 = sbr.rel (%p175) target = $region32
    $region31: #{double_conv.1} parent=5 // pred_region
      // Predicated region
      $region33: #{double_conv.1} parent=31 // pred_check
        %p178 = pneg %p31
      $region34: #{double_conv.1} parent=31 // pred_check_branch
        %180 = sbr.rel (%p178) target = $region36
      $region35: #{double_conv.1} parent=31 // pred_region
        %p181 = scmp.lt.s32.totalorder %s11, 1
        %s182 = scalar_select %p181, %s11, 1
        %s183 = smul.addr %s182, 32
        %s184 = smul.addr %s183, 4
        %s185 = scalar_lea.vmem %s0, %s184
      $region36: #{double_conv.1} parent=31 // pred_fallthru
        _
    $region32: #{double_conv.1} parent=5 // pred_fallthru
      _
    %p186 = scmp.le.s32.totalorder 1, %s11
    %p187 = scmp.lt.s32.totalorder %s11, 3
    %p188 = pnand %p186, %p187
    %p189 = pneg %p188
    // Predicated region
    $region37: #{double_conv.1} parent=5 // pred_check
      _
    $region38: #{double_conv.1} parent=5 // pred_check_branch
      %191 = sbr.rel (%p188) target = $region40
    $region39: #{double_conv.1} parent=5 // pred_region
      %s192 = ssub.s32 %s11, 1
      %p193 = scmp.lt.s32.totalorder %s16, 1
      %s194 = scalar_select %p193, %s16, 1
      %s195 = smul.addr %s194, 32
      %s196 = smul.addr %s195, 4
      %s197 = scalar_lea.vmem %s0, %s196
      %p198 = pneg %p37
      %p199 = pneg %p34
      %p200 = pneg %p58
      %p201 = pneg %p55
      %p202 = pneg %p79
      %p203 = pneg %p76
      %p204 = pneg %p100
      %p205 = pneg %p97
      %p206 = pneg %p121
      %p207 = pneg %p118
      %p208 = pneg %p147
      %p209 = pneg %p144
      %p210 = scmp.lt.s32.totalorder %s16, 1
      %s211 = scalar_select %p210, %s16, 1
      %s212 = smul.addr %s211, 32
      %s213 = smul.addr %s212, 8
      %s214 = scalar_lea.vmem %s5, %s213
      %p215 = scmp.lt.s32.totalorder %s16, 1
      %s216 = scalar_select %p215, %s16, 1
      %s217 = smul.addr %s216, 32
      %s218 = smul.addr %s217, 4
      %s219 = scalar_lea.vmem %s0, %s218
      %p220 = scmp.lt.s32.totalorder %s16, 1
      %s221 = scalar_select %p220, %s16, 1
      %s222 = smul.addr %s221, 32
      %s223 = smul.addr %s222, 8
      %s224 = scalar_lea.vmem %s5, %s223
      %p226 = scmp.eq.s32.totalorder %s16, 0
      // Predicated region
      $region41: #{double_conv.1} parent=39 // pred_check
        %p227 = pneg %p226
      $region42: #{double_conv.1} parent=39 // pred_check_branch
        %229 = sbr.rel (%p227) target = $region44
      $region43: #{double_conv.1} parent=39 // pred_region
        %vm230 = vcmask 31744
        %231 = vst.msk [vmem:[#allocation2] sm:$0xff] %vm230, 0.0
        %232 = vst.msk [vmem:[#allocation2 + $0x8] sm:$0xff] %vm230, 0.0
        %vm233 = vcmask 25600
        %234 = vst.msk [vmem:[#allocation2 + $0x10] sm:$0x3] %vm233, 0.0
        %235 = vst.msk [vmem:[#allocation2 + $0x18] sm:$0xff] %vm230, 0.0
        %236 = vst.msk [vmem:[#allocation2 + $0x20] sm:$0xff] %vm230, 0.0
        %237 = vst.msk [vmem:[#allocation2 + $0x28] sm:$0x3] %vm233, 0.0
        %238 = vst.msk [vmem:[#allocation2 + $0x30] sm:$0xff] %vm230, 0.0
        %239 = vst.msk [vmem:[#allocation2 + $0x38] sm:$0xff] %vm230, 0.0
        %240 = vst.msk [vmem:[#allocation2 + $0x40] sm:$0x3] %vm233, 0.0
        %241 = vst.msk [vmem:[#allocation2 + $0x48] sm:$0xff] %vm230, 0.0
        %242 = vst.msk [vmem:[#allocation2 + $0x50] sm:$0xff] %vm230, 0.0
        %243 = vst.msk [vmem:[#allocation2 + $0x58] sm:$0x3] %vm233, 0.0
        %244 = vst.msk [vmem:[#allocation2 + $0x60] sm:$0xff] %vm230, 0.0
        %245 = vst.msk [vmem:[#allocation2 + $0x68] sm:$0xff] %vm230, 0.0
        %246 = vst.msk [vmem:[#allocation2 + $0x70] sm:$0x3] %vm233, 0.0
        %247 = vst.msk [vmem:[#allocation2 + $0x78] sm:$0xff] %vm230, 0.0
        %248 = vst.msk [vmem:[#allocation2 + $0x80] sm:$0xff] %vm230, 0.0
        %249 = vst.msk [vmem:[#allocation2 + $0x88] sm:$0x3] %vm233, 0.0
        %250 = vst.msk [vmem:[#allocation2 + $0x90] sm:$0xff] %vm230, 0.0
        %251 = vst.msk [vmem:[#allocation2 + $0x98] sm:$0xff] %vm230, 0.0
        %252 = vst.msk [vmem:[#allocation2 + $0xa0] sm:$0x3] %vm233, 0.0
        %253 = vst.msk [vmem:[#allocation2 + $0xa8] sm:$0xff] %vm230, 0.0
        %254 = vst.msk [vmem:[#allocation2 + $0xb0] sm:$0xff] %vm230, 0.0
        %255 = vst.msk [vmem:[#allocation2 + $0xb8] sm:$0x3] %vm233, 0.0
        %256 = vst.msk [vmem:[#allocation2 + $0xc0] sm:$0xff] %vm230, 0.0
        %257 = vst.msk [vmem:[#allocation2 + $0xc8] sm:$0xff] %vm230, 0.0
        %258 = vst.msk [vmem:[#allocation2 + $0xd0] sm:$0x3] %vm233, 0.0
        %259 = vst.msk [vmem:[#allocation2 + $0xd8] sm:$0xff] %vm230, 0.0
        %260 = vst.msk [vmem:[#allocation2 + $0xe0] sm:$0xff] %vm230, 0.0
        %261 = vst.msk [vmem:[#allocation2 + $0xe8] sm:$0x3] %vm233, 0.0
        %262 = vst.msk [vmem:[#allocation2 + $0xf0] sm:$0xff] %vm230, 0.0
        %263 = vst.msk [vmem:[#allocation2 + $0xf8] sm:$0xff] %vm230, 0.0
        %264 = vst.msk [vmem:[#allocation2 + $0x100] sm:$0x3] %vm233, 0.0
        %265 = vst.msk [vmem:[#allocation2 + $0x108] sm:$0xff] %vm230, 0.0
        %266 = vst.msk [vmem:[#allocation2 + $0x110] sm:$0xff] %vm230, 0.0
        %267 = vst.msk [vmem:[#allocation2 + $0x118] sm:$0x3] %vm233, 0.0
        %268 = vst.msk [vmem:[#allocation2 + $0x120] sm:$0xff] %vm230, 0.0
        %269 = vst.msk [vmem:[#allocation2 + $0x128] sm:$0xff] %vm230, 0.0
        %270 = vst.msk [vmem:[#allocation2 + $0x130] sm:$0x3] %vm233, 0.0
        %271 = vst.msk [vmem:[#allocation2 + $0x138] sm:$0xff] %vm230, 0.0
        %272 = vst.msk [vmem:[#allocation2 + $0x140] sm:$0xff] %vm230, 0.0
        %273 = vst.msk [vmem:[#allocation2 + $0x148] sm:$0x3] %vm233, 0.0
        %274 = vst.msk [vmem:[#allocation2 + $0x150] sm:$0xff] %vm230, 0.0
        %275 = vst.msk [vmem:[#allocation2 + $0x158] sm:$0xff] %vm230, 0.0
        %276 = vst.msk [vmem:[#allocation2 + $0x160] sm:$0x3] %vm233, 0.0
        %277 = vst.msk [vmem:[#allocation2 + $0x168] sm:$0xff] %vm230, 0.0
        %278 = vst.msk [vmem:[#allocation2 + $0x170] sm:$0xff] %vm230, 0.0
        %279 = vst.msk [vmem:[#allocation2 + $0x178] sm:$0x3] %vm233, 0.0
        %280 = vst.msk [vmem:[#allocation2 + $0x180] sm:$0xff] %vm230, 0.0
        %281 = vst.msk [vmem:[#allocation2 + $0x188] sm:$0xff] %vm230, 0.0
        %282 = vst.msk [vmem:[#allocation2 + $0x190] sm:$0x3] %vm233, 0.0
        %283 = vst.msk [vmem:[#allocation2 + $0x198] sm:$0xff] %vm230, 0.0
        %284 = vst.msk [vmem:[#allocation2 + $0x1a0] sm:$0xff] %vm230, 0.0
        %285 = vst.msk [vmem:[#allocation2 + $0x1a8] sm:$0x3] %vm233, 0.0
        %286 = vst [vmem:[#allocation3] sm:$0xff] 0.0
        %287 = vst [vmem:[#allocation3 + $0x8] sm:$0xff] 0.0
        %288 = vst [vmem:[#allocation3 + $0x10] sm:$0x3] 0.0
        %289 = vst [vmem:[#allocation3 + $0x18] sm:$0xff] 0.0
        %290 = vst [vmem:[#allocation3 + $0x20] sm:$0xff] 0.0
        %291 = vst [vmem:[#allocation3 + $0x28] sm:$0x3] 0.0
        %292 = vst [vmem:[#allocation3 + $0x30] sm:$0xff] 0.0
        %293 = vst [vmem:[#allocation3 + $0x38] sm:$0xff] 0.0
        %294 = vst [vmem:[#allocation3 + $0x40] sm:$0x3] 0.0
        %295 = vst [vmem:[#allocation3 + $0x48] sm:$0xff] 0.0
        %296 = vst [vmem:[#allocation3 + $0x50] sm:$0xff] 0.0
        %297 = vst [vmem:[#allocation3 + $0x58] sm:$0x3] 0.0
        %298 = vst [vmem:[#allocation3 + $0x60] sm:$0xff] 0.0
        %299 = vst [vmem:[#allocation3 + $0x68] sm:$0xff] 0.0
        %300 = vst [vmem:[#allocation3 + $0x70] sm:$0x3] 0.0
        %301 = vst [vmem:[#allocation3 + $0x78] sm:$0xff] 0.0
        %302 = vst [vmem:[#allocation3 + $0x80] sm:$0xff] 0.0
        %303 = vst [vmem:[#allocation3 + $0x88] sm:$0x3] 0.0
        %304 = vst [vmem:[#allocation3 + $0x90] sm:$0xff] 0.0
        %305 = vst [vmem:[#allocation3 + $0x98] sm:$0xff] 0.0
        %306 = vst [vmem:[#allocation3 + $0xa0] sm:$0x3] 0.0
        %307 = vst [vmem:[#allocation3 + $0xa8] sm:$0xff] 0.0
        %308 = vst [vmem:[#allocation3 + $0xb0] sm:$0xff] 0.0
        %309 = vst [vmem:[#allocation3 + $0xb8] sm:$0x3] 0.0
        %310 = vst [vmem:[#allocation3 + $0xc0] sm:$0xff] 0.0
        %311 = vst [vmem:[#allocation3 + $0xc8] sm:$0xff] 0.0
        %312 = vst [vmem:[#allocation3 + $0xd0] sm:$0x3] 0.0
        %313 = vst [vmem:[#allocation3 + $0xd8] sm:$0xff] 0.0
        %314 = vst [vmem:[#allocation3 + $0xe0] sm:$0xff] 0.0
        %315 = vst [vmem:[#allocation3 + $0xe8] sm:$0x3] 0.0
        %316 = vst [vmem:[#allocation3 + $0xf0] sm:$0xff] 0.0
        %317 = vst [vmem:[#allocation3 + $0xf8] sm:$0xff] 0.0
        %318 = vst [vmem:[#allocation3 + $0x100] sm:$0x3] 0.0
        %319 = vst [vmem:[#allocation3 + $0x108] sm:$0xff] 0.0
        %320 = vst [vmem:[#allocation3 + $0x110] sm:$0xff] 0.0
        %321 = vst [vmem:[#allocation3 + $0x118] sm:$0x3] 0.0
        %322 = vst [vmem:[#allocation3 + $0x120] sm:$0xff] 0.0
        %323 = vst [vmem:[#allocation3 + $0x128] sm:$0xff] 0.0
        %324 = vst [vmem:[#allocation3 + $0x130] sm:$0x3] 0.0
        %325 = vst [vmem:[#allocation3 + $0x138] sm:$0xff] 0.0
        %326 = vst [vmem:[#allocation3 + $0x140] sm:$0xff] 0.0
        %327 = vst [vmem:[#allocation3 + $0x148] sm:$0x3] 0.0
        %328 = vst [vmem:[#allocation3 + $0x150] sm:$0xff] 0.0
        %329 = vst [vmem:[#allocation3 + $0x158] sm:$0xff] 0.0
        %330 = vst [vmem:[#allocation3 + $0x160] sm:$0x3] 0.0
        %331 = vst [vmem:[#allocation3 + $0x168] sm:$0xff] 0.0
        %332 = vst [vmem:[#allocation3 + $0x170] sm:$0xff] 0.0
        %333 = vst [vmem:[#allocation3 + $0x178] sm:$0x3] 0.0
        %334 = vst [vmem:[#allocation3 + $0x180] sm:$0xff] 0.0
        %335 = vst [vmem:[#allocation3 + $0x188] sm:$0xff] 0.0
        %336 = vst [vmem:[#allocation3 + $0x190] sm:$0x3] 0.0
        %337 = vst [vmem:[#allocation3 + $0x198] sm:$0xff] 0.0
        %338 = vst [vmem:[#allocation3 + $0x1a0] sm:$0xff] 0.0
        %339 = vst [vmem:[#allocation3 + $0x1a8] sm:$0x3] 0.0
      $region44: #{double_conv.1} parent=39 // pred_fallthru
        _
      %v340 = vld [vmem:[%s219] sm:$0xf]
      %v341 = vld [vmem:[%s219 + $0x4] sm:$0xf]
      %v342 = vld [vmem:[%s219 + $0x8] sm:$0xf]
      %v343 = vld [vmem:[%s219 + $0xc] sm:$0xf]
      %v344 = vld [vmem:[%s219 + $0x10] sm:$0xf]
      %v345 = vld [vmem:[%s219 + $0x14] sm:$0xf]
      %v346 = vld [vmem:[%s219 + $0x18] sm:$0xf]
      %v347 = vld [vmem:[%s219 + $0x1c] sm:$0xf]
      %v348 = vld [vmem:[%s219 + $0x20] sm:$0xf]
      %v349 = vld [vmem:[%s219 + $0x24] sm:$0xf]
      %v350 = vld [vmem:[%s219 + $0x28] sm:$0xf]
      %v351 = vld [vmem:[%s219 + $0x2c] sm:$0xf]
      %v352 = vld [vmem:[%s219 + $0x30] sm:$0xf]
      %v353 = vld [vmem:[%s219 + $0x34] sm:$0xf]
      %v354 = vld [vmem:[%s219 + $0x38] sm:$0xf]
      %v355 = vld [vmem:[%s219 + $0x3c] sm:$0xf]
      %v356 = vld [vmem:[%s219 + $0x40] sm:$0xf]
      %v357 = vld [vmem:[%s219 + $0x44] sm:$0xf]
      %v358 = vld [vmem:[%s219 + $0x48] sm:$0xf]
      %v359 = vld [vmem:[%s219 + $0x4c] sm:$0xf]
      %v360 = vld [vmem:[%s219 + $0x50] sm:$0xf]
      %v361 = vld [vmem:[%s219 + $0x54] sm:$0xf]
      %v362 = vld [vmem:[%s219 + $0x58] sm:$0xf]
      %v363 = vld [vmem:[%s219 + $0x5c] sm:$0xf]
      %v364 = vld [vmem:[%s219 + $0x60] sm:$0xf]
      %v365 = vld [vmem:[%s219 + $0x64] sm:$0xf]
      %v366 = vld [vmem:[%s219 + $0x68] sm:$0xf]
      %v367 = vld [vmem:[%s219 + $0x6c] sm:$0xf]
      %v368 = vld [vmem:[%s219 + $0x70] sm:$0xf]
      %v369 = vld [vmem:[%s219 + $0x74] sm:$0xf]
      %v370 = vld [vmem:[%s219 + $0x78] sm:$0xf]
      %v371 = vld [vmem:[%s219 + $0x7c] sm:$0xf]
      %v372 = vunpack.c.l.bf16 %v340
      %v373 = vunpack.c.l.bf16 %v341
      %v374 = vunpack.c.l.bf16 %v342
      %v375 = vunpack.c.l.bf16 %v343
      %v376 = vunpack.c.l.bf16 %v344
      %v377 = vunpack.c.l.bf16 %v345
      %v378 = vunpack.c.l.bf16 %v346
      %v379 = vunpack.c.l.bf16 %v347
      %v380 = vunpack.c.l.bf16 %v348
      %v381 = vunpack.c.l.bf16 %v349
      %v382 = vunpack.c.l.bf16 %v350
      %v383 = vunpack.c.l.bf16 %v351
      %v384 = vunpack.c.l.bf16 %v352
      %v385 = vunpack.c.l.bf16 %v353
      %v386 = vunpack.c.l.bf16 %v354
      %v387 = vunpack.c.l.bf16 %v355
      %v388 = vunpack.c.l.bf16 %v356
      %v389 = vunpack.c.l.bf16 %v357
      %v390 = vunpack.c.l.bf16 %v358
      %v391 = vunpack.c.l.bf16 %v359
      %v392 = vunpack.c.l.bf16 %v360
      %v393 = vunpack.c.l.bf16 %v361
      %v394 = vunpack.c.l.bf16 %v362
      %v395 = vunpack.c.l.bf16 %v363
      %v396 = vunpack.c.l.bf16 %v364
      %v397 = vunpack.c.l.bf16 %v365
      %v398 = vunpack.c.l.bf16 %v366
      %v399 = vunpack.c.l.bf16 %v367
      %v400 = vunpack.c.l.bf16 %v368
      %v401 = vunpack.c.l.bf16 %v369
      %v402 = vunpack.c.l.bf16 %v370
      %v403 = vunpack.c.l.bf16 %v371
      %s404 = scalar_lea.vmem [#allocation2], 24
      %vm405 = vcmask 31744
      %406 = vst.msk [vmem:[%s404 + $0x1] sm:$0xff] %vm405, %v372
      %407 = vst.msk [vmem:[%s404 + $0x9] sm:$0xff] %vm405, %v373
      %408 = vst.msk [vmem:[%s404 + $0x19] sm:$0xff] %vm405, %v374
      %409 = vst.msk [vmem:[%s404 + $0x21] sm:$0xff] %vm405, %v375
      %410 = vst.msk [vmem:[%s404 + $0x31] sm:$0xff] %vm405, %v376
      %411 = vst.msk [vmem:[%s404 + $0x39] sm:$0xff] %vm405, %v377
      %412 = vst.msk [vmem:[%s404 + $0x49] sm:$0xff] %vm405, %v378
      %413 = vst.msk [vmem:[%s404 + $0x51] sm:$0xff] %vm405, %v379
      %414 = vst.msk [vmem:[%s404 + $0x61] sm:$0xff] %vm405, %v380
      %415 = vst.msk [vmem:[%s404 + $0x69] sm:$0xff] %vm405, %v381
      %416 = vst.msk [vmem:[%s404 + $0x79] sm:$0xff] %vm405, %v382
      %417 = vst.msk [vmem:[%s404 + $0x81] sm:$0xff] %vm405, %v383
      %418 = vst.msk [vmem:[%s404 + $0x91] sm:$0xff] %vm405, %v384
      %419 = vst.msk [vmem:[%s404 + $0x99] sm:$0xff] %vm405, %v385
      %420 = vst.msk [vmem:[%s404 + $0xa9] sm:$0xff] %vm405, %v386
      %421 = vst.msk [vmem:[%s404 + $0xb1] sm:$0xff] %vm405, %v387
      %422 = vst.msk [vmem:[%s404 + $0xc1] sm:$0xff] %vm405, %v388
      %423 = vst.msk [vmem:[%s404 + $0xc9] sm:$0xff] %vm405, %v389
      %424 = vst.msk [vmem:[%s404 + $0xd9] sm:$0xff] %vm405, %v390
      %425 = vst.msk [vmem:[%s404 + $0xe1] sm:$0xff] %vm405, %v391
      %426 = vst.msk [vmem:[%s404 + $0xf1] sm:$0xff] %vm405, %v392
      %427 = vst.msk [vmem:[%s404 + $0xf9] sm:$0xff] %vm405, %v393
      %428 = vst.msk [vmem:[%s404 + $0x109] sm:$0xff] %vm405, %v394
      %429 = vst.msk [vmem:[%s404 + $0x111] sm:$0xff] %vm405, %v395
      %430 = vst.msk [vmem:[%s404 + $0x121] sm:$0xff] %vm405, %v396
      %431 = vst.msk [vmem:[%s404 + $0x129] sm:$0xff] %vm405, %v397
      %432 = vst.msk [vmem:[%s404 + $0x139] sm:$0xff] %vm405, %v398
      %433 = vst.msk [vmem:[%s404 + $0x141] sm:$0xff] %vm405, %v399
      %434 = vst.msk [vmem:[%s404 + $0x151] sm:$0xff] %vm405, %v400
      %435 = vst.msk [vmem:[%s404 + $0x159] sm:$0xff] %vm405, %v401
      %436 = vst.msk [vmem:[%s404 + $0x169] sm:$0xff] %vm405, %v402
      %437 = vst.msk [vmem:[%s404 + $0x171] sm:$0xff] %vm405, %v403
      %v438 = vld [vmem:[#allocation2] sm:$0xff]
      %v439 = vld [vmem:[#allocation2 + $0x8] sm:$0xff]
      %v440 = vld [vmem:[#allocation2 + $0x18] sm:$0xff]
      %v441 = vld [vmem:[#allocation2 + $0x20] sm:$0xff]
      %v442 = vld [vmem:[#allocation2 + $0x30] sm:$0xff]
      %v443 = vld [vmem:[#allocation2 + $0x38] sm:$0xff]
      %v444 = vld [vmem:[#allocation2 + $0x48] sm:$0xff]
      %v445 = vld [vmem:[#allocation2 + $0x50] sm:$0xff]
      %v446 = vld [vmem:[#allocation2 + $0x60] sm:$0xff]
      %v447 = vld [vmem:[#allocation2 + $0x68] sm:$0xff]
      %v448 = vld [vmem:[#allocation2 + $0x78] sm:$0xff]
      %v449 = vld [vmem:[#allocation2 + $0x80] sm:$0xff]
      %v450 = vld [vmem:[#allocation2 + $0x90] sm:$0xff]
      %v451 = vld [vmem:[#allocation2 + $0x98] sm:$0xff]
      %v452 = vld [vmem:[#allocation2 + $0xa8] sm:$0xff]
      %v453 = vld [vmem:[#allocation2 + $0xb0] sm:$0xff]
      %v454 = vld [vmem:[#allocation2 + $0xc0] sm:$0xff]
      %v455 = vld [vmem:[#allocation2 + $0xc8] sm:$0xff]
      %v456 = vld [vmem:[#allocation2 + $0xd8] sm:$0xff]
      %v457 = vld [vmem:[#allocation2 + $0xe0] sm:$0xff]
      %v458 = vld [vmem:[#allocation2 + $0xf0] sm:$0xff]
      %v459 = vld [vmem:[#allocation2 + $0xf8] sm:$0xff]
      %v460 = vld [vmem:[#allocation2 + $0x108] sm:$0xff]
      %v461 = vld [vmem:[#allocation2 + $0x110] sm:$0xff]
      %v462 = vld [vmem:[#allocation2 + $0x120] sm:$0xff]
      %v463 = vld [vmem:[#allocation2 + $0x128] sm:$0xff]
      %v464 = vld [vmem:[#allocation2 + $0x138] sm:$0xff]
      %v465 = vld [vmem:[#allocation2 + $0x140] sm:$0xff]
      %v466 = vld [vmem:[#allocation2 + $0x150] sm:$0xff]
      %v467 = vld [vmem:[#allocation2 + $0x158] sm:$0xff]
      %v468 = vld [vmem:[#allocation2 + $0x168] sm:$0xff]
      %v469 = vld [vmem:[#allocation2 + $0x170] sm:$0xff]
      %v470 = vpack.c.bf16 %v439, %v438
      %v471 = vpack.c.bf16 %v441, %v440
      %v472 = vpack.c.bf16 %v443, %v442
      %v473 = vpack.c.bf16 %v445, %v444
      %v474 = vpack.c.bf16 %v447, %v446
      %v475 = vpack.c.bf16 %v449, %v448
      %v476 = vpack.c.bf16 %v451, %v450
      %v477 = vpack.c.bf16 %v453, %v452
      %v478 = vpack.c.bf16 %v455, %v454
      %v479 = vpack.c.bf16 %v457, %v456
      %v480 = vpack.c.bf16 %v459, %v458
      %v481 = vpack.c.bf16 %v461, %v460
      %v482 = vpack.c.bf16 %v463, %v462
      %v483 = vpack.c.bf16 %v465, %v464
      %v484 = vpack.c.bf16 %v467, %v466
      %v485 = vpack.c.bf16 %v469, %v468
      %v486 = vld [vmem:[%s1] sm:$0x3]
      %v487 = vld [vmem:[#allocation2 + $0x1] sm:$0xff]
      %v488 = vld [vmem:[#allocation2 + $0x9] sm:$0xff]
      %v489 = vld [vmem:[#allocation2 + $0x19] sm:$0xff]
      %v490 = vld [vmem:[#allocation2 + $0x21] sm:$0xff]
      %v491 = vld [vmem:[#allocation2 + $0x31] sm:$0xff]
      %v492 = vld [vmem:[#allocation2 + $0x39] sm:$0xff]
      %v493 = vld [vmem:[#allocation2 + $0x49] sm:$0xff]
      %v494 = vld [vmem:[#allocation2 + $0x51] sm:$0xff]
      %v495 = vld [vmem:[#allocation2 + $0x61] sm:$0xff]
      %v496 = vld [vmem:[#allocation2 + $0x69] sm:$0xff]
      %v497 = vld [vmem:[#allocation2 + $0x79] sm:$0xff]
      %v498 = vld [vmem:[#allocation2 + $0x81] sm:$0xff]
      %v499 = vld [vmem:[#allocation2 + $0x91] sm:$0xff]
      %v500 = vld [vmem:[#allocation2 + $0x99] sm:$0xff]
      %v501 = vld [vmem:[#allocation2 + $0xa9] sm:$0xff]
      %v502 = vld [vmem:[#allocation2 + $0xb1] sm:$0xff]
      %v503 = vld [vmem:[#allocation2 + $0xc1] sm:$0xff]
      %v504 = vld [vmem:[#allocation2 + $0xc9] sm:$0xff]
      %v505 = vld [vmem:[#allocation2 + $0xd9] sm:$0xff]
      %v506 = vld [vmem:[#allocation2 + $0xe1] sm:$0xff]
      %v507 = vld [vmem:[#allocation2 + $0xf1] sm:$0xff]
      %v508 = vld [vmem:[#allocation2 + $0xf9] sm:$0xff]
      %v509 = vld [vmem:[#allocation2 + $0x109] sm:$0xff]
      %v510 = vld [vmem:[#allocation2 + $0x111] sm:$0xff]
      %v511 = vld [vmem:[#allocation2 + $0x121] sm:$0xff]
      %v512 = vld [vmem:[#allocation2 + $0x129] sm:$0xff]
      %v513 = vld [vmem:[#allocation2 + $0x139] sm:$0xff]
      %v514 = vld [vmem:[#allocation2 + $0x141] sm:$0xff]
      %v515 = vld [vmem:[#allocation2 + $0x151] sm:$0xff]
      %v516 = vld [vmem:[#allocation2 + $0x159] sm:$0xff]
      %v517 = vld [vmem:[#allocation2 + $0x169] sm:$0xff]
      %v518 = vld [vmem:[#allocation2 + $0x171] sm:$0xff]
      %v519 = vpack.c.bf16 %v488, %v487
      %v520 = vpack.c.bf16 %v490, %v489
      %v521 = vpack.c.bf16 %v492, %v491
      %v522 = vpack.c.bf16 %v494, %v493
      %v523 = vpack.c.bf16 %v496, %v495
      %v524 = vpack.c.bf16 %v498, %v497
      %v525 = vpack.c.bf16 %v500, %v499
      %v526 = vpack.c.bf16 %v502, %v501
      %v527 = vpack.c.bf16 %v504, %v503
      %v528 = vpack.c.bf16 %v506, %v505
      %v529 = vpack.c.bf16 %v508, %v507
      %v530 = vpack.c.bf16 %v510, %v509
      %v531 = vpack.c.bf16 %v512, %v511
      %v532 = vpack.c.bf16 %v514, %v513
      %v533 = vpack.c.bf16 %v516, %v515
      %v534 = vpack.c.bf16 %v518, %v517
      %s535 = scalar_lea.vmem %s1, 2
      %v536 = vld [vmem:[%s535] sm:$0x3]
      %v538 = vsel %vm405, %v519, 0
      %v541 = vsel %vm405, %v520, 0
      %v544 = vsel %vm405, %v521, 0
      %v547 = vsel %vm405, %v522, 0
      %v550 = vsel %vm405, %v523, 0
      %v553 = vsel %vm405, %v524, 0
      %v556 = vsel %vm405, %v525, 0
      %v559 = vsel %vm405, %v526, 0
      %v562 = vsel %vm405, %v527, 0
      %v565 = vsel %vm405, %v528, 0
      %v568 = vsel %vm405, %v529, 0
      %v571 = vsel %vm405, %v530, 0
      %v574 = vsel %vm405, %v531, 0
      %v577 = vsel %vm405, %v532, 0
      %v580 = vsel %vm405, %v533, 0
      %v583 = vsel %vm405, %v534, 0
      %vm585 = vcmask 1041408
      %v587 = vsel %vm585, %v536, 0
      %589 = vmatprep.subr.bf16.mxu0 0
      %590 = vmatpush1.bf16.msra.mxu0 %v587
      %591 = vmatprep.subr.bf16.mxu0 0
      %592 = vmatpush1.bf16.msra.mxu0 0
      %593 = vmatprep.subr.bf16.mxu0 0
      %594 = vmatpush1.bf16.msra.mxu0 0
      %595 = vmatprep.subr.bf16.mxu0 0
      %596 = vmatpush1.bf16.msra.mxu0 0
      %597 = vmatprep.subr.bf16.mxu0 0
      %598 = vmatpush1.bf16.msra.mxu0 0
      %599 = vmatprep.subr.bf16.mxu0 0
      %600 = vmatpush1.bf16.msra.mxu0 0
      %601 = vmatprep.subr.bf16.mxu0 0
      %602 = vmatpush1.bf16.msra.mxu0 0
      %603 = vmatprep.subr.bf16.mxu0 0
      %604 = vmatpush1.bf16.msra.mxu0 0
      %605 = vmatprep.subr.bf16.mxu0 0
      %606 = vmatpush1.bf16.msra.mxu0 0
      %607 = vmatprep.subr.bf16.mxu0 0
      %608 = vmatpush1.bf16.msra.mxu0 0
      %609 = vmatprep.subr.bf16.mxu0 0
      %610 = vmatpush1.bf16.msra.mxu0 0
      %611 = vmatprep.subr.bf16.mxu0 0
      %612 = vmatpush1.bf16.msra.mxu0 0
      %613 = vmatprep.subr.bf16.mxu0 0
      %614 = vmatpush1.bf16.msra.mxu0 0
      %615 = vmatprep.subr.bf16.mxu0 0
      %616 = vmatpush1.bf16.msra.mxu0 0
      %617 = vmatprep.subr.bf16.mxu0 0
      %618 = vmatpush1.bf16.msra.mxu0 0
      %619 = vmatprep.subr.bf16.mxu0 0
      %620 = vmatpush1.bf16.msra.mxu0 0
      %621 = vmatprep.mubr.bf16.mxu0 0
      %622 = vmatmul.mubr.bf16.gmra.mrb[0].mxu0 %v538
      %v623 = vpop.f32.mrb[0].mxu0
      %v624 = vadd.f32 0.0, %v623
      %v625 = vpop.f32.mrb[0].mxu0
      %v626 = vpop.f32.mrb[0].mxu0
      %v627 = vadd.f32 0.0, %v626
      %v628 = vpop.f32.mrb[0].mxu0
      %629 = vmatprep.mubr.bf16.mxu0 0
      %630 = vmatmul.mubr.bf16.gmra.mrb[0].mxu0 %v541
      %v631 = vpop.f32.mrb[0].mxu0
      %v632 = vadd.f32 0.0, %v631
      %v633 = vpop.f32.mrb[0].mxu0
      %v634 = vpop.f32.mrb[0].mxu0
      %v635 = vadd.f32 0.0, %v634
      %v636 = vpop.f32.mrb[0].mxu0
      %637 = vmatprep.mubr.bf16.mxu0 0
      %638 = vmatmul.mubr.bf16.gmra.mrb[0].mxu0 %v544
      %v639 = vpop.f32.mrb[0].mxu0
      %v640 = vadd.f32 0.0, %v639
      %v641 = vpop.f32.mrb[0].mxu0
      %v642 = vpop.f32.mrb[0].mxu0
      %v643 = vadd.f32 0.0, %v642
      %v644 = vpop.f32.mrb[0].mxu0
      %645 = vmatprep.mubr.bf16.mxu0 0
      %646 = vmatmul.mubr.bf16.gmra.mrb[0].mxu0 %v547
      %v647 = vpop.f32.mrb[0].mxu0
      %v648 = vadd.f32 0.0, %v647
      %v649 = vpop.f32.mrb[0].mxu0
      %v650 = vpop.f32.mrb[0].mxu0
      %v651 = vadd.f32 0.0, %v650
      %v652 = vpop.f32.mrb[0].mxu0
      %653 = vmatprep.mubr.bf16.mxu0 0
      %654 = vmatmul.mubr.bf16.gmra.mrb[0].mxu0 %v550
      %v655 = vpop.f32.mrb[0].mxu0
      %v656 = vadd.f32 0.0, %v655
      %v657 = vpop.f32.mrb[0].mxu0
      %v658 = vpop.f32.mrb[0].mxu0
      %v659 = vadd.f32 0.0, %v658
      %v660 = vpop.f32.mrb[0].mxu0
      %661 = vmatprep.mubr.bf16.mxu0 0
      %662 = vmatmul.mubr.bf16.gmra.mrb[0].mxu0 %v553
      %v663 = vpop.f32.mrb[0].mxu0
      %v664 = vadd.f32 0.0, %v663
      %v665 = vpop.f32.mrb[0].mxu0
      %v666 = vpop.f32.mrb[0].mxu0
      %v667 = vadd.f32 0.0, %v666
      %v668 = vpop.f32.mrb[0].mxu0
      %669 = vmatprep.mubr.bf16.mxu0 0
      %670 = vmatmul.mubr.bf16.gmra.mrb[0].mxu0 %v556
      %v671 = vpop.f32.mrb[0].mxu0
      %v672 = vadd.f32 0.0, %v671
      %v673 = vpop.f32.mrb[0].mxu0
      %v674 = vpop.f32.mrb[0].mxu0
      %v675 = vadd.f32 0.0, %v674
      %v676 = vpop.f32.mrb[0].mxu0
      %677 = vmatprep.mubr.bf16.mxu0 0
      %678 = vmatmul.mubr.bf16.gmra.mrb[0].mxu0 %v559
      %v679 = vpop.f32.mrb[0].mxu0
      %v680 = vadd.f32 0.0, %v679
      %v681 = vpop.f32.mrb[0].mxu0
      %v682 = vpop.f32.mrb[0].mxu0
      %v683 = vadd.f32 0.0, %v682
      %v684 = vpop.f32.mrb[0].mxu0
      %685 = vmatprep.mubr.bf16.mxu0 0
      %686 = vmatmul.mubr.bf16.gmra.mrb[0].mxu0 %v562
      %v687 = vpop.f32.mrb[0].mxu0
      %v688 = vadd.f32 0.0, %v687
      %v689 = vpop.f32.mrb[0].mxu0
      %v690 = vpop.f32.mrb[0].mxu0
      %v691 = vadd.f32 0.0, %v690
      %v692 = vpop.f32.mrb[0].mxu0
      %693 = vmatprep.mubr.bf16.mxu0 0
      %694 = vmatmul.mubr.bf16.gmra.mrb[0].mxu0 %v565
      %v695 = vpop.f32.mrb[0].mxu0
      %v696 = vadd.f32 0.0, %v695
      %v697 = vpop.f32.mrb[0].mxu0
      %v698 = vpop.f32.mrb[0].mxu0
      %v699 = vadd.f32 0.0, %v698
      %v700 = vpop.f32.mrb[0].mxu0
      %701 = vmatprep.mubr.bf16.mxu0 0
      %702 = vmatmul.mubr.bf16.gmra.mrb[0].mxu0 %v568
      %v703 = vpop.f32.mrb[0].mxu0
      %v704 = vadd.f32 0.0, %v703
      %v705 = vpop.f32.mrb[0].mxu0
      %v706 = vpop.f32.mrb[0].mxu0
      %v707 = vadd.f32 0.0, %v706
      %v708 = vpop.f32.mrb[0].mxu0
      %709 = vmatprep.mubr.bf16.mxu0 0
      %710 = vmatmul.mubr.bf16.gmra.mrb[0].mxu0 %v571
      %v711 = vpop.f32.mrb[0].mxu0
      %v712 = vadd.f32 0.0, %v711
      %v713 = vpop.f32.mrb[0].mxu0
      %v714 = vpop.f32.mrb[0].mxu0
      %v715 = vadd.f32 0.0, %v714
      %v716 = vpop.f32.mrb[0].mxu0
      %717 = vmatprep.mubr.bf16.mxu0 0
      %718 = vmatmul.mubr.bf16.gmra.mrb[0].mxu0 %v574
      %v719 = vpop.f32.mrb[0].mxu0
      %v720 = vadd.f32 0.0, %v719
      %v721 = vpop.f32.mrb[0].mxu0
      %v722 = vpop.f32.mrb[0].mxu0
      %v723 = vadd.f32 0.0, %v722
      %v724 = vpop.f32.mrb[0].mxu0
      %725 = vmatprep.mubr.bf16.mxu0 0
      %726 = vmatmul.mubr.bf16.gmra.mrb[0].mxu0 %v577
      %v727 = vpop.f32.mrb[0].mxu0
      %v728 = vadd.f32 0.0, %v727
      %v729 = vpop.f32.mrb[0].mxu0
      %v730 = vpop.f32.mrb[0].mxu0
      %v731 = vadd.f32 0.0, %v730
      %v732 = vpop.f32.mrb[0].mxu0
      %733 = vmatprep.mubr.bf16.mxu0 0
      %734 = vmatmul.mubr.bf16.gmra.mrb[0].mxu0 %v580
      %v735 = vpop.f32.mrb[0].mxu0
      %v736 = vadd.f32 0.0, %v735
      %v737 = vpop.f32.mrb[0].mxu0
      %v738 = vpop.f32.mrb[0].mxu0
      %v739 = vadd.f32 0.0, %v738
      %v740 = vpop.f32.mrb[0].mxu0
      %741 = vmatprep.mubr.bf16.mxu0 0
      %742 = vmatmul.mubr.bf16.gmra.mrb[0].mxu0 %v583
      %v743 = vpop.f32.mrb[0].mxu0
      %v744 = vadd.f32 0.0, %v743
      %v745 = vpop.f32.mrb[0].mxu0
      %v746 = vpop.f32.mrb[0].mxu0
      %v747 = vadd.f32 0.0, %v746
      %v748 = vpop.f32.mrb[0].mxu0
      %749 = vdwg.mxu0
      %v751 = vsel %vm405, %v470, 0
      %v754 = vsel %vm405, %v471, 0
      %v757 = vsel %vm405, %v472, 0
      %v760 = vsel %vm405, %v473, 0
      %v763 = vsel %vm405, %v474, 0
      %v766 = vsel %vm405, %v475, 0
      %v769 = vsel %vm405, %v476, 0
      %v772 = vsel %vm405, %v477, 0
      %v775 = vsel %vm405, %v478, 0
      %v778 = vsel %vm405, %v479, 0
      %v781 = vsel %vm405, %v480, 0
      %v784 = vsel %vm405, %v481, 0
      %v787 = vsel %vm405, %v482, 0
      %v790 = vsel %vm405, %v483, 0
      %v793 = vsel %vm405, %v484, 0
      %v796 = vsel %vm405, %v485, 0
      %v799 = vsel %vm585, %v486, 0
      %801 = vmatprep.subr.bf16.mxu0 0
      %802 = vmatpush1.bf16.msra.mxu0 %v799
      %803 = vmatprep.subr.bf16.mxu0 0
      %804 = vmatpush1.bf16.msra.mxu0 0
      %805 = vmatprep.subr.bf16.mxu0 0
      %806 = vmatpush1.bf16.msra.mxu0 0
      %807 = vmatprep.subr.bf16.mxu0 0
      %808 = vmatpush1.bf16.msra.mxu0 0
      %809 = vmatprep.subr.bf16.mxu0 0
      %810 = vmatpush1.bf16.msra.mxu0 0
      %811 = vmatprep.subr.bf16.mxu0 0
      %812 = vmatpush1.bf16.msra.mxu0 0
      %813 = vmatprep.subr.bf16.mxu0 0
      %814 = vmatpush1.bf16.msra.mxu0 0
      %815 = vmatprep.subr.bf16.mxu0 0
      %816 = vmatpush1.bf16.msra.mxu0 0
      %817 = vmatprep.subr.bf16.mxu0 0
      %818 = vmatpush1.bf16.msra.mxu0 0
      %819 = vmatprep.subr.bf16.mxu0 0
      %820 = vmatpush1.bf16.msra.mxu0 0
      %821 = vmatprep.subr.bf16.mxu0 0
      %822 = vmatpush1.bf16.msra.mxu0 0
      %823 = vmatprep.subr.bf16.mxu0 0
      %824 = vmatpush1.bf16.msra.mxu0 0
      %825 = vmatprep.subr.bf16.mxu0 0
      %826 = vmatpush1.bf16.msra.mxu0 0
      %827 = vmatprep.subr.bf16.mxu0 0
      %828 = vmatpush1.bf16.msra.mxu0 0
      %829 = vmatprep.subr.bf16.mxu0 0
      %830 = vmatpush1.bf16.msra.mxu0 0
      %831 = vmatprep.subr.bf16.mxu0 0
      %832 = vmatpush1.bf16.msra.mxu0 0
      %833 = vmatprep.mubr.bf16.mxu0 0
      %834 = vmatmul.mubr.bf16.gmra.mrb[0].mxu0 %v751
      %v835 = vpop.f32.mrb[0].mxu0
      %v836 = vadd.f32 %v624, %v835
      %v837 = vpop.f32.mrb[0].mxu0
      %v838 = vpop.f32.mrb[0].mxu0
      %v839 = vadd.f32 %v627, %v838
      %v840 = vpop.f32.mrb[0].mxu0
      %841 = vmatprep.mubr.bf16.mxu0 0
      %842 = vmatmul.mubr.bf16.gmra.mrb[0].mxu0 %v754
      %v843 = vpop.f32.mrb[0].mxu0
      %v844 = vadd.f32 %v632, %v843
      %v845 = vpop.f32.mrb[0].mxu0
      %v846 = vpop.f32.mrb[0].mxu0
      %v847 = vadd.f32 %v635, %v846
      %v848 = vpop.f32.mrb[0].mxu0
      %849 = vmatprep.mubr.bf16.mxu0 0
      %850 = vmatmul.mubr.bf16.gmra.mrb[0].mxu0 %v757
      %v851 = vpop.f32.mrb[0].mxu0
      %v852 = vadd.f32 %v640, %v851
      %v853 = vpop.f32.mrb[0].mxu0
      %v854 = vpop.f32.mrb[0].mxu0
      %v855 = vadd.f32 %v643, %v854
      %v856 = vpop.f32.mrb[0].mxu0
      %857 = vmatprep.mubr.bf16.mxu0 0
      %858 = vmatmul.mubr.bf16.gmra.mrb[0].mxu0 %v760
      %v859 = vpop.f32.mrb[0].mxu0
      %v860 = vadd.f32 %v648, %v859
      %v861 = vpop.f32.mrb[0].mxu0
      %v862 = vpop.f32.mrb[0].mxu0
      %v863 = vadd.f32 %v651, %v862
      %v864 = vpop.f32.mrb[0].mxu0
      %865 = vmatprep.mubr.bf16.mxu0 0
      %866 = vmatmul.mubr.bf16.gmra.mrb[0].mxu0 %v763
      %v867 = vpop.f32.mrb[0].mxu0
      %v868 = vadd.f32 %v656, %v867
      %v869 = vpop.f32.mrb[0].mxu0
      %v870 = vpop.f32.mrb[0].mxu0
      %v871 = vadd.f32 %v659, %v870
      %v872 = vpop.f32.mrb[0].mxu0
      %873 = vmatprep.mubr.bf16.mxu0 0
      %874 = vmatmul.mubr.bf16.gmra.mrb[0].mxu0 %v766
      %v875 = vpop.f32.mrb[0].mxu0
      %v876 = vadd.f32 %v664, %v875
      %v877 = vpop.f32.mrb[0].mxu0
      %v878 = vpop.f32.mrb[0].mxu0
      %v879 = vadd.f32 %v667, %v878
      %v880 = vpop.f32.mrb[0].mxu0
      %881 = vmatprep.mubr.bf16.mxu0 0
      %882 = vmatmul.mubr.bf16.gmra.mrb[0].mxu0 %v769
      %v883 = vpop.f32.mrb[0].mxu0
      %v884 = vadd.f32 %v672, %v883
      %v885 = vpop.f32.mrb[0].mxu0
      %v886 = vpop.f32.mrb[0].mxu0
      %v887 = vadd.f32 %v675, %v886
      %v888 = vpop.f32.mrb[0].mxu0
      %889 = vmatprep.mubr.bf16.mxu0 0
      %890 = vmatmul.mubr.bf16.gmra.mrb[0].mxu0 %v772
      %v891 = vpop.f32.mrb[0].mxu0
      %v892 = vadd.f32 %v680, %v891
      %v893 = vpop.f32.mrb[0].mxu0
      %v894 = vpop.f32.mrb[0].mxu0
      %v895 = vadd.f32 %v683, %v894
      %v896 = vpop.f32.mrb[0].mxu0
      %897 = vmatprep.mubr.bf16.mxu0 0
      %898 = vmatmul.mubr.bf16.gmra.mrb[0].mxu0 %v775
      %v899 = vpop.f32.mrb[0].mxu0
      %v900 = vadd.f32 %v688, %v899
      %v901 = vpop.f32.mrb[0].mxu0
      %v902 = vpop.f32.mrb[0].mxu0
      %v903 = vadd.f32 %v691, %v902
      %v904 = vpop.f32.mrb[0].mxu0
      %905 = vmatprep.mubr.bf16.mxu0 0
      %906 = vmatmul.mubr.bf16.gmra.mrb[0].mxu0 %v778
      %v907 = vpop.f32.mrb[0].mxu0
      %v908 = vadd.f32 %v696, %v907
      %v909 = vpop.f32.mrb[0].mxu0
      %v910 = vpop.f32.mrb[0].mxu0
      %v911 = vadd.f32 %v699, %v910
      %v912 = vpop.f32.mrb[0].mxu0
      %913 = vmatprep.mubr.bf16.mxu0 0
      %914 = vmatmul.mubr.bf16.gmra.mrb[0].mxu0 %v781
      %v915 = vpop.f32.mrb[0].mxu0
      %v916 = vadd.f32 %v704, %v915
      %v917 = vpop.f32.mrb[0].mxu0
      %v918 = vpop.f32.mrb[0].mxu0
      %v919 = vadd.f32 %v707, %v918
      %v920 = vpop.f32.mrb[0].mxu0
      %921 = vmatprep.mubr.bf16.mxu0 0
      %922 = vmatmul.mubr.bf16.gmra.mrb[0].mxu0 %v784
      %v923 = vpop.f32.mrb[0].mxu0
      %v924 = vadd.f32 %v712, %v923
      %v925 = vpop.f32.mrb[0].mxu0
      %v926 = vpop.f32.mrb[0].mxu0
      %v927 = vadd.f32 %v715, %v926
      %v928 = vpop.f32.mrb[0].mxu0
      %929 = vmatprep.mubr.bf16.mxu0 0
      %930 = vmatmul.mubr.bf16.gmra.mrb[0].mxu0 %v787
      %v931 = vpop.f32.mrb[0].mxu0
      %v932 = vadd.f32 %v720, %v931
      %v933 = vpop.f32.mrb[0].mxu0
      %v934 = vpop.f32.mrb[0].mxu0
      %v935 = vadd.f32 %v723, %v934
      %v936 = vpop.f32.mrb[0].mxu0
      %937 = vmatprep.mubr.bf16.mxu0 0
      %938 = vmatmul.mubr.bf16.gmra.mrb[0].mxu0 %v790
      %v939 = vpop.f32.mrb[0].mxu0
      %v940 = vadd.f32 %v728, %v939
      %v941 = vpop.f32.mrb[0].mxu0
      %v942 = vpop.f32.mrb[0].mxu0
      %v943 = vadd.f32 %v731, %v942
      %v944 = vpop.f32.mrb[0].mxu0
      %945 = vmatprep.mubr.bf16.mxu0 0
      %946 = vmatmul.mubr.bf16.gmra.mrb[0].mxu0 %v793
      %v947 = vpop.f32.mrb[0].mxu0
      %v948 = vadd.f32 %v736, %v947
      %v949 = vpop.f32.mrb[0].mxu0
      %v950 = vpop.f32.mrb[0].mxu0
      %v951 = vadd.f32 %v739, %v950
      %v952 = vpop.f32.mrb[0].mxu0
      %953 = vmatprep.mubr.bf16.mxu0 0
      %954 = vmatmul.mubr.bf16.gmra.mrb[0].mxu0 %v796
      %v955 = vpop.f32.mrb[0].mxu0
      %v956 = vadd.f32 %v744, %v955
      %v957 = vpop.f32.mrb[0].mxu0
      %v958 = vpop.f32.mrb[0].mxu0
      %v959 = vadd.f32 %v747, %v958
      %v960 = vpop.f32.mrb[0].mxu0
      %961 = vdwg.mxu0
      %v962 = vld [vmem:[#allocation2 + $0x2] sm:$0xff]
      %v963 = vld [vmem:[#allocation2 + $0xa] sm:$0xff]
      %v964 = vld [vmem:[#allocation2 + $0x1a] sm:$0xff]
      %v965 = vld [vmem:[#allocation2 + $0x22] sm:$0xff]
      %v966 = vld [vmem:[#allocation2 + $0x32] sm:$0xff]
      %v967 = vld [vmem:[#allocation2 + $0x3a] sm:$0xff]
      %v968 = vld [vmem:[#allocation2 + $0x4a] sm:$0xff]
      %v969 = vld [vmem:[#allocation2 + $0x52] sm:$0xff]
      %v970 = vld [vmem:[#allocation2 + $0x62] sm:$0xff]
      %v971 = vld [vmem:[#allocation2 + $0x6a] sm:$0xff]
      %v972 = vld [vmem:[#allocation2 + $0x7a] sm:$0xff]
      %v973 = vld [vmem:[#allocation2 + $0x82] sm:$0xff]
      %v974 = vld [vmem:[#allocation2 + $0x92] sm:$0xff]
      %v975 = vld [vmem:[#allocation2 + $0x9a] sm:$0xff]
      %v976 = vld [vmem:[#allocation2 + $0xaa] sm:$0xff]
      %v977 = vld [vmem:[#allocation2 + $0xb2] sm:$0xff]
      %v978 = vld [vmem:[#allocation2 + $0xc2] sm:$0xff]
      %v979 = vld [vmem:[#allocation2 + $0xca] sm:$0xff]
      %v980 = vld [vmem:[#allocation2 + $0xda] sm:$0xff]
      %v981 = vld [vmem:[#allocation2 + $0xe2] sm:$0xff]
      %v982 = vld [vmem:[#allocation2 + $0xf2] sm:$0xff]
      %v983 = vld [vmem:[#allocation2 + $0xfa] sm:$0xff]
      %v984 = vld [vmem:[#allocation2 + $0x10a] sm:$0xff]
      %v985 = vld [vmem:[#allocation2 + $0x112] sm:$0xff]
      %v986 = vld [vmem:[#allocation2 + $0x122] sm:$0xff]
      %v987 = vld [vmem:[#allocation2 + $0x12a] sm:$0xff]
      %v988 = vld [vmem:[#allocation2 + $0x13a] sm:$0xff]
      %v989 = vld [vmem:[#allocation2 + $0x142] sm:$0xff]
      %v990 = vld [vmem:[#allocation2 + $0x152] sm:$0xff]
      %v991 = vld [vmem:[#allocation2 + $0x15a] sm:$0xff]
      %v992 = vld [vmem:[#allocation2 + $0x16a] sm:$0xff]
      %v993 = vld [vmem:[#allocation2 + $0x172] sm:$0xff]
      %v994 = vpack.c.bf16 %v963, %v962
      %v995 = vpack.c.bf16 %v965, %v964
      %v996 = vpack.c.bf16 %v967, %v966
      %v997 = vpack.c.bf16 %v969, %v968
      %v998 = vpack.c.bf16 %v971, %v970
      %v999 = vpack.c.bf16 %v973, %v972
      %v1000 = vpack.c.bf16 %v975, %v974
      %v1001 = vpack.c.bf16 %v977, %v976
      %v1002 = vpack.c.bf16 %v979, %v978
      %v1003 = vpack.c.bf16 %v981, %v980
      %v1004 = vpack.c.bf16 %v983, %v982
      %v1005 = vpack.c.bf16 %v985, %v984
      %v1006 = vpack.c.bf16 %v987, %v986
      %v1007 = vpack.c.bf16 %v989, %v988
      %v1008 = vpack.c.bf16 %v991, %v990
      %v1009 = vpack.c.bf16 %v993, %v992
      %s1010 = scalar_lea.vmem %s1, 4
      %v1011 = vld [vmem:[%s1010] sm:$0x3]
      %v1013 = vsel %vm405, %v994, 0
      %v1016 = vsel %vm405, %v995, 0
      %v1019 = vsel %vm405, %v996, 0
      %v1022 = vsel %vm405, %v997, 0
      %v1025 = vsel %vm405, %v998, 0
      %v1028 = vsel %vm405, %v999, 0
      %v1031 = vsel %vm405, %v1000, 0
      %v1034 = vsel %vm405, %v1001, 0
      %v1037 = vsel %vm405, %v1002, 0
      %v1040 = vsel %vm405, %v1003, 0
      %v1043 = vsel %vm405, %v1004, 0
      %v1046 = vsel %vm405, %v1005, 0
      %v1049 = vsel %vm405, %v1006, 0
      %v1052 = vsel %vm405, %v1007, 0
      %v1055 = vsel %vm405, %v1008, 0
      %v1058 = vsel %vm405, %v1009, 0
      %v1061 = vsel %vm585, %v1011, 0
      %1063 = vmatprep.subr.bf16.mxu0 0
      %1064 = vmatpush1.bf16.msra.mxu0 %v1061
      %1065 = vmatprep.subr.bf16.mxu0 0
      %1066 = vmatpush1.bf16.msra.mxu0 0
      %1067 = vmatprep.subr.bf16.mxu0 0
      %1068 = vmatpush1.bf16.msra.mxu0 0
      %1069 = vmatprep.subr.bf16.mxu0 0
      %1070 = vmatpush1.bf16.msra.mxu0 0
      %1071 = vmatprep.subr.bf16.mxu0 0
      %1072 = vmatpush1.bf16.msra.mxu0 0
      %1073 = vmatprep.subr.bf16.mxu0 0
      %1074 = vmatpush1.bf16.msra.mxu0 0
      %1075 = vmatprep.subr.bf16.mxu0 0
      %1076 = vmatpush1.bf16.msra.mxu0 0
      %1077 = vmatprep.subr.bf16.mxu0 0
      %1078 = vmatpush1.bf16.msra.mxu0 0
      %1079 = vmatprep.subr.bf16.mxu0 0
      %1080 = vmatpush1.bf16.msra.mxu0 0
      %1081 = vmatprep.subr.bf16.mxu0 0
      %1082 = vmatpush1.bf16.msra.mxu0 0
      %1083 = vmatprep.subr.bf16.mxu0 0
      %1084 = vmatpush1.bf16.msra.mxu0 0
      %1085 = vmatprep.subr.bf16.mxu0 0
      %1086 = vmatpush1.bf16.msra.mxu0 0
      %1087 = vmatprep.subr.bf16.mxu0 0
      %1088 = vmatpush1.bf16.msra.mxu0 0
      %1089 = vmatprep.subr.bf16.mxu0 0
      %1090 = vmatpush1.bf16.msra.mxu0 0
      %1091 = vmatprep.subr.bf16.mxu0 0
      %1092 = vmatpush1.bf16.msra.mxu0 0
      %1093 = vmatprep.subr.bf16.mxu0 0
      %1094 = vmatpush1.bf16.msra.mxu0 0
      %1095 = vmatprep.mubr.bf16.mxu0 0
      %1096 = vmatmul.mubr.bf16.gmra.mrb[0].mxu0 %v1013
      %v1097 = vpop.f32.mrb[0].mxu0
      %v1098 = vadd.f32 0.0, %v1097
      %v1099 = vpop.f32.mrb[0].mxu0
      %v1100 = vpop.f32.mrb[0].mxu0
      %v1101 = vadd.f32 0.0, %v1100
      %v1102 = vpop.f32.mrb[0].mxu0
      %1103 = vmatprep.mubr.bf16.mxu0 0
      %1104 = vmatmul.mubr.bf16.gmra.mrb[0].mxu0 %v1016
      %v1105 = vpop.f32.mrb[0].mxu0
      %v1106 = vadd.f32 0.0, %v1105
      %v1107 = vpop.f32.mrb[0].mxu0
      %v1108 = vpop.f32.mrb[0].mxu0
      %v1109 = vadd.f32 0.0, %v1108
      %v1110 = vpop.f32.mrb[0].mxu0
      %1111 = vmatprep.mubr.bf16.mxu0 0
      %1112 = vmatmul.mubr.bf16.gmra.mrb[0].mxu0 %v1019
      %v1113 = vpop.f32.mrb[0].mxu0
      %v1114 = vadd.f32 0.0, %v1113
      %v1115 = vpop.f32.mrb[0].mxu0
      %v1116 = vpop.f32.mrb[0].mxu0
      %v1117 = vadd.f32 0.0, %v1116
      %v1118 = vpop.f32.mrb[0].mxu0
      %1119 = vmatprep.mubr.bf16.mxu0 0
      %1120 = vmatmul.mubr.bf16.gmra.mrb[0].mxu0 %v1022
      %v1121 = vpop.f32.mrb[0].mxu0
      %v1122 = vadd.f32 0.0, %v1121
      %v1123 = vpop.f32.mrb[0].mxu0
      %v1124 = vpop.f32.mrb[0].mxu0
      %v1125 = vadd.f32 0.0, %v1124
      %v1126 = vpop.f32.mrb[0].mxu0
      %1127 = vmatprep.mubr.bf16.mxu0 0
      %1128 = vmatmul.mubr.bf16.gmra.mrb[0].mxu0 %v1025
      %v1129 = vpop.f32.mrb[0].mxu0
      %v1130 = vadd.f32 0.0, %v1129
      %v1131 = vpop.f32.mrb[0].mxu0
      %v1132 = vpop.f32.mrb[0].mxu0
      %v1133 = vadd.f32 0.0, %v1132
      %v1134 = vpop.f32.mrb[0].mxu0
      %1135 = vmatprep.mubr.bf16.mxu0 0
      %1136 = vmatmul.mubr.bf16.gmra.mrb[0].mxu0 %v1028
      %v1137 = vpop.f32.mrb[0].mxu0
      %v1138 = vadd.f32 0.0, %v1137
      %v1139 = vpop.f32.mrb[0].mxu0
      %v1140 = vpop.f32.mrb[0].mxu0
      %v1141 = vadd.f32 0.0, %v1140
      %v1142 = vpop.f32.mrb[0].mxu0
      %1143 = vmatprep.mubr.bf16.mxu0 0
      %1144 = vmatmul.mubr.bf16.gmra.mrb[0].mxu0 %v1031
      %v1145 = vpop.f32.mrb[0].mxu0
      %v1146 = vadd.f32 0.0, %v1145
      %v1147 = vpop.f32.mrb[0].mxu0
      %v1148 = vpop.f32.mrb[0].mxu0
      %v1149 = vadd.f32 0.0, %v1148
      %v1150 = vpop.f32.mrb[0].mxu0
      %1151 = vmatprep.mubr.bf16.mxu0 0
      %1152 = vmatmul.mubr.bf16.gmra.mrb[0].mxu0 %v1034
      %v1153 = vpop.f32.mrb[0].mxu0
      %v1154 = vadd.f32 0.0, %v1153
      %v1155 = vpop.f32.mrb[0].mxu0
      %v1156 = vpop.f32.mrb[0].mxu0
      %v1157 = vadd.f32 0.0, %v1156
      %v1158 = vpop.f32.mrb[0].mxu0
      %1159 = vmatprep.mubr.bf16.mxu0 0
      %1160 = vmatmul.mubr.bf16.gmra.mrb[0].mxu0 %v1037
      %v1161 = vpop.f32.mrb[0].mxu0
      %v1162 = vadd.f32 0.0, %v1161
      %v1163 = vpop.f32.mrb[0].mxu0
      %v1164 = vpop.f32.mrb[0].mxu0
      %v1165 = vadd.f32 0.0, %v1164
      %v1166 = vpop.f32.mrb[0].mxu0
      %1167 = vmatprep.mubr.bf16.mxu0 0
      %1168 = vmatmul.mubr.bf16.gmra.mrb[0].mxu0 %v1040
      %v1169 = vpop.f32.mrb[0].mxu0
      %v1170 = vadd.f32 0.0, %v1169
      %v1171 = vpop.f32.mrb[0].mxu0
      %v1172 = vpop.f32.mrb[0].mxu0
      %v1173 = vadd.f32 0.0, %v1172
      %v1174 = vpop.f32.mrb[0].mxu0
      %1175 = vmatprep.mubr.bf16.mxu0 0
      %1176 = vmatmul.mubr.bf16.gmra.mrb[0].mxu0 %v1043
      %v1177 = vpop.f32.mrb[0].mxu0
      %v1178 = vadd.f32 0.0, %v1177
      %v1179 = vpop.f32.mrb[0].mxu0
      %v1180 = vpop.f32.mrb[0].mxu0
      %v1181 = vadd.f32 0.0, %v1180
      %v1182 = vpop.f32.mrb[0].mxu0
      %1183 = vmatprep.mubr.bf16.mxu0 0
      %1184 = vmatmul.mubr.bf16.gmra.mrb[0].mxu0 %v1046
      %v1185 = vpop.f32.mrb[0].mxu0
      %v1186 = vadd.f32 0.0, %v1185
      %v1187 = vpop.f32.mrb[0].mxu0
      %v1188 = vpop.f32.mrb[0].mxu0
      %v1189 = vadd.f32 0.0, %v1188
      %v1190 = vpop.f32.mrb[0].mxu0
      %1191 = vmatprep.mubr.bf16.mxu0 0
      %1192 = vmatmul.mubr.bf16.gmra.mrb[0].mxu0 %v1049
      %v1193 = vpop.f32.mrb[0].mxu0
      %v1194 = vadd.f32 0.0, %v1193
      %v1195 = vpop.f32.mrb[0].mxu0
      %v1196 = vpop.f32.mrb[0].mxu0
      %v1197 = vadd.f32 0.0, %v1196
      %v1198 = vpop.f32.mrb[0].mxu0
      %1199 = vmatprep.mubr.bf16.mxu0 0
      %1200 = vmatmul.mubr.bf16.gmra.mrb[0].mxu0 %v1052
      %v1201 = vpop.f32.mrb[0].mxu0
      %v1202 = vadd.f32 0.0, %v1201
      %v1203 = vpop.f32.mrb[0].mxu0
      %v1204 = vpop.f32.mrb[0].mxu0
      %v1205 = vadd.f32 0.0, %v1204
      %v1206 = vpop.f32.mrb[0].mxu0
      %1207 = vmatprep.mubr.bf16.mxu0 0
      %1208 = vmatmul.mubr.bf16.gmra.mrb[0].mxu0 %v1055
      %v1209 = vpop.f32.mrb[0].mxu0
      %v1210 = vadd.f32 0.0, %v1209
      %v1211 = vpop.f32.mrb[0].mxu0
      %v1212 = vpop.f32.mrb[0].mxu0
      %v1213 = vadd.f32 0.0, %v1212
      %v1214 = vpop.f32.mrb[0].mxu0
      %1215 = vmatprep.mubr.bf16.mxu0 0
      %1216 = vmatmul.mubr.bf16.gmra.mrb[0].mxu0 %v1058
      %v1217 = vpop.f32.mrb[0].mxu0
      %v1218 = vadd.f32 0.0, %v1217
      %v1219 = vpop.f32.mrb[0].mxu0
      %v1220 = vpop.f32.mrb[0].mxu0
      %v1221 = vadd.f32 0.0, %v1220
      %v1222 = vpop.f32.mrb[0].mxu0
      %1223 = vdwg.mxu0
      %v1224 = vadd.f32 %v836, %v1098
      %v1225 = vadd.f32 %v839, %v1101
      %v1226 = vadd.f32 %v844, %v1106
      %v1227 = vadd.f32 %v847, %v1109
      %v1228 = vadd.f32 %v852, %v1114
      %v1229 = vadd.f32 %v855, %v1117
      %v1230 = vadd.f32 %v860, %v1122
      %v1231 = vadd.f32 %v863, %v1125
      %v1232 = vadd.f32 %v868, %v1130
      %v1233 = vadd.f32 %v871, %v1133
      %v1234 = vadd.f32 %v876, %v1138
      %v1235 = vadd.f32 %v879, %v1141
      %v1236 = vadd.f32 %v884, %v1146
      %v1237 = vadd.f32 %v887, %v1149
      %v1238 = vadd.f32 %v892, %v1154
      %v1239 = vadd.f32 %v895, %v1157
      %v1240 = vadd.f32 %v900, %v1162
      %v1241 = vadd.f32 %v903, %v1165
      %v1242 = vadd.f32 %v908, %v1170
      %v1243 = vadd.f32 %v911, %v1173
      %v1244 = vadd.f32 %v916, %v1178
      %v1245 = vadd.f32 %v919, %v1181
      %v1246 = vadd.f32 %v924, %v1186
      %v1247 = vadd.f32 %v927, %v1189
      %v1248 = vadd.f32 %v932, %v1194
      %v1249 = vadd.f32 %v935, %v1197
      %v1250 = vadd.f32 %v940, %v1202
      %v1251 = vadd.f32 %v943, %v1205
      %v1252 = vadd.f32 %v948, %v1210
      %v1253 = vadd.f32 %v951, %v1213
      %v1254 = vadd.f32 %v956, %v1218
      %v1255 = vadd.f32 %v959, %v1221
      %v1256 = vld [vmem:[%s404] sm:$0xff]
      %v1257 = vld [vmem:[%s404 + $0x8] sm:$0xff]
      %v1258 = vld [vmem:[%s404 + $0x18] sm:$0xff]
      %v1259 = vld [vmem:[%s404 + $0x20] sm:$0xff]
      %v1260 = vld [vmem:[%s404 + $0x30] sm:$0xff]
      %v1261 = vld [vmem:[%s404 + $0x38] sm:$0xff]
      %v1262 = vld [vmem:[%s404 + $0x48] sm:$0xff]
      %v1263 = vld [vmem:[%s404 + $0x50] sm:$0xff]
      %v1264 = vld [vmem:[%s404 + $0x60] sm:$0xff]
      %v1265 = vld [vmem:[%s404 + $0x68] sm:$0xff]
      %v1266 = vld [vmem:[%s404 + $0x78] sm:$0xff]
      %v1267 = vld [vmem:[%s404 + $0x80] sm:$0xff]
      %v1268 = vld [vmem:[%s404 + $0x90] sm:$0xff]
      %v1269 = vld [vmem:[%s404 + $0x98] sm:$0xff]
      %v1270 = vld [vmem:[%s404 + $0xa8] sm:$0xff]
      %v1271 = vld [vmem:[%s404 + $0xb0] sm:$0xff]
      %v1272 = vld [vmem:[%s404 + $0xc0] sm:$0xff]
      %v1273 = vld [vmem:[%s404 + $0xc8] sm:$0xff]
      %v1274 = vld [vmem:[%s404 + $0xd8] sm:$0xff]
      %v1275 = vld [vmem:[%s404 + $0xe0] sm:$0xff]
      %v1276 = vld [vmem:[%s404 + $0xf0] sm:$0xff]
      %v1277 = vld [vmem:[%s404 + $0xf8] sm:$0xff]
      %v1278 = vld [vmem:[%s404 + $0x108] sm:$0xff]
      %v1279 = vld [vmem:[%s404 + $0x110] sm:$0xff]
      %v1280 = vld [vmem:[%s404 + $0x120] sm:$0xff]
      %v1281 = vld [vmem:[%s404 + $0x128] sm:$0xff]
      %v1282 = vld [vmem:[%s404 + $0x138] sm:$0xff]
      %v1283 = vld [vmem:[%s404 + $0x140] sm:$0xff]
      %v1284 = vld [vmem:[%s404 + $0x150] sm:$0xff]
      %v1285 = vld [vmem:[%s404 + $0x158] sm:$0xff]
      %v1286 = vld [vmem:[%s404 + $0x168] sm:$0xff]
      %v1287 = vld [vmem:[%s404 + $0x170] sm:$0xff]
      %v1288 = vpack.c.bf16 %v1257, %v1256
      %v1289 = vpack.c.bf16 %v1259, %v1258
      %v1290 = vpack.c.bf16 %v1261, %v1260
      %v1291 = vpack.c.bf16 %v1263, %v1262
      %v1292 = vpack.c.bf16 %v1265, %v1264
      %v1293 = vpack.c.bf16 %v1267, %v1266
      %v1294 = vpack.c.bf16 %v1269, %v1268
      %v1295 = vpack.c.bf16 %v1271, %v1270
      %v1296 = vpack.c.bf16 %v1273, %v1272
      %v1297 = vpack.c.bf16 %v1275, %v1274
      %v1298 = vpack.c.bf16 %v1277, %v1276
      %v1299 = vpack.c.bf16 %v1279, %v1278
      %v1300 = vpack.c.bf16 %v1281, %v1280
      %v1301 = vpack.c.bf16 %v1283, %v1282
      %v1302 = vpack.c.bf16 %v1285, %v1284
      %v1303 = vpack.c.bf16 %v1287, %v1286
      %s1304 = scalar_lea.vmem %s1, 6
      %v1305 = vld [vmem:[%s1304] sm:$0x3]
      %v1307 = vsel %vm405, %v1288, 0
      %v1310 = vsel %vm405, %v1289, 0
      %v1313 = vsel %vm405, %v1290, 0
      %v1316 = vsel %vm405, %v1291, 0
      %v1319 = vsel %vm405, %v1292, 0
      %v1322 = vsel %vm405, %v1293, 0
      %v1325 = vsel %vm405, %v1294, 0
      %v1328 = vsel %vm405, %v1295, 0
      %v1331 = vsel %vm405, %v1296, 0
      %v1334 = vsel %vm405, %v1297, 0
      %v1337 = vsel %vm405, %v1298, 0
      %v1340 = vsel %vm405, %v1299, 0
      %v1343 = vsel %vm405, %v1300, 0
      %v1346 = vsel %vm405, %v1301, 0
      %v1349 = vsel %vm405, %v1302, 0
      %v1352 = vsel %vm405, %v1303, 0
      %v1355 = vsel %vm585, %v1305, 0
      %1357 = vmatprep.subr.bf16.mxu0 0
      %1358 = vmatpush1.bf16.msra.mxu0 %v1355
      %1359 = vmatprep.subr.bf16.mxu0 0
      %1360 = vmatpush1.bf16.msra.mxu0 0
      %1361 = vmatprep.subr.bf16.mxu0 0
      %1362 = vmatpush1.bf16.msra.mxu0 0
      %1363 = vmatprep.subr.bf16.mxu0 0
      %1364 = vmatpush1.bf16.msra.mxu0 0
      %1365 = vmatprep.subr.bf16.mxu0 0
      %1366 = vmatpush1.bf16.msra.mxu0 0
      %1367 = vmatprep.subr.bf16.mxu0 0
      %1368 = vmatpush1.bf16.msra.mxu0 0
      %1369 = vmatprep.subr.bf16.mxu0 0
      %1370 = vmatpush1.bf16.msra.mxu0 0
      %1371 = vmatprep.subr.bf16.mxu0 0
      %1372 = vmatpush1.bf16.msra.mxu0 0
      %1373 = vmatprep.subr.bf16.mxu0 0
      %1374 = vmatpush1.bf16.msra.mxu0 0
      %1375 = vmatprep.subr.bf16.mxu0 0
      %1376 = vmatpush1.bf16.msra.mxu0 0
      %1377 = vmatprep.subr.bf16.mxu0 0
      %1378 = vmatpush1.bf16.msra.mxu0 0
      %1379 = vmatprep.subr.bf16.mxu0 0
      %1380 = vmatpush1.bf16.msra.mxu0 0
      %1381 = vmatprep.subr.bf16.mxu0 0
      %1382 = vmatpush1.bf16.msra.mxu0 0
      %1383 = vmatprep.subr.bf16.mxu0 0
      %1384 = vmatpush1.bf16.msra.mxu0 0
      %1385 = vmatprep.subr.bf16.mxu0 0
      %1386 = vmatpush1.bf16.msra.mxu0 0
      %1387 = vmatprep.subr.bf16.mxu0 0
      %1388 = vmatpush1.bf16.msra.mxu0 0
      %1389 = vmatprep.mubr.bf16.mxu0 0
      %1390 = vmatmul.mubr.bf16.gmra.mrb[0].mxu0 %v1307
      %v1391 = vpop.f32.mrb[0].mxu0
      %v1392 = vadd.f32 0.0, %v1391
      %v1393 = vpop.f32.mrb[0].mxu0
      %v1394 = vpop.f32.mrb[0].mxu0
      %v1395 = vadd.f32 0.0, %v1394
      %v1396 = vpop.f32.mrb[0].mxu0
      %1397 = vmatprep.mubr.bf16.mxu0 0
      %1398 = vmatmul.mubr.bf16.gmra.mrb[0].mxu0 %v1310
      %v1399 = vpop.f32.mrb[0].mxu0
      %v1400 = vadd.f32 0.0, %v1399
      %v1401 = vpop.f32.mrb[0].mxu0
      %v1402 = vpop.f32.mrb[0].mxu0
      %v1403 = vadd.f32 0.0, %v1402
      %v1404 = vpop.f32.mrb[0].mxu0
      %1405 = vmatprep.mubr.bf16.mxu0 0
      %1406 = vmatmul.mubr.bf16.gmra.mrb[0].mxu0 %v1313
      %v1407 = vpop.f32.mrb[0].mxu0
      %v1408 = vadd.f32 0.0, %v1407
      %v1409 = vpop.f32.mrb[0].mxu0
      %v1410 = vpop.f32.mrb[0].mxu0
      %v1411 = vadd.f32 0.0, %v1410
      %v1412 = vpop.f32.mrb[0].mxu0
      %1413 = vmatprep.mubr.bf16.mxu0 0
      %1414 = vmatmul.mubr.bf16.gmra.mrb[0].mxu0 %v1316
      %v1415 = vpop.f32.mrb[0].mxu0
      %v1416 = vadd.f32 0.0, %v1415
      %v1417 = vpop.f32.mrb[0].mxu0
      %v1418 = vpop.f32.mrb[0].mxu0
      %v1419 = vadd.f32 0.0, %v1418
      %v1420 = vpop.f32.mrb[0].mxu0
      %1421 = vmatprep.mubr.bf16.mxu0 0
      %1422 = vmatmul.mubr.bf16.gmra.mrb[0].mxu0 %v1319
      %v1423 = vpop.f32.mrb[0].mxu0
      %v1424 = vadd.f32 0.0, %v1423
      %v1425 = vpop.f32.mrb[0].mxu0
      %v1426 = vpop.f32.mrb[0].mxu0
      %v1427 = vadd.f32 0.0, %v1426
      %v1428 = vpop.f32.mrb[0].mxu0
      %1429 = vmatprep.mubr.bf16.mxu0 0
      %1430 = vmatmul.mubr.bf16.gmra.mrb[0].mxu0 %v1322
      %v1431 = vpop.f32.mrb[0].mxu0
      %v1432 = vadd.f32 0.0, %v1431
      %v1433 = vpop.f32.mrb[0].mxu0
      %v1434 = vpop.f32.mrb[0].mxu0
      %v1435 = vadd.f32 0.0, %v1434
      %v1436 = vpop.f32.mrb[0].mxu0
      %1437 = vmatprep.mubr.bf16.mxu0 0
      %1438 = vmatmul.mubr.bf16.gmra.mrb[0].mxu0 %v1325
      %v1439 = vpop.f32.mrb[0].mxu0
      %v1440 = vadd.f32 0.0, %v1439
      %v1441 = vpop.f32.mrb[0].mxu0
      %v1442 = vpop.f32.mrb[0].mxu0
      %v1443 = vadd.f32 0.0, %v1442
      %v1444 = vpop.f32.mrb[0].mxu0
      %1445 = vmatprep.mubr.bf16.mxu0 0
      %1446 = vmatmul.mubr.bf16.gmra.mrb[0].mxu0 %v1328
      %v1447 = vpop.f32.mrb[0].mxu0
      %v1448 = vadd.f32 0.0, %v1447
      %v1449 = vpop.f32.mrb[0].mxu0
      %v1450 = vpop.f32.mrb[0].mxu0
      %v1451 = vadd.f32 0.0, %v1450
      %v1452 = vpop.f32.mrb[0].mxu0
      %1453 = vmatprep.mubr.bf16.mxu0 0
      %1454 = vmatmul.mubr.bf16.gmra.mrb[0].mxu0 %v1331
      %v1455 = vpop.f32.mrb[0].mxu0
      %v1456 = vadd.f32 0.0, %v1455
      %v1457 = vpop.f32.mrb[0].mxu0
      %v1458 = vpop.f32.mrb[0].mxu0
      %v1459 = vadd.f32 0.0, %v1458
      %v1460 = vpop.f32.mrb[0].mxu0
      %1461 = vmatprep.mubr.bf16.mxu0 0
      %1462 = vmatmul.mubr.bf16.gmra.mrb[0].mxu0 %v1334
      %v1463 = vpop.f32.mrb[0].mxu0
      %v1464 = vadd.f32 0.0, %v1463
      %v1465 = vpop.f32.mrb[0].mxu0
      %v1466 = vpop.f32.mrb[0].mxu0
      %v1467 = vadd.f32 0.0, %v1466
      %v1468 = vpop.f32.mrb[0].mxu0
      %1469 = vmatprep.mubr.bf16.mxu0 0
      %1470 = vmatmul.mubr.bf16.gmra.mrb[0].mxu0 %v1337
      %v1471 = vpop.f32.mrb[0].mxu0
      %v1472 = vadd.f32 0.0, %v1471
      %v1473 = vpop.f32.mrb[0].mxu0
      %v1474 = vpop.f32.mrb[0].mxu0
      %v1475 = vadd.f32 0.0, %v1474
      %v1476 = vpop.f32.mrb[0].mxu0
      %1477 = vmatprep.mubr.bf16.mxu0 0
      %1478 = vmatmul.mubr.bf16.gmra.mrb[0].mxu0 %v1340
      %v1479 = vpop.f32.mrb[0].mxu0
      %v1480 = vadd.f32 0.0, %v1479
      %v1481 = vpop.f32.mrb[0].mxu0
      %v1482 = vpop.f32.mrb[0].mxu0
      %v1483 = vadd.f32 0.0, %v1482
      %v1484 = vpop.f32.mrb[0].mxu0
      %1485 = vmatprep.mubr.bf16.mxu0 0
      %1486 = vmatmul.mubr.bf16.gmra.mrb[0].mxu0 %v1343
      %v1487 = vpop.f32.mrb[0].mxu0
      %v1488 = vadd.f32 0.0, %v1487
      %v1489 = vpop.f32.mrb[0].mxu0
      %v1490 = vpop.f32.mrb[0].mxu0
      %v1491 = vadd.f32 0.0, %v1490
      %v1492 = vpop.f32.mrb[0].mxu0
      %1493 = vmatprep.mubr.bf16.mxu0 0
      %1494 = vmatmul.mubr.bf16.gmra.mrb[0].mxu0 %v1346
      %v1495 = vpop.f32.mrb[0].mxu0
      %v1496 = vadd.f32 0.0, %v1495
      %v1497 = vpop.f32.mrb[0].mxu0
      %v1498 = vpop.f32.mrb[0].mxu0
      %v1499 = vadd.f32 0.0, %v1498
      %v1500 = vpop.f32.mrb[0].mxu0
      %1501 = vmatprep.mubr.bf16.mxu0 0
      %1502 = vmatmul.mubr.bf16.gmra.mrb[0].mxu0 %v1349
      %v1503 = vpop.f32.mrb[0].mxu0
      %v1504 = vadd.f32 0.0, %v1503
      %v1505 = vpop.f32.mrb[0].mxu0
      %v1506 = vpop.f32.mrb[0].mxu0
      %v1507 = vadd.f32 0.0, %v1506
      %v1508 = vpop.f32.mrb[0].mxu0
      %1509 = vmatprep.mubr.bf16.mxu0 0
      %1510 = vmatmul.mubr.bf16.gmra.mrb[0].mxu0 %v1352
      %v1511 = vpop.f32.mrb[0].mxu0
      %v1512 = vadd.f32 0.0, %v1511
      %v1513 = vpop.f32.mrb[0].mxu0
      %v1514 = vpop.f32.mrb[0].mxu0
      %v1515 = vadd.f32 0.0, %v1514
      %v1516 = vpop.f32.mrb[0].mxu0
      %1517 = vdwg.mxu0
      %v1518 = vadd.f32 %v1224, %v1392
      %v1519 = vadd.f32 %v1225, %v1395
      %v1520 = vadd.f32 %v1226, %v1400
      %v1521 = vadd.f32 %v1227, %v1403
      %v1522 = vadd.f32 %v1228, %v1408
      %v1523 = vadd.f32 %v1229, %v1411
      %v1524 = vadd.f32 %v1230, %v1416
      %v1525 = vadd.f32 %v1231, %v1419
      %v1526 = vadd.f32 %v1232, %v1424
      %v1527 = vadd.f32 %v1233, %v1427
      %v1528 = vadd.f32 %v1234, %v1432
      %v1529 = vadd.f32 %v1235, %v1435
      %v1530 = vadd.f32 %v1236, %v1440
      %v1531 = vadd.f32 %v1237, %v1443
      %v1532 = vadd.f32 %v1238, %v1448
      %v1533 = vadd.f32 %v1239, %v1451
      %v1534 = vadd.f32 %v1240, %v1456
      %v1535 = vadd.f32 %v1241, %v1459
      %v1536 = vadd.f32 %v1242, %v1464
      %v1537 = vadd.f32 %v1243, %v1467
      %v1538 = vadd.f32 %v1244, %v1472
      %v1539 = vadd.f32 %v1245, %v1475
      %v1540 = vadd.f32 %v1246, %v1480
      %v1541 = vadd.f32 %v1247, %v1483
      %v1542 = vadd.f32 %v1248, %v1488
      %v1543 = vadd.f32 %v1249, %v1491
      %v1544 = vadd.f32 %v1250, %v1496
      %v1545 = vadd.f32 %v1251, %v1499
      %v1546 = vadd.f32 %v1252, %v1504
      %v1547 = vadd.f32 %v1253, %v1507
      %v1548 = vadd.f32 %v1254, %v1512
      %v1549 = vadd.f32 %v1255, %v1515
      %v1550 = vld [vmem:[%s404 + $0x1] sm:$0xff]
      %v1551 = vld [vmem:[%s404 + $0x9] sm:$0xff]
      %v1552 = vld [vmem:[%s404 + $0x19] sm:$0xff]
      %v1553 = vld [vmem:[%s404 + $0x21] sm:$0xff]
      %v1554 = vld [vmem:[%s404 + $0x31] sm:$0xff]
      %v1555 = vld [vmem:[%s404 + $0x39] sm:$0xff]
      %v1556 = vld [vmem:[%s404 + $0x49] sm:$0xff]
      %v1557 = vld [vmem:[%s404 + $0x51] sm:$0xff]
      %v1558 = vld [vmem:[%s404 + $0x61] sm:$0xff]
      %v1559 = vld [vmem:[%s404 + $0x69] sm:$0xff]
      %v1560 = vld [vmem:[%s404 + $0x79] sm:$0xff]
      %v1561 = vld [vmem:[%s404 + $0x81] sm:$0xff]
      %v1562 = vld [vmem:[%s404 + $0x91] sm:$0xff]
      %v1563 = vld [vmem:[%s404 + $0x99] sm:$0xff]
      %v1564 = vld [vmem:[%s404 + $0xa9] sm:$0xff]
      %v1565 = vld [vmem:[%s404 + $0xb1] sm:$0xff]
      %v1566 = vld [vmem:[%s404 + $0xc1] sm:$0xff]
      %v1567 = vld [vmem:[%s404 + $0xc9] sm:$0xff]
      %v1568 = vld [vmem:[%s404 + $0xd9] sm:$0xff]
      %v1569 = vld [vmem:[%s404 + $0xe1] sm:$0xff]
      %v1570 = vld [vmem:[%s404 + $0xf1] sm:$0xff]
      %v1571 = vld [vmem:[%s404 + $0xf9] sm:$0xff]
      %v1572 = vld [vmem:[%s404 + $0x109] sm:$0xff]
      %v1573 = vld [vmem:[%s404 + $0x111] sm:$0xff]
      %v1574 = vld [vmem:[%s404 + $0x121] sm:$0xff]
      %v1575 = vld [vmem:[%s404 + $0x129] sm:$0xff]
      %v1576 = vld [vmem:[%s404 + $0x139] sm:$0xff]
      %v1577 = vld [vmem:[%s404 + $0x141] sm:$0xff]
      %v1578 = vld [vmem:[%s404 + $0x151] sm:$0xff]
      %v1579 = vld [vmem:[%s404 + $0x159] sm:$0xff]
      %v1580 = vld [vmem:[%s404 + $0x169] sm:$0xff]
      %v1581 = vld [vmem:[%s404 + $0x171] sm:$0xff]
      %v1582 = vpack.c.bf16 %v1551, %v1550
      %v1583 = vpack.c.bf16 %v1553, %v1552
      %v1584 = vpack.c.bf16 %v1555, %v1554
      %v1585 = vpack.c.bf16 %v1557, %v1556
      %v1586 = vpack.c.bf16 %v1559, %v1558
      %v1587 = vpack.c.bf16 %v1561, %v1560
      %v1588 = vpack.c.bf16 %v1563, %v1562
      %v1589 = vpack.c.bf16 %v1565, %v1564
      %v1590 = vpack.c.bf16 %v1567, %v1566
      %v1591 = vpack.c.bf16 %v1569, %v1568
      %v1592 = vpack.c.bf16 %v1571, %v1570
      %v1593 = vpack.c.bf16 %v1573, %v1572
      %v1594 = vpack.c.bf16 %v1575, %v1574
      %v1595 = vpack.c.bf16 %v1577, %v1576
      %v1596 = vpack.c.bf16 %v1579, %v1578
      %v1597 = vpack.c.bf16 %v1581, %v1580
      %s1598 = scalar_lea.vmem %s1, 8
      %v1599 = vld [vmem:[%s1598] sm:$0x3]
      %v1601 = vsel %vm405, %v1582, 0
      %v1604 = vsel %vm405, %v1583, 0
      %v1607 = vsel %vm405, %v1584, 0
      %v1610 = vsel %vm405, %v1585, 0
      %v1613 = vsel %vm405, %v1586, 0
      %v1616 = vsel %vm405, %v1587, 0
      %v1619 = vsel %vm405, %v1588, 0
      %v1622 = vsel %vm405, %v1589, 0
      %v1625 = vsel %vm405, %v1590, 0
      %v1628 = vsel %vm405, %v1591, 0
      %v1631 = vsel %vm405, %v1592, 0
      %v1634 = vsel %vm405, %v1593, 0
      %v1637 = vsel %vm405, %v1594, 0
      %v1640 = vsel %vm405, %v1595, 0
      %v1643 = vsel %vm405, %v1596, 0
      %v1646 = vsel %vm405, %v1597, 0
      %v1649 = vsel %vm585, %v1599, 0
      %1651 = vmatprep.subr.bf16.mxu0 0
      %1652 = vmatpush1.bf16.msra.mxu0 %v1649
      %1653 = vmatprep.subr.bf16.mxu0 0
      %1654 = vmatpush1.bf16.msra.mxu0 0
      %1655 = vmatprep.subr.bf16.mxu0 0
      %1656 = vmatpush1.bf16.msra.mxu0 0
      %1657 = vmatprep.subr.bf16.mxu0 0
      %1658 = vmatpush1.bf16.msra.mxu0 0
      %1659 = vmatprep.subr.bf16.mxu0 0
      %1660 = vmatpush1.bf16.msra.mxu0 0
      %1661 = vmatprep.subr.bf16.mxu0 0
      %1662 = vmatpush1.bf16.msra.mxu0 0
      %1663 = vmatprep.subr.bf16.mxu0 0
      %1664 = vmatpush1.bf16.msra.mxu0 0
      %1665 = vmatprep.subr.bf16.mxu0 0
      %1666 = vmatpush1.bf16.msra.mxu0 0
      %1667 = vmatprep.subr.bf16.mxu0 0
      %1668 = vmatpush1.bf16.msra.mxu0 0
      %1669 = vmatprep.subr.bf16.mxu0 0
      %1670 = vmatpush1.bf16.msra.mxu0 0
      %1671 = vmatprep.subr.bf16.mxu0 0
      %1672 = vmatpush1.bf16.msra.mxu0 0
      %1673 = vmatprep.subr.bf16.mxu0 0
      %1674 = vmatpush1.bf16.msra.mxu0 0
      %1675 = vmatprep.subr.bf16.mxu0 0
      %1676 = vmatpush1.bf16.msra.mxu0 0
      %1677 = vmatprep.subr.bf16.mxu0 0
      %1678 = vmatpush1.bf16.msra.mxu0 0
      %1679 = vmatprep.subr.bf16.mxu0 0
      %1680 = vmatpush1.bf16.msra.mxu0 0
      %1681 = vmatprep.subr.bf16.mxu0 0
      %1682 = vmatpush1.bf16.msra.mxu0 0
      %1683 = vmatprep.mubr.bf16.mxu0 0
      %1684 = vmatmul.mubr.bf16.gmra.mrb[0].mxu0 %v1601
      %v1685 = vpop.f32.mrb[0].mxu0
      %v1686 = vadd.f32 0.0, %v1685
      %v1687 = vpop.f32.mrb[0].mxu0
      %v1688 = vpop.f32.mrb[0].mxu0
      %v1689 = vadd.f32 0.0, %v1688
      %v1690 = vpop.f32.mrb[0].mxu0
      %1691 = vmatprep.mubr.bf16.mxu0 0
      %1692 = vmatmul.mubr.bf16.gmra.mrb[0].mxu0 %v1604
      %v1693 = vpop.f32.mrb[0].mxu0
      %v1694 = vadd.f32 0.0, %v1693
      %v1695 = vpop.f32.mrb[0].mxu0
      %v1696 = vpop.f32.mrb[0].mxu0
      %v1697 = vadd.f32 0.0, %v1696
      %v1698 = vpop.f32.mrb[0].mxu0
      %1699 = vmatprep.mubr.bf16.mxu0 0
      %1700 = vmatmul.mubr.bf16.gmra.mrb[0].mxu0 %v1607
      %v1701 = vpop.f32.mrb[0].mxu0
      %v1702 = vadd.f32 0.0, %v1701
      %v1703 = vpop.f32.mrb[0].mxu0
      %v1704 = vpop.f32.mrb[0].mxu0
      %v1705 = vadd.f32 0.0, %v1704
      %v1706 = vpop.f32.mrb[0].mxu0
      %1707 = vmatprep.mubr.bf16.mxu0 0
      %1708 = vmatmul.mubr.bf16.gmra.mrb[0].mxu0 %v1610
      %v1709 = vpop.f32.mrb[0].mxu0
      %v1710 = vadd.f32 0.0, %v1709
      %v1711 = vpop.f32.mrb[0].mxu0
      %v1712 = vpop.f32.mrb[0].mxu0
      %v1713 = vadd.f32 0.0, %v1712
      %v1714 = vpop.f32.mrb[0].mxu0
      %1715 = vmatprep.mubr.bf16.mxu0 0
      %1716 = vmatmul.mubr.bf16.gmra.mrb[0].mxu0 %v1613
      %v1717 = vpop.f32.mrb[0].mxu0
      %v1718 = vadd.f32 0.0, %v1717
      %v1719 = vpop.f32.mrb[0].mxu0
      %v1720 = vpop.f32.mrb[0].mxu0
      %v1721 = vadd.f32 0.0, %v1720
      %v1722 = vpop.f32.mrb[0].mxu0
      %1723 = vmatprep.mubr.bf16.mxu0 0
      %1724 = vmatmul.mubr.bf16.gmra.mrb[0].mxu0 %v1616
      %v1725 = vpop.f32.mrb[0].mxu0
      %v1726 = vadd.f32 0.0, %v1725
      %v1727 = vpop.f32.mrb[0].mxu0
      %v1728 = vpop.f32.mrb[0].mxu0
      %v1729 = vadd.f32 0.0, %v1728
      %v1730 = vpop.f32.mrb[0].mxu0
      %1731 = vmatprep.mubr.bf16.mxu0 0
      %1732 = vmatmul.mubr.bf16.gmra.mrb[0].mxu0 %v1619
      %v1733 = vpop.f32.mrb[0].mxu0
      %v1734 = vadd.f32 0.0, %v1733
      %v1735 = vpop.f32.mrb[0].mxu0
      %v1736 = vpop.f32.mrb[0].mxu0
      %v1737 = vadd.f32 0.0, %v1736
      %v1738 = vpop.f32.mrb[0].mxu0
      %1739 = vmatprep.mubr.bf16.mxu0 0
      %1740 = vmatmul.mubr.bf16.gmra.mrb[0].mxu0 %v1622
      %v1741 = vpop.f32.mrb[0].mxu0
      %v1742 = vadd.f32 0.0, %v1741
      %v1743 = vpop.f32.mrb[0].mxu0
      %v1744 = vpop.f32.mrb[0].mxu0
      %v1745 = vadd.f32 0.0, %v1744
      %v1746 = vpop.f32.mrb[0].mxu0
      %1747 = vmatprep.mubr.bf16.mxu0 0
      %1748 = vmatmul.mubr.bf16.gmra.mrb[0].mxu0 %v1625
      %v1749 = vpop.f32.mrb[0].mxu0
      %v1750 = vadd.f32 0.0, %v1749
      %v1751 = vpop.f32.mrb[0].mxu0
      %v1752 = vpop.f32.mrb[0].mxu0
      %v1753 = vadd.f32 0.0, %v1752
      %v1754 = vpop.f32.mrb[0].mxu0
      %1755 = vmatprep.mubr.bf16.mxu0 0
      %1756 = vmatmul.mubr.bf16.gmra.mrb[0].mxu0 %v1628
      %v1757 = vpop.f32.mrb[0].mxu0
      %v1758 = vadd.f32 0.0, %v1757
      %v1759 = vpop.f32.mrb[0].mxu0
      %v1760 = vpop.f32.mrb[0].mxu0
      %v1761 = vadd.f32 0.0, %v1760
      %v1762 = vpop.f32.mrb[0].mxu0
      %1763 = vmatprep.mubr.bf16.mxu0 0
      %1764 = vmatmul.mubr.bf16.gmra.mrb[0].mxu0 %v1631
      %v1765 = vpop.f32.mrb[0].mxu0
      %v1766 = vadd.f32 0.0, %v1765
      %v1767 = vpop.f32.mrb[0].mxu0
      %v1768 = vpop.f32.mrb[0].mxu0
      %v1769 = vadd.f32 0.0, %v1768
      %v1770 = vpop.f32.mrb[0].mxu0
      %1771 = vmatprep.mubr.bf16.mxu0 0
      %1772 = vmatmul.mubr.bf16.gmra.mrb[0].mxu0 %v1634
      %v1773 = vpop.f32.mrb[0].mxu0
      %v1774 = vadd.f32 0.0, %v1773
      %v1775 = vpop.f32.mrb[0].mxu0
      %v1776 = vpop.f32.mrb[0].mxu0
      %v1777 = vadd.f32 0.0, %v1776
      %v1778 = vpop.f32.mrb[0].mxu0
      %1779 = vmatprep.mubr.bf16.mxu0 0
      %1780 = vmatmul.mubr.bf16.gmra.mrb[0].mxu0 %v1637
      %v1781 = vpop.f32.mrb[0].mxu0
      %v1782 = vadd.f32 0.0, %v1781
      %v1783 = vpop.f32.mrb[0].mxu0
      %v1784 = vpop.f32.mrb[0].mxu0
      %v1785 = vadd.f32 0.0, %v1784
      %v1786 = vpop.f32.mrb[0].mxu0
      %1787 = vmatprep.mubr.bf16.mxu0 0
      %1788 = vmatmul.mubr.bf16.gmra.mrb[0].mxu0 %v1640
      %v1789 = vpop.f32.mrb[0].mxu0
      %v1790 = vadd.f32 0.0, %v1789
      %v1791 = vpop.f32.mrb[0].mxu0
      %v1792 = vpop.f32.mrb[0].mxu0
      %v1793 = vadd.f32 0.0, %v1792
      %v1794 = vpop.f32.mrb[0].mxu0
      %1795 = vmatprep.mubr.bf16.mxu0 0
      %1796 = vmatmul.mubr.bf16.gmra.mrb[0].mxu0 %v1643
      %v1797 = vpop.f32.mrb[0].mxu0
      %v1798 = vadd.f32 0.0, %v1797
      %v1799 = vpop.f32.mrb[0].mxu0
      %v1800 = vpop.f32.mrb[0].mxu0
      %v1801 = vadd.f32 0.0, %v1800
      %v1802 = vpop.f32.mrb[0].mxu0
      %1803 = vmatprep.mubr.bf16.mxu0 0
      %1804 = vmatmul.mubr.bf16.gmra.mrb[0].mxu0 %v1646
      %v1805 = vpop.f32.mrb[0].mxu0
      %v1806 = vadd.f32 0.0, %v1805
      %v1807 = vpop.f32.mrb[0].mxu0
      %v1808 = vpop.f32.mrb[0].mxu0
      %v1809 = vadd.f32 0.0, %v1808
      %v1810 = vpop.f32.mrb[0].mxu0
      %1811 = vdwg.mxu0
      %v1812 = vadd.f32 %v1518, %v1686
      %v1813 = vadd.f32 %v1519, %v1689
      %v1814 = vadd.f32 %v1520, %v1694
      %v1815 = vadd.f32 %v1521, %v1697
      %v1816 = vadd.f32 %v1522, %v1702
      %v1817 = vadd.f32 %v1523, %v1705
      %v1818 = vadd.f32 %v1524, %v1710
      %v1819 = vadd.f32 %v1525, %v1713
      %v1820 = vadd.f32 %v1526, %v1718
      %v1821 = vadd.f32 %v1527, %v1721
      %v1822 = vadd.f32 %v1528, %v1726
      %v1823 = vadd.f32 %v1529, %v1729
      %v1824 = vadd.f32 %v1530, %v1734
      %v1825 = vadd.f32 %v1531, %v1737
      %v1826 = vadd.f32 %v1532, %v1742
      %v1827 = vadd.f32 %v1533, %v1745
      %v1828 = vadd.f32 %v1534, %v1750
      %v1829 = vadd.f32 %v1535, %v1753
      %v1830 = vadd.f32 %v1536, %v1758
      %v1831 = vadd.f32 %v1537, %v1761
      %v1832 = vadd.f32 %v1538, %v1766
      %v1833 = vadd.f32 %v1539, %v1769
      %v1834 = vadd.f32 %v1540, %v1774
      %v1835 = vadd.f32 %v1541, %v1777
      %v1836 = vadd.f32 %v1542, %v1782
      %v1837 = vadd.f32 %v1543, %v1785
      %v1838 = vadd.f32 %v1544, %v1790
      %v1839 = vadd.f32 %v1545, %v1793
      %v1840 = vadd.f32 %v1546, %v1798
      %v1841 = vadd.f32 %v1547, %v1801
      %v1842 = vadd.f32 %v1548, %v1806
      %v1843 = vadd.f32 %v1549, %v1809
      %v1844 = vld [vmem:[%s404 + $0x2] sm:$0xff]
      %v1845 = vld [vmem:[%s404 + $0xa] sm:$0xff]
      %v1846 = vld [vmem:[%s404 + $0x1a] sm:$0xff]
      %v1847 = vld [vmem:[%s404 + $0x22] sm:$0xff]
      %v1848 = vld [vmem:[%s404 + $0x32] sm:$0xff]
      %v1849 = vld [vmem:[%s404 + $0x3a] sm:$0xff]
      %v1850 = vld [vmem:[%s404 + $0x4a] sm:$0xff]
      %v1851 = vld [vmem:[%s404 + $0x52] sm:$0xff]
      %v1852 = vld [vmem:[%s404 + $0x62] sm:$0xff]
      %v1853 = vld [vmem:[%s404 + $0x6a] sm:$0xff]
      %v1854 = vld [vmem:[%s404 + $0x7a] sm:$0xff]
      %v1855 = vld [vmem:[%s404 + $0x82] sm:$0xff]
      %v1856 = vld [vmem:[%s404 + $0x92] sm:$0xff]
      %v1857 = vld [vmem:[%s404 + $0x9a] sm:$0xff]
      %v1858 = vld [vmem:[%s404 + $0xaa] sm:$0xff]
      %v1859 = vld [vmem:[%s404 + $0xb2] sm:$0xff]
      %v1860 = vld [vmem:[%s404 + $0xc2] sm:$0xff]
      %v1861 = vld [vmem:[%s404 + $0xca] sm:$0xff]
      %v1862 = vld [vmem:[%s404 + $0xda] sm:$0xff]
      %v1863 = vld [vmem:[%s404 + $0xe2] sm:$0xff]
      %v1864 = vld [vmem:[%s404 + $0xf2] sm:$0xff]
      %v1865 = vld [vmem:[%s404 + $0xfa] sm:$0xff]
      %v1866 = vld [vmem:[%s404 + $0x10a] sm:$0xff]
      %v1867 = vld [vmem:[%s404 + $0x112] sm:$0xff]
      %v1868 = vld [vmem:[%s404 + $0x122] sm:$0xff]
      %v1869 = vld [vmem:[%s404 + $0x12a] sm:$0xff]
      %v1870 = vld [vmem:[%s404 + $0x13a] sm:$0xff]
      %v1871 = vld [vmem:[%s404 + $0x142] sm:$0xff]
      %v1872 = vld [vmem:[%s404 + $0x152] sm:$0xff]
      %v1873 = vld [vmem:[%s404 + $0x15a] sm:$0xff]
      %v1874 = vld [vmem:[%s404 + $0x16a] sm:$0xff]
      %v1875 = vld [vmem:[%s404 + $0x172] sm:$0xff]
      %v1876 = vpack.c.bf16 %v1845, %v1844
      %v1877 = vpack.c.bf16 %v1847, %v1846
      %v1878 = vpack.c.bf16 %v1849, %v1848
      %v1879 = vpack.c.bf16 %v1851, %v1850
      %v1880 = vpack.c.bf16 %v1853, %v1852
      %v1881 = vpack.c.bf16 %v1855, %v1854
      %v1882 = vpack.c.bf16 %v1857, %v1856
      %v1883 = vpack.c.bf16 %v1859, %v1858
      %v1884 = vpack.c.bf16 %v1861, %v1860
      %v1885 = vpack.c.bf16 %v1863, %v1862
      %v1886 = vpack.c.bf16 %v1865, %v1864
      %v1887 = vpack.c.bf16 %v1867, %v1866
      %v1888 = vpack.c.bf16 %v1869, %v1868
      %v1889 = vpack.c.bf16 %v1871, %v1870
      %v1890 = vpack.c.bf16 %v1873, %v1872
      %v1891 = vpack.c.bf16 %v1875, %v1874
      %s1892 = scalar_lea.vmem %s1, 10
      %v1893 = vld [vmem:[%s1892] sm:$0x3]
      %v1895 = vsel %vm405, %v1876, 0
      %v1898 = vsel %vm405, %v1877, 0
      %v1901 = vsel %vm405, %v1878, 0
      %v1904 = vsel %vm405, %v1879, 0
      %v1907 = vsel %vm405, %v1880, 0
      %v1910 = vsel %vm405, %v1881, 0
      %v1913 = vsel %vm405, %v1882, 0
      %v1916 = vsel %vm405, %v1883, 0
      %v1919 = vsel %vm405, %v1884, 0
      %v1922 = vsel %vm405, %v1885, 0
      %v1925 = vsel %vm405, %v1886, 0
      %v1928 = vsel %vm405, %v1887, 0
      %v1931 = vsel %vm405, %v1888, 0
      %v1934 = vsel %vm405, %v1889, 0
      %v1937 = vsel %vm405, %v1890, 0
      %v1940 = vsel %vm405, %v1891, 0
      %v1943 = vsel %vm585, %v1893, 0
      %1945 = vmatprep.subr.bf16.mxu0 0
      %1946 = vmatpush1.bf16.msra.mxu0 %v1943
      %1947 = vmatprep.subr.bf16.mxu0 0
      %1948 = vmatpush1.bf16.msra.mxu0 0
      %1949 = vmatprep.subr.bf16.mxu0 0
      %1950 = vmatpush1.bf16.msra.mxu0 0
      %1951 = vmatprep.subr.bf16.mxu0 0
      %1952 = vmatpush1.bf16.msra.mxu0 0
      %1953 = vmatprep.subr.bf16.mxu0 0
      %1954 = vmatpush1.bf16.msra.mxu0 0
      %1955 = vmatprep.subr.bf16.mxu0 0
      %1956 = vmatpush1.bf16.msra.mxu0 0
      %1957 = vmatprep.subr.bf16.mxu0 0
      %1958 = vmatpush1.bf16.msra.mxu0 0
      %1959 = vmatprep.subr.bf16.mxu0 0
      %1960 = vmatpush1.bf16.msra.mxu0 0
      %1961 = vmatprep.subr.bf16.mxu0 0
      %1962 = vmatpush1.bf16.msra.mxu0 0
      %1963 = vmatprep.subr.bf16.mxu0 0
      %1964 = vmatpush1.bf16.msra.mxu0 0
      %1965 = vmatprep.subr.bf16.mxu0 0
      %1966 = vmatpush1.bf16.msra.mxu0 0
      %1967 = vmatprep.subr.bf16.mxu0 0
      %1968 = vmatpush1.bf16.msra.mxu0 0
      %1969 = vmatprep.subr.bf16.mxu0 0
      %1970 = vmatpush1.bf16.msra.mxu0 0
      %1971 = vmatprep.subr.bf16.mxu0 0
      %1972 = vmatpush1.bf16.msra.mxu0 0
      %1973 = vmatprep.subr.bf16.mxu0 0
      %1974 = vmatpush1.bf16.msra.mxu0 0
      %1975 = vmatprep.subr.bf16.mxu0 0
      %1976 = vmatpush1.bf16.msra.mxu0 0
      %1977 = vmatprep.mubr.bf16.mxu0 0
      %1978 = vmatmul.mubr.bf16.gmra.mrb[0].mxu0 %v1895
      %v1979 = vpop.f32.mrb[0].mxu0
      %v1980 = vadd.f32 0.0, %v1979
      %v1981 = vpop.f32.mrb[0].mxu0
      %v1982 = vpop.f32.mrb[0].mxu0
      %v1983 = vadd.f32 0.0, %v1982
      %v1984 = vpop.f32.mrb[0].mxu0
      %1985 = vmatprep.mubr.bf16.mxu0 0
      %1986 = vmatmul.mubr.bf16.gmra.mrb[0].mxu0 %v1898
      %v1987 = vpop.f32.mrb[0].mxu0
      %v1988 = vadd.f32 0.0, %v1987
      %v1989 = vpop.f32.mrb[0].mxu0
      %v1990 = vpop.f32.mrb[0].mxu0
      %v1991 = vadd.f32 0.0, %v1990
      %v1992 = vpop.f32.mrb[0].mxu0
      %1993 = vmatprep.mubr.bf16.mxu0 0
      %1994 = vmatmul.mubr.bf16.gmra.mrb[0].mxu0 %v1901
      %v1995 = vpop.f32.mrb[0].mxu0
      %v1996 = vadd.f32 0.0, %v1995
      %v1997 = vpop.f32.mrb[0].mxu0
      %v1998 = vpop.f32.mrb[0].mxu0
      %v1999 = vadd.f32 0.0, %v1998
      %v2000 = vpop.f32.mrb[0].mxu0
      %2001 = vmatprep.mubr.bf16.mxu0 0
      %2002 = vmatmul.mubr.bf16.gmra.mrb[0].mxu0 %v1904
      %v2003 = vpop.f32.mrb[0].mxu0
      %v2004 = vadd.f32 0.0, %v2003
      %v2005 = vpop.f32.mrb[0].mxu0
      %v2006 = vpop.f32.mrb[0].mxu0
      %v2007 = vadd.f32 0.0, %v2006
      %v2008 = vpop.f32.mrb[0].mxu0
      %2009 = vmatprep.mubr.bf16.mxu0 0
      %2010 = vmatmul.mubr.bf16.gmra.mrb[0].mxu0 %v1907
      %v2011 = vpop.f32.mrb[0].mxu0
      %v2012 = vadd.f32 0.0, %v2011
      %v2013 = vpop.f32.mrb[0].mxu0
      %v2014 = vpop.f32.mrb[0].mxu0
      %v2015 = vadd.f32 0.0, %v2014
      %v2016 = vpop.f32.mrb[0].mxu0
      %2017 = vmatprep.mubr.bf16.mxu0 0
      %2018 = vmatmul.mubr.bf16.gmra.mrb[0].mxu0 %v1910
      %v2019 = vpop.f32.mrb[0].mxu0
      %v2020 = vadd.f32 0.0, %v2019
      %v2021 = vpop.f32.mrb[0].mxu0
      %v2022 = vpop.f32.mrb[0].mxu0
      %v2023 = vadd.f32 0.0, %v2022
      %v2024 = vpop.f32.mrb[0].mxu0
      %2025 = vmatprep.mubr.bf16.mxu0 0
      %2026 = vmatmul.mubr.bf16.gmra.mrb[0].mxu0 %v1913
      %v2027 = vpop.f32.mrb[0].mxu0
      %v2028 = vadd.f32 0.0, %v2027
      %v2029 = vpop.f32.mrb[0].mxu0
      %v2030 = vpop.f32.mrb[0].mxu0
      %v2031 = vadd.f32 0.0, %v2030
      %v2032 = vpop.f32.mrb[0].mxu0
      %2033 = vmatprep.mubr.bf16.mxu0 0
      %2034 = vmatmul.mubr.bf16.gmra.mrb[0].mxu0 %v1916
      %v2035 = vpop.f32.mrb[0].mxu0
      %v2036 = vadd.f32 0.0, %v2035
      %v2037 = vpop.f32.mrb[0].mxu0
      %v2038 = vpop.f32.mrb[0].mxu0
      %v2039 = vadd.f32 0.0, %v2038
      %v2040 = vpop.f32.mrb[0].mxu0
      %2041 = vmatprep.mubr.bf16.mxu0 0
      %2042 = vmatmul.mubr.bf16.gmra.mrb[0].mxu0 %v1919
      %v2043 = vpop.f32.mrb[0].mxu0
      %v2044 = vadd.f32 0.0, %v2043
      %v2045 = vpop.f32.mrb[0].mxu0
      %v2046 = vpop.f32.mrb[0].mxu0
      %v2047 = vadd.f32 0.0, %v2046
      %v2048 = vpop.f32.mrb[0].mxu0
      %2049 = vmatprep.mubr.bf16.mxu0 0
      %2050 = vmatmul.mubr.bf16.gmra.mrb[0].mxu0 %v1922
      %v2051 = vpop.f32.mrb[0].mxu0
      %v2052 = vadd.f32 0.0, %v2051
      %v2053 = vpop.f32.mrb[0].mxu0
      %v2054 = vpop.f32.mrb[0].mxu0
      %v2055 = vadd.f32 0.0, %v2054
      %v2056 = vpop.f32.mrb[0].mxu0
      %2057 = vmatprep.mubr.bf16.mxu0 0
      %2058 = vmatmul.mubr.bf16.gmra.mrb[0].mxu0 %v1925
      %v2059 = vpop.f32.mrb[0].mxu0
      %v2060 = vadd.f32 0.0, %v2059
      %v2061 = vpop.f32.mrb[0].mxu0
      %v2062 = vpop.f32.mrb[0].mxu0
      %v2063 = vadd.f32 0.0, %v2062
      %v2064 = vpop.f32.mrb[0].mxu0
      %2065 = vmatprep.mubr.bf16.mxu0 0
      %2066 = vmatmul.mubr.bf16.gmra.mrb[0].mxu0 %v1928
      %v2067 = vpop.f32.mrb[0].mxu0
      %v2068 = vadd.f32 0.0, %v2067
      %v2069 = vpop.f32.mrb[0].mxu0
      %v2070 = vpop.f32.mrb[0].mxu0
      %v2071 = vadd.f32 0.0, %v2070
      %v2072 = vpop.f32.mrb[0].mxu0
      %2073 = vmatprep.mubr.bf16.mxu0 0
      %2074 = vmatmul.mubr.bf16.gmra.mrb[0].mxu0 %v1931
      %v2075 = vpop.f32.mrb[0].mxu0
      %v2076 = vadd.f32 0.0, %v2075
      %v2077 = vpop.f32.mrb[0].mxu0
      %v2078 = vpop.f32.mrb[0].mxu0
      %v2079 = vadd.f32 0.0, %v2078
      %v2080 = vpop.f32.mrb[0].mxu0
      %2081 = vmatprep.mubr.bf16.mxu0 0
      %2082 = vmatmul.mubr.bf16.gmra.mrb[0].mxu0 %v1934
      %v2083 = vpop.f32.mrb[0].mxu0
      %v2084 = vadd.f32 0.0, %v2083
      %v2085 = vpop.f32.mrb[0].mxu0
      %v2086 = vpop.f32.mrb[0].mxu0
      %v2087 = vadd.f32 0.0, %v2086
      %v2088 = vpop.f32.mrb[0].mxu0
      %2089 = vmatprep.mubr.bf16.mxu0 0
      %2090 = vmatmul.mubr.bf16.gmra.mrb[0].mxu0 %v1937
      %v2091 = vpop.f32.mrb[0].mxu0
      %v2092 = vadd.f32 0.0, %v2091
      %v2093 = vpop.f32.mrb[0].mxu0
      %v2094 = vpop.f32.mrb[0].mxu0
      %v2095 = vadd.f32 0.0, %v2094
      %v2096 = vpop.f32.mrb[0].mxu0
      %2097 = vmatprep.mubr.bf16.mxu0 0
      %2098 = vmatmul.mubr.bf16.gmra.mrb[0].mxu0 %v1940
      %v2099 = vpop.f32.mrb[0].mxu0
      %v2100 = vadd.f32 0.0, %v2099
      %v2101 = vpop.f32.mrb[0].mxu0
      %v2102 = vpop.f32.mrb[0].mxu0
      %v2103 = vadd.f32 0.0, %v2102
      %v2104 = vpop.f32.mrb[0].mxu0
      %2105 = vdwg.mxu0
      %v2106 = vadd.f32 %v1812, %v1980
      %v2107 = vadd.f32 %v1813, %v1983
      %v2108 = vadd.f32 %v1814, %v1988
      %v2109 = vadd.f32 %v1815, %v1991
      %v2110 = vadd.f32 %v1816, %v1996
      %v2111 = vadd.f32 %v1817, %v1999
      %v2112 = vadd.f32 %v1818, %v2004
      %v2113 = vadd.f32 %v1819, %v2007
      %v2114 = vadd.f32 %v1820, %v2012
      %v2115 = vadd.f32 %v1821, %v2015
      %v2116 = vadd.f32 %v1822, %v2020
      %v2117 = vadd.f32 %v1823, %v2023
      %v2118 = vadd.f32 %v1824, %v2028
      %v2119 = vadd.f32 %v1825, %v2031
      %v2120 = vadd.f32 %v1826, %v2036
      %v2121 = vadd.f32 %v1827, %v2039
      %v2122 = vadd.f32 %v1828, %v2044
      %v2123 = vadd.f32 %v1829, %v2047
      %v2124 = vadd.f32 %v1830, %v2052
      %v2125 = vadd.f32 %v1831, %v2055
      %v2126 = vadd.f32 %v1832, %v2060
      %v2127 = vadd.f32 %v1833, %v2063
      %v2128 = vadd.f32 %v1834, %v2068
      %v2129 = vadd.f32 %v1835, %v2071
      %v2130 = vadd.f32 %v1836, %v2076
      %v2131 = vadd.f32 %v1837, %v2079
      %v2132 = vadd.f32 %v1838, %v2084
      %v2133 = vadd.f32 %v1839, %v2087
      %v2134 = vadd.f32 %v1840, %v2092
      %v2135 = vadd.f32 %v1841, %v2095
      %v2136 = vadd.f32 %v1842, %v2100
      %v2137 = vadd.f32 %v1843, %v2103
      %s2138 = scalar_lea.vmem [#allocation2], 48
      %v2139 = vld [vmem:[%s2138] sm:$0xff]
      %v2140 = vld [vmem:[%s2138 + $0x8] sm:$0xff]
      %v2141 = vld [vmem:[%s2138 + $0x18] sm:$0xff]
      %v2142 = vld [vmem:[%s2138 + $0x20] sm:$0xff]
      %v2143 = vld [vmem:[%s2138 + $0x30] sm:$0xff]
      %v2144 = vld [vmem:[%s2138 + $0x38] sm:$0xff]
      %v2145 = vld [vmem:[%s2138 + $0x48] sm:$0xff]
      %v2146 = vld [vmem:[%s2138 + $0x50] sm:$0xff]
      %v2147 = vld [vmem:[%s2138 + $0x60] sm:$0xff]
      %v2148 = vld [vmem:[%s2138 + $0x68] sm:$0xff]
      %v2149 = vld [vmem:[%s2138 + $0x78] sm:$0xff]
      %v2150 = vld [vmem:[%s2138 + $0x80] sm:$0xff]
      %v2151 = vld [vmem:[%s2138 + $0x90] sm:$0xff]
      %v2152 = vld [vmem:[%s2138 + $0x98] sm:$0xff]
      %v2153 = vld [vmem:[%s2138 + $0xa8] sm:$0xff]
      %v2154 = vld [vmem:[%s2138 + $0xb0] sm:$0xff]
      %v2155 = vld [vmem:[%s2138 + $0xc0] sm:$0xff]
      %v2156 = vld [vmem:[%s2138 + $0xc8] sm:$0xff]
      %v2157 = vld [vmem:[%s2138 + $0xd8] sm:$0xff]
      %v2158 = vld [vmem:[%s2138 + $0xe0] sm:$0xff]
      %v2159 = vld [vmem:[%s2138 + $0xf0] sm:$0xff]
      %v2160 = vld [vmem:[%s2138 + $0xf8] sm:$0xff]
      %v2161 = vld [vmem:[%s2138 + $0x108] sm:$0xff]
      %v2162 = vld [vmem:[%s2138 + $0x110] sm:$0xff]
      %v2163 = vld [vmem:[%s2138 + $0x120] sm:$0xff]
      %v2164 = vld [vmem:[%s2138 + $0x128] sm:$0xff]
      %v2165 = vld [vmem:[%s2138 + $0x138] sm:$0xff]
      %v2166 = vld [vmem:[%s2138 + $0x140] sm:$0xff]
      %v2167 = vld [vmem:[%s2138 + $0x150] sm:$0xff]
      %v2168 = vld [vmem:[%s2138 + $0x158] sm:$0xff]
      %v2169 = vld [vmem:[%s2138 + $0x168] sm:$0xff]
      %v2170 = vld [vmem:[%s2138 + $0x170] sm:$0xff]
      %v2171 = vpack.c.bf16 %v2140, %v2139
      %v2172 = vpack.c.bf16 %v2142, %v2141
      %v2173 = vpack.c.bf16 %v2144, %v2143
      %v2174 = vpack.c.bf16 %v2146, %v2145
      %v2175 = vpack.c.bf16 %v2148, %v2147
      %v2176 = vpack.c.bf16 %v2150, %v2149
      %v2177 = vpack.c.bf16 %v2152, %v2151
      %v2178 = vpack.c.bf16 %v2154, %v2153
      %v2179 = vpack.c.bf16 %v2156, %v2155
      %v2180 = vpack.c.bf16 %v2158, %v2157
      %v2181 = vpack.c.bf16 %v2160, %v2159
      %v2182 = vpack.c.bf16 %v2162, %v2161
      %v2183 = vpack.c.bf16 %v2164, %v2163
      %v2184 = vpack.c.bf16 %v2166, %v2165
      %v2185 = vpack.c.bf16 %v2168, %v2167
      %v2186 = vpack.c.bf16 %v2170, %v2169
      %s2187 = scalar_lea.vmem %s1, 12
      %v2188 = vld [vmem:[%s2187] sm:$0x3]
      %v2190 = vsel %vm405, %v2171, 0
      %v2193 = vsel %vm405, %v2172, 0
      %v2196 = vsel %vm405, %v2173, 0
      %v2199 = vsel %vm405, %v2174, 0
      %v2202 = vsel %vm405, %v2175, 0
      %v2205 = vsel %vm405, %v2176, 0
      %v2208 = vsel %vm405, %v2177, 0
      %v2211 = vsel %vm405, %v2178, 0
      %v2214 = vsel %vm405, %v2179, 0
      %v2217 = vsel %vm405, %v2180, 0
      %v2220 = vsel %vm405, %v2181, 0
      %v2223 = vsel %vm405, %v2182, 0
      %v2226 = vsel %vm405, %v2183, 0
      %v2229 = vsel %vm405, %v2184, 0
      %v2232 = vsel %vm405, %v2185, 0
      %v2235 = vsel %vm405, %v2186, 0
      %v2238 = vsel %vm585, %v2188, 0
      %2240 = vmatprep.subr.bf16.mxu0 0
      %2241 = vmatpush1.bf16.msra.mxu0 %v2238
      %2242 = vmatprep.subr.bf16.mxu0 0
      %2243 = vmatpush1.bf16.msra.mxu0 0
      %2244 = vmatprep.subr.bf16.mxu0 0
      %2245 = vmatpush1.bf16.msra.mxu0 0
      %2246 = vmatprep.subr.bf16.mxu0 0
      %2247 = vmatpush1.bf16.msra.mxu0 0
      %2248 = vmatprep.subr.bf16.mxu0 0
      %2249 = vmatpush1.bf16.msra.mxu0 0
      %2250 = vmatprep.subr.bf16.mxu0 0
      %2251 = vmatpush1.bf16.msra.mxu0 0
      %2252 = vmatprep.subr.bf16.mxu0 0
      %2253 = vmatpush1.bf16.msra.mxu0 0
      %2254 = vmatprep.subr.bf16.mxu0 0
      %2255 = vmatpush1.bf16.msra.mxu0 0
      %2256 = vmatprep.subr.bf16.mxu0 0
      %2257 = vmatpush1.bf16.msra.mxu0 0
      %2258 = vmatprep.subr.bf16.mxu0 0
      %2259 = vmatpush1.bf16.msra.mxu0 0
      %2260 = vmatprep.subr.bf16.mxu0 0
      %2261 = vmatpush1.bf16.msra.mxu0 0
      %2262 = vmatprep.subr.bf16.mxu0 0
      %2263 = vmatpush1.bf16.msra.mxu0 0
      %2264 = vmatprep.subr.bf16.mxu0 0
      %2265 = vmatpush1.bf16.msra.mxu0 0
      %2266 = vmatprep.subr.bf16.mxu0 0
      %2267 = vmatpush1.bf16.msra.mxu0 0
      %2268 = vmatprep.subr.bf16.mxu0 0
      %2269 = vmatpush1.bf16.msra.mxu0 0
      %2270 = vmatprep.subr.bf16.mxu0 0
      %2271 = vmatpush1.bf16.msra.mxu0 0
      %2272 = vmatprep.mubr.bf16.mxu0 0
      %2273 = vmatmul.mubr.bf16.gmra.mrb[0].mxu0 %v2190
      %v2274 = vpop.f32.mrb[0].mxu0
      %v2275 = vadd.f32 0.0, %v2274
      %v2276 = vpop.f32.mrb[0].mxu0
      %v2277 = vpop.f32.mrb[0].mxu0
      %v2278 = vadd.f32 0.0, %v2277
      %v2279 = vpop.f32.mrb[0].mxu0
      %2280 = vmatprep.mubr.bf16.mxu0 0
      %2281 = vmatmul.mubr.bf16.gmra.mrb[0].mxu0 %v2193
      %v2282 = vpop.f32.mrb[0].mxu0
      %v2283 = vadd.f32 0.0, %v2282
      %v2284 = vpop.f32.mrb[0].mxu0
      %v2285 = vpop.f32.mrb[0].mxu0
      %v2286 = vadd.f32 0.0, %v2285
      %v2287 = vpop.f32.mrb[0].mxu0
      %2288 = vmatprep.mubr.bf16.mxu0 0
      %2289 = vmatmul.mubr.bf16.gmra.mrb[0].mxu0 %v2196
      %v2290 = vpop.f32.mrb[0].mxu0
      %v2291 = vadd.f32 0.0, %v2290
      %v2292 = vpop.f32.mrb[0].mxu0
      %v2293 = vpop.f32.mrb[0].mxu0
      %v2294 = vadd.f32 0.0, %v2293
      %v2295 = vpop.f32.mrb[0].mxu0
      %2296 = vmatprep.mubr.bf16.mxu0 0
      %2297 = vmatmul.mubr.bf16.gmra.mrb[0].mxu0 %v2199
      %v2298 = vpop.f32.mrb[0].mxu0
      %v2299 = vadd.f32 0.0, %v2298
      %v2300 = vpop.f32.mrb[0].mxu0
      %v2301 = vpop.f32.mrb[0].mxu0
      %v2302 = vadd.f32 0.0, %v2301
      %v2303 = vpop.f32.mrb[0].mxu0
      %2304 = vmatprep.mubr.bf16.mxu0 0
      %2305 = vmatmul.mubr.bf16.gmra.mrb[0].mxu0 %v2202
      %v2306 = vpop.f32.mrb[0].mxu0
      %v2307 = vadd.f32 0.0, %v2306
      %v2308 = vpop.f32.mrb[0].mxu0
      %v2309 = vpop.f32.mrb[0].mxu0
      %v2310 = vadd.f32 0.0, %v2309
      %v2311 = vpop.f32.mrb[0].mxu0
      %2312 = vmatprep.mubr.bf16.mxu0 0
      %2313 = vmatmul.mubr.bf16.gmra.mrb[0].mxu0 %v2205
      %v2314 = vpop.f32.mrb[0].mxu0
      %v2315 = vadd.f32 0.0, %v2314
      %v2316 = vpop.f32.mrb[0].mxu0
      %v2317 = vpop.f32.mrb[0].mxu0
      %v2318 = vadd.f32 0.0, %v2317
      %v2319 = vpop.f32.mrb[0].mxu0
      %2320 = vmatprep.mubr.bf16.mxu0 0
      %2321 = vmatmul.mubr.bf16.gmra.mrb[0].mxu0 %v2208
      %v2322 = vpop.f32.mrb[0].mxu0
      %v2323 = vadd.f32 0.0, %v2322
      %v2324 = vpop.f32.mrb[0].mxu0
      %v2325 = vpop.f32.mrb[0].mxu0
      %v2326 = vadd.f32 0.0, %v2325
      %v2327 = vpop.f32.mrb[0].mxu0
      %2328 = vmatprep.mubr.bf16.mxu0 0
      %2329 = vmatmul.mubr.bf16.gmra.mrb[0].mxu0 %v2211
      %v2330 = vpop.f32.mrb[0].mxu0
      %v2331 = vadd.f32 0.0, %v2330
      %v2332 = vpop.f32.mrb[0].mxu0
      %v2333 = vpop.f32.mrb[0].mxu0
      %v2334 = vadd.f32 0.0, %v2333
      %v2335 = vpop.f32.mrb[0].mxu0
      %2336 = vmatprep.mubr.bf16.mxu0 0
      %2337 = vmatmul.mubr.bf16.gmra.mrb[0].mxu0 %v2214
      %v2338 = vpop.f32.mrb[0].mxu0
      %v2339 = vadd.f32 0.0, %v2338
      %v2340 = vpop.f32.mrb[0].mxu0
      %v2341 = vpop.f32.mrb[0].mxu0
      %v2342 = vadd.f32 0.0, %v2341
      %v2343 = vpop.f32.mrb[0].mxu0
      %2344 = vmatprep.mubr.bf16.mxu0 0
      %2345 = vmatmul.mubr.bf16.gmra.mrb[0].mxu0 %v2217
      %v2346 = vpop.f32.mrb[0].mxu0
      %v2347 = vadd.f32 0.0, %v2346
      %v2348 = vpop.f32.mrb[0].mxu0
      %v2349 = vpop.f32.mrb[0].mxu0
      %v2350 = vadd.f32 0.0, %v2349
      %v2351 = vpop.f32.mrb[0].mxu0
      %2352 = vmatprep.mubr.bf16.mxu0 0
      %2353 = vmatmul.mubr.bf16.gmra.mrb[0].mxu0 %v2220
      %v2354 = vpop.f32.mrb[0].mxu0
      %v2355 = vadd.f32 0.0, %v2354
      %v2356 = vpop.f32.mrb[0].mxu0
      %v2357 = vpop.f32.mrb[0].mxu0
      %v2358 = vadd.f32 0.0, %v2357
      %v2359 = vpop.f32.mrb[0].mxu0
      %2360 = vmatprep.mubr.bf16.mxu0 0
      %2361 = vmatmul.mubr.bf16.gmra.mrb[0].mxu0 %v2223
      %v2362 = vpop.f32.mrb[0].mxu0
      %v2363 = vadd.f32 0.0, %v2362
      %v2364 = vpop.f32.mrb[0].mxu0
      %v2365 = vpop.f32.mrb[0].mxu0
      %v2366 = vadd.f32 0.0, %v2365
      %v2367 = vpop.f32.mrb[0].mxu0
      %2368 = vmatprep.mubr.bf16.mxu0 0
      %2369 = vmatmul.mubr.bf16.gmra.mrb[0].mxu0 %v2226
      %v2370 = vpop.f32.mrb[0].mxu0
      %v2371 = vadd.f32 0.0, %v2370
      %v2372 = vpop.f32.mrb[0].mxu0
      %v2373 = vpop.f32.mrb[0].mxu0
      %v2374 = vadd.f32 0.0, %v2373
      %v2375 = vpop.f32.mrb[0].mxu0
      %2376 = vmatprep.mubr.bf16.mxu0 0
      %2377 = vmatmul.mubr.bf16.gmra.mrb[0].mxu0 %v2229
      %v2378 = vpop.f32.mrb[0].mxu0
      %v2379 = vadd.f32 0.0, %v2378
      %v2380 = vpop.f32.mrb[0].mxu0
      %v2381 = vpop.f32.mrb[0].mxu0
      %v2382 = vadd.f32 0.0, %v2381
      %v2383 = vpop.f32.mrb[0].mxu0
      %2384 = vmatprep.mubr.bf16.mxu0 0
      %2385 = vmatmul.mubr.bf16.gmra.mrb[0].mxu0 %v2232
      %v2386 = vpop.f32.mrb[0].mxu0
      %v2387 = vadd.f32 0.0, %v2386
      %v2388 = vpop.f32.mrb[0].mxu0
      %v2389 = vpop.f32.mrb[0].mxu0
      %v2390 = vadd.f32 0.0, %v2389
      %v2391 = vpop.f32.mrb[0].mxu0
      %2392 = vmatprep.mubr.bf16.mxu0 0
      %2393 = vmatmul.mubr.bf16.gmra.mrb[0].mxu0 %v2235
      %v2394 = vpop.f32.mrb[0].mxu0
      %v2395 = vadd.f32 0.0, %v2394
      %v2396 = vpop.f32.mrb[0].mxu0
      %v2397 = vpop.f32.mrb[0].mxu0
      %v2398 = vadd.f32 0.0, %v2397
      %v2399 = vpop.f32.mrb[0].mxu0
      %2400 = vdwg.mxu0
      %v2401 = vadd.f32 %v2106, %v2275
      %v2402 = vadd.f32 %v2107, %v2278
      %v2403 = vadd.f32 %v2108, %v2283
      %v2404 = vadd.f32 %v2109, %v2286
      %v2405 = vadd.f32 %v2110, %v2291
      %v2406 = vadd.f32 %v2111, %v2294
      %v2407 = vadd.f32 %v2112, %v2299
      %v2408 = vadd.f32 %v2113, %v2302
      %v2409 = vadd.f32 %v2114, %v2307
      %v2410 = vadd.f32 %v2115, %v2310
      %v2411 = vadd.f32 %v2116, %v2315
      %v2412 = vadd.f32 %v2117, %v2318
      %v2413 = vadd.f32 %v2118, %v2323
      %v2414 = vadd.f32 %v2119, %v2326
      %v2415 = vadd.f32 %v2120, %v2331
      %v2416 = vadd.f32 %v2121, %v2334
      %v2417 = vadd.f32 %v2122, %v2339
      %v2418 = vadd.f32 %v2123, %v2342
      %v2419 = vadd.f32 %v2124, %v2347
      %v2420 = vadd.f32 %v2125, %v2350
      %v2421 = vadd.f32 %v2126, %v2355
      %v2422 = vadd.f32 %v2127, %v2358
      %v2423 = vadd.f32 %v2128, %v2363
      %v2424 = vadd.f32 %v2129, %v2366
      %v2425 = vadd.f32 %v2130, %v2371
      %v2426 = vadd.f32 %v2131, %v2374
      %v2427 = vadd.f32 %v2132, %v2379
      %v2428 = vadd.f32 %v2133, %v2382
      %v2429 = vadd.f32 %v2134, %v2387
      %v2430 = vadd.f32 %v2135, %v2390
      %v2431 = vadd.f32 %v2136, %v2395
      %v2432 = vadd.f32 %v2137, %v2398
      %v2433 = vld [vmem:[%s2138 + $0x1] sm:$0xff]
      %v2434 = vld [vmem:[%s2138 + $0x9] sm:$0xff]
      %v2435 = vld [vmem:[%s2138 + $0x19] sm:$0xff]
      %v2436 = vld [vmem:[%s2138 + $0x21] sm:$0xff]
      %v2437 = vld [vmem:[%s2138 + $0x31] sm:$0xff]
      %v2438 = vld [vmem:[%s2138 + $0x39] sm:$0xff]
      %v2439 = vld [vmem:[%s2138 + $0x49] sm:$0xff]
      %v2440 = vld [vmem:[%s2138 + $0x51] sm:$0xff]
      %v2441 = vld [vmem:[%s2138 + $0x61] sm:$0xff]
      %v2442 = vld [vmem:[%s2138 + $0x69] sm:$0xff]
      %v2443 = vld [vmem:[%s2138 + $0x79] sm:$0xff]
      %v2444 = vld [vmem:[%s2138 + $0x81] sm:$0xff]
      %v2445 = vld [vmem:[%s2138 + $0x91] sm:$0xff]
      %v2446 = vld [vmem:[%s2138 + $0x99] sm:$0xff]
      %v2447 = vld [vmem:[%s2138 + $0xa9] sm:$0xff]
      %v2448 = vld [vmem:[%s2138 + $0xb1] sm:$0xff]
      %v2449 = vld [vmem:[%s2138 + $0xc1] sm:$0xff]
      %v2450 = vld [vmem:[%s2138 + $0xc9] sm:$0xff]
      %v2451 = vld [vmem:[%s2138 + $0xd9] sm:$0xff]
      %v2452 = vld [vmem:[%s2138 + $0xe1] sm:$0xff]
      %v2453 = vld [vmem:[%s2138 + $0xf1] sm:$0xff]
      %v2454 = vld [vmem:[%s2138 + $0xf9] sm:$0xff]
      %v2455 = vld [vmem:[%s2138 + $0x109] sm:$0xff]
      %v2456 = vld [vmem:[%s2138 + $0x111] sm:$0xff]
      %v2457 = vld [vmem:[%s2138 + $0x121] sm:$0xff]
      %v2458 = vld [vmem:[%s2138 + $0x129] sm:$0xff]
      %v2459 = vld [vmem:[%s2138 + $0x139] sm:$0xff]
      %v2460 = vld [vmem:[%s2138 + $0x141] sm:$0xff]
      %v2461 = vld [vmem:[%s2138 + $0x151] sm:$0xff]
      %v2462 = vld [vmem:[%s2138 + $0x159] sm:$0xff]
      %v2463 = vld [vmem:[%s2138 + $0x169] sm:$0xff]
      %v2464 = vld [vmem:[%s2138 + $0x171] sm:$0xff]
      %v2465 = vpack.c.bf16 %v2434, %v2433
      %v2466 = vpack.c.bf16 %v2436, %v2435
      %v2467 = vpack.c.bf16 %v2438, %v2437
      %v2468 = vpack.c.bf16 %v2440, %v2439
      %v2469 = vpack.c.bf16 %v2442, %v2441
      %v2470 = vpack.c.bf16 %v2444, %v2443
      %v2471 = vpack.c.bf16 %v2446, %v2445
      %v2472 = vpack.c.bf16 %v2448, %v2447
      %v2473 = vpack.c.bf16 %v2450, %v2449
      %v2474 = vpack.c.bf16 %v2452, %v2451
      %v2475 = vpack.c.bf16 %v2454, %v2453
      %v2476 = vpack.c.bf16 %v2456, %v2455
      %v2477 = vpack.c.bf16 %v2458, %v2457
      %v2478 = vpack.c.bf16 %v2460, %v2459
      %v2479 = vpack.c.bf16 %v2462, %v2461
      %v2480 = vpack.c.bf16 %v2464, %v2463
      %s2481 = scalar_lea.vmem %s1, 14
      %v2482 = vld [vmem:[%s2481] sm:$0x3]
      %v2484 = vsel %vm405, %v2465, 0
      %v2487 = vsel %vm405, %v2466, 0
      %v2490 = vsel %vm405, %v2467, 0
      %v2493 = vsel %vm405, %v2468, 0
      %v2496 = vsel %vm405, %v2469, 0
      %v2499 = vsel %vm405, %v2470, 0
      %v2502 = vsel %vm405, %v2471, 0
      %v2505 = vsel %vm405, %v2472, 0
      %v2508 = vsel %vm405, %v2473, 0
      %v2511 = vsel %vm405, %v2474, 0
      %v2514 = vsel %vm405, %v2475, 0
      %v2517 = vsel %vm405, %v2476, 0
      %v2520 = vsel %vm405, %v2477, 0
      %v2523 = vsel %vm405, %v2478, 0
      %v2526 = vsel %vm405, %v2479, 0
      %v2529 = vsel %vm405, %v2480, 0
      %v2532 = vsel %vm585, %v2482, 0
      %2534 = vmatprep.subr.bf16.mxu0 0
      %2535 = vmatpush1.bf16.msra.mxu0 %v2532
      %2536 = vmatprep.subr.bf16.mxu0 0
      %2537 = vmatpush1.bf16.msra.mxu0 0
      %2538 = vmatprep.subr.bf16.mxu0 0
      %2539 = vmatpush1.bf16.msra.mxu0 0
      %2540 = vmatprep.subr.bf16.mxu0 0
      %2541 = vmatpush1.bf16.msra.mxu0 0
      %2542 = vmatprep.subr.bf16.mxu0 0
      %2543 = vmatpush1.bf16.msra.mxu0 0
      %2544 = vmatprep.subr.bf16.mxu0 0
      %2545 = vmatpush1.bf16.msra.mxu0 0
      %2546 = vmatprep.subr.bf16.mxu0 0
      %2547 = vmatpush1.bf16.msra.mxu0 0
      %2548 = vmatprep.subr.bf16.mxu0 0
      %2549 = vmatpush1.bf16.msra.mxu0 0
      %2550 = vmatprep.subr.bf16.mxu0 0
      %2551 = vmatpush1.bf16.msra.mxu0 0
      %2552 = vmatprep.subr.bf16.mxu0 0
      %2553 = vmatpush1.bf16.msra.mxu0 0
      %2554 = vmatprep.subr.bf16.mxu0 0
      %2555 = vmatpush1.bf16.msra.mxu0 0
      %2556 = vmatprep.subr.bf16.mxu0 0
      %2557 = vmatpush1.bf16.msra.mxu0 0
      %2558 = vmatprep.subr.bf16.mxu0 0
      %2559 = vmatpush1.bf16.msra.mxu0 0
      %2560 = vmatprep.subr.bf16.mxu0 0
      %2561 = vmatpush1.bf16.msra.mxu0 0
      %2562 = vmatprep.subr.bf16.mxu0 0
      %2563 = vmatpush1.bf16.msra.mxu0 0
      %2564 = vmatprep.subr.bf16.mxu0 0
      %2565 = vmatpush1.bf16.msra.mxu0 0
      %2566 = vmatprep.mubr.bf16.mxu0 0
      %2567 = vmatmul.mubr.bf16.gmra.mrb[0].mxu0 %v2484
      %v2568 = vpop.f32.mrb[0].mxu0
      %v2569 = vadd.f32 0.0, %v2568
      %v2570 = vpop.f32.mrb[0].mxu0
      %v2571 = vpop.f32.mrb[0].mxu0
      %v2572 = vadd.f32 0.0, %v2571
      %v2573 = vpop.f32.mrb[0].mxu0
      %2574 = vmatprep.mubr.bf16.mxu0 0
      %2575 = vmatmul.mubr.bf16.gmra.mrb[0].mxu0 %v2487
      %v2576 = vpop.f32.mrb[0].mxu0
      %v2577 = vadd.f32 0.0, %v2576
      %v2578 = vpop.f32.mrb[0].mxu0
      %v2579 = vpop.f32.mrb[0].mxu0
      %v2580 = vadd.f32 0.0, %v2579
      %v2581 = vpop.f32.mrb[0].mxu0
      %2582 = vmatprep.mubr.bf16.mxu0 0
      %2583 = vmatmul.mubr.bf16.gmra.mrb[0].mxu0 %v2490
      %v2584 = vpop.f32.mrb[0].mxu0
      %v2585 = vadd.f32 0.0, %v2584
      %v2586 = vpop.f32.mrb[0].mxu0
      %v2587 = vpop.f32.mrb[0].mxu0
      %v2588 = vadd.f32 0.0, %v2587
      %v2589 = vpop.f32.mrb[0].mxu0
      %2590 = vmatprep.mubr.bf16.mxu0 0
      %2591 = vmatmul.mubr.bf16.gmra.mrb[0].mxu0 %v2493
      %v2592 = vpop.f32.mrb[0].mxu0
      %v2593 = vadd.f32 0.0, %v2592
      %v2594 = vpop.f32.mrb[0].mxu0
      %v2595 = vpop.f32.mrb[0].mxu0
      %v2596 = vadd.f32 0.0, %v2595
      %v2597 = vpop.f32.mrb[0].mxu0
      %2598 = vmatprep.mubr.bf16.mxu0 0
      %2599 = vmatmul.mubr.bf16.gmra.mrb[0].mxu0 %v2496
      %v2600 = vpop.f32.mrb[0].mxu0
      %v2601 = vadd.f32 0.0, %v2600
      %v2602 = vpop.f32.mrb[0].mxu0
      %v2603 = vpop.f32.mrb[0].mxu0
      %v2604 = vadd.f32 0.0, %v2603
      %v2605 = vpop.f32.mrb[0].mxu0
      %2606 = vmatprep.mubr.bf16.mxu0 0
      %2607 = vmatmul.mubr.bf16.gmra.mrb[0].mxu0 %v2499
      %v2608 = vpop.f32.mrb[0].mxu0
      %v2609 = vadd.f32 0.0, %v2608
      %v2610 = vpop.f32.mrb[0].mxu0
      %v2611 = vpop.f32.mrb[0].mxu0
      %v2612 = vadd.f32 0.0, %v2611
      %v2613 = vpop.f32.mrb[0].mxu0
      %2614 = vmatprep.mubr.bf16.mxu0 0
      %2615 = vmatmul.mubr.bf16.gmra.mrb[0].mxu0 %v2502
      %v2616 = vpop.f32.mrb[0].mxu0
      %v2617 = vadd.f32 0.0, %v2616
      %v2618 = vpop.f32.mrb[0].mxu0
      %v2619 = vpop.f32.mrb[0].mxu0
      %v2620 = vadd.f32 0.0, %v2619
      %v2621 = vpop.f32.mrb[0].mxu0
      %2622 = vmatprep.mubr.bf16.mxu0 0
      %2623 = vmatmul.mubr.bf16.gmra.mrb[0].mxu0 %v2505
      %v2624 = vpop.f32.mrb[0].mxu0
      %v2625 = vadd.f32 0.0, %v2624
      %v2626 = vpop.f32.mrb[0].mxu0
      %v2627 = vpop.f32.mrb[0].mxu0
      %v2628 = vadd.f32 0.0, %v2627
      %v2629 = vpop.f32.mrb[0].mxu0
      %2630 = vmatprep.mubr.bf16.mxu0 0
      %2631 = vmatmul.mubr.bf16.gmra.mrb[0].mxu0 %v2508
      %v2632 = vpop.f32.mrb[0].mxu0
      %v2633 = vadd.f32 0.0, %v2632
      %v2634 = vpop.f32.mrb[0].mxu0
      %v2635 = vpop.f32.mrb[0].mxu0
      %v2636 = vadd.f32 0.0, %v2635
      %v2637 = vpop.f32.mrb[0].mxu0
      %2638 = vmatprep.mubr.bf16.mxu0 0
      %2639 = vmatmul.mubr.bf16.gmra.mrb[0].mxu0 %v2511
      %v2640 = vpop.f32.mrb[0].mxu0
      %v2641 = vadd.f32 0.0, %v2640
      %v2642 = vpop.f32.mrb[0].mxu0
      %v2643 = vpop.f32.mrb[0].mxu0
      %v2644 = vadd.f32 0.0, %v2643
      %v2645 = vpop.f32.mrb[0].mxu0
      %2646 = vmatprep.mubr.bf16.mxu0 0
      %2647 = vmatmul.mubr.bf16.gmra.mrb[0].mxu0 %v2514
      %v2648 = vpop.f32.mrb[0].mxu0
      %v2649 = vadd.f32 0.0, %v2648
      %v2650 = vpop.f32.mrb[0].mxu0
      %v2651 = vpop.f32.mrb[0].mxu0
      %v2652 = vadd.f32 0.0, %v2651
      %v2653 = vpop.f32.mrb[0].mxu0
      %2654 = vmatprep.mubr.bf16.mxu0 0
      %2655 = vmatmul.mubr.bf16.gmra.mrb[0].mxu0 %v2517
      %v2656 = vpop.f32.mrb[0].mxu0
      %v2657 = vadd.f32 0.0, %v2656
      %v2658 = vpop.f32.mrb[0].mxu0
      %v2659 = vpop.f32.mrb[0].mxu0
      %v2660 = vadd.f32 0.0, %v2659
      %v2661 = vpop.f32.mrb[0].mxu0
      %2662 = vmatprep.mubr.bf16.mxu0 0
      %2663 = vmatmul.mubr.bf16.gmra.mrb[0].mxu0 %v2520
      %v2664 = vpop.f32.mrb[0].mxu0
      %v2665 = vadd.f32 0.0, %v2664
      %v2666 = vpop.f32.mrb[0].mxu0
      %v2667 = vpop.f32.mrb[0].mxu0
      %v2668 = vadd.f32 0.0, %v2667
      %v2669 = vpop.f32.mrb[0].mxu0
      %2670 = vmatprep.mubr.bf16.mxu0 0
      %2671 = vmatmul.mubr.bf16.gmra.mrb[0].mxu0 %v2523
      %v2672 = vpop.f32.mrb[0].mxu0
      %v2673 = vadd.f32 0.0, %v2672
      %v2674 = vpop.f32.mrb[0].mxu0
      %v2675 = vpop.f32.mrb[0].mxu0
      %v2676 = vadd.f32 0.0, %v2675
      %v2677 = vpop.f32.mrb[0].mxu0
      %2678 = vmatprep.mubr.bf16.mxu0 0
      %2679 = vmatmul.mubr.bf16.gmra.mrb[0].mxu0 %v2526
      %v2680 = vpop.f32.mrb[0].mxu0
      %v2681 = vadd.f32 0.0, %v2680
      %v2682 = vpop.f32.mrb[0].mxu0
      %v2683 = vpop.f32.mrb[0].mxu0
      %v2684 = vadd.f32 0.0, %v2683
      %v2685 = vpop.f32.mrb[0].mxu0
      %2686 = vmatprep.mubr.bf16.mxu0 0
      %2687 = vmatmul.mubr.bf16.gmra.mrb[0].mxu0 %v2529
      %v2688 = vpop.f32.mrb[0].mxu0
      %v2689 = vadd.f32 0.0, %v2688
      %v2690 = vpop.f32.mrb[0].mxu0
      %v2691 = vpop.f32.mrb[0].mxu0
      %v2692 = vadd.f32 0.0, %v2691
      %v2693 = vpop.f32.mrb[0].mxu0
      %2694 = vdwg.mxu0
      %v2695 = vadd.f32 %v2401, %v2569
      %v2696 = vadd.f32 %v2402, %v2572
      %v2697 = vadd.f32 %v2403, %v2577
      %v2698 = vadd.f32 %v2404, %v2580
      %v2699 = vadd.f32 %v2405, %v2585
      %v2700 = vadd.f32 %v2406, %v2588
      %v2701 = vadd.f32 %v2407, %v2593
      %v2702 = vadd.f32 %v2408, %v2596
      %v2703 = vadd.f32 %v2409, %v2601
      %v2704 = vadd.f32 %v2410, %v2604
      %v2705 = vadd.f32 %v2411, %v2609
      %v2706 = vadd.f32 %v2412, %v2612
      %v2707 = vadd.f32 %v2413, %v2617
      %v2708 = vadd.f32 %v2414, %v2620
      %v2709 = vadd.f32 %v2415, %v2625
      %v2710 = vadd.f32 %v2416, %v2628
      %v2711 = vadd.f32 %v2417, %v2633
      %v2712 = vadd.f32 %v2418, %v2636
      %v2713 = vadd.f32 %v2419, %v2641
      %v2714 = vadd.f32 %v2420, %v2644
      %v2715 = vadd.f32 %v2421, %v2649
      %v2716 = vadd.f32 %v2422, %v2652
      %v2717 = vadd.f32 %v2423, %v2657
      %v2718 = vadd.f32 %v2424, %v2660
      %v2719 = vadd.f32 %v2425, %v2665
      %v2720 = vadd.f32 %v2426, %v2668
      %v2721 = vadd.f32 %v2427, %v2673
      %v2722 = vadd.f32 %v2428, %v2676
      %v2723 = vadd.f32 %v2429, %v2681
      %v2724 = vadd.f32 %v2430, %v2684
      %v2725 = vadd.f32 %v2431, %v2689
      %v2726 = vadd.f32 %v2432, %v2692
      %v2727 = vld [vmem:[%s2138 + $0x2] sm:$0xff]
      %v2728 = vld [vmem:[%s2138 + $0xa] sm:$0xff]
      %v2729 = vld [vmem:[%s2138 + $0x1a] sm:$0xff]
      %v2730 = vld [vmem:[%s2138 + $0x22] sm:$0xff]
      %v2731 = vld [vmem:[%s2138 + $0x32] sm:$0xff]
      %v2732 = vld [vmem:[%s2138 + $0x3a] sm:$0xff]
      %v2733 = vld [vmem:[%s2138 + $0x4a] sm:$0xff]
      %v2734 = vld [vmem:[%s2138 + $0x52] sm:$0xff]
      %v2735 = vld [vmem:[%s2138 + $0x62] sm:$0xff]
      %v2736 = vld [vmem:[%s2138 + $0x6a] sm:$0xff]
      %v2737 = vld [vmem:[%s2138 + $0x7a] sm:$0xff]
      %v2738 = vld [vmem:[%s2138 + $0x82] sm:$0xff]
      %v2739 = vld [vmem:[%s2138 + $0x92] sm:$0xff]
      %v2740 = vld [vmem:[%s2138 + $0x9a] sm:$0xff]
      %v2741 = vld [vmem:[%s2138 + $0xaa] sm:$0xff]
      %v2742 = vld [vmem:[%s2138 + $0xb2] sm:$0xff]
      %v2743 = vld [vmem:[%s2138 + $0xc2] sm:$0xff]
      %v2744 = vld [vmem:[%s2138 + $0xca] sm:$0xff]
      %v2745 = vld [vmem:[%s2138 + $0xda] sm:$0xff]
      %v2746 = vld [vmem:[%s2138 + $0xe2] sm:$0xff]
      %v2747 = vld [vmem:[%s2138 + $0xf2] sm:$0xff]
      %v2748 = vld [vmem:[%s2138 + $0xfa] sm:$0xff]
      %v2749 = vld [vmem:[%s2138 + $0x10a] sm:$0xff]
      %v2750 = vld [vmem:[%s2138 + $0x112] sm:$0xff]
      %v2751 = vld [vmem:[%s2138 + $0x122] sm:$0xff]
      %v2752 = vld [vmem:[%s2138 + $0x12a] sm:$0xff]
      %v2753 = vld [vmem:[%s2138 + $0x13a] sm:$0xff]
      %v2754 = vld [vmem:[%s2138 + $0x142] sm:$0xff]
      %v2755 = vld [vmem:[%s2138 + $0x152] sm:$0xff]
      %v2756 = vld [vmem:[%s2138 + $0x15a] sm:$0xff]
      %v2757 = vld [vmem:[%s2138 + $0x16a] sm:$0xff]
      %v2758 = vld [vmem:[%s2138 + $0x172] sm:$0xff]
      %v2759 = vpack.c.bf16 %v2728, %v2727
      %v2760 = vpack.c.bf16 %v2730, %v2729
      %v2761 = vpack.c.bf16 %v2732, %v2731
      %v2762 = vpack.c.bf16 %v2734, %v2733
      %v2763 = vpack.c.bf16 %v2736, %v2735
      %v2764 = vpack.c.bf16 %v2738, %v2737
      %v2765 = vpack.c.bf16 %v2740, %v2739
      %v2766 = vpack.c.bf16 %v2742, %v2741
      %v2767 = vpack.c.bf16 %v2744, %v2743
      %v2768 = vpack.c.bf16 %v2746, %v2745
      %v2769 = vpack.c.bf16 %v2748, %v2747
      %v2770 = vpack.c.bf16 %v2750, %v2749
      %v2771 = vpack.c.bf16 %v2752, %v2751
      %v2772 = vpack.c.bf16 %v2754, %v2753
      %v2773 = vpack.c.bf16 %v2756, %v2755
      %v2774 = vpack.c.bf16 %v2758, %v2757
      %s2775 = scalar_lea.vmem %s1, 16
      %v2776 = vld [vmem:[%s2775] sm:$0x3]
      %v2778 = vsel %vm405, %v2759, 0
      %v2781 = vsel %vm405, %v2760, 0
      %v2784 = vsel %vm405, %v2761, 0
      %v2787 = vsel %vm405, %v2762, 0
      %v2790 = vsel %vm405, %v2763, 0
      %v2793 = vsel %vm405, %v2764, 0
      %v2796 = vsel %vm405, %v2765, 0
      %v2799 = vsel %vm405, %v2766, 0
      %v2802 = vsel %vm405, %v2767, 0
      %v2805 = vsel %vm405, %v2768, 0
      %v2808 = vsel %vm405, %v2769, 0
      %v2811 = vsel %vm405, %v2770, 0
      %v2814 = vsel %vm405, %v2771, 0
      %v2817 = vsel %vm405, %v2772, 0
      %v2820 = vsel %vm405, %v2773, 0
      %v2823 = vsel %vm405, %v2774, 0
      %v2826 = vsel %vm585, %v2776, 0
      %2828 = vmatprep.subr.bf16.mxu0 0
      %2829 = vmatpush1.bf16.msra.mxu0 %v2826
      %2830 = vmatprep.subr.bf16.mxu0 0
      %2831 = vmatpush1.bf16.msra.mxu0 0
      %2832 = vmatprep.subr.bf16.mxu0 0
      %2833 = vmatpush1.bf16.msra.mxu0 0
      %2834 = vmatprep.subr.bf16.mxu0 0
      %2835 = vmatpush1.bf16.msra.mxu0 0
      %2836 = vmatprep.subr.bf16.mxu0 0
      %2837 = vmatpush1.bf16.msra.mxu0 0
      %2838 = vmatprep.subr.bf16.mxu0 0
      %2839 = vmatpush1.bf16.msra.mxu0 0
      %2840 = vmatprep.subr.bf16.mxu0 0
      %2841 = vmatpush1.bf16.msra.mxu0 0
      %2842 = vmatprep.subr.bf16.mxu0 0
      %2843 = vmatpush1.bf16.msra.mxu0 0
      %2844 = vmatprep.subr.bf16.mxu0 0
      %2845 = vmatpush1.bf16.msra.mxu0 0
      %2846 = vmatprep.subr.bf16.mxu0 0
      %2847 = vmatpush1.bf16.msra.mxu0 0
      %2848 = vmatprep.subr.bf16.mxu0 0
      %2849 = vmatpush1.bf16.msra.mxu0 0
      %2850 = vmatprep.subr.bf16.mxu0 0
      %2851 = vmatpush1.bf16.msra.mxu0 0
      %2852 = vmatprep.subr.bf16.mxu0 0
      %2853 = vmatpush1.bf16.msra.mxu0 0
      %2854 = vmatprep.subr.bf16.mxu0 0
      %2855 = vmatpush1.bf16.msra.mxu0 0
      %2856 = vmatprep.subr.bf16.mxu0 0
      %2857 = vmatpush1.bf16.msra.mxu0 0
      %2858 = vmatprep.subr.bf16.mxu0 0
      %2859 = vmatpush1.bf16.msra.mxu0 0
      %2860 = vmatprep.mubr.bf16.mxu0 0
      %2861 = vmatmul.mubr.bf16.gmra.mrb[0].mxu0 %v2778
      %v2862 = vpop.f32.mrb[0].mxu0
      %v2863 = vadd.f32 0.0, %v2862
      %v2864 = vpop.f32.mrb[0].mxu0
      %v2865 = vpop.f32.mrb[0].mxu0
      %v2866 = vadd.f32 0.0, %v2865
      %v2867 = vpop.f32.mrb[0].mxu0
      %2868 = vmatprep.mubr.bf16.mxu0 0
      %2869 = vmatmul.mubr.bf16.gmra.mrb[0].mxu0 %v2781
      %v2870 = vpop.f32.mrb[0].mxu0
      %v2871 = vadd.f32 0.0, %v2870
      %v2872 = vpop.f32.mrb[0].mxu0
      %v2873 = vpop.f32.mrb[0].mxu0
      %v2874 = vadd.f32 0.0, %v2873
      %v2875 = vpop.f32.mrb[0].mxu0
      %2876 = vmatprep.mubr.bf16.mxu0 0
      %2877 = vmatmul.mubr.bf16.gmra.mrb[0].mxu0 %v2784
      %v2878 = vpop.f32.mrb[0].mxu0
      %v2879 = vadd.f32 0.0, %v2878
      %v2880 = vpop.f32.mrb[0].mxu0
      %v2881 = vpop.f32.mrb[0].mxu0
      %v2882 = vadd.f32 0.0, %v2881
      %v2883 = vpop.f32.mrb[0].mxu0
      %2884 = vmatprep.mubr.bf16.mxu0 0
      %2885 = vmatmul.mubr.bf16.gmra.mrb[0].mxu0 %v2787
      %v2886 = vpop.f32.mrb[0].mxu0
      %v2887 = vadd.f32 0.0, %v2886
      %v2888 = vpop.f32.mrb[0].mxu0
      %v2889 = vpop.f32.mrb[0].mxu0
      %v2890 = vadd.f32 0.0, %v2889
      %v2891 = vpop.f32.mrb[0].mxu0
      %2892 = vmatprep.mubr.bf16.mxu0 0
      %2893 = vmatmul.mubr.bf16.gmra.mrb[0].mxu0 %v2790
      %v2894 = vpop.f32.mrb[0].mxu0
      %v2895 = vadd.f32 0.0, %v2894
      %v2896 = vpop.f32.mrb[0].mxu0
      %v2897 = vpop.f32.mrb[0].mxu0
      %v2898 = vadd.f32 0.0, %v2897
      %v2899 = vpop.f32.mrb[0].mxu0
      %2900 = vmatprep.mubr.bf16.mxu0 0
      %2901 = vmatmul.mubr.bf16.gmra.mrb[0].mxu0 %v2793
      %v2902 = vpop.f32.mrb[0].mxu0
      %v2903 = vadd.f32 0.0, %v2902
      %v2904 = vpop.f32.mrb[0].mxu0
      %v2905 = vpop.f32.mrb[0].mxu0
      %v2906 = vadd.f32 0.0, %v2905
      %v2907 = vpop.f32.mrb[0].mxu0
      %2908 = vmatprep.mubr.bf16.mxu0 0
      %2909 = vmatmul.mubr.bf16.gmra.mrb[0].mxu0 %v2796
      %v2910 = vpop.f32.mrb[0].mxu0
      %v2911 = vadd.f32 0.0, %v2910
      %v2912 = vpop.f32.mrb[0].mxu0
      %v2913 = vpop.f32.mrb[0].mxu0
      %v2914 = vadd.f32 0.0, %v2913
      %v2915 = vpop.f32.mrb[0].mxu0
      %2916 = vmatprep.mubr.bf16.mxu0 0
      %2917 = vmatmul.mubr.bf16.gmra.mrb[0].mxu0 %v2799
      %v2918 = vpop.f32.mrb[0].mxu0
      %v2919 = vadd.f32 0.0, %v2918
      %v2920 = vpop.f32.mrb[0].mxu0
      %v2921 = vpop.f32.mrb[0].mxu0
      %v2922 = vadd.f32 0.0, %v2921
      %v2923 = vpop.f32.mrb[0].mxu0
      %2924 = vmatprep.mubr.bf16.mxu0 0
      %2925 = vmatmul.mubr.bf16.gmra.mrb[0].mxu0 %v2802
      %v2926 = vpop.f32.mrb[0].mxu0
      %v2927 = vadd.f32 0.0, %v2926
      %v2928 = vpop.f32.mrb[0].mxu0
      %v2929 = vpop.f32.mrb[0].mxu0
      %v2930 = vadd.f32 0.0, %v2929
      %v2931 = vpop.f32.mrb[0].mxu0
      %2932 = vmatprep.mubr.bf16.mxu0 0
      %2933 = vmatmul.mubr.bf16.gmra.mrb[0].mxu0 %v2805
      %v2934 = vpop.f32.mrb[0].mxu0
      %v2935 = vadd.f32 0.0, %v2934
      %v2936 = vpop.f32.mrb[0].mxu0
      %v2937 = vpop.f32.mrb[0].mxu0
      %v2938 = vadd.f32 0.0, %v2937
      %v2939 = vpop.f32.mrb[0].mxu0
      %2940 = vmatprep.mubr.bf16.mxu0 0
      %2941 = vmatmul.mubr.bf16.gmra.mrb[0].mxu0 %v2808
      %v2942 = vpop.f32.mrb[0].mxu0
      %v2943 = vadd.f32 0.0, %v2942
      %v2944 = vpop.f32.mrb[0].mxu0
      %v2945 = vpop.f32.mrb[0].mxu0
      %v2946 = vadd.f32 0.0, %v2945
      %v2947 = vpop.f32.mrb[0].mxu0
      %2948 = vmatprep.mubr.bf16.mxu0 0
      %2949 = vmatmul.mubr.bf16.gmra.mrb[0].mxu0 %v2811
      %v2950 = vpop.f32.mrb[0].mxu0
      %v2951 = vadd.f32 0.0, %v2950
      %v2952 = vpop.f32.mrb[0].mxu0
      %v2953 = vpop.f32.mrb[0].mxu0
      %v2954 = vadd.f32 0.0, %v2953
      %v2955 = vpop.f32.mrb[0].mxu0
      %2956 = vmatprep.mubr.bf16.mxu0 0
      %2957 = vmatmul.mubr.bf16.gmra.mrb[0].mxu0 %v2814
      %v2958 = vpop.f32.mrb[0].mxu0
      %v2959 = vadd.f32 0.0, %v2958
      %v2960 = vpop.f32.mrb[0].mxu0
      %v2961 = vpop.f32.mrb[0].mxu0
      %v2962 = vadd.f32 0.0, %v2961
      %v2963 = vpop.f32.mrb[0].mxu0
      %2964 = vmatprep.mubr.bf16.mxu0 0
      %2965 = vmatmul.mubr.bf16.gmra.mrb[0].mxu0 %v2817
      %v2966 = vpop.f32.mrb[0].mxu0
      %v2967 = vadd.f32 0.0, %v2966
      %v2968 = vpop.f32.mrb[0].mxu0
      %v2969 = vpop.f32.mrb[0].mxu0
      %v2970 = vadd.f32 0.0, %v2969
      %v2971 = vpop.f32.mrb[0].mxu0
      %2972 = vmatprep.mubr.bf16.mxu0 0
      %2973 = vmatmul.mubr.bf16.gmra.mrb[0].mxu0 %v2820
      %v2974 = vpop.f32.mrb[0].mxu0
      %v2975 = vadd.f32 0.0, %v2974
      %v2976 = vpop.f32.mrb[0].mxu0
      %v2977 = vpop.f32.mrb[0].mxu0
      %v2978 = vadd.f32 0.0, %v2977
      %v2979 = vpop.f32.mrb[0].mxu0
      %2980 = vmatprep.mubr.bf16.mxu0 0
      %2981 = vmatmul.mubr.bf16.gmra.mrb[0].mxu0 %v2823
      %v2982 = vpop.f32.mrb[0].mxu0
      %v2983 = vadd.f32 0.0, %v2982
      %v2984 = vpop.f32.mrb[0].mxu0
      %v2985 = vpop.f32.mrb[0].mxu0
      %v2986 = vadd.f32 0.0, %v2985
      %v2987 = vpop.f32.mrb[0].mxu0
      %2988 = vdwg.mxu0
      %v2989 = vadd.f32 %v2695, %v2863
      %v2990 = vadd.f32 %v2696, %v2866
      %v2991 = vadd.f32 %v2697, %v2871
      %v2992 = vadd.f32 %v2698, %v2874
      %v2993 = vadd.f32 %v2699, %v2879
      %v2994 = vadd.f32 %v2700, %v2882
      %v2995 = vadd.f32 %v2701, %v2887
      %v2996 = vadd.f32 %v2702, %v2890
      %v2997 = vadd.f32 %v2703, %v2895
      %v2998 = vadd.f32 %v2704, %v2898
      %v2999 = vadd.f32 %v2705, %v2903
      %v3000 = vadd.f32 %v2706, %v2906
      %v3001 = vadd.f32 %v2707, %v2911
      %v3002 = vadd.f32 %v2708, %v2914
      %v3003 = vadd.f32 %v2709, %v2919
      %v3004 = vadd.f32 %v2710, %v2922
      %v3005 = vadd.f32 %v2711, %v2927
      %v3006 = vadd.f32 %v2712, %v2930
      %v3007 = vadd.f32 %v2713, %v2935
      %v3008 = vadd.f32 %v2714, %v2938
      %v3009 = vadd.f32 %v2715, %v2943
      %v3010 = vadd.f32 %v2716, %v2946
      %v3011 = vadd.f32 %v2717, %v2951
      %v3012 = vadd.f32 %v2718, %v2954
      %v3013 = vadd.f32 %v2719, %v2959
      %v3014 = vadd.f32 %v2720, %v2962
      %v3015 = vadd.f32 %v2721, %v2967
      %v3016 = vadd.f32 %v2722, %v2970
      %v3017 = vadd.f32 %v2723, %v2975
      %v3018 = vadd.f32 %v2724, %v2978
      %v3019 = vadd.f32 %v2725, %v2983
      %v3020 = vadd.f32 %v2726, %v2986
      %v3021 = vld [vmem:[%s2] sm:$0x1]
      %v3023 = vlaneseq
      %v3024 = vshrl.u32 %v3023, 7
      %v3025 = vsub.s32 0, %v3024
      %v3026 = vrot.slane %v3021, %v3025
      %v3028 = vadd.f32 %v2989, %v3026
      %v3029 = vadd.f32 %v2990, %v3026
      %v3030 = vadd.f32 %v2991, %v3026
      %v3031 = vadd.f32 %v2992, %v3026
      %v3032 = vadd.f32 %v2993, %v3026
      %v3033 = vadd.f32 %v2994, %v3026
      %v3034 = vadd.f32 %v2995, %v3026
      %v3035 = vadd.f32 %v2996, %v3026
      %v3036 = vadd.f32 %v2997, %v3026
      %v3037 = vadd.f32 %v2998, %v3026
      %v3038 = vadd.f32 %v2999, %v3026
      %v3039 = vadd.f32 %v3000, %v3026
      %v3040 = vadd.f32 %v3001, %v3026
      %v3041 = vadd.f32 %v3002, %v3026
      %v3042 = vadd.f32 %v3003, %v3026
      %v3043 = vadd.f32 %v3004, %v3026
      %v3044 = vadd.f32 %v3005, %v3026
      %v3045 = vadd.f32 %v3006, %v3026
      %v3046 = vadd.f32 %v3007, %v3026
      %v3047 = vadd.f32 %v3008, %v3026
      %v3048 = vadd.f32 %v3009, %v3026
      %v3049 = vadd.f32 %v3010, %v3026
      %v3050 = vadd.f32 %v3011, %v3026
      %v3051 = vadd.f32 %v3012, %v3026
      %v3052 = vadd.f32 %v3013, %v3026
      %v3053 = vadd.f32 %v3014, %v3026
      %v3054 = vadd.f32 %v3015, %v3026
      %v3055 = vadd.f32 %v3016, %v3026
      %v3056 = vadd.f32 %v3017, %v3026
      %v3057 = vadd.f32 %v3018, %v3026
      %v3058 = vadd.f32 %v3019, %v3026
      %v3059 = vadd.f32 %v3020, %v3026
      %v3060 = vmax.f32 %v3028, 0.0
      %v3061 = vmax.f32 %v3029, 0.0
      %v3062 = vmax.f32 %v3030, 0.0
      %v3063 = vmax.f32 %v3031, 0.0
      %v3064 = vmax.f32 %v3032, 0.0
      %v3065 = vmax.f32 %v3033, 0.0
      %v3066 = vmax.f32 %v3034, 0.0
      %v3067 = vmax.f32 %v3035, 0.0
      %v3068 = vmax.f32 %v3036, 0.0
      %v3069 = vmax.f32 %v3037, 0.0
      %v3070 = vmax.f32 %v3038, 0.0
      %v3071 = vmax.f32 %v3039, 0.0
      %v3072 = vmax.f32 %v3040, 0.0
      %v3073 = vmax.f32 %v3041, 0.0
      %v3074 = vmax.f32 %v3042, 0.0
      %v3075 = vmax.f32 %v3043, 0.0
      %v3076 = vmax.f32 %v3044, 0.0
      %v3077 = vmax.f32 %v3045, 0.0
      %v3078 = vmax.f32 %v3046, 0.0
      %v3079 = vmax.f32 %v3047, 0.0
      %v3080 = vmax.f32 %v3048, 0.0
      %v3081 = vmax.f32 %v3049, 0.0
      %v3082 = vmax.f32 %v3050, 0.0
      %v3083 = vmax.f32 %v3051, 0.0
      %v3084 = vmax.f32 %v3052, 0.0
      %v3085 = vmax.f32 %v3053, 0.0
      %v3086 = vmax.f32 %v3054, 0.0
      %v3087 = vmax.f32 %v3055, 0.0
      %v3088 = vmax.f32 %v3056, 0.0
      %v3089 = vmax.f32 %v3057, 0.0
      %v3090 = vmax.f32 %v3058, 0.0
      %v3091 = vmax.f32 %v3059, 0.0
      %s3092 = scalar_lea.vmem [#allocation3], 24
      %3093 = vst [vmem:[%s3092 + $0x1] sm:$0xff] %v3060
      %3094 = vst [vmem:[%s3092 + $0x9] sm:$0xff] %v3061
      %3095 = vst [vmem:[%s3092 + $0x19] sm:$0xff] %v3062
      %3096 = vst [vmem:[%s3092 + $0x21] sm:$0xff] %v3063
      %3097 = vst [vmem:[%s3092 + $0x31] sm:$0xff] %v3064
      %3098 = vst [vmem:[%s3092 + $0x39] sm:$0xff] %v3065
      %3099 = vst [vmem:[%s3092 + $0x49] sm:$0xff] %v3066
      %3100 = vst [vmem:[%s3092 + $0x51] sm:$0xff] %v3067
      %3101 = vst [vmem:[%s3092 + $0x61] sm:$0xff] %v3068
      %3102 = vst [vmem:[%s3092 + $0x69] sm:$0xff] %v3069
      %3103 = vst [vmem:[%s3092 + $0x79] sm:$0xff] %v3070
      %3104 = vst [vmem:[%s3092 + $0x81] sm:$0xff] %v3071
      %3105 = vst [vmem:[%s3092 + $0x91] sm:$0xff] %v3072
      %3106 = vst [vmem:[%s3092 + $0x99] sm:$0xff] %v3073
      %3107 = vst [vmem:[%s3092 + $0xa9] sm:$0xff] %v3074
      %3108 = vst [vmem:[%s3092 + $0xb1] sm:$0xff] %v3075
      %3109 = vst [vmem:[%s3092 + $0xc1] sm:$0xff] %v3076
      %3110 = vst [vmem:[%s3092 + $0xc9] sm:$0xff] %v3077
      %3111 = vst [vmem:[%s3092 + $0xd9] sm:$0xff] %v3078
      %3112 = vst [vmem:[%s3092 + $0xe1] sm:$0xff] %v3079
      %3113 = vst [vmem:[%s3092 + $0xf1] sm:$0xff] %v3080
      %3114 = vst [vmem:[%s3092 + $0xf9] sm:$0xff] %v3081
      %3115 = vst [vmem:[%s3092 + $0x109] sm:$0xff] %v3082
      %3116 = vst [vmem:[%s3092 + $0x111] sm:$0xff] %v3083
      %3117 = vst [vmem:[%s3092 + $0x121] sm:$0xff] %v3084
      %3118 = vst [vmem:[%s3092 + $0x129] sm:$0xff] %v3085
      %3119 = vst [vmem:[%s3092 + $0x139] sm:$0xff] %v3086
      %3120 = vst [vmem:[%s3092 + $0x141] sm:$0xff] %v3087
      %3121 = vst [vmem:[%s3092 + $0x151] sm:$0xff] %v3088
      %3122 = vst [vmem:[%s3092 + $0x159] sm:$0xff] %v3089
      %3123 = vst [vmem:[%s3092 + $0x169] sm:$0xff] %v3090
      %3124 = vst [vmem:[%s3092 + $0x171] sm:$0xff] %v3091
      %v3125 = vld [vmem:[#allocation3] sm:$0xff]
      %v3126 = vld [vmem:[#allocation3 + $0x8] sm:$0xff]
      %v3127 = vld [vmem:[#allocation3 + $0x18] sm:$0xff]
      %v3128 = vld [vmem:[#allocation3 + $0x20] sm:$0xff]
      %v3129 = vld [vmem:[#allocation3 + $0x30] sm:$0xff]
      %v3130 = vld [vmem:[#allocation3 + $0x38] sm:$0xff]
      %v3131 = vld [vmem:[#allocation3 + $0x48] sm:$0xff]
      %v3132 = vld [vmem:[#allocation3 + $0x50] sm:$0xff]
      %v3133 = vld [vmem:[#allocation3 + $0x60] sm:$0xff]
      %v3134 = vld [vmem:[#allocation3 + $0x68] sm:$0xff]
      %v3135 = vld [vmem:[#allocation3 + $0x78] sm:$0xff]
      %v3136 = vld [vmem:[#allocation3 + $0x80] sm:$0xff]
      %v3137 = vld [vmem:[#allocation3 + $0x90] sm:$0xff]
      %v3138 = vld [vmem:[#allocation3 + $0x98] sm:$0xff]
      %v3139 = vld [vmem:[#allocation3 + $0xa8] sm:$0xff]
      %v3140 = vld [vmem:[#allocation3 + $0xb0] sm:$0xff]
      %v3141 = vld [vmem:[#allocation3 + $0xc0] sm:$0xff]
      %v3142 = vld [vmem:[#allocation3 + $0xc8] sm:$0xff]
      %v3143 = vld [vmem:[#allocation3 + $0xd8] sm:$0xff]
      %v3144 = vld [vmem:[#allocation3 + $0xe0] sm:$0xff]
      %v3145 = vld [vmem:[#allocation3 + $0xf0] sm:$0xff]
      %v3146 = vld [vmem:[#allocation3 + $0xf8] sm:$0xff]
      %v3147 = vld [vmem:[#allocation3 + $0x108] sm:$0xff]
      %v3148 = vld [vmem:[#allocation3 + $0x110] sm:$0xff]
      %v3149 = vld [vmem:[#allocation3 + $0x120] sm:$0xff]
      %v3150 = vld [vmem:[#allocation3 + $0x128] sm:$0xff]
      %v3151 = vld [vmem:[#allocation3 + $0x138] sm:$0xff]
      %v3152 = vld [vmem:[#allocation3 + $0x140] sm:$0xff]
      %v3153 = vld [vmem:[#allocation3 + $0x150] sm:$0xff]
      %v3154 = vld [vmem:[#allocation3 + $0x158] sm:$0xff]
      %v3155 = vld [vmem:[#allocation3 + $0x168] sm:$0xff]
      %v3156 = vld [vmem:[#allocation3 + $0x170] sm:$0xff]
      %v3157 = vpack.c.bf16 %v3126, %v3125
      %v3158 = vpack.c.bf16 %v3128, %v3127
      %v3159 = vpack.c.bf16 %v3130, %v3129
      %v3160 = vpack.c.bf16 %v3132, %v3131
      %v3161 = vpack.c.bf16 %v3134, %v3133
      %v3162 = vpack.c.bf16 %v3136, %v3135
      %v3163 = vpack.c.bf16 %v3138, %v3137
      %v3164 = vpack.c.bf16 %v3140, %v3139
      %v3165 = vpack.c.bf16 %v3142, %v3141
      %v3166 = vpack.c.bf16 %v3144, %v3143
      %v3167 = vpack.c.bf16 %v3146, %v3145
      %v3168 = vpack.c.bf16 %v3148, %v3147
      %v3169 = vpack.c.bf16 %v3150, %v3149
      %v3170 = vpack.c.bf16 %v3152, %v3151
      %v3171 = vpack.c.bf16 %v3154, %v3153
      %v3172 = vpack.c.bf16 %v3156, %v3155
      %v3173 = vld [vmem:[%s3] sm:$0xf]
      %v3174 = vld [vmem:[%s3 + $0x4] sm:$0xf]
      %v3175 = vld [vmem:[%s3 + $0x8] sm:$0xf]
      %v3176 = vld [vmem:[%s3 + $0xc] sm:$0xf]
      %v3177 = vld [vmem:[%s3 + $0x10] sm:$0xf]
      %v3178 = vld [vmem:[%s3 + $0x14] sm:$0xf]
      %v3179 = vld [vmem:[%s3 + $0x18] sm:$0xf]
      %v3180 = vld [vmem:[%s3 + $0x1c] sm:$0xf]
      %v3181 = vld [vmem:[%s3 + $0x20] sm:$0xf]
      %v3182 = vld [vmem:[%s3 + $0x24] sm:$0xf]
      %v3183 = vld [vmem:[%s3 + $0x28] sm:$0xf]
      %v3184 = vld [vmem:[%s3 + $0x2c] sm:$0xf]
      %v3185 = vld [vmem:[%s3 + $0x30] sm:$0xf]
      %v3186 = vld [vmem:[%s3 + $0x34] sm:$0xf]
      %v3187 = vld [vmem:[%s3 + $0x38] sm:$0xf]
      %v3188 = vld [vmem:[%s3 + $0x3c] sm:$0xf]
      %v3189 = vld [vmem:[#allocation3 + $0x1] sm:$0xff]
      %v3190 = vld [vmem:[#allocation3 + $0x9] sm:$0xff]
      %v3191 = vld [vmem:[#allocation3 + $0x19] sm:$0xff]
      %v3192 = vld [vmem:[#allocation3 + $0x21] sm:$0xff]
      %v3193 = vld [vmem:[#allocation3 + $0x31] sm:$0xff]
      %v3194 = vld [vmem:[#allocation3 + $0x39] sm:$0xff]
      %v3195 = vld [vmem:[#allocation3 + $0x49] sm:$0xff]
      %v3196 = vld [vmem:[#allocation3 + $0x51] sm:$0xff]
      %v3197 = vld [vmem:[#allocation3 + $0x61] sm:$0xff]
      %v3198 = vld [vmem:[#allocation3 + $0x69] sm:$0xff]
      %v3199 = vld [vmem:[#allocation3 + $0x79] sm:$0xff]
      %v3200 = vld [vmem:[#allocation3 + $0x81] sm:$0xff]
      %v3201 = vld [vmem:[#allocation3 + $0x91] sm:$0xff]
      %v3202 = vld [vmem:[#allocation3 + $0x99] sm:$0xff]
      %v3203 = vld [vmem:[#allocation3 + $0xa9] sm:$0xff]
      %v3204 = vld [vmem:[#allocation3 + $0xb1] sm:$0xff]
      %v3205 = vld [vmem:[#allocation3 + $0xc1] sm:$0xff]
      %v3206 = vld [vmem:[#allocation3 + $0xc9] sm:$0xff]
      %v3207 = vld [vmem:[#allocation3 + $0xd9] sm:$0xff]
      %v3208 = vld [vmem:[#allocation3 + $0xe1] sm:$0xff]
      %v3209 = vld [vmem:[#allocation3 + $0xf1] sm:$0xff]
      %v3210 = vld [vmem:[#allocation3 + $0xf9] sm:$0xff]
      %v3211 = vld [vmem:[#allocation3 + $0x109] sm:$0xff]
      %v3212 = vld [vmem:[#allocation3 + $0x111] sm:$0xff]
      %v3213 = vld [vmem:[#allocation3 + $0x121] sm:$0xff]
      %v3214 = vld [vmem:[#allocation3 + $0x129] sm:$0xff]
      %v3215 = vld [vmem:[#allocation3 + $0x139] sm:$0xff]
      %v3216 = vld [vmem:[#allocation3 + $0x141] sm:$0xff]
      %v3217 = vld [vmem:[#allocation3 + $0x151] sm:$0xff]
      %v3218 = vld [vmem:[#allocation3 + $0x159] sm:$0xff]
      %v3219 = vld [vmem:[#allocation3 + $0x169] sm:$0xff]
      %v3220 = vld [vmem:[#allocation3 + $0x171] sm:$0xff]
      %v3221 = vpack.c.bf16 %v3190, %v3189
      %v3222 = vpack.c.bf16 %v3192, %v3191
      %v3223 = vpack.c.bf16 %v3194, %v3193
      %v3224 = vpack.c.bf16 %v3196, %v3195
      %v3225 = vpack.c.bf16 %v3198, %v3197
      %v3226 = vpack.c.bf16 %v3200, %v3199
      %v3227 = vpack.c.bf16 %v3202, %v3201
      %v3228 = vpack.c.bf16 %v3204, %v3203
      %v3229 = vpack.c.bf16 %v3206, %v3205
      %v3230 = vpack.c.bf16 %v3208, %v3207
      %v3231 = vpack.c.bf16 %v3210, %v3209
      %v3232 = vpack.c.bf16 %v3212, %v3211
      %v3233 = vpack.c.bf16 %v3214, %v3213
      %v3234 = vpack.c.bf16 %v3216, %v3215
      %v3235 = vpack.c.bf16 %v3218, %v3217
      %v3236 = vpack.c.bf16 %v3220, %v3219
      %s3237 = scalar_lea.vmem %s3, 64
      %v3238 = vld [vmem:[%s3237] sm:$0xf]
      %v3239 = vld [vmem:[%s3237 + $0x4] sm:$0xf]
      %v3240 = vld [vmem:[%s3237 + $0x8] sm:$0xf]
      %v3241 = vld [vmem:[%s3237 + $0xc] sm:$0xf]
      %v3242 = vld [vmem:[%s3237 + $0x10] sm:$0xf]
      %v3243 = vld [vmem:[%s3237 + $0x14] sm:$0xf]
      %v3244 = vld [vmem:[%s3237 + $0x18] sm:$0xf]
      %v3245 = vld [vmem:[%s3237 + $0x1c] sm:$0xf]
      %v3246 = vld [vmem:[%s3237 + $0x20] sm:$0xf]
      %v3247 = vld [vmem:[%s3237 + $0x24] sm:$0xf]
      %v3248 = vld [vmem:[%s3237 + $0x28] sm:$0xf]
      %v3249 = vld [vmem:[%s3237 + $0x2c] sm:$0xf]
      %v3250 = vld [vmem:[%s3237 + $0x30] sm:$0xf]
      %v3251 = vld [vmem:[%s3237 + $0x34] sm:$0xf]
      %v3252 = vld [vmem:[%s3237 + $0x38] sm:$0xf]
      %v3253 = vld [vmem:[%s3237 + $0x3c] sm:$0xf]
      %v3270 = vunpack.c.l.b16 %v3238
      %v3271 = vunpack.c.l.b16 %v3239
      %v3272 = vunpack.c.l.b16 %v3240
      %v3273 = vunpack.c.l.b16 %v3241
      %v3274 = vunpack.c.l.b16 %v3242
      %v3275 = vunpack.c.l.b16 %v3243
      %v3276 = vunpack.c.l.b16 %v3244
      %v3277 = vunpack.c.l.b16 %v3245
      %v3278 = vunpack.c.l.b16 %v3246
      %v3279 = vunpack.c.l.b16 %v3247
      %v3280 = vunpack.c.l.b16 %v3248
      %v3281 = vunpack.c.l.b16 %v3249
      %v3282 = vunpack.c.l.b16 %v3250
      %v3283 = vunpack.c.l.b16 %v3251
      %v3284 = vunpack.c.l.b16 %v3252
      %v3285 = vunpack.c.l.b16 %v3253
      %v3286 = vpack.c.b16 %v3271, %v3270
      %v3287 = vpack.c.b16 %v3273, %v3272
      %v3288 = vpack.c.b16 %v3275, %v3274
      %v3289 = vpack.c.b16 %v3277, %v3276
      %v3290 = vpack.c.b16 %v3279, %v3278
      %v3291 = vpack.c.b16 %v3281, %v3280
      %v3292 = vpack.c.b16 %v3283, %v3282
      %v3293 = vpack.c.b16 %v3285, %v3284
      %3302 = vmatprep.subr.bf16.mxu0 0
      %3303 = vmatpush1.bf16.msra.mxu0 %v3286
      %3304 = vmatprep.subr.bf16.mxu0 0
      %3305 = vmatpush1.bf16.msra.mxu0 %v3287
      %3306 = vmatprep.subr.bf16.mxu0 0
      %3307 = vmatpush1.bf16.msra.mxu0 %v3288
      %3308 = vmatprep.subr.bf16.mxu0 0
      %3309 = vmatpush1.bf16.msra.mxu0 %v3289
      %3310 = vmatprep.subr.bf16.mxu0 0
      %3311 = vmatpush1.bf16.msra.mxu0 %v3290
      %3312 = vmatprep.subr.bf16.mxu0 0
      %3313 = vmatpush1.bf16.msra.mxu0 %v3291
      %3314 = vmatprep.subr.bf16.mxu0 0
      %3315 = vmatpush1.bf16.msra.mxu0 %v3292
      %3316 = vmatprep.subr.bf16.mxu0 0
      %3317 = vmatpush1.bf16.msra.mxu0 %v3293
      %3318 = vmatprep.subr.bf16.mxu0 0
      %3319 = vmatpush1.bf16.msra.mxu0 0
      %3320 = vmatprep.subr.bf16.mxu0 0
      %3321 = vmatpush1.bf16.msra.mxu0 0
      %3322 = vmatprep.subr.bf16.mxu0 0
      %3323 = vmatpush1.bf16.msra.mxu0 0
      %3324 = vmatprep.subr.bf16.mxu0 0
      %3325 = vmatpush1.bf16.msra.mxu0 0
      %3326 = vmatprep.subr.bf16.mxu0 0
      %3327 = vmatpush1.bf16.msra.mxu0 0
      %3328 = vmatprep.subr.bf16.mxu0 0
      %3329 = vmatpush1.bf16.msra.mxu0 0
      %3330 = vmatprep.subr.bf16.mxu0 0
      %3331 = vmatpush1.bf16.msra.mxu0 0
      %3332 = vmatprep.subr.bf16.mxu0 0
      %3333 = vmatpush1.bf16.msra.mxu0 0
      %3334 = vmatprep.mubr.bf16.mxu0 0
      %3335 = vmatmul.mubr.bf16.gmra.mrb[0].mxu0 %v3221
      %v3336 = vpop.f32.mrb[0].mxu0
      %v3337 = vadd.f32 0.0, %v3336
      %v3338 = vpop.f32.mrb[0].mxu0
      %v3339 = vpop.f32.mrb[0].mxu0
      %v3340 = vadd.f32 0.0, %v3339
      %v3341 = vpop.f32.mrb[0].mxu0
      %3342 = vmatprep.mubr.bf16.mxu0 0
      %3343 = vmatmul.mubr.bf16.gmra.mrb[0].mxu0 %v3222
      %v3344 = vpop.f32.mrb[0].mxu0
      %v3345 = vadd.f32 0.0, %v3344
      %v3346 = vpop.f32.mrb[0].mxu0
      %v3347 = vpop.f32.mrb[0].mxu0
      %v3348 = vadd.f32 0.0, %v3347
      %v3349 = vpop.f32.mrb[0].mxu0
      %3350 = vmatprep.mubr.bf16.mxu0 0
      %3351 = vmatmul.mubr.bf16.gmra.mrb[0].mxu0 %v3223
      %v3352 = vpop.f32.mrb[0].mxu0
      %v3353 = vadd.f32 0.0, %v3352
      %v3354 = vpop.f32.mrb[0].mxu0
      %v3355 = vpop.f32.mrb[0].mxu0
      %v3356 = vadd.f32 0.0, %v3355
      %v3357 = vpop.f32.mrb[0].mxu0
      %3358 = vmatprep.mubr.bf16.mxu0 0
      %3359 = vmatmul.mubr.bf16.gmra.mrb[0].mxu0 %v3224
      %v3360 = vpop.f32.mrb[0].mxu0
      %v3361 = vadd.f32 0.0, %v3360
      %v3362 = vpop.f32.mrb[0].mxu0
      %v3363 = vpop.f32.mrb[0].mxu0
      %v3364 = vadd.f32 0.0, %v3363
      %v3365 = vpop.f32.mrb[0].mxu0
      %3366 = vmatprep.mubr.bf16.mxu0 0
      %3367 = vmatmul.mubr.bf16.gmra.mrb[0].mxu0 %v3225
      %v3368 = vpop.f32.mrb[0].mxu0
      %v3369 = vadd.f32 0.0, %v3368
      %v3370 = vpop.f32.mrb[0].mxu0
      %v3371 = vpop.f32.mrb[0].mxu0
      %v3372 = vadd.f32 0.0, %v3371
      %v3373 = vpop.f32.mrb[0].mxu0
      %3374 = vmatprep.mubr.bf16.mxu0 0
      %3375 = vmatmul.mubr.bf16.gmra.mrb[0].mxu0 %v3226
      %v3376 = vpop.f32.mrb[0].mxu0
      %v3377 = vadd.f32 0.0, %v3376
      %v3378 = vpop.f32.mrb[0].mxu0
      %v3379 = vpop.f32.mrb[0].mxu0
      %v3380 = vadd.f32 0.0, %v3379
      %v3381 = vpop.f32.mrb[0].mxu0
      %3382 = vmatprep.mubr.bf16.mxu0 0
      %3383 = vmatmul.mubr.bf16.gmra.mrb[0].mxu0 %v3227
      %v3384 = vpop.f32.mrb[0].mxu0
      %v3385 = vadd.f32 0.0, %v3384
      %v3386 = vpop.f32.mrb[0].mxu0
      %v3387 = vpop.f32.mrb[0].mxu0
      %v3388 = vadd.f32 0.0, %v3387
      %v3389 = vpop.f32.mrb[0].mxu0
      %3390 = vmatprep.mubr.bf16.mxu0 0
      %3391 = vmatmul.mubr.bf16.gmra.mrb[0].mxu0 %v3228
      %v3392 = vpop.f32.mrb[0].mxu0
      %v3393 = vadd.f32 0.0, %v3392
      %v3394 = vpop.f32.mrb[0].mxu0
      %v3395 = vpop.f32.mrb[0].mxu0
      %v3396 = vadd.f32 0.0, %v3395
      %v3397 = vpop.f32.mrb[0].mxu0
      %3398 = vmatprep.mubr.bf16.mxu0 0
      %3399 = vmatmul.mubr.bf16.gmra.mrb[0].mxu0 %v3229
      %v3400 = vpop.f32.mrb[0].mxu0
      %v3401 = vadd.f32 0.0, %v3400
      %v3402 = vpop.f32.mrb[0].mxu0
      %v3403 = vpop.f32.mrb[0].mxu0
      %v3404 = vadd.f32 0.0, %v3403
      %v3405 = vpop.f32.mrb[0].mxu0
      %3406 = vmatprep.mubr.bf16.mxu0 0
      %3407 = vmatmul.mubr.bf16.gmra.mrb[0].mxu0 %v3230
      %v3408 = vpop.f32.mrb[0].mxu0
      %v3409 = vadd.f32 0.0, %v3408
      %v3410 = vpop.f32.mrb[0].mxu0
      %v3411 = vpop.f32.mrb[0].mxu0
      %v3412 = vadd.f32 0.0, %v3411
      %v3413 = vpop.f32.mrb[0].mxu0
      %3414 = vmatprep.mubr.bf16.mxu0 0
      %3415 = vmatmul.mubr.bf16.gmra.mrb[0].mxu0 %v3231
      %v3416 = vpop.f32.mrb[0].mxu0
      %v3417 = vadd.f32 0.0, %v3416
      %v3418 = vpop.f32.mrb[0].mxu0
      %v3419 = vpop.f32.mrb[0].mxu0
      %v3420 = vadd.f32 0.0, %v3419
      %v3421 = vpop.f32.mrb[0].mxu0
      %3422 = vmatprep.mubr.bf16.mxu0 0
      %3423 = vmatmul.mubr.bf16.gmra.mrb[0].mxu0 %v3232
      %v3424 = vpop.f32.mrb[0].mxu0
      %v3425 = vadd.f32 0.0, %v3424
      %v3426 = vpop.f32.mrb[0].mxu0
      %v3427 = vpop.f32.mrb[0].mxu0
      %v3428 = vadd.f32 0.0, %v3427
      %v3429 = vpop.f32.mrb[0].mxu0
      %3430 = vmatprep.mubr.bf16.mxu0 0
      %3431 = vmatmul.mubr.bf16.gmra.mrb[0].mxu0 %v3233
      %v3432 = vpop.f32.mrb[0].mxu0
      %v3433 = vadd.f32 0.0, %v3432
      %v3434 = vpop.f32.mrb[0].mxu0
      %v3435 = vpop.f32.mrb[0].mxu0
      %v3436 = vadd.f32 0.0, %v3435
      %v3437 = vpop.f32.mrb[0].mxu0
      %3438 = vmatprep.mubr.bf16.mxu0 0
      %3439 = vmatmul.mubr.bf16.gmra.mrb[0].mxu0 %v3234
      %v3440 = vpop.f32.mrb[0].mxu0
      %v3441 = vadd.f32 0.0, %v3440
      %v3442 = vpop.f32.mrb[0].mxu0
      %v3443 = vpop.f32.mrb[0].mxu0
      %v3444 = vadd.f32 0.0, %v3443
      %v3445 = vpop.f32.mrb[0].mxu0
      %3446 = vmatprep.mubr.bf16.mxu0 0
      %3447 = vmatmul.mubr.bf16.gmra.mrb[0].mxu0 %v3235
      %v3448 = vpop.f32.mrb[0].mxu0
      %v3449 = vadd.f32 0.0, %v3448
      %v3450 = vpop.f32.mrb[0].mxu0
      %v3451 = vpop.f32.mrb[0].mxu0
      %v3452 = vadd.f32 0.0, %v3451
      %v3453 = vpop.f32.mrb[0].mxu0
      %3454 = vmatprep.mubr.bf16.mxu0 0
      %3455 = vmatmul.mubr.bf16.gmra.mrb[0].mxu0 %v3236
      %v3456 = vpop.f32.mrb[0].mxu0
      %v3457 = vadd.f32 0.0, %v3456
      %v3458 = vpop.f32.mrb[0].mxu0
      %v3459 = vpop.f32.mrb[0].mxu0
      %v3460 = vadd.f32 0.0, %v3459
      %v3461 = vpop.f32.mrb[0].mxu0
      %3462 = vdwg.mxu0
      %v3479 = vunpack.c.l.b16 %v3173
      %v3480 = vunpack.c.l.b16 %v3174
      %v3481 = vunpack.c.l.b16 %v3175
      %v3482 = vunpack.c.l.b16 %v3176
      %v3483 = vunpack.c.l.b16 %v3177
      %v3484 = vunpack.c.l.b16 %v3178
      %v3485 = vunpack.c.l.b16 %v3179
      %v3486 = vunpack.c.l.b16 %v3180
      %v3487 = vunpack.c.l.b16 %v3181
      %v3488 = vunpack.c.l.b16 %v3182
      %v3489 = vunpack.c.l.b16 %v3183
      %v3490 = vunpack.c.l.b16 %v3184
      %v3491 = vunpack.c.l.b16 %v3185
      %v3492 = vunpack.c.l.b16 %v3186
      %v3493 = vunpack.c.l.b16 %v3187
      %v3494 = vunpack.c.l.b16 %v3188
      %v3495 = vpack.c.b16 %v3480, %v3479
      %v3496 = vpack.c.b16 %v3482, %v3481
      %v3497 = vpack.c.b16 %v3484, %v3483
      %v3498 = vpack.c.b16 %v3486, %v3485
      %v3499 = vpack.c.b16 %v3488, %v3487
      %v3500 = vpack.c.b16 %v3490, %v3489
      %v3501 = vpack.c.b16 %v3492, %v3491
      %v3502 = vpack.c.b16 %v3494, %v3493
      %3511 = vmatprep.subr.bf16.mxu0 0
      %3512 = vmatpush1.bf16.msra.mxu0 %v3495
      %3513 = vmatprep.subr.bf16.mxu0 0
      %3514 = vmatpush1.bf16.msra.mxu0 %v3496
      %3515 = vmatprep.subr.bf16.mxu0 0
      %3516 = vmatpush1.bf16.msra.mxu0 %v3497
      %3517 = vmatprep.subr.bf16.mxu0 0
      %3518 = vmatpush1.bf16.msra.mxu0 %v3498
      %3519 = vmatprep.subr.bf16.mxu0 0
      %3520 = vmatpush1.bf16.msra.mxu0 %v3499
      %3521 = vmatprep.subr.bf16.mxu0 0
      %3522 = vmatpush1.bf16.msra.mxu0 %v3500
      %3523 = vmatprep.subr.bf16.mxu0 0
      %3524 = vmatpush1.bf16.msra.mxu0 %v3501
      %3525 = vmatprep.subr.bf16.mxu0 0
      %3526 = vmatpush1.bf16.msra.mxu0 %v3502
      %3527 = vmatprep.subr.bf16.mxu0 0
      %3528 = vmatpush1.bf16.msra.mxu0 0
      %3529 = vmatprep.subr.bf16.mxu0 0
      %3530 = vmatpush1.bf16.msra.mxu0 0
      %3531 = vmatprep.subr.bf16.mxu0 0
      %3532 = vmatpush1.bf16.msra.mxu0 0
      %3533 = vmatprep.subr.bf16.mxu0 0
      %3534 = vmatpush1.bf16.msra.mxu0 0
      %3535 = vmatprep.subr.bf16.mxu0 0
      %3536 = vmatpush1.bf16.msra.mxu0 0
      %3537 = vmatprep.subr.bf16.mxu0 0
      %3538 = vmatpush1.bf16.msra.mxu0 0
      %3539 = vmatprep.subr.bf16.mxu0 0
      %3540 = vmatpush1.bf16.msra.mxu0 0
      %3541 = vmatprep.subr.bf16.mxu0 0
      %3542 = vmatpush1.bf16.msra.mxu0 0
      %3543 = vmatprep.mubr.bf16.mxu0 0
      %3544 = vmatmul.mubr.bf16.gmra.mrb[0].mxu0 %v3157
      %v3545 = vpop.f32.mrb[0].mxu0
      %v3546 = vadd.f32 %v3337, %v3545
      %v3547 = vpop.f32.mrb[0].mxu0
      %v3548 = vpop.f32.mrb[0].mxu0
      %v3549 = vadd.f32 %v3340, %v3548
      %v3550 = vpop.f32.mrb[0].mxu0
      %3551 = vmatprep.mubr.bf16.mxu0 0
      %3552 = vmatmul.mubr.bf16.gmra.mrb[0].mxu0 %v3158
      %v3553 = vpop.f32.mrb[0].mxu0
      %v3554 = vadd.f32 %v3345, %v3553
      %v3555 = vpop.f32.mrb[0].mxu0
      %v3556 = vpop.f32.mrb[0].mxu0
      %v3557 = vadd.f32 %v3348, %v3556
      %v3558 = vpop.f32.mrb[0].mxu0
      %3559 = vmatprep.mubr.bf16.mxu0 0
      %3560 = vmatmul.mubr.bf16.gmra.mrb[0].mxu0 %v3159
      %v3561 = vpop.f32.mrb[0].mxu0
      %v3562 = vadd.f32 %v3353, %v3561
      %v3563 = vpop.f32.mrb[0].mxu0
      %v3564 = vpop.f32.mrb[0].mxu0
      %v3565 = vadd.f32 %v3356, %v3564
      %v3566 = vpop.f32.mrb[0].mxu0
      %3567 = vmatprep.mubr.bf16.mxu0 0
      %3568 = vmatmul.mubr.bf16.gmra.mrb[0].mxu0 %v3160
      %v3569 = vpop.f32.mrb[0].mxu0
      %v3570 = vadd.f32 %v3361, %v3569
      %v3571 = vpop.f32.mrb[0].mxu0
      %v3572 = vpop.f32.mrb[0].mxu0
      %v3573 = vadd.f32 %v3364, %v3572
      %v3574 = vpop.f32.mrb[0].mxu0
      %3575 = vmatprep.mubr.bf16.mxu0 0
      %3576 = vmatmul.mubr.bf16.gmra.mrb[0].mxu0 %v3161
      %v3577 = vpop.f32.mrb[0].mxu0
      %v3578 = vadd.f32 %v3369, %v3577
      %v3579 = vpop.f32.mrb[0].mxu0
      %v3580 = vpop.f32.mrb[0].mxu0
      %v3581 = vadd.f32 %v3372, %v3580
      %v3582 = vpop.f32.mrb[0].mxu0
      %3583 = vmatprep.mubr.bf16.mxu0 0
      %3584 = vmatmul.mubr.bf16.gmra.mrb[0].mxu0 %v3162
      %v3585 = vpop.f32.mrb[0].mxu0
      %v3586 = vadd.f32 %v3377, %v3585
      %v3587 = vpop.f32.mrb[0].mxu0
      %v3588 = vpop.f32.mrb[0].mxu0
      %v3589 = vadd.f32 %v3380, %v3588
      %v3590 = vpop.f32.mrb[0].mxu0
      %3591 = vmatprep.mubr.bf16.mxu0 0
      %3592 = vmatmul.mubr.bf16.gmra.mrb[0].mxu0 %v3163
      %v3593 = vpop.f32.mrb[0].mxu0
      %v3594 = vadd.f32 %v3385, %v3593
      %v3595 = vpop.f32.mrb[0].mxu0
      %v3596 = vpop.f32.mrb[0].mxu0
      %v3597 = vadd.f32 %v3388, %v3596
      %v3598 = vpop.f32.mrb[0].mxu0
      %3599 = vmatprep.mubr.bf16.mxu0 0
      %3600 = vmatmul.mubr.bf16.gmra.mrb[0].mxu0 %v3164
      %v3601 = vpop.f32.mrb[0].mxu0
      %v3602 = vadd.f32 %v3393, %v3601
      %v3603 = vpop.f32.mrb[0].mxu0
      %v3604 = vpop.f32.mrb[0].mxu0
      %v3605 = vadd.f32 %v3396, %v3604
      %v3606 = vpop.f32.mrb[0].mxu0
      %3607 = vmatprep.mubr.bf16.mxu0 0
      %3608 = vmatmul.mubr.bf16.gmra.mrb[0].mxu0 %v3165
      %v3609 = vpop.f32.mrb[0].mxu0
      %v3610 = vadd.f32 %v3401, %v3609
      %v3611 = vpop.f32.mrb[0].mxu0
      %v3612 = vpop.f32.mrb[0].mxu0
      %v3613 = vadd.f32 %v3404, %v3612
      %v3614 = vpop.f32.mrb[0].mxu0
      %3615 = vmatprep.mubr.bf16.mxu0 0
      %3616 = vmatmul.mubr.bf16.gmra.mrb[0].mxu0 %v3166
      %v3617 = vpop.f32.mrb[0].mxu0
      %v3618 = vadd.f32 %v3409, %v3617
      %v3619 = vpop.f32.mrb[0].mxu0
      %v3620 = vpop.f32.mrb[0].mxu0
      %v3621 = vadd.f32 %v3412, %v3620
      %v3622 = vpop.f32.mrb[0].mxu0
      %3623 = vmatprep.mubr.bf16.mxu0 0
      %3624 = vmatmul.mubr.bf16.gmra.mrb[0].mxu0 %v3167
      %v3625 = vpop.f32.mrb[0].mxu0
      %v3626 = vadd.f32 %v3417, %v3625
      %v3627 = vpop.f32.mrb[0].mxu0
      %v3628 = vpop.f32.mrb[0].mxu0
      %v3629 = vadd.f32 %v3420, %v3628
      %v3630 = vpop.f32.mrb[0].mxu0
      %3631 = vmatprep.mubr.bf16.mxu0 0
      %3632 = vmatmul.mubr.bf16.gmra.mrb[0].mxu0 %v3168
      %v3633 = vpop.f32.mrb[0].mxu0
      %v3634 = vadd.f32 %v3425, %v3633
      %v3635 = vpop.f32.mrb[0].mxu0
      %v3636 = vpop.f32.mrb[0].mxu0
      %v3637 = vadd.f32 %v3428, %v3636
      %v3638 = vpop.f32.mrb[0].mxu0
      %3639 = vmatprep.mubr.bf16.mxu0 0
      %3640 = vmatmul.mubr.bf16.gmra.mrb[0].mxu0 %v3169
      %v3641 = vpop.f32.mrb[0].mxu0
      %v3642 = vadd.f32 %v3433, %v3641
      %v3643 = vpop.f32.mrb[0].mxu0
      %v3644 = vpop.f32.mrb[0].mxu0
      %v3645 = vadd.f32 %v3436, %v3644
      %v3646 = vpop.f32.mrb[0].mxu0
      %3647 = vmatprep.mubr.bf16.mxu0 0
      %3648 = vmatmul.mubr.bf16.gmra.mrb[0].mxu0 %v3170
      %v3649 = vpop.f32.mrb[0].mxu0
      %v3650 = vadd.f32 %v3441, %v3649
      %v3651 = vpop.f32.mrb[0].mxu0
      %v3652 = vpop.f32.mrb[0].mxu0
      %v3653 = vadd.f32 %v3444, %v3652
      %v3654 = vpop.f32.mrb[0].mxu0
      %3655 = vmatprep.mubr.bf16.mxu0 0
      %3656 = vmatmul.mubr.bf16.gmra.mrb[0].mxu0 %v3171
      %v3657 = vpop.f32.mrb[0].mxu0
      %v3658 = vadd.f32 %v3449, %v3657
      %v3659 = vpop.f32.mrb[0].mxu0
      %v3660 = vpop.f32.mrb[0].mxu0
      %v3661 = vadd.f32 %v3452, %v3660
      %v3662 = vpop.f32.mrb[0].mxu0
      %3663 = vmatprep.mubr.bf16.mxu0 0
      %3664 = vmatmul.mubr.bf16.gmra.mrb[0].mxu0 %v3172
      %v3665 = vpop.f32.mrb[0].mxu0
      %v3666 = vadd.f32 %v3457, %v3665
      %v3667 = vpop.f32.mrb[0].mxu0
      %v3668 = vpop.f32.mrb[0].mxu0
      %v3669 = vadd.f32 %v3460, %v3668
      %v3670 = vpop.f32.mrb[0].mxu0
      %3671 = vdwg.mxu0
      %v3672 = vld [vmem:[#allocation3 + $0x2] sm:$0xff]
      %v3673 = vld [vmem:[#allocation3 + $0xa] sm:$0xff]
      %v3674 = vld [vmem:[#allocation3 + $0x1a] sm:$0xff]
      %v3675 = vld [vmem:[#allocation3 + $0x22] sm:$0xff]
      %v3676 = vld [vmem:[#allocation3 + $0x32] sm:$0xff]
      %v3677 = vld [vmem:[#allocation3 + $0x3a] sm:$0xff]
      %v3678 = vld [vmem:[#allocation3 + $0x4a] sm:$0xff]
      %v3679 = vld [vmem:[#allocation3 + $0x52] sm:$0xff]
      %v3680 = vld [vmem:[#allocation3 + $0x62] sm:$0xff]
      %v3681 = vld [vmem:[#allocation3 + $0x6a] sm:$0xff]
      %v3682 = vld [vmem:[#allocation3 + $0x7a] sm:$0xff]
      %v3683 = vld [vmem:[#allocation3 + $0x82] sm:$0xff]
      %v3684 = vld [vmem:[#allocation3 + $0x92] sm:$0xff]
      %v3685 = vld [vmem:[#allocation3 + $0x9a] sm:$0xff]
      %v3686 = vld [vmem:[#allocation3 + $0xaa] sm:$0xff]
      %v3687 = vld [vmem:[#allocation3 + $0xb2] sm:$0xff]
      %v3688 = vld [vmem:[#allocation3 + $0xc2] sm:$0xff]
      %v3689 = vld [vmem:[#allocation3 + $0xca] sm:$0xff]
      %v3690 = vld [vmem:[#allocation3 + $0xda] sm:$0xff]
      %v3691 = vld [vmem:[#allocation3 + $0xe2] sm:$0xff]
      %v3692 = vld [vmem:[#allocation3 + $0xf2] sm:$0xff]
      %v3693 = vld [vmem:[#allocation3 + $0xfa] sm:$0xff]
      %v3694 = vld [vmem:[#allocation3 + $0x10a] sm:$0xff]
      %v3695 = vld [vmem:[#allocation3 + $0x112] sm:$0xff]
      %v3696 = vld [vmem:[#allocation3 + $0x122] sm:$0xff]
      %v3697 = vld [vmem:[#allocation3 + $0x12a] sm:$0xff]
      %v3698 = vld [vmem:[#allocation3 + $0x13a] sm:$0xff]
      %v3699 = vld [vmem:[#allocation3 + $0x142] sm:$0xff]
      %v3700 = vld [vmem:[#allocation3 + $0x152] sm:$0xff]
      %v3701 = vld [vmem:[#allocation3 + $0x15a] sm:$0xff]
      %v3702 = vld [vmem:[#allocation3 + $0x16a] sm:$0xff]
      %v3703 = vld [vmem:[#allocation3 + $0x172] sm:$0xff]
      %v3704 = vpack.c.bf16 %v3673, %v3672
      %v3705 = vpack.c.bf16 %v3675, %v3674
      %v3706 = vpack.c.bf16 %v3677, %v3676
      %v3707 = vpack.c.bf16 %v3679, %v3678
      %v3708 = vpack.c.bf16 %v3681, %v3680
      %v3709 = vpack.c.bf16 %v3683, %v3682
      %v3710 = vpack.c.bf16 %v3685, %v3684
      %v3711 = vpack.c.bf16 %v3687, %v3686
      %v3712 = vpack.c.bf16 %v3689, %v3688
      %v3713 = vpack.c.bf16 %v3691, %v3690
      %v3714 = vpack.c.bf16 %v3693, %v3692
      %v3715 = vpack.c.bf16 %v3695, %v3694
      %v3716 = vpack.c.bf16 %v3697, %v3696
      %v3717 = vpack.c.bf16 %v3699, %v3698
      %v3718 = vpack.c.bf16 %v3701, %v3700
      %v3719 = vpack.c.bf16 %v3703, %v3702
      %s3720 = scalar_lea.vmem %s3, 128
      %v3721 = vld [vmem:[%s3720] sm:$0xf]
      %v3722 = vld [vmem:[%s3720 + $0x4] sm:$0xf]
      %v3723 = vld [vmem:[%s3720 + $0x8] sm:$0xf]
      %v3724 = vld [vmem:[%s3720 + $0xc] sm:$0xf]
      %v3725 = vld [vmem:[%s3720 + $0x10] sm:$0xf]
      %v3726 = vld [vmem:[%s3720 + $0x14] sm:$0xf]
      %v3727 = vld [vmem:[%s3720 + $0x18] sm:$0xf]
      %v3728 = vld [vmem:[%s3720 + $0x1c] sm:$0xf]
      %v3729 = vld [vmem:[%s3720 + $0x20] sm:$0xf]
      %v3730 = vld [vmem:[%s3720 + $0x24] sm:$0xf]
      %v3731 = vld [vmem:[%s3720 + $0x28] sm:$0xf]
      %v3732 = vld [vmem:[%s3720 + $0x2c] sm:$0xf]
      %v3733 = vld [vmem:[%s3720 + $0x30] sm:$0xf]
      %v3734 = vld [vmem:[%s3720 + $0x34] sm:$0xf]
      %v3735 = vld [vmem:[%s3720 + $0x38] sm:$0xf]
      %v3736 = vld [vmem:[%s3720 + $0x3c] sm:$0xf]
      %v3753 = vunpack.c.l.b16 %v3721
      %v3754 = vunpack.c.l.b16 %v3722
      %v3755 = vunpack.c.l.b16 %v3723
      %v3756 = vunpack.c.l.b16 %v3724
      %v3757 = vunpack.c.l.b16 %v3725
      %v3758 = vunpack.c.l.b16 %v3726
      %v3759 = vunpack.c.l.b16 %v3727
      %v3760 = vunpack.c.l.b16 %v3728
      %v3761 = vunpack.c.l.b16 %v3729
      %v3762 = vunpack.c.l.b16 %v3730
      %v3763 = vunpack.c.l.b16 %v3731
      %v3764 = vunpack.c.l.b16 %v3732
      %v3765 = vunpack.c.l.b16 %v3733
      %v3766 = vunpack.c.l.b16 %v3734
      %v3767 = vunpack.c.l.b16 %v3735
      %v3768 = vunpack.c.l.b16 %v3736
      %v3769 = vpack.c.b16 %v3754, %v3753
      %v3770 = vpack.c.b16 %v3756, %v3755
      %v3771 = vpack.c.b16 %v3758, %v3757
      %v3772 = vpack.c.b16 %v3760, %v3759
      %v3773 = vpack.c.b16 %v3762, %v3761
      %v3774 = vpack.c.b16 %v3764, %v3763
      %v3775 = vpack.c.b16 %v3766, %v3765
      %v3776 = vpack.c.b16 %v3768, %v3767
      %3785 = vmatprep.subr.bf16.mxu0 0
      %3786 = vmatpush1.bf16.msra.mxu0 %v3769
      %3787 = vmatprep.subr.bf16.mxu0 0
      %3788 = vmatpush1.bf16.msra.mxu0 %v3770
      %3789 = vmatprep.subr.bf16.mxu0 0
      %3790 = vmatpush1.bf16.msra.mxu0 %v3771
      %3791 = vmatprep.subr.bf16.mxu0 0
      %3792 = vmatpush1.bf16.msra.mxu0 %v3772
      %3793 = vmatprep.subr.bf16.mxu0 0
      %3794 = vmatpush1.bf16.msra.mxu0 %v3773
      %3795 = vmatprep.subr.bf16.mxu0 0
      %3796 = vmatpush1.bf16.msra.mxu0 %v3774
      %3797 = vmatprep.subr.bf16.mxu0 0
      %3798 = vmatpush1.bf16.msra.mxu0 %v3775
      %3799 = vmatprep.subr.bf16.mxu0 0
      %3800 = vmatpush1.bf16.msra.mxu0 %v3776
      %3801 = vmatprep.subr.bf16.mxu0 0
      %3802 = vmatpush1.bf16.msra.mxu0 0
      %3803 = vmatprep.subr.bf16.mxu0 0
      %3804 = vmatpush1.bf16.msra.mxu0 0
      %3805 = vmatprep.subr.bf16.mxu0 0
      %3806 = vmatpush1.bf16.msra.mxu0 0
      %3807 = vmatprep.subr.bf16.mxu0 0
      %3808 = vmatpush1.bf16.msra.mxu0 0
      %3809 = vmatprep.subr.bf16.mxu0 0
      %3810 = vmatpush1.bf16.msra.mxu0 0
      %3811 = vmatprep.subr.bf16.mxu0 0
      %3812 = vmatpush1.bf16.msra.mxu0 0
      %3813 = vmatprep.subr.bf16.mxu0 0
      %3814 = vmatpush1.bf16.msra.mxu0 0
      %3815 = vmatprep.subr.bf16.mxu0 0
      %3816 = vmatpush1.bf16.msra.mxu0 0
      %3817 = vmatprep.mubr.bf16.mxu0 0
      %3818 = vmatmul.mubr.bf16.gmra.mrb[0].mxu0 %v3704
      %v3819 = vpop.f32.mrb[0].mxu0
      %v3820 = vadd.f32 0.0, %v3819
      %v3821 = vpop.f32.mrb[0].mxu0
      %v3822 = vpop.f32.mrb[0].mxu0
      %v3823 = vadd.f32 0.0, %v3822
      %v3824 = vpop.f32.mrb[0].mxu0
      %3825 = vmatprep.mubr.bf16.mxu0 0
      %3826 = vmatmul.mubr.bf16.gmra.mrb[0].mxu0 %v3705
      %v3827 = vpop.f32.mrb[0].mxu0
      %v3828 = vadd.f32 0.0, %v3827
      %v3829 = vpop.f32.mrb[0].mxu0
      %v3830 = vpop.f32.mrb[0].mxu0
      %v3831 = vadd.f32 0.0, %v3830
      %v3832 = vpop.f32.mrb[0].mxu0
      %3833 = vmatprep.mubr.bf16.mxu0 0
      %3834 = vmatmul.mubr.bf16.gmra.mrb[0].mxu0 %v3706
      %v3835 = vpop.f32.mrb[0].mxu0
      %v3836 = vadd.f32 0.0, %v3835
      %v3837 = vpop.f32.mrb[0].mxu0
      %v3838 = vpop.f32.mrb[0].mxu0
      %v3839 = vadd.f32 0.0, %v3838
      %v3840 = vpop.f32.mrb[0].mxu0
      %3841 = vmatprep.mubr.bf16.mxu0 0
      %3842 = vmatmul.mubr.bf16.gmra.mrb[0].mxu0 %v3707
      %v3843 = vpop.f32.mrb[0].mxu0
      %v3844 = vadd.f32 0.0, %v3843
      %v3845 = vpop.f32.mrb[0].mxu0
      %v3846 = vpop.f32.mrb[0].mxu0
      %v3847 = vadd.f32 0.0, %v3846
      %v3848 = vpop.f32.mrb[0].mxu0
      %3849 = vmatprep.mubr.bf16.mxu0 0
      %3850 = vmatmul.mubr.bf16.gmra.mrb[0].mxu0 %v3708
      %v3851 = vpop.f32.mrb[0].mxu0
      %v3852 = vadd.f32 0.0, %v3851
      %v3853 = vpop.f32.mrb[0].mxu0
      %v3854 = vpop.f32.mrb[0].mxu0
      %v3855 = vadd.f32 0.0, %v3854
      %v3856 = vpop.f32.mrb[0].mxu0
      %3857 = vmatprep.mubr.bf16.mxu0 0
      %3858 = vmatmul.mubr.bf16.gmra.mrb[0].mxu0 %v3709
      %v3859 = vpop.f32.mrb[0].mxu0
      %v3860 = vadd.f32 0.0, %v3859
      %v3861 = vpop.f32.mrb[0].mxu0
      %v3862 = vpop.f32.mrb[0].mxu0
      %v3863 = vadd.f32 0.0, %v3862
      %v3864 = vpop.f32.mrb[0].mxu0
      %3865 = vmatprep.mubr.bf16.mxu0 0
      %3866 = vmatmul.mubr.bf16.gmra.mrb[0].mxu0 %v3710
      %v3867 = vpop.f32.mrb[0].mxu0
      %v3868 = vadd.f32 0.0, %v3867
      %v3869 = vpop.f32.mrb[0].mxu0
      %v3870 = vpop.f32.mrb[0].mxu0
      %v3871 = vadd.f32 0.0, %v3870
      %v3872 = vpop.f32.mrb[0].mxu0
      %3873 = vmatprep.mubr.bf16.mxu0 0
      %3874 = vmatmul.mubr.bf16.gmra.mrb[0].mxu0 %v3711
      %v3875 = vpop.f32.mrb[0].mxu0
      %v3876 = vadd.f32 0.0, %v3875
      %v3877 = vpop.f32.mrb[0].mxu0
      %v3878 = vpop.f32.mrb[0].mxu0
      %v3879 = vadd.f32 0.0, %v3878
      %v3880 = vpop.f32.mrb[0].mxu0
      %3881 = vmatprep.mubr.bf16.mxu0 0
      %3882 = vmatmul.mubr.bf16.gmra.mrb[0].mxu0 %v3712
      %v3883 = vpop.f32.mrb[0].mxu0
      %v3884 = vadd.f32 0.0, %v3883
      %v3885 = vpop.f32.mrb[0].mxu0
      %v3886 = vpop.f32.mrb[0].mxu0
      %v3887 = vadd.f32 0.0, %v3886
      %v3888 = vpop.f32.mrb[0].mxu0
      %3889 = vmatprep.mubr.bf16.mxu0 0
      %3890 = vmatmul.mubr.bf16.gmra.mrb[0].mxu0 %v3713
      %v3891 = vpop.f32.mrb[0].mxu0
      %v3892 = vadd.f32 0.0, %v3891
      %v3893 = vpop.f32.mrb[0].mxu0
      %v3894 = vpop.f32.mrb[0].mxu0
      %v3895 = vadd.f32 0.0, %v3894
      %v3896 = vpop.f32.mrb[0].mxu0
      %3897 = vmatprep.mubr.bf16.mxu0 0
      %3898 = vmatmul.mubr.bf16.gmra.mrb[0].mxu0 %v3714
      %v3899 = vpop.f32.mrb[0].mxu0
      %v3900 = vadd.f32 0.0, %v3899
      %v3901 = vpop.f32.mrb[0].mxu0
      %v3902 = vpop.f32.mrb[0].mxu0
      %v3903 = vadd.f32 0.0, %v3902
      %v3904 = vpop.f32.mrb[0].mxu0
      %3905 = vmatprep.mubr.bf16.mxu0 0
      %3906 = vmatmul.mubr.bf16.gmra.mrb[0].mxu0 %v3715
      %v3907 = vpop.f32.mrb[0].mxu0
      %v3908 = vadd.f32 0.0, %v3907
      %v3909 = vpop.f32.mrb[0].mxu0
      %v3910 = vpop.f32.mrb[0].mxu0
      %v3911 = vadd.f32 0.0, %v3910
      %v3912 = vpop.f32.mrb[0].mxu0
      %3913 = vmatprep.mubr.bf16.mxu0 0
      %3914 = vmatmul.mubr.bf16.gmra.mrb[0].mxu0 %v3716
      %v3915 = vpop.f32.mrb[0].mxu0
      %v3916 = vadd.f32 0.0, %v3915
      %v3917 = vpop.f32.mrb[0].mxu0
      %v3918 = vpop.f32.mrb[0].mxu0
      %v3919 = vadd.f32 0.0, %v3918
      %v3920 = vpop.f32.mrb[0].mxu0
      %3921 = vmatprep.mubr.bf16.mxu0 0
      %3922 = vmatmul.mubr.bf16.gmra.mrb[0].mxu0 %v3717
      %v3923 = vpop.f32.mrb[0].mxu0
      %v3924 = vadd.f32 0.0, %v3923
      %v3925 = vpop.f32.mrb[0].mxu0
      %v3926 = vpop.f32.mrb[0].mxu0
      %v3927 = vadd.f32 0.0, %v3926
      %v3928 = vpop.f32.mrb[0].mxu0
      %3929 = vmatprep.mubr.bf16.mxu0 0
      %3930 = vmatmul.mubr.bf16.gmra.mrb[0].mxu0 %v3718
      %v3931 = vpop.f32.mrb[0].mxu0
      %v3932 = vadd.f32 0.0, %v3931
      %v3933 = vpop.f32.mrb[0].mxu0
      %v3934 = vpop.f32.mrb[0].mxu0
      %v3935 = vadd.f32 0.0, %v3934
      %v3936 = vpop.f32.mrb[0].mxu0
      %3937 = vmatprep.mubr.bf16.mxu0 0
      %3938 = vmatmul.mubr.bf16.gmra.mrb[0].mxu0 %v3719
      %v3939 = vpop.f32.mrb[0].mxu0
      %v3940 = vadd.f32 0.0, %v3939
      %v3941 = vpop.f32.mrb[0].mxu0
      %v3942 = vpop.f32.mrb[0].mxu0
      %v3943 = vadd.f32 0.0, %v3942
      %v3944 = vpop.f32.mrb[0].mxu0
      %3945 = vdwg.mxu0
      %v3946 = vadd.f32 %v3546, %v3820
      %v3947 = vadd.f32 %v3549, %v3823
      %v3948 = vadd.f32 %v3554, %v3828
      %v3949 = vadd.f32 %v3557, %v3831
      %v3950 = vadd.f32 %v3562, %v3836
      %v3951 = vadd.f32 %v3565, %v3839
      %v3952 = vadd.f32 %v3570, %v3844
      %v3953 = vadd.f32 %v3573, %v3847
      %v3954 = vadd.f32 %v3578, %v3852
      %v3955 = vadd.f32 %v3581, %v3855
      %v3956 = vadd.f32 %v3586, %v3860
      %v3957 = vadd.f32 %v3589, %v3863
      %v3958 = vadd.f32 %v3594, %v3868
      %v3959 = vadd.f32 %v3597, %v3871
      %v3960 = vadd.f32 %v3602, %v3876
      %v3961 = vadd.f32 %v3605, %v3879
      %v3962 = vadd.f32 %v3610, %v3884
      %v3963 = vadd.f32 %v3613, %v3887
      %v3964 = vadd.f32 %v3618, %v3892
      %v3965 = vadd.f32 %v3621, %v3895
      %v3966 = vadd.f32 %v3626, %v3900
      %v3967 = vadd.f32 %v3629, %v3903
      %v3968 = vadd.f32 %v3634, %v3908
      %v3969 = vadd.f32 %v3637, %v3911
      %v3970 = vadd.f32 %v3642, %v3916
      %v3971 = vadd.f32 %v3645, %v3919
      %v3972 = vadd.f32 %v3650, %v3924
      %v3973 = vadd.f32 %v3653, %v3927
      %v3974 = vadd.f32 %v3658, %v3932
      %v3975 = vadd.f32 %v3661, %v3935
      %v3976 = vadd.f32 %v3666, %v3940
      %v3977 = vadd.f32 %v3669, %v3943
      %v3978 = vld [vmem:[%s3092] sm:$0xff]
      %v3979 = vld [vmem:[%s3092 + $0x8] sm:$0xff]
      %v3980 = vld [vmem:[%s3092 + $0x18] sm:$0xff]
      %v3981 = vld [vmem:[%s3092 + $0x20] sm:$0xff]
      %v3982 = vld [vmem:[%s3092 + $0x30] sm:$0xff]
      %v3983 = vld [vmem:[%s3092 + $0x38] sm:$0xff]
      %v3984 = vld [vmem:[%s3092 + $0x48] sm:$0xff]
      %v3985 = vld [vmem:[%s3092 + $0x50] sm:$0xff]
      %v3986 = vld [vmem:[%s3092 + $0x60] sm:$0xff]
      %v3987 = vld [vmem:[%s3092 + $0x68] sm:$0xff]
      %v3988 = vld [vmem:[%s3092 + $0x78] sm:$0xff]
      %v3989 = vld [vmem:[%s3092 + $0x80] sm:$0xff]
      %v3990 = vld [vmem:[%s3092 + $0x90] sm:$0xff]
      %v3991 = vld [vmem:[%s3092 + $0x98] sm:$0xff]
      %v3992 = vld [vmem:[%s3092 + $0xa8] sm:$0xff]
      %v3993 = vld [vmem:[%s3092 + $0xb0] sm:$0xff]
      %v3994 = vld [vmem:[%s3092 + $0xc0] sm:$0xff]
      %v3995 = vld [vmem:[%s3092 + $0xc8] sm:$0xff]
      %v3996 = vld [vmem:[%s3092 + $0xd8] sm:$0xff]
      %v3997 = vld [vmem:[%s3092 + $0xe0] sm:$0xff]
      %v3998 = vld [vmem:[%s3092 + $0xf0] sm:$0xff]
      %v3999 = vld [vmem:[%s3092 + $0xf8] sm:$0xff]
      %v4000 = vld [vmem:[%s3092 + $0x108] sm:$0xff]
      %v4001 = vld [vmem:[%s3092 + $0x110] sm:$0xff]
      %v4002 = vld [vmem:[%s3092 + $0x120] sm:$0xff]
      %v4003 = vld [vmem:[%s3092 + $0x128] sm:$0xff]
      %v4004 = vld [vmem:[%s3092 + $0x138] sm:$0xff]
      %v4005 = vld [vmem:[%s3092 + $0x140] sm:$0xff]
      %v4006 = vld [vmem:[%s3092 + $0x150] sm:$0xff]
      %v4007 = vld [vmem:[%s3092 + $0x158] sm:$0xff]
      %v4008 = vld [vmem:[%s3092 + $0x168] sm:$0xff]
      %v4009 = vld [vmem:[%s3092 + $0x170] sm:$0xff]
      %v4010 = vpack.c.bf16 %v3979, %v3978
      %v4011 = vpack.c.bf16 %v3981, %v3980
      %v4012 = vpack.c.bf16 %v3983, %v3982
      %v4013 = vpack.c.bf16 %v3985, %v3984
      %v4014 = vpack.c.bf16 %v3987, %v3986
      %v4015 = vpack.c.bf16 %v3989, %v3988
      %v4016 = vpack.c.bf16 %v3991, %v3990
      %v4017 = vpack.c.bf16 %v3993, %v3992
      %v4018 = vpack.c.bf16 %v3995, %v3994
      %v4019 = vpack.c.bf16 %v3997, %v3996
      %v4020 = vpack.c.bf16 %v3999, %v3998
      %v4021 = vpack.c.bf16 %v4001, %v4000
      %v4022 = vpack.c.bf16 %v4003, %v4002
      %v4023 = vpack.c.bf16 %v4005, %v4004
      %v4024 = vpack.c.bf16 %v4007, %v4006
      %v4025 = vpack.c.bf16 %v4009, %v4008
      %s4026 = scalar_lea.vmem %s3, 192
      %v4027 = vld [vmem:[%s4026] sm:$0xf]
      %v4028 = vld [vmem:[%s4026 + $0x4] sm:$0xf]
      %v4029 = vld [vmem:[%s4026 + $0x8] sm:$0xf]
      %v4030 = vld [vmem:[%s4026 + $0xc] sm:$0xf]
      %v4031 = vld [vmem:[%s4026 + $0x10] sm:$0xf]
      %v4032 = vld [vmem:[%s4026 + $0x14] sm:$0xf]
      %v4033 = vld [vmem:[%s4026 + $0x18] sm:$0xf]
      %v4034 = vld [vmem:[%s4026 + $0x1c] sm:$0xf]
      %v4035 = vld [vmem:[%s4026 + $0x20] sm:$0xf]
      %v4036 = vld [vmem:[%s4026 + $0x24] sm:$0xf]
      %v4037 = vld [vmem:[%s4026 + $0x28] sm:$0xf]
      %v4038 = vld [vmem:[%s4026 + $0x2c] sm:$0xf]
      %v4039 = vld [vmem:[%s4026 + $0x30] sm:$0xf]
      %v4040 = vld [vmem:[%s4026 + $0x34] sm:$0xf]
      %v4041 = vld [vmem:[%s4026 + $0x38] sm:$0xf]
      %v4042 = vld [vmem:[%s4026 + $0x3c] sm:$0xf]
      %v4059 = vunpack.c.l.b16 %v4027
      %v4060 = vunpack.c.l.b16 %v4028
      %v4061 = vunpack.c.l.b16 %v4029
      %v4062 = vunpack.c.l.b16 %v4030
      %v4063 = vunpack.c.l.b16 %v4031
      %v4064 = vunpack.c.l.b16 %v4032
      %v4065 = vunpack.c.l.b16 %v4033
      %v4066 = vunpack.c.l.b16 %v4034
      %v4067 = vunpack.c.l.b16 %v4035
      %v4068 = vunpack.c.l.b16 %v4036
      %v4069 = vunpack.c.l.b16 %v4037
      %v4070 = vunpack.c.l.b16 %v4038
      %v4071 = vunpack.c.l.b16 %v4039
      %v4072 = vunpack.c.l.b16 %v4040
      %v4073 = vunpack.c.l.b16 %v4041
      %v4074 = vunpack.c.l.b16 %v4042
      %v4075 = vpack.c.b16 %v4060, %v4059
      %v4076 = vpack.c.b16 %v4062, %v4061
      %v4077 = vpack.c.b16 %v4064, %v4063
      %v4078 = vpack.c.b16 %v4066, %v4065
      %v4079 = vpack.c.b16 %v4068, %v4067
      %v4080 = vpack.c.b16 %v4070, %v4069
      %v4081 = vpack.c.b16 %v4072, %v4071
      %v4082 = vpack.c.b16 %v4074, %v4073
      %4091 = vmatprep.subr.bf16.mxu0 0
      %4092 = vmatpush1.bf16.msra.mxu0 %v4075
      %4093 = vmatprep.subr.bf16.mxu0 0
      %4094 = vmatpush1.bf16.msra.mxu0 %v4076
      %4095 = vmatprep.subr.bf16.mxu0 0
      %4096 = vmatpush1.bf16.msra.mxu0 %v4077
      %4097 = vmatprep.subr.bf16.mxu0 0
      %4098 = vmatpush1.bf16.msra.mxu0 %v4078
      %4099 = vmatprep.subr.bf16.mxu0 0
      %4100 = vmatpush1.bf16.msra.mxu0 %v4079
      %4101 = vmatprep.subr.bf16.mxu0 0
      %4102 = vmatpush1.bf16.msra.mxu0 %v4080
      %4103 = vmatprep.subr.bf16.mxu0 0
      %4104 = vmatpush1.bf16.msra.mxu0 %v4081
      %4105 = vmatprep.subr.bf16.mxu0 0
      %4106 = vmatpush1.bf16.msra.mxu0 %v4082
      %4107 = vmatprep.subr.bf16.mxu0 0
      %4108 = vmatpush1.bf16.msra.mxu0 0
      %4109 = vmatprep.subr.bf16.mxu0 0
      %4110 = vmatpush1.bf16.msra.mxu0 0
      %4111 = vmatprep.subr.bf16.mxu0 0
      %4112 = vmatpush1.bf16.msra.mxu0 0
      %4113 = vmatprep.subr.bf16.mxu0 0
      %4114 = vmatpush1.bf16.msra.mxu0 0
      %4115 = vmatprep.subr.bf16.mxu0 0
      %4116 = vmatpush1.bf16.msra.mxu0 0
      %4117 = vmatprep.subr.bf16.mxu0 0
      %4118 = vmatpush1.bf16.msra.mxu0 0
      %4119 = vmatprep.subr.bf16.mxu0 0
      %4120 = vmatpush1.bf16.msra.mxu0 0
      %4121 = vmatprep.subr.bf16.mxu0 0
      %4122 = vmatpush1.bf16.msra.mxu0 0
      %4123 = vmatprep.mubr.bf16.mxu0 0
      %4124 = vmatmul.mubr.bf16.gmra.mrb[0].mxu0 %v4010
      %v4125 = vpop.f32.mrb[0].mxu0
      %v4126 = vadd.f32 0.0, %v4125
      %v4127 = vpop.f32.mrb[0].mxu0
      %v4128 = vpop.f32.mrb[0].mxu0
      %v4129 = vadd.f32 0.0, %v4128
      %v4130 = vpop.f32.mrb[0].mxu0
      %4131 = vmatprep.mubr.bf16.mxu0 0
      %4132 = vmatmul.mubr.bf16.gmra.mrb[0].mxu0 %v4011
      %v4133 = vpop.f32.mrb[0].mxu0
      %v4134 = vadd.f32 0.0, %v4133
      %v4135 = vpop.f32.mrb[0].mxu0
      %v4136 = vpop.f32.mrb[0].mxu0
      %v4137 = vadd.f32 0.0, %v4136
      %v4138 = vpop.f32.mrb[0].mxu0
      %4139 = vmatprep.mubr.bf16.mxu0 0
      %4140 = vmatmul.mubr.bf16.gmra.mrb[0].mxu0 %v4012
      %v4141 = vpop.f32.mrb[0].mxu0
      %v4142 = vadd.f32 0.0, %v4141
      %v4143 = vpop.f32.mrb[0].mxu0
      %v4144 = vpop.f32.mrb[0].mxu0
      %v4145 = vadd.f32 0.0, %v4144
      %v4146 = vpop.f32.mrb[0].mxu0
      %4147 = vmatprep.mubr.bf16.mxu0 0
      %4148 = vmatmul.mubr.bf16.gmra.mrb[0].mxu0 %v4013
      %v4149 = vpop.f32.mrb[0].mxu0
      %v4150 = vadd.f32 0.0, %v4149
      %v4151 = vpop.f32.mrb[0].mxu0
      %v4152 = vpop.f32.mrb[0].mxu0
      %v4153 = vadd.f32 0.0, %v4152
      %v4154 = vpop.f32.mrb[0].mxu0
      %4155 = vmatprep.mubr.bf16.mxu0 0
      %4156 = vmatmul.mubr.bf16.gmra.mrb[0].mxu0 %v4014
      %v4157 = vpop.f32.mrb[0].mxu0
      %v4158 = vadd.f32 0.0, %v4157
      %v4159 = vpop.f32.mrb[0].mxu0
      %v4160 = vpop.f32.mrb[0].mxu0
      %v4161 = vadd.f32 0.0, %v4160
      %v4162 = vpop.f32.mrb[0].mxu0
      %4163 = vmatprep.mubr.bf16.mxu0 0
      %4164 = vmatmul.mubr.bf16.gmra.mrb[0].mxu0 %v4015
      %v4165 = vpop.f32.mrb[0].mxu0
      %v4166 = vadd.f32 0.0, %v4165
      %v4167 = vpop.f32.mrb[0].mxu0
      %v4168 = vpop.f32.mrb[0].mxu0
      %v4169 = vadd.f32 0.0, %v4168
      %v4170 = vpop.f32.mrb[0].mxu0
      %4171 = vmatprep.mubr.bf16.mxu0 0
      %4172 = vmatmul.mubr.bf16.gmra.mrb[0].mxu0 %v4016
      %v4173 = vpop.f32.mrb[0].mxu0
      %v4174 = vadd.f32 0.0, %v4173
      %v4175 = vpop.f32.mrb[0].mxu0
      %v4176 = vpop.f32.mrb[0].mxu0
      %v4177 = vadd.f32 0.0, %v4176
      %v4178 = vpop.f32.mrb[0].mxu0
      %4179 = vmatprep.mubr.bf16.mxu0 0
      %4180 = vmatmul.mubr.bf16.gmra.mrb[0].mxu0 %v4017
      %v4181 = vpop.f32.mrb[0].mxu0
      %v4182 = vadd.f32 0.0, %v4181
      %v4183 = vpop.f32.mrb[0].mxu0
      %v4184 = vpop.f32.mrb[0].mxu0
      %v4185 = vadd.f32 0.0, %v4184
      %v4186 = vpop.f32.mrb[0].mxu0
      %4187 = vmatprep.mubr.bf16.mxu0 0
      %4188 = vmatmul.mubr.bf16.gmra.mrb[0].mxu0 %v4018
      %v4189 = vpop.f32.mrb[0].mxu0
      %v4190 = vadd.f32 0.0, %v4189
      %v4191 = vpop.f32.mrb[0].mxu0
      %v4192 = vpop.f32.mrb[0].mxu0
      %v4193 = vadd.f32 0.0, %v4192
      %v4194 = vpop.f32.mrb[0].mxu0
      %4195 = vmatprep.mubr.bf16.mxu0 0
      %4196 = vmatmul.mubr.bf16.gmra.mrb[0].mxu0 %v4019
      %v4197 = vpop.f32.mrb[0].mxu0
      %v4198 = vadd.f32 0.0, %v4197
      %v4199 = vpop.f32.mrb[0].mxu0
      %v4200 = vpop.f32.mrb[0].mxu0
      %v4201 = vadd.f32 0.0, %v4200
      %v4202 = vpop.f32.mrb[0].mxu0
      %4203 = vmatprep.mubr.bf16.mxu0 0
      %4204 = vmatmul.mubr.bf16.gmra.mrb[0].mxu0 %v4020
      %v4205 = vpop.f32.mrb[0].mxu0
      %v4206 = vadd.f32 0.0, %v4205
      %v4207 = vpop.f32.mrb[0].mxu0
      %v4208 = vpop.f32.mrb[0].mxu0
      %v4209 = vadd.f32 0.0, %v4208
      %v4210 = vpop.f32.mrb[0].mxu0
      %4211 = vmatprep.mubr.bf16.mxu0 0
      %4212 = vmatmul.mubr.bf16.gmra.mrb[0].mxu0 %v4021
      %v4213 = vpop.f32.mrb[0].mxu0
      %v4214 = vadd.f32 0.0, %v4213
      %v4215 = vpop.f32.mrb[0].mxu0
      %v4216 = vpop.f32.mrb[0].mxu0
      %v4217 = vadd.f32 0.0, %v4216
      %v4218 = vpop.f32.mrb[0].mxu0
      %4219 = vmatprep.mubr.bf16.mxu0 0
      %4220 = vmatmul.mubr.bf16.gmra.mrb[0].mxu0 %v4022
      %v4221 = vpop.f32.mrb[0].mxu0
      %v4222 = vadd.f32 0.0, %v4221
      %v4223 = vpop.f32.mrb[0].mxu0
      %v4224 = vpop.f32.mrb[0].mxu0
      %v4225 = vadd.f32 0.0, %v4224
      %v4226 = vpop.f32.mrb[0].mxu0
      %4227 = vmatprep.mubr.bf16.mxu0 0
      %4228 = vmatmul.mubr.bf16.gmra.mrb[0].mxu0 %v4023
      %v4229 = vpop.f32.mrb[0].mxu0
      %v4230 = vadd.f32 0.0, %v4229
      %v4231 = vpop.f32.mrb[0].mxu0
      %v4232 = vpop.f32.mrb[0].mxu0
      %v4233 = vadd.f32 0.0, %v4232
      %v4234 = vpop.f32.mrb[0].mxu0
      %4235 = vmatprep.mubr.bf16.mxu0 0
      %4236 = vmatmul.mubr.bf16.gmra.mrb[0].mxu0 %v4024
      %v4237 = vpop.f32.mrb[0].mxu0
      %v4238 = vadd.f32 0.0, %v4237
      %v4239 = vpop.f32.mrb[0].mxu0
      %v4240 = vpop.f32.mrb[0].mxu0
      %v4241 = vadd.f32 0.0, %v4240
      %v4242 = vpop.f32.mrb[0].mxu0
      %4243 = vmatprep.mubr.bf16.mxu0 0
      %4244 = vmatmul.mubr.bf16.gmra.mrb[0].mxu0 %v4025
      %v4245 = vpop.f32.mrb[0].mxu0
      %v4246 = vadd.f32 0.0, %v4245
      %v4247 = vpop.f32.mrb[0].mxu0
      %v4248 = vpop.f32.mrb[0].mxu0
      %v4249 = vadd.f32 0.0, %v4248
      %v4250 = vpop.f32.mrb[0].mxu0
      %4251 = vdwg.mxu0
      %v4252 = vadd.f32 %v3946, %v4126
      %v4253 = vadd.f32 %v3947, %v4129
      %v4254 = vadd.f32 %v3948, %v4134
      %v4255 = vadd.f32 %v3949, %v4137
      %v4256 = vadd.f32 %v3950, %v4142
      %v4257 = vadd.f32 %v3951, %v4145
      %v4258 = vadd.f32 %v3952, %v4150
      %v4259 = vadd.f32 %v3953, %v4153
      %v4260 = vadd.f32 %v3954, %v4158
      %v4261 = vadd.f32 %v3955, %v4161
      %v4262 = vadd.f32 %v3956, %v4166
      %v4263 = vadd.f32 %v3957, %v4169
      %v4264 = vadd.f32 %v3958, %v4174
      %v4265 = vadd.f32 %v3959, %v4177
      %v4266 = vadd.f32 %v3960, %v4182
      %v4267 = vadd.f32 %v3961, %v4185
      %v4268 = vadd.f32 %v3962, %v4190
      %v4269 = vadd.f32 %v3963, %v4193
      %v4270 = vadd.f32 %v3964, %v4198
      %v4271 = vadd.f32 %v3965, %v4201
      %v4272 = vadd.f32 %v3966, %v4206
      %v4273 = vadd.f32 %v3967, %v4209
      %v4274 = vadd.f32 %v3968, %v4214
      %v4275 = vadd.f32 %v3969, %v4217
      %v4276 = vadd.f32 %v3970, %v4222
      %v4277 = vadd.f32 %v3971, %v4225
      %v4278 = vadd.f32 %v3972, %v4230
      %v4279 = vadd.f32 %v3973, %v4233
      %v4280 = vadd.f32 %v3974, %v4238
      %v4281 = vadd.f32 %v3975, %v4241
      %v4282 = vadd.f32 %v3976, %v4246
      %v4283 = vadd.f32 %v3977, %v4249
      %v4284 = vld [vmem:[%s3092 + $0x1] sm:$0xff]
      %v4285 = vld [vmem:[%s3092 + $0x9] sm:$0xff]
      %v4286 = vld [vmem:[%s3092 + $0x19] sm:$0xff]
      %v4287 = vld [vmem:[%s3092 + $0x21] sm:$0xff]
      %v4288 = vld [vmem:[%s3092 + $0x31] sm:$0xff]
      %v4289 = vld [vmem:[%s3092 + $0x39] sm:$0xff]
      %v4290 = vld [vmem:[%s3092 + $0x49] sm:$0xff]
      %v4291 = vld [vmem:[%s3092 + $0x51] sm:$0xff]
      %v4292 = vld [vmem:[%s3092 + $0x61] sm:$0xff]
      %v4293 = vld [vmem:[%s3092 + $0x69] sm:$0xff]
      %v4294 = vld [vmem:[%s3092 + $0x79] sm:$0xff]
      %v4295 = vld [vmem:[%s3092 + $0x81] sm:$0xff]
      %v4296 = vld [vmem:[%s3092 + $0x91] sm:$0xff]
      %v4297 = vld [vmem:[%s3092 + $0x99] sm:$0xff]
      %v4298 = vld [vmem:[%s3092 + $0xa9] sm:$0xff]
      %v4299 = vld [vmem:[%s3092 + $0xb1] sm:$0xff]
      %v4300 = vld [vmem:[%s3092 + $0xc1] sm:$0xff]
      %v4301 = vld [vmem:[%s3092 + $0xc9] sm:$0xff]
      %v4302 = vld [vmem:[%s3092 + $0xd9] sm:$0xff]
      %v4303 = vld [vmem:[%s3092 + $0xe1] sm:$0xff]
      %v4304 = vld [vmem:[%s3092 + $0xf1] sm:$0xff]
      %v4305 = vld [vmem:[%s3092 + $0xf9] sm:$0xff]
      %v4306 = vld [vmem:[%s3092 + $0x109] sm:$0xff]
      %v4307 = vld [vmem:[%s3092 + $0x111] sm:$0xff]
      %v4308 = vld [vmem:[%s3092 + $0x121] sm:$0xff]
      %v4309 = vld [vmem:[%s3092 + $0x129] sm:$0xff]
      %v4310 = vld [vmem:[%s3092 + $0x139] sm:$0xff]
      %v4311 = vld [vmem:[%s3092 + $0x141] sm:$0xff]
      %v4312 = vld [vmem:[%s3092 + $0x151] sm:$0xff]
      %v4313 = vld [vmem:[%s3092 + $0x159] sm:$0xff]
      %v4314 = vld [vmem:[%s3092 + $0x169] sm:$0xff]
      %v4315 = vld [vmem:[%s3092 + $0x171] sm:$0xff]
      %v4316 = vpack.c.bf16 %v4285, %v4284
      %v4317 = vpack.c.bf16 %v4287, %v4286
      %v4318 = vpack.c.bf16 %v4289, %v4288
      %v4319 = vpack.c.bf16 %v4291, %v4290
      %v4320 = vpack.c.bf16 %v4293, %v4292
      %v4321 = vpack.c.bf16 %v4295, %v4294
      %v4322 = vpack.c.bf16 %v4297, %v4296
      %v4323 = vpack.c.bf16 %v4299, %v4298
      %v4324 = vpack.c.bf16 %v4301, %v4300
      %v4325 = vpack.c.bf16 %v4303, %v4302
      %v4326 = vpack.c.bf16 %v4305, %v4304
      %v4327 = vpack.c.bf16 %v4307, %v4306
      %v4328 = vpack.c.bf16 %v4309, %v4308
      %v4329 = vpack.c.bf16 %v4311, %v4310
      %v4330 = vpack.c.bf16 %v4313, %v4312
      %v4331 = vpack.c.bf16 %v4315, %v4314
      %s4332 = scalar_lea.vmem %s3, 256
      %v4333 = vld [vmem:[%s4332] sm:$0xf]
      %v4334 = vld [vmem:[%s4332 + $0x4] sm:$0xf]
      %v4335 = vld [vmem:[%s4332 + $0x8] sm:$0xf]
      %v4336 = vld [vmem:[%s4332 + $0xc] sm:$0xf]
      %v4337 = vld [vmem:[%s4332 + $0x10] sm:$0xf]
      %v4338 = vld [vmem:[%s4332 + $0x14] sm:$0xf]
      %v4339 = vld [vmem:[%s4332 + $0x18] sm:$0xf]
      %v4340 = vld [vmem:[%s4332 + $0x1c] sm:$0xf]
      %v4341 = vld [vmem:[%s4332 + $0x20] sm:$0xf]
      %v4342 = vld [vmem:[%s4332 + $0x24] sm:$0xf]
      %v4343 = vld [vmem:[%s4332 + $0x28] sm:$0xf]
      %v4344 = vld [vmem:[%s4332 + $0x2c] sm:$0xf]
      %v4345 = vld [vmem:[%s4332 + $0x30] sm:$0xf]
      %v4346 = vld [vmem:[%s4332 + $0x34] sm:$0xf]
      %v4347 = vld [vmem:[%s4332 + $0x38] sm:$0xf]
      %v4348 = vld [vmem:[%s4332 + $0x3c] sm:$0xf]
      %v4365 = vunpack.c.l.b16 %v4333
      %v4366 = vunpack.c.l.b16 %v4334
      %v4367 = vunpack.c.l.b16 %v4335
      %v4368 = vunpack.c.l.b16 %v4336
      %v4369 = vunpack.c.l.b16 %v4337
      %v4370 = vunpack.c.l.b16 %v4338
      %v4371 = vunpack.c.l.b16 %v4339
      %v4372 = vunpack.c.l.b16 %v4340
      %v4373 = vunpack.c.l.b16 %v4341
      %v4374 = vunpack.c.l.b16 %v4342
      %v4375 = vunpack.c.l.b16 %v4343
      %v4376 = vunpack.c.l.b16 %v4344
      %v4377 = vunpack.c.l.b16 %v4345
      %v4378 = vunpack.c.l.b16 %v4346
      %v4379 = vunpack.c.l.b16 %v4347
      %v4380 = vunpack.c.l.b16 %v4348
      %v4381 = vpack.c.b16 %v4366, %v4365
      %v4382 = vpack.c.b16 %v4368, %v4367
      %v4383 = vpack.c.b16 %v4370, %v4369
      %v4384 = vpack.c.b16 %v4372, %v4371
      %v4385 = vpack.c.b16 %v4374, %v4373
      %v4386 = vpack.c.b16 %v4376, %v4375
      %v4387 = vpack.c.b16 %v4378, %v4377
      %v4388 = vpack.c.b16 %v4380, %v4379
      %4397 = vmatprep.subr.bf16.mxu0 0
      %4398 = vmatpush1.bf16.msra.mxu0 %v4381
      %4399 = vmatprep.subr.bf16.mxu0 0
      %4400 = vmatpush1.bf16.msra.mxu0 %v4382
      %4401 = vmatprep.subr.bf16.mxu0 0
      %4402 = vmatpush1.bf16.msra.mxu0 %v4383
      %4403 = vmatprep.subr.bf16.mxu0 0
      %4404 = vmatpush1.bf16.msra.mxu0 %v4384
      %4405 = vmatprep.subr.bf16.mxu0 0
      %4406 = vmatpush1.bf16.msra.mxu0 %v4385
      %4407 = vmatprep.subr.bf16.mxu0 0
      %4408 = vmatpush1.bf16.msra.mxu0 %v4386
      %4409 = vmatprep.subr.bf16.mxu0 0
      %4410 = vmatpush1.bf16.msra.mxu0 %v4387
      %4411 = vmatprep.subr.bf16.mxu0 0
      %4412 = vmatpush1.bf16.msra.mxu0 %v4388
      %4413 = vmatprep.subr.bf16.mxu0 0
      %4414 = vmatpush1.bf16.msra.mxu0 0
      %4415 = vmatprep.subr.bf16.mxu0 0
      %4416 = vmatpush1.bf16.msra.mxu0 0
      %4417 = vmatprep.subr.bf16.mxu0 0
      %4418 = vmatpush1.bf16.msra.mxu0 0
      %4419 = vmatprep.subr.bf16.mxu0 0
      %4420 = vmatpush1.bf16.msra.mxu0 0
      %4421 = vmatprep.subr.bf16.mxu0 0
      %4422 = vmatpush1.bf16.msra.mxu0 0
      %4423 = vmatprep.subr.bf16.mxu0 0
      %4424 = vmatpush1.bf16.msra.mxu0 0
      %4425 = vmatprep.subr.bf16.mxu0 0
      %4426 = vmatpush1.bf16.msra.mxu0 0
      %4427 = vmatprep.subr.bf16.mxu0 0
      %4428 = vmatpush1.bf16.msra.mxu0 0
      %4429 = vmatprep.mubr.bf16.mxu0 0
      %4430 = vmatmul.mubr.bf16.gmra.mrb[0].mxu0 %v4316
      %v4431 = vpop.f32.mrb[0].mxu0
      %v4432 = vadd.f32 0.0, %v4431
      %v4433 = vpop.f32.mrb[0].mxu0
      %v4434 = vpop.f32.mrb[0].mxu0
      %v4435 = vadd.f32 0.0, %v4434
      %v4436 = vpop.f32.mrb[0].mxu0
      %4437 = vmatprep.mubr.bf16.mxu0 0
      %4438 = vmatmul.mubr.bf16.gmra.mrb[0].mxu0 %v4317
      %v4439 = vpop.f32.mrb[0].mxu0
      %v4440 = vadd.f32 0.0, %v4439
      %v4441 = vpop.f32.mrb[0].mxu0
      %v4442 = vpop.f32.mrb[0].mxu0
      %v4443 = vadd.f32 0.0, %v4442
      %v4444 = vpop.f32.mrb[0].mxu0
      %4445 = vmatprep.mubr.bf16.mxu0 0
      %4446 = vmatmul.mubr.bf16.gmra.mrb[0].mxu0 %v4318
      %v4447 = vpop.f32.mrb[0].mxu0
      %v4448 = vadd.f32 0.0, %v4447
      %v4449 = vpop.f32.mrb[0].mxu0
      %v4450 = vpop.f32.mrb[0].mxu0
      %v4451 = vadd.f32 0.0, %v4450
      %v4452 = vpop.f32.mrb[0].mxu0
      %4453 = vmatprep.mubr.bf16.mxu0 0
      %4454 = vmatmul.mubr.bf16.gmra.mrb[0].mxu0 %v4319
      %v4455 = vpop.f32.mrb[0].mxu0
      %v4456 = vadd.f32 0.0, %v4455
      %v4457 = vpop.f32.mrb[0].mxu0
      %v4458 = vpop.f32.mrb[0].mxu0
      %v4459 = vadd.f32 0.0, %v4458
      %v4460 = vpop.f32.mrb[0].mxu0
      %4461 = vmatprep.mubr.bf16.mxu0 0
      %4462 = vmatmul.mubr.bf16.gmra.mrb[0].mxu0 %v4320
      %v4463 = vpop.f32.mrb[0].mxu0
      %v4464 = vadd.f32 0.0, %v4463
      %v4465 = vpop.f32.mrb[0].mxu0
      %v4466 = vpop.f32.mrb[0].mxu0
      %v4467 = vadd.f32 0.0, %v4466
      %v4468 = vpop.f32.mrb[0].mxu0
      %4469 = vmatprep.mubr.bf16.mxu0 0
      %4470 = vmatmul.mubr.bf16.gmra.mrb[0].mxu0 %v4321
      %v4471 = vpop.f32.mrb[0].mxu0
      %v4472 = vadd.f32 0.0, %v4471
      %v4473 = vpop.f32.mrb[0].mxu0
      %v4474 = vpop.f32.mrb[0].mxu0
      %v4475 = vadd.f32 0.0, %v4474
      %v4476 = vpop.f32.mrb[0].mxu0
      %4477 = vmatprep.mubr.bf16.mxu0 0
      %4478 = vmatmul.mubr.bf16.gmra.mrb[0].mxu0 %v4322
      %v4479 = vpop.f32.mrb[0].mxu0
      %v4480 = vadd.f32 0.0, %v4479
      %v4481 = vpop.f32.mrb[0].mxu0
      %v4482 = vpop.f32.mrb[0].mxu0
      %v4483 = vadd.f32 0.0, %v4482
      %v4484 = vpop.f32.mrb[0].mxu0
      %4485 = vmatprep.mubr.bf16.mxu0 0
      %4486 = vmatmul.mubr.bf16.gmra.mrb[0].mxu0 %v4323
      %v4487 = vpop.f32.mrb[0].mxu0
      %v4488 = vadd.f32 0.0, %v4487
      %v4489 = vpop.f32.mrb[0].mxu0
      %v4490 = vpop.f32.mrb[0].mxu0
      %v4491 = vadd.f32 0.0, %v4490
      %v4492 = vpop.f32.mrb[0].mxu0
      %4493 = vmatprep.mubr.bf16.mxu0 0
      %4494 = vmatmul.mubr.bf16.gmra.mrb[0].mxu0 %v4324
      %v4495 = vpop.f32.mrb[0].mxu0
      %v4496 = vadd.f32 0.0, %v4495
      %v4497 = vpop.f32.mrb[0].mxu0
      %v4498 = vpop.f32.mrb[0].mxu0
      %v4499 = vadd.f32 0.0, %v4498
      %v4500 = vpop.f32.mrb[0].mxu0
      %4501 = vmatprep.mubr.bf16.mxu0 0
      %4502 = vmatmul.mubr.bf16.gmra.mrb[0].mxu0 %v4325
      %v4503 = vpop.f32.mrb[0].mxu0
      %v4504 = vadd.f32 0.0, %v4503
      %v4505 = vpop.f32.mrb[0].mxu0
      %v4506 = vpop.f32.mrb[0].mxu0
      %v4507 = vadd.f32 0.0, %v4506
      %v4508 = vpop.f32.mrb[0].mxu0
      %4509 = vmatprep.mubr.bf16.mxu0 0
      %4510 = vmatmul.mubr.bf16.gmra.mrb[0].mxu0 %v4326
      %v4511 = vpop.f32.mrb[0].mxu0
      %v4512 = vadd.f32 0.0, %v4511
      %v4513 = vpop.f32.mrb[0].mxu0
      %v4514 = vpop.f32.mrb[0].mxu0
      %v4515 = vadd.f32 0.0, %v4514
      %v4516 = vpop.f32.mrb[0].mxu0
      %4517 = vmatprep.mubr.bf16.mxu0 0
      %4518 = vmatmul.mubr.bf16.gmra.mrb[0].mxu0 %v4327
      %v4519 = vpop.f32.mrb[0].mxu0
      %v4520 = vadd.f32 0.0, %v4519
      %v4521 = vpop.f32.mrb[0].mxu0
      %v4522 = vpop.f32.mrb[0].mxu0
      %v4523 = vadd.f32 0.0, %v4522
      %v4524 = vpop.f32.mrb[0].mxu0
      %4525 = vmatprep.mubr.bf16.mxu0 0
      %4526 = vmatmul.mubr.bf16.gmra.mrb[0].mxu0 %v4328
      %v4527 = vpop.f32.mrb[0].mxu0
      %v4528 = vadd.f32 0.0, %v4527
      %v4529 = vpop.f32.mrb[0].mxu0
      %v4530 = vpop.f32.mrb[0].mxu0
      %v4531 = vadd.f32 0.0, %v4530
      %v4532 = vpop.f32.mrb[0].mxu0
      %4533 = vmatprep.mubr.bf16.mxu0 0
      %4534 = vmatmul.mubr.bf16.gmra.mrb[0].mxu0 %v4329
      %v4535 = vpop.f32.mrb[0].mxu0
      %v4536 = vadd.f32 0.0, %v4535
      %v4537 = vpop.f32.mrb[0].mxu0
      %v4538 = vpop.f32.mrb[0].mxu0
      %v4539 = vadd.f32 0.0, %v4538
      %v4540 = vpop.f32.mrb[0].mxu0
      %4541 = vmatprep.mubr.bf16.mxu0 0
      %4542 = vmatmul.mubr.bf16.gmra.mrb[0].mxu0 %v4330
      %v4543 = vpop.f32.mrb[0].mxu0
      %v4544 = vadd.f32 0.0, %v4543
      %v4545 = vpop.f32.mrb[0].mxu0
      %v4546 = vpop.f32.mrb[0].mxu0
      %v4547 = vadd.f32 0.0, %v4546
      %v4548 = vpop.f32.mrb[0].mxu0
      %4549 = vmatprep.mubr.bf16.mxu0 0
      %4550 = vmatmul.mubr.bf16.gmra.mrb[0].mxu0 %v4331
      %v4551 = vpop.f32.mrb[0].mxu0
      %v4552 = vadd.f32 0.0, %v4551
      %v4553 = vpop.f32.mrb[0].mxu0
      %v4554 = vpop.f32.mrb[0].mxu0
      %v4555 = vadd.f32 0.0, %v4554
      %v4556 = vpop.f32.mrb[0].mxu0
      %4557 = vdwg.mxu0
      %v4558 = vadd.f32 %v4252, %v4432
      %v4559 = vadd.f32 %v4253, %v4435
      %v4560 = vadd.f32 %v4254, %v4440
      %v4561 = vadd.f32 %v4255, %v4443
      %v4562 = vadd.f32 %v4256, %v4448
      %v4563 = vadd.f32 %v4257, %v4451
      %v4564 = vadd.f32 %v4258, %v4456
      %v4565 = vadd.f32 %v4259, %v4459
      %v4566 = vadd.f32 %v4260, %v4464
      %v4567 = vadd.f32 %v4261, %v4467
      %v4568 = vadd.f32 %v4262, %v4472
      %v4569 = vadd.f32 %v4263, %v4475
      %v4570 = vadd.f32 %v4264, %v4480
      %v4571 = vadd.f32 %v4265, %v4483
      %v4572 = vadd.f32 %v4266, %v4488
      %v4573 = vadd.f32 %v4267, %v4491
      %v4574 = vadd.f32 %v4268, %v4496
      %v4575 = vadd.f32 %v4269, %v4499
      %v4576 = vadd.f32 %v4270, %v4504
      %v4577 = vadd.f32 %v4271, %v4507
      %v4578 = vadd.f32 %v4272, %v4512
      %v4579 = vadd.f32 %v4273, %v4515
      %v4580 = vadd.f32 %v4274, %v4520
      %v4581 = vadd.f32 %v4275, %v4523
      %v4582 = vadd.f32 %v4276, %v4528
      %v4583 = vadd.f32 %v4277, %v4531
      %v4584 = vadd.f32 %v4278, %v4536
      %v4585 = vadd.f32 %v4279, %v4539
      %v4586 = vadd.f32 %v4280, %v4544
      %v4587 = vadd.f32 %v4281, %v4547
      %v4588 = vadd.f32 %v4282, %v4552
      %v4589 = vadd.f32 %v4283, %v4555
      %v4590 = vld [vmem:[%s3092 + $0x2] sm:$0xff]
      %v4591 = vld [vmem:[%s3092 + $0xa] sm:$0xff]
      %v4592 = vld [vmem:[%s3092 + $0x1a] sm:$0xff]
      %v4593 = vld [vmem:[%s3092 + $0x22] sm:$0xff]
      %v4594 = vld [vmem:[%s3092 + $0x32] sm:$0xff]
      %v4595 = vld [vmem:[%s3092 + $0x3a] sm:$0xff]
      %v4596 = vld [vmem:[%s3092 + $0x4a] sm:$0xff]
      %v4597 = vld [vmem:[%s3092 + $0x52] sm:$0xff]
      %v4598 = vld [vmem:[%s3092 + $0x62] sm:$0xff]
      %v4599 = vld [vmem:[%s3092 + $0x6a] sm:$0xff]
      %v4600 = vld [vmem:[%s3092 + $0x7a] sm:$0xff]
      %v4601 = vld [vmem:[%s3092 + $0x82] sm:$0xff]
      %v4602 = vld [vmem:[%s3092 + $0x92] sm:$0xff]
      %v4603 = vld [vmem:[%s3092 + $0x9a] sm:$0xff]
      %v4604 = vld [vmem:[%s3092 + $0xaa] sm:$0xff]
      %v4605 = vld [vmem:[%s3092 + $0xb2] sm:$0xff]
      %v4606 = vld [vmem:[%s3092 + $0xc2] sm:$0xff]
      %v4607 = vld [vmem:[%s3092 + $0xca] sm:$0xff]
      %v4608 = vld [vmem:[%s3092 + $0xda] sm:$0xff]
      %v4609 = vld [vmem:[%s3092 + $0xe2] sm:$0xff]
      %v4610 = vld [vmem:[%s3092 + $0xf2] sm:$0xff]
      %v4611 = vld [vmem:[%s3092 + $0xfa] sm:$0xff]
      %v4612 = vld [vmem:[%s3092 + $0x10a] sm:$0xff]
      %v4613 = vld [vmem:[%s3092 + $0x112] sm:$0xff]
      %v4614 = vld [vmem:[%s3092 + $0x122] sm:$0xff]
      %v4615 = vld [vmem:[%s3092 + $0x12a] sm:$0xff]
      %v4616 = vld [vmem:[%s3092 + $0x13a] sm:$0xff]
      %v4617 = vld [vmem:[%s3092 + $0x142] sm:$0xff]
      %v4618 = vld [vmem:[%s3092 + $0x152] sm:$0xff]
      %v4619 = vld [vmem:[%s3092 + $0x15a] sm:$0xff]
      %v4620 = vld [vmem:[%s3092 + $0x16a] sm:$0xff]
      %v4621 = vld [vmem:[%s3092 + $0x172] sm:$0xff]
      %v4622 = vpack.c.bf16 %v4591, %v4590
      %v4623 = vpack.c.bf16 %v4593, %v4592
      %v4624 = vpack.c.bf16 %v4595, %v4594
      %v4625 = vpack.c.bf16 %v4597, %v4596
      %v4626 = vpack.c.bf16 %v4599, %v4598
      %v4627 = vpack.c.bf16 %v4601, %v4600
      %v4628 = vpack.c.bf16 %v4603, %v4602
      %v4629 = vpack.c.bf16 %v4605, %v4604
      %v4630 = vpack.c.bf16 %v4607, %v4606
      %v4631 = vpack.c.bf16 %v4609, %v4608
      %v4632 = vpack.c.bf16 %v4611, %v4610
      %v4633 = vpack.c.bf16 %v4613, %v4612
      %v4634 = vpack.c.bf16 %v4615, %v4614
      %v4635 = vpack.c.bf16 %v4617, %v4616
      %v4636 = vpack.c.bf16 %v4619, %v4618
      %v4637 = vpack.c.bf16 %v4621, %v4620
      %s4638 = scalar_lea.vmem %s3, 320
      %v4639 = vld [vmem:[%s4638] sm:$0xf]
      %v4640 = vld [vmem:[%s4638 + $0x4] sm:$0xf]
      %v4641 = vld [vmem:[%s4638 + $0x8] sm:$0xf]
      %v4642 = vld [vmem:[%s4638 + $0xc] sm:$0xf]
      %v4643 = vld [vmem:[%s4638 + $0x10] sm:$0xf]
      %v4644 = vld [vmem:[%s4638 + $0x14] sm:$0xf]
      %v4645 = vld [vmem:[%s4638 + $0x18] sm:$0xf]
      %v4646 = vld [vmem:[%s4638 + $0x1c] sm:$0xf]
      %v4647 = vld [vmem:[%s4638 + $0x20] sm:$0xf]
      %v4648 = vld [vmem:[%s4638 + $0x24] sm:$0xf]
      %v4649 = vld [vmem:[%s4638 + $0x28] sm:$0xf]
      %v4650 = vld [vmem:[%s4638 + $0x2c] sm:$0xf]
      %v4651 = vld [vmem:[%s4638 + $0x30] sm:$0xf]
      %v4652 = vld [vmem:[%s4638 + $0x34] sm:$0xf]
      %v4653 = vld [vmem:[%s4638 + $0x38] sm:$0xf]
      %v4654 = vld [vmem:[%s4638 + $0x3c] sm:$0xf]
      %v4671 = vunpack.c.l.b16 %v4639
      %v4672 = vunpack.c.l.b16 %v4640
      %v4673 = vunpack.c.l.b16 %v4641
      %v4674 = vunpack.c.l.b16 %v4642
      %v4675 = vunpack.c.l.b16 %v4643
      %v4676 = vunpack.c.l.b16 %v4644
      %v4677 = vunpack.c.l.b16 %v4645
      %v4678 = vunpack.c.l.b16 %v4646
      %v4679 = vunpack.c.l.b16 %v4647
      %v4680 = vunpack.c.l.b16 %v4648
      %v4681 = vunpack.c.l.b16 %v4649
      %v4682 = vunpack.c.l.b16 %v4650
      %v4683 = vunpack.c.l.b16 %v4651
      %v4684 = vunpack.c.l.b16 %v4652
      %v4685 = vunpack.c.l.b16 %v4653
      %v4686 = vunpack.c.l.b16 %v4654
      %v4687 = vpack.c.b16 %v4672, %v4671
      %v4688 = vpack.c.b16 %v4674, %v4673
      %v4689 = vpack.c.b16 %v4676, %v4675
      %v4690 = vpack.c.b16 %v4678, %v4677
      %v4691 = vpack.c.b16 %v4680, %v4679
      %v4692 = vpack.c.b16 %v4682, %v4681
      %v4693 = vpack.c.b16 %v4684, %v4683
      %v4694 = vpack.c.b16 %v4686, %v4685
      %4703 = vmatprep.subr.bf16.mxu0 0
      %4704 = vmatpush1.bf16.msra.mxu0 %v4687
      %4705 = vmatprep.subr.bf16.mxu0 0
      %4706 = vmatpush1.bf16.msra.mxu0 %v4688
      %4707 = vmatprep.subr.bf16.mxu0 0
      %4708 = vmatpush1.bf16.msra.mxu0 %v4689
      %4709 = vmatprep.subr.bf16.mxu0 0
      %4710 = vmatpush1.bf16.msra.mxu0 %v4690
      %4711 = vmatprep.subr.bf16.mxu0 0
      %4712 = vmatpush1.bf16.msra.mxu0 %v4691
      %4713 = vmatprep.subr.bf16.mxu0 0
      %4714 = vmatpush1.bf16.msra.mxu0 %v4692
      %4715 = vmatprep.subr.bf16.mxu0 0
      %4716 = vmatpush1.bf16.msra.mxu0 %v4693
      %4717 = vmatprep.subr.bf16.mxu0 0
      %4718 = vmatpush1.bf16.msra.mxu0 %v4694
      %4719 = vmatprep.subr.bf16.mxu0 0
      %4720 = vmatpush1.bf16.msra.mxu0 0
      %4721 = vmatprep.subr.bf16.mxu0 0
      %4722 = vmatpush1.bf16.msra.mxu0 0
      %4723 = vmatprep.subr.bf16.mxu0 0
      %4724 = vmatpush1.bf16.msra.mxu0 0
      %4725 = vmatprep.subr.bf16.mxu0 0
      %4726 = vmatpush1.bf16.msra.mxu0 0
      %4727 = vmatprep.subr.bf16.mxu0 0
      %4728 = vmatpush1.bf16.msra.mxu0 0
      %4729 = vmatprep.subr.bf16.mxu0 0
      %4730 = vmatpush1.bf16.msra.mxu0 0
      %4731 = vmatprep.subr.bf16.mxu0 0
      %4732 = vmatpush1.bf16.msra.mxu0 0
      %4733 = vmatprep.subr.bf16.mxu0 0
      %4734 = vmatpush1.bf16.msra.mxu0 0
      %4735 = vmatprep.mubr.bf16.mxu0 0
      %4736 = vmatmul.mubr.bf16.gmra.mrb[0].mxu0 %v4622
      %v4737 = vpop.f32.mrb[0].mxu0
      %v4738 = vadd.f32 0.0, %v4737
      %v4739 = vpop.f32.mrb[0].mxu0
      %v4740 = vpop.f32.mrb[0].mxu0
      %v4741 = vadd.f32 0.0, %v4740
      %v4742 = vpop.f32.mrb[0].mxu0
      %4743 = vmatprep.mubr.bf16.mxu0 0
      %4744 = vmatmul.mubr.bf16.gmra.mrb[0].mxu0 %v4623
      %v4745 = vpop.f32.mrb[0].mxu0
      %v4746 = vadd.f32 0.0, %v4745
      %v4747 = vpop.f32.mrb[0].mxu0
      %v4748 = vpop.f32.mrb[0].mxu0
      %v4749 = vadd.f32 0.0, %v4748
      %v4750 = vpop.f32.mrb[0].mxu0
      %4751 = vmatprep.mubr.bf16.mxu0 0
      %4752 = vmatmul.mubr.bf16.gmra.mrb[0].mxu0 %v4624
      %v4753 = vpop.f32.mrb[0].mxu0
      %v4754 = vadd.f32 0.0, %v4753
      %v4755 = vpop.f32.mrb[0].mxu0
      %v4756 = vpop.f32.mrb[0].mxu0
      %v4757 = vadd.f32 0.0, %v4756
      %v4758 = vpop.f32.mrb[0].mxu0
      %4759 = vmatprep.mubr.bf16.mxu0 0
      %4760 = vmatmul.mubr.bf16.gmra.mrb[0].mxu0 %v4625
      %v4761 = vpop.f32.mrb[0].mxu0
      %v4762 = vadd.f32 0.0, %v4761
      %v4763 = vpop.f32.mrb[0].mxu0
      %v4764 = vpop.f32.mrb[0].mxu0
      %v4765 = vadd.f32 0.0, %v4764
      %v4766 = vpop.f32.mrb[0].mxu0
      %4767 = vmatprep.mubr.bf16.mxu0 0
      %4768 = vmatmul.mubr.bf16.gmra.mrb[0].mxu0 %v4626
      %v4769 = vpop.f32.mrb[0].mxu0
      %v4770 = vadd.f32 0.0, %v4769
      %v4771 = vpop.f32.mrb[0].mxu0
      %v4772 = vpop.f32.mrb[0].mxu0
      %v4773 = vadd.f32 0.0, %v4772
      %v4774 = vpop.f32.mrb[0].mxu0
      %4775 = vmatprep.mubr.bf16.mxu0 0
      %4776 = vmatmul.mubr.bf16.gmra.mrb[0].mxu0 %v4627
      %v4777 = vpop.f32.mrb[0].mxu0
      %v4778 = vadd.f32 0.0, %v4777
      %v4779 = vpop.f32.mrb[0].mxu0
      %v4780 = vpop.f32.mrb[0].mxu0
      %v4781 = vadd.f32 0.0, %v4780
      %v4782 = vpop.f32.mrb[0].mxu0
      %4783 = vmatprep.mubr.bf16.mxu0 0
      %4784 = vmatmul.mubr.bf16.gmra.mrb[0].mxu0 %v4628
      %v4785 = vpop.f32.mrb[0].mxu0
      %v4786 = vadd.f32 0.0, %v4785
      %v4787 = vpop.f32.mrb[0].mxu0
      %v4788 = vpop.f32.mrb[0].mxu0
      %v4789 = vadd.f32 0.0, %v4788
      %v4790 = vpop.f32.mrb[0].mxu0
      %4791 = vmatprep.mubr.bf16.mxu0 0
      %4792 = vmatmul.mubr.bf16.gmra.mrb[0].mxu0 %v4629
      %v4793 = vpop.f32.mrb[0].mxu0
      %v4794 = vadd.f32 0.0, %v4793
      %v4795 = vpop.f32.mrb[0].mxu0
      %v4796 = vpop.f32.mrb[0].mxu0
      %v4797 = vadd.f32 0.0, %v4796
      %v4798 = vpop.f32.mrb[0].mxu0
      %4799 = vmatprep.mubr.bf16.mxu0 0
      %4800 = vmatmul.mubr.bf16.gmra.mrb[0].mxu0 %v4630
      %v4801 = vpop.f32.mrb[0].mxu0
      %v4802 = vadd.f32 0.0, %v4801
      %v4803 = vpop.f32.mrb[0].mxu0
      %v4804 = vpop.f32.mrb[0].mxu0
      %v4805 = vadd.f32 0.0, %v4804
      %v4806 = vpop.f32.mrb[0].mxu0
      %4807 = vmatprep.mubr.bf16.mxu0 0
      %4808 = vmatmul.mubr.bf16.gmra.mrb[0].mxu0 %v4631
      %v4809 = vpop.f32.mrb[0].mxu0
      %v4810 = vadd.f32 0.0, %v4809
      %v4811 = vpop.f32.mrb[0].mxu0
      %v4812 = vpop.f32.mrb[0].mxu0
      %v4813 = vadd.f32 0.0, %v4812
      %v4814 = vpop.f32.mrb[0].mxu0
      %4815 = vmatprep.mubr.bf16.mxu0 0
      %4816 = vmatmul.mubr.bf16.gmra.mrb[0].mxu0 %v4632
      %v4817 = vpop.f32.mrb[0].mxu0
      %v4818 = vadd.f32 0.0, %v4817
      %v4819 = vpop.f32.mrb[0].mxu0
      %v4820 = vpop.f32.mrb[0].mxu0
      %v4821 = vadd.f32 0.0, %v4820
      %v4822 = vpop.f32.mrb[0].mxu0
      %4823 = vmatprep.mubr.bf16.mxu0 0
      %4824 = vmatmul.mubr.bf16.gmra.mrb[0].mxu0 %v4633
      %v4825 = vpop.f32.mrb[0].mxu0
      %v4826 = vadd.f32 0.0, %v4825
      %v4827 = vpop.f32.mrb[0].mxu0
      %v4828 = vpop.f32.mrb[0].mxu0
      %v4829 = vadd.f32 0.0, %v4828
      %v4830 = vpop.f32.mrb[0].mxu0
      %4831 = vmatprep.mubr.bf16.mxu0 0
      %4832 = vmatmul.mubr.bf16.gmra.mrb[0].mxu0 %v4634
      %v4833 = vpop.f32.mrb[0].mxu0
      %v4834 = vadd.f32 0.0, %v4833
      %v4835 = vpop.f32.mrb[0].mxu0
      %v4836 = vpop.f32.mrb[0].mxu0
      %v4837 = vadd.f32 0.0, %v4836
      %v4838 = vpop.f32.mrb[0].mxu0
      %4839 = vmatprep.mubr.bf16.mxu0 0
      %4840 = vmatmul.mubr.bf16.gmra.mrb[0].mxu0 %v4635
      %v4841 = vpop.f32.mrb[0].mxu0
      %v4842 = vadd.f32 0.0, %v4841
      %v4843 = vpop.f32.mrb[0].mxu0
      %v4844 = vpop.f32.mrb[0].mxu0
      %v4845 = vadd.f32 0.0, %v4844
      %v4846 = vpop.f32.mrb[0].mxu0
      %4847 = vmatprep.mubr.bf16.mxu0 0
      %4848 = vmatmul.mubr.bf16.gmra.mrb[0].mxu0 %v4636
      %v4849 = vpop.f32.mrb[0].mxu0
      %v4850 = vadd.f32 0.0, %v4849
      %v4851 = vpop.f32.mrb[0].mxu0
      %v4852 = vpop.f32.mrb[0].mxu0
      %v4853 = vadd.f32 0.0, %v4852
      %v4854 = vpop.f32.mrb[0].mxu0
      %4855 = vmatprep.mubr.bf16.mxu0 0
      %4856 = vmatmul.mubr.bf16.gmra.mrb[0].mxu0 %v4637
      %v4857 = vpop.f32.mrb[0].mxu0
      %v4858 = vadd.f32 0.0, %v4857
      %v4859 = vpop.f32.mrb[0].mxu0
      %v4860 = vpop.f32.mrb[0].mxu0
      %v4861 = vadd.f32 0.0, %v4860
      %v4862 = vpop.f32.mrb[0].mxu0
      %4863 = vdwg.mxu0
      %v4864 = vadd.f32 %v4558, %v4738
      %v4865 = vadd.f32 %v4559, %v4741
      %v4866 = vadd.f32 %v4560, %v4746
      %v4867 = vadd.f32 %v4561, %v4749
      %v4868 = vadd.f32 %v4562, %v4754
      %v4869 = vadd.f32 %v4563, %v4757
      %v4870 = vadd.f32 %v4564, %v4762
      %v4871 = vadd.f32 %v4565, %v4765
      %v4872 = vadd.f32 %v4566, %v4770
      %v4873 = vadd.f32 %v4567, %v4773
      %v4874 = vadd.f32 %v4568, %v4778
      %v4875 = vadd.f32 %v4569, %v4781
      %v4876 = vadd.f32 %v4570, %v4786
      %v4877 = vadd.f32 %v4571, %v4789
      %v4878 = vadd.f32 %v4572, %v4794
      %v4879 = vadd.f32 %v4573, %v4797
      %v4880 = vadd.f32 %v4574, %v4802
      %v4881 = vadd.f32 %v4575, %v4805
      %v4882 = vadd.f32 %v4576, %v4810
      %v4883 = vadd.f32 %v4577, %v4813
      %v4884 = vadd.f32 %v4578, %v4818
      %v4885 = vadd.f32 %v4579, %v4821
      %v4886 = vadd.f32 %v4580, %v4826
      %v4887 = vadd.f32 %v4581, %v4829
      %v4888 = vadd.f32 %v4582, %v4834
      %v4889 = vadd.f32 %v4583, %v4837
      %v4890 = vadd.f32 %v4584, %v4842
      %v4891 = vadd.f32 %v4585, %v4845
      %v4892 = vadd.f32 %v4586, %v4850
      %v4893 = vadd.f32 %v4587, %v4853
      %v4894 = vadd.f32 %v4588, %v4858
      %v4895 = vadd.f32 %v4589, %v4861
      %s4896 = scalar_lea.vmem [#allocation3], 48
      %v4897 = vld [vmem:[%s4896] sm:$0xff]
      %v4898 = vld [vmem:[%s4896 + $0x8] sm:$0xff]
      %v4899 = vld [vmem:[%s4896 + $0x18] sm:$0xff]
      %v4900 = vld [vmem:[%s4896 + $0x20] sm:$0xff]
      %v4901 = vld [vmem:[%s4896 + $0x30] sm:$0xff]
      %v4902 = vld [vmem:[%s4896 + $0x38] sm:$0xff]
      %v4903 = vld [vmem:[%s4896 + $0x48] sm:$0xff]
      %v4904 = vld [vmem:[%s4896 + $0x50] sm:$0xff]
      %v4905 = vld [vmem:[%s4896 + $0x60] sm:$0xff]
      %v4906 = vld [vmem:[%s4896 + $0x68] sm:$0xff]
      %v4907 = vld [vmem:[%s4896 + $0x78] sm:$0xff]
      %v4908 = vld [vmem:[%s4896 + $0x80] sm:$0xff]
      %v4909 = vld [vmem:[%s4896 + $0x90] sm:$0xff]
      %v4910 = vld [vmem:[%s4896 + $0x98] sm:$0xff]
      %v4911 = vld [vmem:[%s4896 + $0xa8] sm:$0xff]
      %v4912 = vld [vmem:[%s4896 + $0xb0] sm:$0xff]
      %v4913 = vld [vmem:[%s4896 + $0xc0] sm:$0xff]
      %v4914 = vld [vmem:[%s4896 + $0xc8] sm:$0xff]
      %v4915 = vld [vmem:[%s4896 + $0xd8] sm:$0xff]
      %v4916 = vld [vmem:[%s4896 + $0xe0] sm:$0xff]
      %v4917 = vld [vmem:[%s4896 + $0xf0] sm:$0xff]
      %v4918 = vld [vmem:[%s4896 + $0xf8] sm:$0xff]
      %v4919 = vld [vmem:[%s4896 + $0x108] sm:$0xff]
      %v4920 = vld [vmem:[%s4896 + $0x110] sm:$0xff]
      %v4921 = vld [vmem:[%s4896 + $0x120] sm:$0xff]
      %v4922 = vld [vmem:[%s4896 + $0x128] sm:$0xff]
      %v4923 = vld [vmem:[%s4896 + $0x138] sm:$0xff]
      %v4924 = vld [vmem:[%s4896 + $0x140] sm:$0xff]
      %v4925 = vld [vmem:[%s4896 + $0x150] sm:$0xff]
      %v4926 = vld [vmem:[%s4896 + $0x158] sm:$0xff]
      %v4927 = vld [vmem:[%s4896 + $0x168] sm:$0xff]
      %v4928 = vld [vmem:[%s4896 + $0x170] sm:$0xff]
      %v4929 = vpack.c.bf16 %v4898, %v4897
      %v4930 = vpack.c.bf16 %v4900, %v4899
      %v4931 = vpack.c.bf16 %v4902, %v4901
      %v4932 = vpack.c.bf16 %v4904, %v4903
      %v4933 = vpack.c.bf16 %v4906, %v4905
      %v4934 = vpack.c.bf16 %v4908, %v4907
      %v4935 = vpack.c.bf16 %v4910, %v4909
      %v4936 = vpack.c.bf16 %v4912, %v4911
      %v4937 = vpack.c.bf16 %v4914, %v4913
      %v4938 = vpack.c.bf16 %v4916, %v4915
      %v4939 = vpack.c.bf16 %v4918, %v4917
      %v4940 = vpack.c.bf16 %v4920, %v4919
      %v4941 = vpack.c.bf16 %v4922, %v4921
      %v4942 = vpack.c.bf16 %v4924, %v4923
      %v4943 = vpack.c.bf16 %v4926, %v4925
      %v4944 = vpack.c.bf16 %v4928, %v4927
      %s4945 = scalar_lea.vmem %s3, 384
      %v4946 = vld [vmem:[%s4945] sm:$0xf]
      %v4947 = vld [vmem:[%s4945 + $0x4] sm:$0xf]
      %v4948 = vld [vmem:[%s4945 + $0x8] sm:$0xf]
      %v4949 = vld [vmem:[%s4945 + $0xc] sm:$0xf]
      %v4950 = vld [vmem:[%s4945 + $0x10] sm:$0xf]
      %v4951 = vld [vmem:[%s4945 + $0x14] sm:$0xf]
      %v4952 = vld [vmem:[%s4945 + $0x18] sm:$0xf]
      %v4953 = vld [vmem:[%s4945 + $0x1c] sm:$0xf]
      %v4954 = vld [vmem:[%s4945 + $0x20] sm:$0xf]
      %v4955 = vld [vmem:[%s4945 + $0x24] sm:$0xf]
      %v4956 = vld [vmem:[%s4945 + $0x28] sm:$0xf]
      %v4957 = vld [vmem:[%s4945 + $0x2c] sm:$0xf]
      %v4958 = vld [vmem:[%s4945 + $0x30] sm:$0xf]
      %v4959 = vld [vmem:[%s4945 + $0x34] sm:$0xf]
      %v4960 = vld [vmem:[%s4945 + $0x38] sm:$0xf]
      %v4961 = vld [vmem:[%s4945 + $0x3c] sm:$0xf]
      %v4978 = vunpack.c.l.b16 %v4946
      %v4979 = vunpack.c.l.b16 %v4947
      %v4980 = vunpack.c.l.b16 %v4948
      %v4981 = vunpack.c.l.b16 %v4949
      %v4982 = vunpack.c.l.b16 %v4950
      %v4983 = vunpack.c.l.b16 %v4951
      %v4984 = vunpack.c.l.b16 %v4952
      %v4985 = vunpack.c.l.b16 %v4953
      %v4986 = vunpack.c.l.b16 %v4954
      %v4987 = vunpack.c.l.b16 %v4955
      %v4988 = vunpack.c.l.b16 %v4956
      %v4989 = vunpack.c.l.b16 %v4957
      %v4990 = vunpack.c.l.b16 %v4958
      %v4991 = vunpack.c.l.b16 %v4959
      %v4992 = vunpack.c.l.b16 %v4960
      %v4993 = vunpack.c.l.b16 %v4961
      %v4994 = vpack.c.b16 %v4979, %v4978
      %v4995 = vpack.c.b16 %v4981, %v4980
      %v4996 = vpack.c.b16 %v4983, %v4982
      %v4997 = vpack.c.b16 %v4985, %v4984
      %v4998 = vpack.c.b16 %v4987, %v4986
      %v4999 = vpack.c.b16 %v4989, %v4988
      %v5000 = vpack.c.b16 %v4991, %v4990
      %v5001 = vpack.c.b16 %v4993, %v4992
      %5010 = vmatprep.subr.bf16.mxu0 0
      %5011 = vmatpush1.bf16.msra.mxu0 %v4994
      %5012 = vmatprep.subr.bf16.mxu0 0
      %5013 = vmatpush1.bf16.msra.mxu0 %v4995
      %5014 = vmatprep.subr.bf16.mxu0 0
      %5015 = vmatpush1.bf16.msra.mxu0 %v4996
      %5016 = vmatprep.subr.bf16.mxu0 0
      %5017 = vmatpush1.bf16.msra.mxu0 %v4997
      %5018 = vmatprep.subr.bf16.mxu0 0
      %5019 = vmatpush1.bf16.msra.mxu0 %v4998
      %5020 = vmatprep.subr.bf16.mxu0 0
      %5021 = vmatpush1.bf16.msra.mxu0 %v4999
      %5022 = vmatprep.subr.bf16.mxu0 0
      %5023 = vmatpush1.bf16.msra.mxu0 %v5000
      %5024 = vmatprep.subr.bf16.mxu0 0
      %5025 = vmatpush1.bf16.msra.mxu0 %v5001
      %5026 = vmatprep.subr.bf16.mxu0 0
      %5027 = vmatpush1.bf16.msra.mxu0 0
      %5028 = vmatprep.subr.bf16.mxu0 0
      %5029 = vmatpush1.bf16.msra.mxu0 0
      %5030 = vmatprep.subr.bf16.mxu0 0
      %5031 = vmatpush1.bf16.msra.mxu0 0
      %5032 = vmatprep.subr.bf16.mxu0 0
      %5033 = vmatpush1.bf16.msra.mxu0 0
      %5034 = vmatprep.subr.bf16.mxu0 0
      %5035 = vmatpush1.bf16.msra.mxu0 0
      %5036 = vmatprep.subr.bf16.mxu0 0
      %5037 = vmatpush1.bf16.msra.mxu0 0
      %5038 = vmatprep.subr.bf16.mxu0 0
      %5039 = vmatpush1.bf16.msra.mxu0 0
      %5040 = vmatprep.subr.bf16.mxu0 0
      %5041 = vmatpush1.bf16.msra.mxu0 0
      %5042 = vmatprep.mubr.bf16.mxu0 0
      %5043 = vmatmul.mubr.bf16.gmra.mrb[0].mxu0 %v4929
      %v5044 = vpop.f32.mrb[0].mxu0
      %v5045 = vadd.f32 0.0, %v5044
      %v5046 = vpop.f32.mrb[0].mxu0
      %v5047 = vpop.f32.mrb[0].mxu0
      %v5048 = vadd.f32 0.0, %v5047
      %v5049 = vpop.f32.mrb[0].mxu0
      %5050 = vmatprep.mubr.bf16.mxu0 0
      %5051 = vmatmul.mubr.bf16.gmra.mrb[0].mxu0 %v4930
      %v5052 = vpop.f32.mrb[0].mxu0
      %v5053 = vadd.f32 0.0, %v5052
      %v5054 = vpop.f32.mrb[0].mxu0
      %v5055 = vpop.f32.mrb[0].mxu0
      %v5056 = vadd.f32 0.0, %v5055
      %v5057 = vpop.f32.mrb[0].mxu0
      %5058 = vmatprep.mubr.bf16.mxu0 0
      %5059 = vmatmul.mubr.bf16.gmra.mrb[0].mxu0 %v4931
      %v5060 = vpop.f32.mrb[0].mxu0
      %v5061 = vadd.f32 0.0, %v5060
      %v5062 = vpop.f32.mrb[0].mxu0
      %v5063 = vpop.f32.mrb[0].mxu0
      %v5064 = vadd.f32 0.0, %v5063
      %v5065 = vpop.f32.mrb[0].mxu0
      %5066 = vmatprep.mubr.bf16.mxu0 0
      %5067 = vmatmul.mubr.bf16.gmra.mrb[0].mxu0 %v4932
      %v5068 = vpop.f32.mrb[0].mxu0
      %v5069 = vadd.f32 0.0, %v5068
      %v5070 = vpop.f32.mrb[0].mxu0
      %v5071 = vpop.f32.mrb[0].mxu0
      %v5072 = vadd.f32 0.0, %v5071
      %v5073 = vpop.f32.mrb[0].mxu0
      %5074 = vmatprep.mubr.bf16.mxu0 0
      %5075 = vmatmul.mubr.bf16.gmra.mrb[0].mxu0 %v4933
      %v5076 = vpop.f32.mrb[0].mxu0
      %v5077 = vadd.f32 0.0, %v5076
      %v5078 = vpop.f32.mrb[0].mxu0
      %v5079 = vpop.f32.mrb[0].mxu0
      %v5080 = vadd.f32 0.0, %v5079
      %v5081 = vpop.f32.mrb[0].mxu0
      %5082 = vmatprep.mubr.bf16.mxu0 0
      %5083 = vmatmul.mubr.bf16.gmra.mrb[0].mxu0 %v4934
      %v5084 = vpop.f32.mrb[0].mxu0
      %v5085 = vadd.f32 0.0, %v5084
      %v5086 = vpop.f32.mrb[0].mxu0
      %v5087 = vpop.f32.mrb[0].mxu0
      %v5088 = vadd.f32 0.0, %v5087
      %v5089 = vpop.f32.mrb[0].mxu0
      %5090 = vmatprep.mubr.bf16.mxu0 0
      %5091 = vmatmul.mubr.bf16.gmra.mrb[0].mxu0 %v4935
      %v5092 = vpop.f32.mrb[0].mxu0
      %v5093 = vadd.f32 0.0, %v5092
      %v5094 = vpop.f32.mrb[0].mxu0
      %v5095 = vpop.f32.mrb[0].mxu0
      %v5096 = vadd.f32 0.0, %v5095
      %v5097 = vpop.f32.mrb[0].mxu0
      %5098 = vmatprep.mubr.bf16.mxu0 0
      %5099 = vmatmul.mubr.bf16.gmra.mrb[0].mxu0 %v4936
      %v5100 = vpop.f32.mrb[0].mxu0
      %v5101 = vadd.f32 0.0, %v5100
      %v5102 = vpop.f32.mrb[0].mxu0
      %v5103 = vpop.f32.mrb[0].mxu0
      %v5104 = vadd.f32 0.0, %v5103
      %v5105 = vpop.f32.mrb[0].mxu0
      %5106 = vmatprep.mubr.bf16.mxu0 0
      %5107 = vmatmul.mubr.bf16.gmra.mrb[0].mxu0 %v4937
      %v5108 = vpop.f32.mrb[0].mxu0
      %v5109 = vadd.f32 0.0, %v5108
      %v5110 = vpop.f32.mrb[0].mxu0
      %v5111 = vpop.f32.mrb[0].mxu0
      %v5112 = vadd.f32 0.0, %v5111
      %v5113 = vpop.f32.mrb[0].mxu0
      %5114 = vmatprep.mubr.bf16.mxu0 0
      %5115 = vmatmul.mubr.bf16.gmra.mrb[0].mxu0 %v4938
      %v5116 = vpop.f32.mrb[0].mxu0
      %v5117 = vadd.f32 0.0, %v5116
      %v5118 = vpop.f32.mrb[0].mxu0
      %v5119 = vpop.f32.mrb[0].mxu0
      %v5120 = vadd.f32 0.0, %v5119
      %v5121 = vpop.f32.mrb[0].mxu0
      %5122 = vmatprep.mubr.bf16.mxu0 0
      %5123 = vmatmul.mubr.bf16.gmra.mrb[0].mxu0 %v4939
      %v5124 = vpop.f32.mrb[0].mxu0
      %v5125 = vadd.f32 0.0, %v5124
      %v5126 = vpop.f32.mrb[0].mxu0
      %v5127 = vpop.f32.mrb[0].mxu0
      %v5128 = vadd.f32 0.0, %v5127
      %v5129 = vpop.f32.mrb[0].mxu0
      %5130 = vmatprep.mubr.bf16.mxu0 0
      %5131 = vmatmul.mubr.bf16.gmra.mrb[0].mxu0 %v4940
      %v5132 = vpop.f32.mrb[0].mxu0
      %v5133 = vadd.f32 0.0, %v5132
      %v5134 = vpop.f32.mrb[0].mxu0
      %v5135 = vpop.f32.mrb[0].mxu0
      %v5136 = vadd.f32 0.0, %v5135
      %v5137 = vpop.f32.mrb[0].mxu0
      %5138 = vmatprep.mubr.bf16.mxu0 0
      %5139 = vmatmul.mubr.bf16.gmra.mrb[0].mxu0 %v4941
      %v5140 = vpop.f32.mrb[0].mxu0
      %v5141 = vadd.f32 0.0, %v5140
      %v5142 = vpop.f32.mrb[0].mxu0
      %v5143 = vpop.f32.mrb[0].mxu0
      %v5144 = vadd.f32 0.0, %v5143
      %v5145 = vpop.f32.mrb[0].mxu0
      %5146 = vmatprep.mubr.bf16.mxu0 0
      %5147 = vmatmul.mubr.bf16.gmra.mrb[0].mxu0 %v4942
      %v5148 = vpop.f32.mrb[0].mxu0
      %v5149 = vadd.f32 0.0, %v5148
      %v5150 = vpop.f32.mrb[0].mxu0
      %v5151 = vpop.f32.mrb[0].mxu0
      %v5152 = vadd.f32 0.0, %v5151
      %v5153 = vpop.f32.mrb[0].mxu0
      %5154 = vmatprep.mubr.bf16.mxu0 0
      %5155 = vmatmul.mubr.bf16.gmra.mrb[0].mxu0 %v4943
      %v5156 = vpop.f32.mrb[0].mxu0
      %v5157 = vadd.f32 0.0, %v5156
      %v5158 = vpop.f32.mrb[0].mxu0
      %v5159 = vpop.f32.mrb[0].mxu0
      %v5160 = vadd.f32 0.0, %v5159
      %v5161 = vpop.f32.mrb[0].mxu0
      %5162 = vmatprep.mubr.bf16.mxu0 0
      %5163 = vmatmul.mubr.bf16.gmra.mrb[0].mxu0 %v4944
      %v5164 = vpop.f32.mrb[0].mxu0
      %v5165 = vadd.f32 0.0, %v5164
      %v5166 = vpop.f32.mrb[0].mxu0
      %v5167 = vpop.f32.mrb[0].mxu0
      %v5168 = vadd.f32 0.0, %v5167
      %v5169 = vpop.f32.mrb[0].mxu0
      %5170 = vdwg.mxu0
      %v5171 = vadd.f32 %v4864, %v5045
      %v5172 = vadd.f32 %v4865, %v5048
      %v5173 = vadd.f32 %v4866, %v5053
      %v5174 = vadd.f32 %v4867, %v5056
      %v5175 = vadd.f32 %v4868, %v5061
      %v5176 = vadd.f32 %v4869, %v5064
      %v5177 = vadd.f32 %v4870, %v5069
      %v5178 = vadd.f32 %v4871, %v5072
      %v5179 = vadd.f32 %v4872, %v5077
      %v5180 = vadd.f32 %v4873, %v5080
      %v5181 = vadd.f32 %v4874, %v5085
      %v5182 = vadd.f32 %v4875, %v5088
      %v5183 = vadd.f32 %v4876, %v5093
      %v5184 = vadd.f32 %v4877, %v5096
      %v5185 = vadd.f32 %v4878, %v5101
      %v5186 = vadd.f32 %v4879, %v5104
      %v5187 = vadd.f32 %v4880, %v5109
      %v5188 = vadd.f32 %v4881, %v5112
      %v5189 = vadd.f32 %v4882, %v5117
      %v5190 = vadd.f32 %v4883, %v5120
      %v5191 = vadd.f32 %v4884, %v5125
      %v5192 = vadd.f32 %v4885, %v5128
      %v5193 = vadd.f32 %v4886, %v5133
      %v5194 = vadd.f32 %v4887, %v5136
      %v5195 = vadd.f32 %v4888, %v5141
      %v5196 = vadd.f32 %v4889, %v5144
      %v5197 = vadd.f32 %v4890, %v5149
      %v5198 = vadd.f32 %v4891, %v5152
      %v5199 = vadd.f32 %v4892, %v5157
      %v5200 = vadd.f32 %v4893, %v5160
      %v5201 = vadd.f32 %v4894, %v5165
      %v5202 = vadd.f32 %v4895, %v5168
      %v5203 = vld [vmem:[%s4896 + $0x1] sm:$0xff]
      %v5204 = vld [vmem:[%s4896 + $0x9] sm:$0xff]
      %v5205 = vld [vmem:[%s4896 + $0x19] sm:$0xff]
      %v5206 = vld [vmem:[%s4896 + $0x21] sm:$0xff]
      %v5207 = vld [vmem:[%s4896 + $0x31] sm:$0xff]
      %v5208 = vld [vmem:[%s4896 + $0x39] sm:$0xff]
      %v5209 = vld [vmem:[%s4896 + $0x49] sm:$0xff]
      %v5210 = vld [vmem:[%s4896 + $0x51] sm:$0xff]
      %v5211 = vld [vmem:[%s4896 + $0x61] sm:$0xff]
      %v5212 = vld [vmem:[%s4896 + $0x69] sm:$0xff]
      %v5213 = vld [vmem:[%s4896 + $0x79] sm:$0xff]
      %v5214 = vld [vmem:[%s4896 + $0x81] sm:$0xff]
      %v5215 = vld [vmem:[%s4896 + $0x91] sm:$0xff]
      %v5216 = vld [vmem:[%s4896 + $0x99] sm:$0xff]
      %v5217 = vld [vmem:[%s4896 + $0xa9] sm:$0xff]
      %v5218 = vld [vmem:[%s4896 + $0xb1] sm:$0xff]
      %v5219 = vld [vmem:[%s4896 + $0xc1] sm:$0xff]
      %v5220 = vld [vmem:[%s4896 + $0xc9] sm:$0xff]
      %v5221 = vld [vmem:[%s4896 + $0xd9] sm:$0xff]
      %v5222 = vld [vmem:[%s4896 + $0xe1] sm:$0xff]
      %v5223 = vld [vmem:[%s4896 + $0xf1] sm:$0xff]
      %v5224 = vld [vmem:[%s4896 + $0xf9] sm:$0xff]
      %v5225 = vld [vmem:[%s4896 + $0x109] sm:$0xff]
      %v5226 = vld [vmem:[%s4896 + $0x111] sm:$0xff]
      %v5227 = vld [vmem:[%s4896 + $0x121] sm:$0xff]
      %v5228 = vld [vmem:[%s4896 + $0x129] sm:$0xff]
      %v5229 = vld [vmem:[%s4896 + $0x139] sm:$0xff]
      %v5230 = vld [vmem:[%s4896 + $0x141] sm:$0xff]
      %v5231 = vld [vmem:[%s4896 + $0x151] sm:$0xff]
      %v5232 = vld [vmem:[%s4896 + $0x159] sm:$0xff]
      %v5233 = vld [vmem:[%s4896 + $0x169] sm:$0xff]
      %v5234 = vld [vmem:[%s4896 + $0x171] sm:$0xff]
      %v5235 = vpack.c.bf16 %v5204, %v5203
      %v5236 = vpack.c.bf16 %v5206, %v5205
      %v5237 = vpack.c.bf16 %v5208, %v5207
      %v5238 = vpack.c.bf16 %v5210, %v5209
      %v5239 = vpack.c.bf16 %v5212, %v5211
      %v5240 = vpack.c.bf16 %v5214, %v5213
      %v5241 = vpack.c.bf16 %v5216, %v5215
      %v5242 = vpack.c.bf16 %v5218, %v5217
      %v5243 = vpack.c.bf16 %v5220, %v5219
      %v5244 = vpack.c.bf16 %v5222, %v5221
      %v5245 = vpack.c.bf16 %v5224, %v5223
      %v5246 = vpack.c.bf16 %v5226, %v5225
      %v5247 = vpack.c.bf16 %v5228, %v5227
      %v5248 = vpack.c.bf16 %v5230, %v5229
      %v5249 = vpack.c.bf16 %v5232, %v5231
      %v5250 = vpack.c.bf16 %v5234, %v5233
      %s5251 = scalar_lea.vmem %s3, 448
      %v5252 = vld [vmem:[%s5251] sm:$0xf]
      %v5253 = vld [vmem:[%s5251 + $0x4] sm:$0xf]
      %v5254 = vld [vmem:[%s5251 + $0x8] sm:$0xf]
      %v5255 = vld [vmem:[%s5251 + $0xc] sm:$0xf]
      %v5256 = vld [vmem:[%s5251 + $0x10] sm:$0xf]
      %v5257 = vld [vmem:[%s5251 + $0x14] sm:$0xf]
      %v5258 = vld [vmem:[%s5251 + $0x18] sm:$0xf]
      %v5259 = vld [vmem:[%s5251 + $0x1c] sm:$0xf]
      %v5260 = vld [vmem:[%s5251 + $0x20] sm:$0xf]
      %v5261 = vld [vmem:[%s5251 + $0x24] sm:$0xf]
      %v5262 = vld [vmem:[%s5251 + $0x28] sm:$0xf]
      %v5263 = vld [vmem:[%s5251 + $0x2c] sm:$0xf]
      %v5264 = vld [vmem:[%s5251 + $0x30] sm:$0xf]
      %v5265 = vld [vmem:[%s5251 + $0x34] sm:$0xf]
      %v5266 = vld [vmem:[%s5251 + $0x38] sm:$0xf]
      %v5267 = vld [vmem:[%s5251 + $0x3c] sm:$0xf]
      %v5284 = vunpack.c.l.b16 %v5252
      %v5285 = vunpack.c.l.b16 %v5253
      %v5286 = vunpack.c.l.b16 %v5254
      %v5287 = vunpack.c.l.b16 %v5255
      %v5288 = vunpack.c.l.b16 %v5256
      %v5289 = vunpack.c.l.b16 %v5257
      %v5290 = vunpack.c.l.b16 %v5258
      %v5291 = vunpack.c.l.b16 %v5259
      %v5292 = vunpack.c.l.b16 %v5260
      %v5293 = vunpack.c.l.b16 %v5261
      %v5294 = vunpack.c.l.b16 %v5262
      %v5295 = vunpack.c.l.b16 %v5263
      %v5296 = vunpack.c.l.b16 %v5264
      %v5297 = vunpack.c.l.b16 %v5265
      %v5298 = vunpack.c.l.b16 %v5266
      %v5299 = vunpack.c.l.b16 %v5267
      %v5300 = vpack.c.b16 %v5285, %v5284
      %v5301 = vpack.c.b16 %v5287, %v5286
      %v5302 = vpack.c.b16 %v5289, %v5288
      %v5303 = vpack.c.b16 %v5291, %v5290
      %v5304 = vpack.c.b16 %v5293, %v5292
      %v5305 = vpack.c.b16 %v5295, %v5294
      %v5306 = vpack.c.b16 %v5297, %v5296
      %v5307 = vpack.c.b16 %v5299, %v5298
      %5316 = vmatprep.subr.bf16.mxu0 0
      %5317 = vmatpush1.bf16.msra.mxu0 %v5300
      %5318 = vmatprep.subr.bf16.mxu0 0
      %5319 = vmatpush1.bf16.msra.mxu0 %v5301
      %5320 = vmatprep.subr.bf16.mxu0 0
      %5321 = vmatpush1.bf16.msra.mxu0 %v5302
      %5322 = vmatprep.subr.bf16.mxu0 0
      %5323 = vmatpush1.bf16.msra.mxu0 %v5303
      %5324 = vmatprep.subr.bf16.mxu0 0
      %5325 = vmatpush1.bf16.msra.mxu0 %v5304
      %5326 = vmatprep.subr.bf16.mxu0 0
      %5327 = vmatpush1.bf16.msra.mxu0 %v5305
      %5328 = vmatprep.subr.bf16.mxu0 0
      %5329 = vmatpush1.bf16.msra.mxu0 %v5306
      %5330 = vmatprep.subr.bf16.mxu0 0
      %5331 = vmatpush1.bf16.msra.mxu0 %v5307
      %5332 = vmatprep.subr.bf16.mxu0 0
      %5333 = vmatpush1.bf16.msra.mxu0 0
      %5334 = vmatprep.subr.bf16.mxu0 0
      %5335 = vmatpush1.bf16.msra.mxu0 0
      %5336 = vmatprep.subr.bf16.mxu0 0
      %5337 = vmatpush1.bf16.msra.mxu0 0
      %5338 = vmatprep.subr.bf16.mxu0 0
      %5339 = vmatpush1.bf16.msra.mxu0 0
      %5340 = vmatprep.subr.bf16.mxu0 0
      %5341 = vmatpush1.bf16.msra.mxu0 0
      %5342 = vmatprep.subr.bf16.mxu0 0
      %5343 = vmatpush1.bf16.msra.mxu0 0
      %5344 = vmatprep.subr.bf16.mxu0 0
      %5345 = vmatpush1.bf16.msra.mxu0 0
      %5346 = vmatprep.subr.bf16.mxu0 0
      %5347 = vmatpush1.bf16.msra.mxu0 0
      %5348 = vmatprep.mubr.bf16.mxu0 0
      %5349 = vmatmul.mubr.bf16.gmra.mrb[0].mxu0 %v5235
      %v5350 = vpop.f32.mrb[0].mxu0
      %v5351 = vadd.f32 0.0, %v5350
      %v5352 = vpop.f32.mrb[0].mxu0
      %v5353 = vpop.f32.mrb[0].mxu0
      %v5354 = vadd.f32 0.0, %v5353
      %v5355 = vpop.f32.mrb[0].mxu0
      %5356 = vmatprep.mubr.bf16.mxu0 0
      %5357 = vmatmul.mubr.bf16.gmra.mrb[0].mxu0 %v5236
      %v5358 = vpop.f32.mrb[0].mxu0
      %v5359 = vadd.f32 0.0, %v5358
      %v5360 = vpop.f32.mrb[0].mxu0
      %v5361 = vpop.f32.mrb[0].mxu0
      %v5362 = vadd.f32 0.0, %v5361
      %v5363 = vpop.f32.mrb[0].mxu0
      %5364 = vmatprep.mubr.bf16.mxu0 0
      %5365 = vmatmul.mubr.bf16.gmra.mrb[0].mxu0 %v5237
      %v5366 = vpop.f32.mrb[0].mxu0
      %v5367 = vadd.f32 0.0, %v5366
      %v5368 = vpop.f32.mrb[0].mxu0
      %v5369 = vpop.f32.mrb[0].mxu0
      %v5370 = vadd.f32 0.0, %v5369
      %v5371 = vpop.f32.mrb[0].mxu0
      %5372 = vmatprep.mubr.bf16.mxu0 0
      %5373 = vmatmul.mubr.bf16.gmra.mrb[0].mxu0 %v5238
      %v5374 = vpop.f32.mrb[0].mxu0
      %v5375 = vadd.f32 0.0, %v5374
      %v5376 = vpop.f32.mrb[0].mxu0
      %v5377 = vpop.f32.mrb[0].mxu0
      %v5378 = vadd.f32 0.0, %v5377
      %v5379 = vpop.f32.mrb[0].mxu0
      %5380 = vmatprep.mubr.bf16.mxu0 0
      %5381 = vmatmul.mubr.bf16.gmra.mrb[0].mxu0 %v5239
      %v5382 = vpop.f32.mrb[0].mxu0
      %v5383 = vadd.f32 0.0, %v5382
      %v5384 = vpop.f32.mrb[0].mxu0
      %v5385 = vpop.f32.mrb[0].mxu0
      %v5386 = vadd.f32 0.0, %v5385
      %v5387 = vpop.f32.mrb[0].mxu0
      %5388 = vmatprep.mubr.bf16.mxu0 0
      %5389 = vmatmul.mubr.bf16.gmra.mrb[0].mxu0 %v5240
      %v5390 = vpop.f32.mrb[0].mxu0
      %v5391 = vadd.f32 0.0, %v5390
      %v5392 = vpop.f32.mrb[0].mxu0
      %v5393 = vpop.f32.mrb[0].mxu0
      %v5394 = vadd.f32 0.0, %v5393
      %v5395 = vpop.f32.mrb[0].mxu0
      %5396 = vmatprep.mubr.bf16.mxu0 0
      %5397 = vmatmul.mubr.bf16.gmra.mrb[0].mxu0 %v5241
      %v5398 = vpop.f32.mrb[0].mxu0
      %v5399 = vadd.f32 0.0, %v5398
      %v5400 = vpop.f32.mrb[0].mxu0
      %v5401 = vpop.f32.mrb[0].mxu0
      %v5402 = vadd.f32 0.0, %v5401
      %v5403 = vpop.f32.mrb[0].mxu0
      %5404 = vmatprep.mubr.bf16.mxu0 0
      %5405 = vmatmul.mubr.bf16.gmra.mrb[0].mxu0 %v5242
      %v5406 = vpop.f32.mrb[0].mxu0
      %v5407 = vadd.f32 0.0, %v5406
      %v5408 = vpop.f32.mrb[0].mxu0
      %v5409 = vpop.f32.mrb[0].mxu0
      %v5410 = vadd.f32 0.0, %v5409
      %v5411 = vpop.f32.mrb[0].mxu0
      %5412 = vmatprep.mubr.bf16.mxu0 0
      %5413 = vmatmul.mubr.bf16.gmra.mrb[0].mxu0 %v5243
      %v5414 = vpop.f32.mrb[0].mxu0
      %v5415 = vadd.f32 0.0, %v5414
      %v5416 = vpop.f32.mrb[0].mxu0
      %v5417 = vpop.f32.mrb[0].mxu0
      %v5418 = vadd.f32 0.0, %v5417
      %v5419 = vpop.f32.mrb[0].mxu0
      %5420 = vmatprep.mubr.bf16.mxu0 0
      %5421 = vmatmul.mubr.bf16.gmra.mrb[0].mxu0 %v5244
      %v5422 = vpop.f32.mrb[0].mxu0
      %v5423 = vadd.f32 0.0, %v5422
      %v5424 = vpop.f32.mrb[0].mxu0
      %v5425 = vpop.f32.mrb[0].mxu0
      %v5426 = vadd.f32 0.0, %v5425
      %v5427 = vpop.f32.mrb[0].mxu0
      %5428 = vmatprep.mubr.bf16.mxu0 0
      %5429 = vmatmul.mubr.bf16.gmra.mrb[0].mxu0 %v5245
      %v5430 = vpop.f32.mrb[0].mxu0
      %v5431 = vadd.f32 0.0, %v5430
      %v5432 = vpop.f32.mrb[0].mxu0
      %v5433 = vpop.f32.mrb[0].mxu0
      %v5434 = vadd.f32 0.0, %v5433
      %v5435 = vpop.f32.mrb[0].mxu0
      %5436 = vmatprep.mubr.bf16.mxu0 0
      %5437 = vmatmul.mubr.bf16.gmra.mrb[0].mxu0 %v5246
      %v5438 = vpop.f32.mrb[0].mxu0
      %v5439 = vadd.f32 0.0, %v5438
      %v5440 = vpop.f32.mrb[0].mxu0
      %v5441 = vpop.f32.mrb[0].mxu0
      %v5442 = vadd.f32 0.0, %v5441
      %v5443 = vpop.f32.mrb[0].mxu0
      %5444 = vmatprep.mubr.bf16.mxu0 0
      %5445 = vmatmul.mubr.bf16.gmra.mrb[0].mxu0 %v5247
      %v5446 = vpop.f32.mrb[0].mxu0
      %v5447 = vadd.f32 0.0, %v5446
      %v5448 = vpop.f32.mrb[0].mxu0
      %v5449 = vpop.f32.mrb[0].mxu0
      %v5450 = vadd.f32 0.0, %v5449
      %v5451 = vpop.f32.mrb[0].mxu0
      %5452 = vmatprep.mubr.bf16.mxu0 0
      %5453 = vmatmul.mubr.bf16.gmra.mrb[0].mxu0 %v5248
      %v5454 = vpop.f32.mrb[0].mxu0
      %v5455 = vadd.f32 0.0, %v5454
      %v5456 = vpop.f32.mrb[0].mxu0
      %v5457 = vpop.f32.mrb[0].mxu0
      %v5458 = vadd.f32 0.0, %v5457
      %v5459 = vpop.f32.mrb[0].mxu0
      %5460 = vmatprep.mubr.bf16.mxu0 0
      %5461 = vmatmul.mubr.bf16.gmra.mrb[0].mxu0 %v5249
      %v5462 = vpop.f32.mrb[0].mxu0
      %v5463 = vadd.f32 0.0, %v5462
      %v5464 = vpop.f32.mrb[0].mxu0
      %v5465 = vpop.f32.mrb[0].mxu0
      %v5466 = vadd.f32 0.0, %v5465
      %v5467 = vpop.f32.mrb[0].mxu0
      %5468 = vmatprep.mubr.bf16.mxu0 0
      %5469 = vmatmul.mubr.bf16.gmra.mrb[0].mxu0 %v5250
      %v5470 = vpop.f32.mrb[0].mxu0
      %v5471 = vadd.f32 0.0, %v5470
      %v5472 = vpop.f32.mrb[0].mxu0
      %v5473 = vpop.f32.mrb[0].mxu0
      %v5474 = vadd.f32 0.0, %v5473
      %v5475 = vpop.f32.mrb[0].mxu0
      %5476 = vdwg.mxu0
      %v5477 = vadd.f32 %v5171, %v5351
      %v5478 = vadd.f32 %v5172, %v5354
      %v5479 = vadd.f32 %v5173, %v5359
      %v5480 = vadd.f32 %v5174, %v5362
      %v5481 = vadd.f32 %v5175, %v5367
      %v5482 = vadd.f32 %v5176, %v5370
      %v5483 = vadd.f32 %v5177, %v5375
      %v5484 = vadd.f32 %v5178, %v5378
      %v5485 = vadd.f32 %v5179, %v5383
      %v5486 = vadd.f32 %v5180, %v5386
      %v5487 = vadd.f32 %v5181, %v5391
      %v5488 = vadd.f32 %v5182, %v5394
      %v5489 = vadd.f32 %v5183, %v5399
      %v5490 = vadd.f32 %v5184, %v5402
      %v5491 = vadd.f32 %v5185, %v5407
      %v5492 = vadd.f32 %v5186, %v5410
      %v5493 = vadd.f32 %v5187, %v5415
      %v5494 = vadd.f32 %v5188, %v5418
      %v5495 = vadd.f32 %v5189, %v5423
      %v5496 = vadd.f32 %v5190, %v5426
      %v5497 = vadd.f32 %v5191, %v5431
      %v5498 = vadd.f32 %v5192, %v5434
      %v5499 = vadd.f32 %v5193, %v5439
      %v5500 = vadd.f32 %v5194, %v5442
      %v5501 = vadd.f32 %v5195, %v5447
      %v5502 = vadd.f32 %v5196, %v5450
      %v5503 = vadd.f32 %v5197, %v5455
      %v5504 = vadd.f32 %v5198, %v5458
      %v5505 = vadd.f32 %v5199, %v5463
      %v5506 = vadd.f32 %v5200, %v5466
      %v5507 = vadd.f32 %v5201, %v5471
      %v5508 = vadd.f32 %v5202, %v5474
      %v5509 = vld [vmem:[%s4896 + $0x2] sm:$0xff]
      %v5510 = vld [vmem:[%s4896 + $0xa] sm:$0xff]
      %v5511 = vld [vmem:[%s4896 + $0x1a] sm:$0xff]
      %v5512 = vld [vmem:[%s4896 + $0x22] sm:$0xff]
      %v5513 = vld [vmem:[%s4896 + $0x32] sm:$0xff]
      %v5514 = vld [vmem:[%s4896 + $0x3a] sm:$0xff]
      %v5515 = vld [vmem:[%s4896 + $0x4a] sm:$0xff]
      %v5516 = vld [vmem:[%s4896 + $0x52] sm:$0xff]
      %v5517 = vld [vmem:[%s4896 + $0x62] sm:$0xff]
      %v5518 = vld [vmem:[%s4896 + $0x6a] sm:$0xff]
      %v5519 = vld [vmem:[%s4896 + $0x7a] sm:$0xff]
      %v5520 = vld [vmem:[%s4896 + $0x82] sm:$0xff]
      %v5521 = vld [vmem:[%s4896 + $0x92] sm:$0xff]
      %v5522 = vld [vmem:[%s4896 + $0x9a] sm:$0xff]
      %v5523 = vld [vmem:[%s4896 + $0xaa] sm:$0xff]
      %v5524 = vld [vmem:[%s4896 + $0xb2] sm:$0xff]
      %v5525 = vld [vmem:[%s4896 + $0xc2] sm:$0xff]
      %v5526 = vld [vmem:[%s4896 + $0xca] sm:$0xff]
      %v5527 = vld [vmem:[%s4896 + $0xda] sm:$0xff]
      %v5528 = vld [vmem:[%s4896 + $0xe2] sm:$0xff]
      %v5529 = vld [vmem:[%s4896 + $0xf2] sm:$0xff]
      %v5530 = vld [vmem:[%s4896 + $0xfa] sm:$0xff]
      %v5531 = vld [vmem:[%s4896 + $0x10a] sm:$0xff]
      %v5532 = vld [vmem:[%s4896 + $0x112] sm:$0xff]
      %v5533 = vld [vmem:[%s4896 + $0x122] sm:$0xff]
      %v5534 = vld [vmem:[%s4896 + $0x12a] sm:$0xff]
      %v5535 = vld [vmem:[%s4896 + $0x13a] sm:$0xff]
      %v5536 = vld [vmem:[%s4896 + $0x142] sm:$0xff]
      %v5537 = vld [vmem:[%s4896 + $0x152] sm:$0xff]
      %v5538 = vld [vmem:[%s4896 + $0x15a] sm:$0xff]
      %v5539 = vld [vmem:[%s4896 + $0x16a] sm:$0xff]
      %v5540 = vld [vmem:[%s4896 + $0x172] sm:$0xff]
      %v5541 = vpack.c.bf16 %v5510, %v5509
      %v5542 = vpack.c.bf16 %v5512, %v5511
      %v5543 = vpack.c.bf16 %v5514, %v5513
      %v5544 = vpack.c.bf16 %v5516, %v5515
      %v5545 = vpack.c.bf16 %v5518, %v5517
      %v5546 = vpack.c.bf16 %v5520, %v5519
      %v5547 = vpack.c.bf16 %v5522, %v5521
      %v5548 = vpack.c.bf16 %v5524, %v5523
      %v5549 = vpack.c.bf16 %v5526, %v5525
      %v5550 = vpack.c.bf16 %v5528, %v5527
      %v5551 = vpack.c.bf16 %v5530, %v5529
      %v5552 = vpack.c.bf16 %v5532, %v5531
      %v5553 = vpack.c.bf16 %v5534, %v5533
      %v5554 = vpack.c.bf16 %v5536, %v5535
      %v5555 = vpack.c.bf16 %v5538, %v5537
      %v5556 = vpack.c.bf16 %v5540, %v5539
      %s5557 = scalar_lea.vmem %s3, 512
      %v5558 = vld [vmem:[%s5557] sm:$0xf]
      %v5559 = vld [vmem:[%s5557 + $0x4] sm:$0xf]
      %v5560 = vld [vmem:[%s5557 + $0x8] sm:$0xf]
      %v5561 = vld [vmem:[%s5557 + $0xc] sm:$0xf]
      %v5562 = vld [vmem:[%s5557 + $0x10] sm:$0xf]
      %v5563 = vld [vmem:[%s5557 + $0x14] sm:$0xf]
      %v5564 = vld [vmem:[%s5557 + $0x18] sm:$0xf]
      %v5565 = vld [vmem:[%s5557 + $0x1c] sm:$0xf]
      %v5566 = vld [vmem:[%s5557 + $0x20] sm:$0xf]
      %v5567 = vld [vmem:[%s5557 + $0x24] sm:$0xf]
      %v5568 = vld [vmem:[%s5557 + $0x28] sm:$0xf]
      %v5569 = vld [vmem:[%s5557 + $0x2c] sm:$0xf]
      %v5570 = vld [vmem:[%s5557 + $0x30] sm:$0xf]
      %v5571 = vld [vmem:[%s5557 + $0x34] sm:$0xf]
      %v5572 = vld [vmem:[%s5557 + $0x38] sm:$0xf]
      %v5573 = vld [vmem:[%s5557 + $0x3c] sm:$0xf]
      %v5590 = vunpack.c.l.b16 %v5558
      %v5591 = vunpack.c.l.b16 %v5559
      %v5592 = vunpack.c.l.b16 %v5560
      %v5593 = vunpack.c.l.b16 %v5561
      %v5594 = vunpack.c.l.b16 %v5562
      %v5595 = vunpack.c.l.b16 %v5563
      %v5596 = vunpack.c.l.b16 %v5564
      %v5597 = vunpack.c.l.b16 %v5565
      %v5598 = vunpack.c.l.b16 %v5566
      %v5599 = vunpack.c.l.b16 %v5567
      %v5600 = vunpack.c.l.b16 %v5568
      %v5601 = vunpack.c.l.b16 %v5569
      %v5602 = vunpack.c.l.b16 %v5570
      %v5603 = vunpack.c.l.b16 %v5571
      %v5604 = vunpack.c.l.b16 %v5572
      %v5605 = vunpack.c.l.b16 %v5573
      %v5606 = vpack.c.b16 %v5591, %v5590
      %v5607 = vpack.c.b16 %v5593, %v5592
      %v5608 = vpack.c.b16 %v5595, %v5594
      %v5609 = vpack.c.b16 %v5597, %v5596
      %v5610 = vpack.c.b16 %v5599, %v5598
      %v5611 = vpack.c.b16 %v5601, %v5600
      %v5612 = vpack.c.b16 %v5603, %v5602
      %v5613 = vpack.c.b16 %v5605, %v5604
      %5622 = vmatprep.subr.bf16.mxu0 0
      %5623 = vmatpush1.bf16.msra.mxu0 %v5606
      %5624 = vmatprep.subr.bf16.mxu0 0
      %5625 = vmatpush1.bf16.msra.mxu0 %v5607
      %5626 = vmatprep.subr.bf16.mxu0 0
      %5627 = vmatpush1.bf16.msra.mxu0 %v5608
      %5628 = vmatprep.subr.bf16.mxu0 0
      %5629 = vmatpush1.bf16.msra.mxu0 %v5609
      %5630 = vmatprep.subr.bf16.mxu0 0
      %5631 = vmatpush1.bf16.msra.mxu0 %v5610
      %5632 = vmatprep.subr.bf16.mxu0 0
      %5633 = vmatpush1.bf16.msra.mxu0 %v5611
      %5634 = vmatprep.subr.bf16.mxu0 0
      %5635 = vmatpush1.bf16.msra.mxu0 %v5612
      %5636 = vmatprep.subr.bf16.mxu0 0
      %5637 = vmatpush1.bf16.msra.mxu0 %v5613
      %5638 = vmatprep.subr.bf16.mxu0 0
      %5639 = vmatpush1.bf16.msra.mxu0 0
      %5640 = vmatprep.subr.bf16.mxu0 0
      %5641 = vmatpush1.bf16.msra.mxu0 0
      %5642 = vmatprep.subr.bf16.mxu0 0
      %5643 = vmatpush1.bf16.msra.mxu0 0
      %5644 = vmatprep.subr.bf16.mxu0 0
      %5645 = vmatpush1.bf16.msra.mxu0 0
      %5646 = vmatprep.subr.bf16.mxu0 0
      %5647 = vmatpush1.bf16.msra.mxu0 0
      %5648 = vmatprep.subr.bf16.mxu0 0
      %5649 = vmatpush1.bf16.msra.mxu0 0
      %5650 = vmatprep.subr.bf16.mxu0 0
      %5651 = vmatpush1.bf16.msra.mxu0 0
      %5652 = vmatprep.subr.bf16.mxu0 0
      %5653 = vmatpush1.bf16.msra.mxu0 0
      %5654 = vmatprep.mubr.bf16.mxu0 0
      %5655 = vmatmul.mubr.bf16.gmra.mrb[0].mxu0 %v5541
      %v5656 = vpop.f32.mrb[0].mxu0
      %v5657 = vadd.f32 0.0, %v5656
      %v5658 = vpop.f32.mrb[0].mxu0
      %v5659 = vpop.f32.mrb[0].mxu0
      %v5660 = vadd.f32 0.0, %v5659
      %v5661 = vpop.f32.mrb[0].mxu0
      %5662 = vmatprep.mubr.bf16.mxu0 0
      %5663 = vmatmul.mubr.bf16.gmra.mrb[0].mxu0 %v5542
      %v5664 = vpop.f32.mrb[0].mxu0
      %v5665 = vadd.f32 0.0, %v5664
      %v5666 = vpop.f32.mrb[0].mxu0
      %v5667 = vpop.f32.mrb[0].mxu0
      %v5668 = vadd.f32 0.0, %v5667
      %v5669 = vpop.f32.mrb[0].mxu0
      %5670 = vmatprep.mubr.bf16.mxu0 0
      %5671 = vmatmul.mubr.bf16.gmra.mrb[0].mxu0 %v5543
      %v5672 = vpop.f32.mrb[0].mxu0
      %v5673 = vadd.f32 0.0, %v5672
      %v5674 = vpop.f32.mrb[0].mxu0
      %v5675 = vpop.f32.mrb[0].mxu0
      %v5676 = vadd.f32 0.0, %v5675
      %v5677 = vpop.f32.mrb[0].mxu0
      %5678 = vmatprep.mubr.bf16.mxu0 0
      %5679 = vmatmul.mubr.bf16.gmra.mrb[0].mxu0 %v5544
      %v5680 = vpop.f32.mrb[0].mxu0
      %v5681 = vadd.f32 0.0, %v5680
      %v5682 = vpop.f32.mrb[0].mxu0
      %v5683 = vpop.f32.mrb[0].mxu0
      %v5684 = vadd.f32 0.0, %v5683
      %v5685 = vpop.f32.mrb[0].mxu0
      %5686 = vmatprep.mubr.bf16.mxu0 0
      %5687 = vmatmul.mubr.bf16.gmra.mrb[0].mxu0 %v5545
      %v5688 = vpop.f32.mrb[0].mxu0
      %v5689 = vadd.f32 0.0, %v5688
      %v5690 = vpop.f32.mrb[0].mxu0
      %v5691 = vpop.f32.mrb[0].mxu0
      %v5692 = vadd.f32 0.0, %v5691
      %v5693 = vpop.f32.mrb[0].mxu0
      %5694 = vmatprep.mubr.bf16.mxu0 0
      %5695 = vmatmul.mubr.bf16.gmra.mrb[0].mxu0 %v5546
      %v5696 = vpop.f32.mrb[0].mxu0
      %v5697 = vadd.f32 0.0, %v5696
      %v5698 = vpop.f32.mrb[0].mxu0
      %v5699 = vpop.f32.mrb[0].mxu0
      %v5700 = vadd.f32 0.0, %v5699
      %v5701 = vpop.f32.mrb[0].mxu0
      %5702 = vmatprep.mubr.bf16.mxu0 0
      %5703 = vmatmul.mubr.bf16.gmra.mrb[0].mxu0 %v5547
      %v5704 = vpop.f32.mrb[0].mxu0
      %v5705 = vadd.f32 0.0, %v5704
      %v5706 = vpop.f32.mrb[0].mxu0
      %v5707 = vpop.f32.mrb[0].mxu0
      %v5708 = vadd.f32 0.0, %v5707
      %v5709 = vpop.f32.mrb[0].mxu0
      %5710 = vmatprep.mubr.bf16.mxu0 0
      %5711 = vmatmul.mubr.bf16.gmra.mrb[0].mxu0 %v5548
      %v5712 = vpop.f32.mrb[0].mxu0
      %v5713 = vadd.f32 0.0, %v5712
      %v5714 = vpop.f32.mrb[0].mxu0
      %v5715 = vpop.f32.mrb[0].mxu0
      %v5716 = vadd.f32 0.0, %v5715
      %v5717 = vpop.f32.mrb[0].mxu0
      %5718 = vmatprep.mubr.bf16.mxu0 0
      %5719 = vmatmul.mubr.bf16.gmra.mrb[0].mxu0 %v5549
      %v5720 = vpop.f32.mrb[0].mxu0
      %v5721 = vadd.f32 0.0, %v5720
      %v5722 = vpop.f32.mrb[0].mxu0
      %v5723 = vpop.f32.mrb[0].mxu0
      %v5724 = vadd.f32 0.0, %v5723
      %v5725 = vpop.f32.mrb[0].mxu0
      %5726 = vmatprep.mubr.bf16.mxu0 0
      %5727 = vmatmul.mubr.bf16.gmra.mrb[0].mxu0 %v5550
      %v5728 = vpop.f32.mrb[0].mxu0
      %v5729 = vadd.f32 0.0, %v5728
      %v5730 = vpop.f32.mrb[0].mxu0
      %v5731 = vpop.f32.mrb[0].mxu0
      %v5732 = vadd.f32 0.0, %v5731
      %v5733 = vpop.f32.mrb[0].mxu0
      %5734 = vmatprep.mubr.bf16.mxu0 0
      %5735 = vmatmul.mubr.bf16.gmra.mrb[0].mxu0 %v5551
      %v5736 = vpop.f32.mrb[0].mxu0
      %v5737 = vadd.f32 0.0, %v5736
      %v5738 = vpop.f32.mrb[0].mxu0
      %v5739 = vpop.f32.mrb[0].mxu0
      %v5740 = vadd.f32 0.0, %v5739
      %v5741 = vpop.f32.mrb[0].mxu0
      %5742 = vmatprep.mubr.bf16.mxu0 0
      %5743 = vmatmul.mubr.bf16.gmra.mrb[0].mxu0 %v5552
      %v5744 = vpop.f32.mrb[0].mxu0
      %v5745 = vadd.f32 0.0, %v5744
      %v5746 = vpop.f32.mrb[0].mxu0
      %v5747 = vpop.f32.mrb[0].mxu0
      %v5748 = vadd.f32 0.0, %v5747
      %v5749 = vpop.f32.mrb[0].mxu0
      %5750 = vmatprep.mubr.bf16.mxu0 0
      %5751 = vmatmul.mubr.bf16.gmra.mrb[0].mxu0 %v5553
      %v5752 = vpop.f32.mrb[0].mxu0
      %v5753 = vadd.f32 0.0, %v5752
      %v5754 = vpop.f32.mrb[0].mxu0
      %v5755 = vpop.f32.mrb[0].mxu0
      %v5756 = vadd.f32 0.0, %v5755
      %v5757 = vpop.f32.mrb[0].mxu0
      %5758 = vmatprep.mubr.bf16.mxu0 0
      %5759 = vmatmul.mubr.bf16.gmra.mrb[0].mxu0 %v5554
      %v5760 = vpop.f32.mrb[0].mxu0
      %v5761 = vadd.f32 0.0, %v5760
      %v5762 = vpop.f32.mrb[0].mxu0
      %v5763 = vpop.f32.mrb[0].mxu0
      %v5764 = vadd.f32 0.0, %v5763
      %v5765 = vpop.f32.mrb[0].mxu0
      %5766 = vmatprep.mubr.bf16.mxu0 0
      %5767 = vmatmul.mubr.bf16.gmra.mrb[0].mxu0 %v5555
      %v5768 = vpop.f32.mrb[0].mxu0
      %v5769 = vadd.f32 0.0, %v5768
      %v5770 = vpop.f32.mrb[0].mxu0
      %v5771 = vpop.f32.mrb[0].mxu0
      %v5772 = vadd.f32 0.0, %v5771
      %v5773 = vpop.f32.mrb[0].mxu0
      %5774 = vmatprep.mubr.bf16.mxu0 0
      %5775 = vmatmul.mubr.bf16.gmra.mrb[0].mxu0 %v5556
      %v5776 = vpop.f32.mrb[0].mxu0
      %v5777 = vadd.f32 0.0, %v5776
      %v5778 = vpop.f32.mrb[0].mxu0
      %v5779 = vpop.f32.mrb[0].mxu0
      %v5780 = vadd.f32 0.0, %v5779
      %v5781 = vpop.f32.mrb[0].mxu0
      %5782 = vdwg.mxu0
      %v5783 = vadd.f32 %v5477, %v5657
      %v5784 = vadd.f32 %v5478, %v5660
      %v5785 = vadd.f32 %v5479, %v5665
      %v5786 = vadd.f32 %v5480, %v5668
      %v5787 = vadd.f32 %v5481, %v5673
      %v5788 = vadd.f32 %v5482, %v5676
      %v5789 = vadd.f32 %v5483, %v5681
      %v5790 = vadd.f32 %v5484, %v5684
      %v5791 = vadd.f32 %v5485, %v5689
      %v5792 = vadd.f32 %v5486, %v5692
      %v5793 = vadd.f32 %v5487, %v5697
      %v5794 = vadd.f32 %v5488, %v5700
      %v5795 = vadd.f32 %v5489, %v5705
      %v5796 = vadd.f32 %v5490, %v5708
      %v5797 = vadd.f32 %v5491, %v5713
      %v5798 = vadd.f32 %v5492, %v5716
      %v5799 = vadd.f32 %v5493, %v5721
      %v5800 = vadd.f32 %v5494, %v5724
      %v5801 = vadd.f32 %v5495, %v5729
      %v5802 = vadd.f32 %v5496, %v5732
      %v5803 = vadd.f32 %v5497, %v5737
      %v5804 = vadd.f32 %v5498, %v5740
      %v5805 = vadd.f32 %v5499, %v5745
      %v5806 = vadd.f32 %v5500, %v5748
      %v5807 = vadd.f32 %v5501, %v5753
      %v5808 = vadd.f32 %v5502, %v5756
      %v5809 = vadd.f32 %v5503, %v5761
      %v5810 = vadd.f32 %v5504, %v5764
      %v5811 = vadd.f32 %v5505, %v5769
      %v5812 = vadd.f32 %v5506, %v5772
      %v5813 = vadd.f32 %v5507, %v5777
      %v5814 = vadd.f32 %v5508, %v5780
      %v5815 = vld [vmem:[%s4] sm:$0x1]
      %v5817 = vlaneseq
      %v5818 = vshrl.u32 %v5817, 7
      %v5819 = vsub.s32 0, %v5818
      %v5820 = vrot.slane %v5815, %v5819
      %v5822 = vadd.f32 %v5783, %v5820
      %v5823 = vadd.f32 %v5784, %v5820
      %v5824 = vadd.f32 %v5785, %v5820
      %v5825 = vadd.f32 %v5786, %v5820
      %v5826 = vadd.f32 %v5787, %v5820
      %v5827 = vadd.f32 %v5788, %v5820
      %v5828 = vadd.f32 %v5789, %v5820
      %v5829 = vadd.f32 %v5790, %v5820
      %v5830 = vadd.f32 %v5791, %v5820
      %v5831 = vadd.f32 %v5792, %v5820
      %v5832 = vadd.f32 %v5793, %v5820
      %v5833 = vadd.f32 %v5794, %v5820
      %v5834 = vadd.f32 %v5795, %v5820
      %v5835 = vadd.f32 %v5796, %v5820
      %v5836 = vadd.f32 %v5797, %v5820
      %v5837 = vadd.f32 %v5798, %v5820
      %v5838 = vadd.f32 %v5799, %v5820
      %v5839 = vadd.f32 %v5800, %v5820
      %v5840 = vadd.f32 %v5801, %v5820
      %v5841 = vadd.f32 %v5802, %v5820
      %v5842 = vadd.f32 %v5803, %v5820
      %v5843 = vadd.f32 %v5804, %v5820
      %v5844 = vadd.f32 %v5805, %v5820
      %v5845 = vadd.f32 %v5806, %v5820
      %v5846 = vadd.f32 %v5807, %v5820
      %v5847 = vadd.f32 %v5808, %v5820
      %v5848 = vadd.f32 %v5809, %v5820
      %v5849 = vadd.f32 %v5810, %v5820
      %v5850 = vadd.f32 %v5811, %v5820
      %v5851 = vadd.f32 %v5812, %v5820
      %v5852 = vadd.f32 %v5813, %v5820
      %v5853 = vadd.f32 %v5814, %v5820
      %v5854 = vmax.f32 %v5822, 0.0
      %v5855 = vmax.f32 %v5823, 0.0
      %v5856 = vmax.f32 %v5824, 0.0
      %v5857 = vmax.f32 %v5825, 0.0
      %v5858 = vmax.f32 %v5826, 0.0
      %v5859 = vmax.f32 %v5827, 0.0
      %v5860 = vmax.f32 %v5828, 0.0
      %v5861 = vmax.f32 %v5829, 0.0
      %v5862 = vmax.f32 %v5830, 0.0
      %v5863 = vmax.f32 %v5831, 0.0
      %v5864 = vmax.f32 %v5832, 0.0
      %v5865 = vmax.f32 %v5833, 0.0
      %v5866 = vmax.f32 %v5834, 0.0
      %v5867 = vmax.f32 %v5835, 0.0
      %v5868 = vmax.f32 %v5836, 0.0
      %v5869 = vmax.f32 %v5837, 0.0
      %v5870 = vmax.f32 %v5838, 0.0
      %v5871 = vmax.f32 %v5839, 0.0
      %v5872 = vmax.f32 %v5840, 0.0
      %v5873 = vmax.f32 %v5841, 0.0
      %v5874 = vmax.f32 %v5842, 0.0
      %v5875 = vmax.f32 %v5843, 0.0
      %v5876 = vmax.f32 %v5844, 0.0
      %v5877 = vmax.f32 %v5845, 0.0
      %v5878 = vmax.f32 %v5846, 0.0
      %v5879 = vmax.f32 %v5847, 0.0
      %v5880 = vmax.f32 %v5848, 0.0
      %v5881 = vmax.f32 %v5849, 0.0
      %v5882 = vmax.f32 %v5850, 0.0
      %v5883 = vmax.f32 %v5851, 0.0
      %v5884 = vmax.f32 %v5852, 0.0
      %v5885 = vmax.f32 %v5853, 0.0
      %5886 = vst [vmem:[%s224] sm:$0xff] %v5854
      %5887 = vst [vmem:[%s224 + $0x8] sm:$0xff] %v5855
      %5888 = vst [vmem:[%s224 + $0x10] sm:$0xff] %v5856
      %5889 = vst [vmem:[%s224 + $0x18] sm:$0xff] %v5857
      %5890 = vst [vmem:[%s224 + $0x20] sm:$0xff] %v5858
      %5891 = vst [vmem:[%s224 + $0x28] sm:$0xff] %v5859
      %5892 = vst [vmem:[%s224 + $0x30] sm:$0xff] %v5860
      %5893 = vst [vmem:[%s224 + $0x38] sm:$0xff] %v5861
      %5894 = vst [vmem:[%s224 + $0x40] sm:$0xff] %v5862
      %5895 = vst [vmem:[%s224 + $0x48] sm:$0xff] %v5863
      %5896 = vst [vmem:[%s224 + $0x50] sm:$0xff] %v5864
      %5897 = vst [vmem:[%s224 + $0x58] sm:$0xff] %v5865
      %5898 = vst [vmem:[%s224 + $0x60] sm:$0xff] %v5866
      %5899 = vst [vmem:[%s224 + $0x68] sm:$0xff] %v5867
      %5900 = vst [vmem:[%s224 + $0x70] sm:$0xff] %v5868
      %5901 = vst [vmem:[%s224 + $0x78] sm:$0xff] %v5869
      %5902 = vst [vmem:[%s224 + $0x80] sm:$0xff] %v5870
      %5903 = vst [vmem:[%s224 + $0x88] sm:$0xff] %v5871
      %5904 = vst [vmem:[%s224 + $0x90] sm:$0xff] %v5872
      %5905 = vst [vmem:[%s224 + $0x98] sm:$0xff] %v5873
      %5906 = vst [vmem:[%s224 + $0xa0] sm:$0xff] %v5874
      %5907 = vst [vmem:[%s224 + $0xa8] sm:$0xff] %v5875
      %5908 = vst [vmem:[%s224 + $0xb0] sm:$0xff] %v5876
      %5909 = vst [vmem:[%s224 + $0xb8] sm:$0xff] %v5877
      %5910 = vst [vmem:[%s224 + $0xc0] sm:$0xff] %v5878
      %5911 = vst [vmem:[%s224 + $0xc8] sm:$0xff] %v5879
      %5912 = vst [vmem:[%s224 + $0xd0] sm:$0xff] %v5880
      %5913 = vst [vmem:[%s224 + $0xd8] sm:$0xff] %v5881
      %5914 = vst [vmem:[%s224 + $0xe0] sm:$0xff] %v5882
      %5915 = vst [vmem:[%s224 + $0xe8] sm:$0xff] %v5883
      %5916 = vst [vmem:[%s224 + $0xf0] sm:$0xff] %v5884
      %5917 = vst [vmem:[%s224 + $0xf8] sm:$0xff] %v5885
      %p5918 = scmp.lt.s32.totalorder %s16, 1
      %s5919 = scalar_select %p5918, %s16, 1
      %s5920 = smul.addr %s5919, 32
      %s5921 = smul.addr %s5920, 8
      %s5922 = scalar_lea.vmem %s5, %s5921
      // Predicated region
      $region45: #{double_conv.1} parent=39 // pred_check
        %p5923 = pneg %p144
      $region46: #{double_conv.1} parent=39 // pred_check_branch
        %5925 = sbr.rel (%p5923) target = $region48
      $region47: #{double_conv.1} parent=39 // pred_region
        _
      $region48: #{double_conv.1} parent=39 // pred_fallthru
        _
    $region40: #{double_conv.1} parent=5 // pred_fallthru
      _
    %p5926 = scmp.le.s32.totalorder 2, %s11
    // Predicated region
    $region49: #{double_conv.1} parent=5 // pred_check
      %p5927 = pneg %p5926
    $region50: #{double_conv.1} parent=5 // pred_check_branch
      %5929 = sbr.rel (%p5927) target = $region52
    $region51: #{double_conv.1} parent=5 // pred_region
      %s5930 = ssub.s32 %s11, 2
      // Predicated region
      $region53: #{double_conv.1} parent=51 // pred_check
        %p5931 = pneg %p150
      $region54: #{double_conv.1} parent=51 // pred_check_branch
        %5933 = sbr.rel (%p5931) target = $region56
      $region55: #{double_conv.1} parent=51 // pred_region
        %p5934 = scmp.lt.s32.totalorder %s17, 1
        %s5935 = scalar_select %p5934, %s17, 1
        %s5936 = smul.addr %s5935, 32
        %s5937 = smul.addr %s5936, 8
        %s5938 = scalar_lea.vmem %s5, %s5937
      $region56: #{double_conv.1} parent=51 // pred_fallthru
        _
    $region52: #{double_conv.1} parent=5 // pred_fallthru
      _
  $region6: #{double_conv.1} parent=0 // loop_footer
    %s15 = sadd.s32 1, %s11
  $region7: #{double_conv.1} parent=0 // loop_footer_branch
    %10 = sbr.rel target = $region3
  $region8: #{double_conv.1} parent=0 // loop_exit
    _

</llo_original>
